<compile_context>
chip_gen: v5e
topology: v5e:2x2
jax: 0.10.0
libtpu: 0.0.40
codegen_flags: <defaults>
</compile_context>

<pallas_src>
import functools
import math

import jax
import jax.numpy as jnp
from jax.experimental import pallas as pl
from jax.experimental.pallas import tpu as pltpu

ETA = 1e-6  # Constants.eta in the reference codebase

# (input H, input W, padding) for conv1..conv4; kernel=4, stride=2 everywhere.
_LAYER_SPECS = ((32, 32, 1), (16, 16, 1), (8, 8, 1), (4, 4, 0))
_KSIZE = 4
_STRIDE = 2
_IN_COLS = 32 * 3          # flattened input columns (W*Cin) of conv1
_IN_COLS_PAD = 128         # lane-padded input columns


# ---------------------------------------------------------------------------
# Fused Pallas kernel
# ---------------------------------------------------------------------------
def _conv_band(x_bf, a_ref, m_ref, b_ref):
    """One stride-2 4x4 conv + bias + ReLU.

    x_bf  : (BT*H, Cflat)            bf16 activations (rows=(image,row))
    a_ref : (4*BT*OH, BT*H)          bf16 0/1 stacked row-selection matrix
    m_ref : (4, Cflat, OW*Cout)      bf16 banded conv weights (one per kernel row)
    b_ref : (1, OW*Cout)             f32 bias tiled over output columns
    returns (BT*OH, OW*Cout) f32 with ReLU applied.
    """
    rows = a_ref.shape[0] // _KSIZE
    # Single stacked selection matmul (gathers the 4 strided row taps at once;
    # zero rows implement H zero-padding).  Selection is exact in bf16.
    sel = jnp.dot(a_ref[...], x_bf, preferred_element_type=jnp.float32)
    sel = sel.astype(jnp.bfloat16)
    out = None
    for kh in range(_KSIZE):
        blk = sel[kh * rows:(kh + 1) * rows, :]          # static, sublane-aligned
        y = jnp.dot(blk, m_ref[kh], preferred_element_type=jnp.float32)
        out = y if out is None else out + y
    return jnp.maximum(out + b_ref[...], 0.0)


def _enc_svhn_kernel(d,
                     x_ref,
                     a1, m1, b1, a2, m2, b2, a3, m3, b3, a4, m4, b4,
                     wh_ref, bh_ref, out_ref):
    h = x_ref[...]                                          # (BT*32, 128) bf16
    h = _conv_band(h, a1, m1, b1).astype(jnp.bfloat16)      # (BT*16, 512)
    h = _conv_band(h, a2, m2, b2).astype(jnp.bfloat16)      # (BT*8,  512)
    h = _conv_band(h, a3, m3, b3).astype(jnp.bfloat16)      # (BT*4,  256)
    h = _conv_band(h, a4, m4, b4).astype(jnp.bfloat16)      # (BT,    128)

    # Fused heads (lane-padded to P columns):
    #   cols [0, d)   -> mu logits (pass-through)
    #   cols [d, 2d)  -> logvar logits -> softmax + eta
    #   cols [2d, P)  -> zero padding
    z = jnp.dot(h, wh_ref[...], preferred_element_type=jnp.float32) + bh_ref[...]
    col = jax.lax.broadcasted_iota(jnp.int32, z.shape, 1)
    is_mu = col < d
    is_lv = jnp.logical_and(col >= d, col < 2 * d)
    lv_max = jnp.max(jnp.where(is_lv, z, jnp.float32(-1e30)), axis=-1, keepdims=True)
    e = jnp.where(is_lv, jnp.exp(z - lv_max), 0.0)
    denom = jnp.sum(e, axis=-1, keepdims=True)
    sm = e * pl.reciprocal(denom, approx=True)
    out_ref[...] = jnp.where(is_lv, sm + ETA, jnp.where(is_mu, z, 0.0))


# ---------------------------------------------------------------------------
# Weight packing: expand conv weights into constant selection / banded matrices
# ---------------------------------------------------------------------------
def _pack_conv(w, b, H, W, pad, bt, pad_in_cols=None, dtype=jnp.bfloat16):
    """PyTorch-layout conv weight (Cout,Cin,4,4) -> (A_stacked, M, bias_row)."""
    cout, cin, kh_, kw_ = w.shape
    assert kh_ == _KSIZE and kw_ == _KSIZE
    oh = (H + 2 * pad - _KSIZE) // _STRIDE + 1
    ow = (W + 2 * pad - _KSIZE) // _STRIDE + 1

    # Row selection: A[kh, (b, oh), (b, ih)] = 1  iff  ih == 2*oh + kh - pad
    # (out-of-range taps become all-zero rows -> implements H zero padding).
    khs = jnp.arange(_KSIZE)[:, None, None]
    ohs = jnp.arange(oh)[None, :, None]
    ihs = jnp.arange(H)[None, None, :]
    rsel = (ihs == _STRIDE * ohs + khs - pad).astype(dtype)          # (4, OH, H)
    eye = jnp.eye(bt, dtype=dtype)
    A = jnp.einsum("koi,bB->kboBi", rsel, eye).reshape(_KSIZE, bt * oh, bt * H)
    A = A.reshape(_KSIZE * bt * oh, bt * H)                          # stacked over kh

    # Banded weights: M[kh, (iw, c), (ow, n)] = w[n, c, kh, iw - 2*ow + pad]
    # (band structure implements the W stride and zero padding).
    kws = jnp.arange(_KSIZE)[:, None, None]
    iws = jnp.arange(W)[None, :, None]
    ows = jnp.arange(ow)[None, None, :]
    csel = (iws == _STRIDE * ows + kws - pad).astype(jnp.float32)    # (4, W, OW)
    wt = jnp.transpose(w, (2, 3, 1, 0)).astype(jnp.float32)          # (kh, kw, cin, cout)
    M = jnp.einsum("vio,hvcn->hicon", csel, wt)                      # (4, W, cin, OW, cout)
    M = M.reshape(_KSIZE, W * cin, ow * cout)
    if pad_in_cols is not None and pad_in_cols > W * cin:
        M = jnp.pad(M, ((0, 0), (0, pad_in_cols - W * cin), (0, 0)))
    M = M.astype(dtype)

    bias_row = jnp.tile(b.astype(jnp.float32), ow).reshape(1, ow * cout)
    return A, M, bias_row


def pack_params(params, bt, dtype=jnp.bfloat16):
    packed = {}
    in_col_pad = (_IN_COLS_PAD, None, None, None)   # only conv1 input needs lane padding
    for idx, (H, W, pad) in enumerate(_LAYER_SPECS, start=1):
        A, M, brow = _pack_conv(params[f"w{idx}"], params[f"b{idx}"], H, W, pad, bt,
                                pad_in_cols=in_col_pad[idx - 1], dtype=dtype)
        packed[f"A{idx}"] = A
        packed[f"M{idx}"] = M
        packed[f"brow{idx}"] = brow
    # Concatenated head weights, lane-padded -> one matmul, one weight DMA,
    # full-width (unmasked) output stores.
    wh = jnp.concatenate([params["wmu"], params["wlv"]], axis=1)
    bh = jnp.concatenate([params["bmu"], params["blv"]])
    two_d = wh.shape[1]
    P = max(128, ((two_d + 127) // 128) * 128)
    packed["wh"] = jnp.pad(wh, ((0, 0), (0, P - two_d))).astype(dtype)
    packed["bh"] = jnp.pad(bh, (0, P - two_d)).reshape(1, P).astype(jnp.float32)
    return packed


# ---------------------------------------------------------------------------
# Forward pass (mirrors Enc_SVHN.forward)
# ---------------------------------------------------------------------------
@functools.partial(jax.jit, static_argnames=("out_dim", "bt"))
def enc_svhn_forward(x_nchw, packed, *, out_dim, bt=8):
    B = x_nchw.shape[0]
    Bp = ((B + bt - 1) // bt) * bt
    x = x_nchw.astype(jnp.float32)
    if Bp != B:
        x = jnp.pad(x, ((0, Bp - B), (0, 0), (0, 0), (0, 0)))
    # NCHW -> flattened NHWC rows (B*H, W*C), lane-padded to 128, bf16 at the boundary.
    x2d = jnp.transpose(x, (0, 2, 3, 1)).reshape(Bp * 32, _IN_COLS)
    x2d = jnp.pad(x2d, ((0, 0), (0, _IN_COLS_PAD - _IN_COLS))).astype(jnp.bfloat16)

    def full_spec(arr):
        return pl.BlockSpec(arr.shape, lambda i: (0,) * arr.ndim)

    operands = [x2d]
    in_specs = [pl.BlockSpec((bt * 32, _IN_COLS_PAD), lambda i: (i, 0))]
    for idx in range(1, 5):
        for key in (f"A{idx}", f"M{idx}", f"brow{idx}"):
            arr = packed[key]
            operands.append(arr)
            in_specs.append(full_spec(arr))
    for key in ("wh", "bh"):
        arr = packed[key]
        operands.append(arr)
        in_specs.append(full_spec(arr))

    P = packed["wh"].shape[1]
    out = pl.pallas_call(
        functools.partial(_enc_svhn_kernel, out_dim),
        out_shape=jax.ShapeDtypeStruct((Bp, P), jnp.float32),
        grid=(Bp // bt,),
        in_specs=in_specs,
        out_specs=pl.BlockSpec((bt, P), lambda i: (i, 0)),
        compiler_params=pltpu.CompilerParams(
            dimension_semantics=("parallel",),
            vmem_limit_bytes=32 * 1024 * 1024,
        ),
    )(*operands)
    return out[:B, :out_dim], out[:B, out_dim:2 * out_dim]


# ---------------------------------------------------------------------------
# Parameter init (deterministic, PyTorch-default-style uniform bounds)
# ---------------------------------------------------------------------------
def _init_conv(key, cout, cin, k):
    bound = 1.0 / math.sqrt(cin * k * k)
    k1, k2 = jax.random.split(key)
    w = jax.random.uniform(k1, (cout, cin, k, k), jnp.float32, -bound, bound)
    b = jax.random.uniform(k2, (cout,), jnp.float32, -bound, bound)
    return w, b


def _init_linear(key, fin, fout):
    bound = 1.0 / math.sqrt(fin)
    k1, k2 = jax.random.split(key)
    w = jax.random.uniform(k1, (fin, fout), jnp.float32, -bound, bound)  # (in, out)
    b = jax.random.uniform(k2, (fout,), jnp.float32, -bound, bound)
    return w, b


def init_params(key, out_dim):
    ks = jax.random.split(key, 6)
    w1, b1 = _init_conv(ks[0], 32, 3, 4)
    w2, b2 = _init_conv(ks[1], 64, 32, 4)
    w3, b3 = _init_conv(ks[2], 64, 64, 4)
    w4, b4 = _init_conv(ks[3], 128, 64, 4)
    wmu, bmu = _init_linear(ks[4], 128, out_dim)
    wlv, blv = _init_linear(ks[5], 128, out_dim)
    return dict(w1=w1, b1=b1, w2=w2, b2=b2, w3=w3, b3=b3, w4=w4, b4=b4,
                wmu=wmu, bmu=bmu, wlv=wlv, blv=blv)


# ---------------------------------------------------------------------------
# Pure-XLA f32 reference (same semantics as Enc_SVHN.forward), for validation
# ---------------------------------------------------------------------------
def reference_forward(x_nchw, params):
    h = x_nchw.astype(jnp.float32)
    for idx, (_, _, pad) in enumerate(_LAYER_SPECS, start=1):
        h = jax.lax.conv_general_dilated(
            h, params[f"w{idx}"], window_strides=(2, 2),
            padding=[(pad, pad), (pad, pad)],
            dimension_numbers=("NCHW", "OIHW", "NCHW"))
        h = jnp.maximum(h + params[f"b{idx}"].reshape(1, -1, 1, 1), 0.0)
    h = h.reshape(h.shape[0], -1)
    mu = h @ params["wmu"] + params["bmu"]
    lv = jax.nn.softmax(h @ params["wlv"] + params["blv"], axis=-1) + ETA
    return mu, lv


if __name__ == "__main__":
    key = jax.random.PRNGKey(0)
    k_x, k_p = jax.random.split(key)

    batch = 16          # two batch tiles of 8 -> exercises the parallel grid
    bt = 8
    latent_dim = 16
    latent_private = None
    out_dim = latent_dim + (latent_private or 0)

    # SVHN-shaped input: 32x32x3 images (required so conv4 reduces 4x4 -> 1x1)
    x = jax.random.normal(k_x, (batch, 3, 32, 32), dtype=jnp.float32)
    params = init_params(k_p, out_dim)
    packed = pack_params(params, bt)

    mu, logvar = enc_svhn_forward(x, packed, out_dim=out_dim, bt=bt)
    jax.block_until_ready((mu, logvar))

    assert mu.shape == (batch, out_dim)
    assert logvar.shape == (batch, out_dim)
    assert bool(jnp.all(logvar > 0))  # softmax(...) + eta -> strictly positive

    # Numerical check vs. f32 XLA reference (kernel matmuls run in bf16).
    mu_ref, lv_ref = reference_forward(x, params)
    assert bool(jnp.allclose(mu, mu_ref, rtol=0.1, atol=0.05)), "mu mismatch vs reference"
    assert bool(jnp.allclose(logvar, lv_ref, rtol=0.1, atol=0.02)), "logvar mismatch vs reference"

    print("KERNEL_OK")
</pallas_src>

<mosaic_0001>
module attributes {stable_mosaic.version = 11 : i64} {
  func.func @_enc_svhn_kernel(%arg0: i32, %arg1: memref<256x128xbf16, #tpu.memory_space<vmem>>, %arg2: memref<512x256xbf16, #tpu.memory_space<vmem>>, %arg3: memref<4x128x512xbf16, #tpu.memory_space<vmem>>, %arg4: memref<1x512xf32, #tpu.memory_space<vmem>>, %arg5: memref<256x128xbf16, #tpu.memory_space<vmem>>, %arg6: memref<4x512x512xbf16, #tpu.memory_space<vmem>>, %arg7: memref<1x512xf32, #tpu.memory_space<vmem>>, %arg8: memref<128x64xbf16, #tpu.memory_space<vmem>>, %arg9: memref<4x512x256xbf16, #tpu.memory_space<vmem>>, %arg10: memref<1x256xf32, #tpu.memory_space<vmem>>, %arg11: memref<32x32xbf16, #tpu.memory_space<vmem>>, %arg12: memref<4x256x128xbf16, #tpu.memory_space<vmem>>, %arg13: memref<1x128xf32, #tpu.memory_space<vmem>>, %arg14: memref<128x128xbf16, #tpu.memory_space<vmem>>, %arg15: memref<1x128xf32, #tpu.memory_space<vmem>>, %arg16: memref<8x128xf32, #tpu.memory_space<vmem>>) attributes {dimension_semantics = [#tpu.dimension_semantics<parallel>], iteration_bounds = array<i64: 2>, scalar_prefetch = 0 : i64, scratch_operands = 0 : i64, tpu.core_type = #tpu.core_type<tc>, window_params = [{transform_indices = @transform_0, window_bounds = array<i64: 256, 128>}, {pipeline_mode = #tpu.pipeline_mode<synchronous>, transform_indices = @transform_1, window_bounds = array<i64: 512, 256>}, {pipeline_mode = #tpu.pipeline_mode<synchronous>, transform_indices = @transform_2, window_bounds = array<i64: 4, 128, 512>}, {pipeline_mode = #tpu.pipeline_mode<synchronous>, transform_indices = @transform_3, window_bounds = array<i64: 1, 512>}, {pipeline_mode = #tpu.pipeline_mode<synchronous>, transform_indices = @transform_4, window_bounds = array<i64: 256, 128>}, {pipeline_mode = #tpu.pipeline_mode<synchronous>, transform_indices = @transform_5, window_bounds = array<i64: 4, 512, 512>}, {pipeline_mode = #tpu.pipeline_mode<synchronous>, transform_indices = @transform_6, window_bounds = array<i64: 1, 512>}, {pipeline_mode = #tpu.pipeline_mode<synchronous>, transform_indices = @transform_7, window_bounds = array<i64: 128, 64>}, {pipeline_mode = #tpu.pipeline_mode<synchronous>, transform_indices = @transform_8, window_bounds = array<i64: 4, 512, 256>}, {pipeline_mode = #tpu.pipeline_mode<synchronous>, transform_indices = @transform_9, window_bounds = array<i64: 1, 256>}, {pipeline_mode = #tpu.pipeline_mode<synchronous>, transform_indices = @transform_10, window_bounds = array<i64: 32, 32>}, {pipeline_mode = #tpu.pipeline_mode<synchronous>, transform_indices = @transform_11, window_bounds = array<i64: 4, 256, 128>}, {pipeline_mode = #tpu.pipeline_mode<synchronous>, transform_indices = @transform_12, window_bounds = array<i64: 1, 128>}, {pipeline_mode = #tpu.pipeline_mode<synchronous>, transform_indices = @transform_13, window_bounds = array<i64: 128, 128>}, {pipeline_mode = #tpu.pipeline_mode<synchronous>, transform_indices = @transform_14, window_bounds = array<i64: 1, 128>}, {transform_indices = @transform_15, window_bounds = array<i64: 8, 128>}]} {
    %c0 = arith.constant 0 : index
    %c0_0 = arith.constant 0 : index
    %0 = vector.load %arg1[%c0, %c0_0] : memref<256x128xbf16, #tpu.memory_space<vmem>>, vector<256x128xbf16>
    %c0_1 = arith.constant 0 : index
    %c0_2 = arith.constant 0 : index
    %1 = vector.load %arg2[%c0_1, %c0_2] : memref<512x256xbf16, #tpu.memory_space<vmem>>, vector<512x256xbf16>
    %cst = arith.constant dense<0.000000e+00> : vector<512x128xf32>
    %2 = tpu.matmul %1, %0, %cst {dimension_numbers = #tpu.dot_dimension_numbers<[1], [0], [0], [1], [0, 0, 1, 1], [], []>} : vector<512x256xbf16>, vector<256x128xbf16>, vector<512x128xf32> -> vector<512x128xf32>
    %3 = arith.truncf %2 : vector<512x128xf32> to vector<512x128xbf16>
    %4 = vector.extract_strided_slice %3 {offsets = [0, 0], sizes = [128, 128], strides = [1, 1]} : vector<512x128xbf16> to vector<128x128xbf16>
    %c0_3 = arith.constant 0 : index
    %c0_4 = arith.constant 0 : index
    %c0_5 = arith.constant 0 : index
    %5 = vector.load %arg3[%c0_3, %c0_4, %c0_5] : memref<4x128x512xbf16, #tpu.memory_space<vmem>>, vector<1x128x512xbf16>
    %6 = vector.shape_cast %5 : vector<1x128x512xbf16> to vector<128x512xbf16>
    %cst_6 = arith.constant dense<0.000000e+00> : vector<128x512xf32>
    %7 = tpu.matmul %4, %6, %cst_6 {dimension_numbers = #tpu.dot_dimension_numbers<[1], [0], [0], [1], [0, 0, 1, 1], [], []>} : vector<128x128xbf16>, vector<128x512xbf16>, vector<128x512xf32> -> vector<128x512xf32>
    %8 = vector.extract_strided_slice %3 {offsets = [128, 0], sizes = [128, 128], strides = [1, 1]} : vector<512x128xbf16> to vector<128x128xbf16>
    %c1 = arith.constant 1 : index
    %c0_7 = arith.constant 0 : index
    %c0_8 = arith.constant 0 : index
    %9 = vector.load %arg3[%c1, %c0_7, %c0_8] : memref<4x128x512xbf16, #tpu.memory_space<vmem>>, vector<1x128x512xbf16>
    %10 = vector.shape_cast %9 : vector<1x128x512xbf16> to vector<128x512xbf16>
    %cst_9 = arith.constant dense<0.000000e+00> : vector<128x512xf32>
    %11 = tpu.matmul %8, %10, %cst_9 {dimension_numbers = #tpu.dot_dimension_numbers<[1], [0], [0], [1], [0, 0, 1, 1], [], []>} : vector<128x128xbf16>, vector<128x512xbf16>, vector<128x512xf32> -> vector<128x512xf32>
    %12 = arith.addf %7, %11 : vector<128x512xf32>
    %13 = vector.extract_strided_slice %3 {offsets = [256, 0], sizes = [128, 128], strides = [1, 1]} : vector<512x128xbf16> to vector<128x128xbf16>
    %c2 = arith.constant 2 : index
    %c0_10 = arith.constant 0 : index
    %c0_11 = arith.constant 0 : index
    %14 = vector.load %arg3[%c2, %c0_10, %c0_11] : memref<4x128x512xbf16, #tpu.memory_space<vmem>>, vector<1x128x512xbf16>
    %15 = vector.shape_cast %14 : vector<1x128x512xbf16> to vector<128x512xbf16>
    %cst_12 = arith.constant dense<0.000000e+00> : vector<128x512xf32>
    %16 = tpu.matmul %13, %15, %cst_12 {dimension_numbers = #tpu.dot_dimension_numbers<[1], [0], [0], [1], [0, 0, 1, 1], [], []>} : vector<128x128xbf16>, vector<128x512xbf16>, vector<128x512xf32> -> vector<128x512xf32>
    %17 = arith.addf %12, %16 : vector<128x512xf32>
    %18 = vector.extract_strided_slice %3 {offsets = [384, 0], sizes = [128, 128], strides = [1, 1]} : vector<512x128xbf16> to vector<128x128xbf16>
    %c3 = arith.constant 3 : index
    %c0_13 = arith.constant 0 : index
    %c0_14 = arith.constant 0 : index
    %19 = vector.load %arg3[%c3, %c0_13, %c0_14] : memref<4x128x512xbf16, #tpu.memory_space<vmem>>, vector<1x128x512xbf16>
    %20 = vector.shape_cast %19 : vector<1x128x512xbf16> to vector<128x512xbf16>
    %cst_15 = arith.constant dense<0.000000e+00> : vector<128x512xf32>
    %21 = tpu.matmul %18, %20, %cst_15 {dimension_numbers = #tpu.dot_dimension_numbers<[1], [0], [0], [1], [0, 0, 1, 1], [], []>} : vector<128x128xbf16>, vector<128x512xbf16>, vector<128x512xf32> -> vector<128x512xf32>
    %22 = arith.addf %17, %21 : vector<128x512xf32>
    %c0_16 = arith.constant 0 : index
    %c0_17 = arith.constant 0 : index
    %23 = vector.load %arg4[%c0_16, %c0_17] : memref<1x512xf32, #tpu.memory_space<vmem>>, vector<1x512xf32>
    %24 = vector.broadcast %23 : vector<1x512xf32> to vector<128x512xf32>
    %25 = arith.addf %22, %24 : vector<128x512xf32>
    %cst_18 = arith.constant 0.000000e+00 : f32
    %26 = vector.broadcast %cst_18 : f32 to vector<128x512xf32>
    %27 = arith.maximumf %25, %26 : vector<128x512xf32>
    %28 = arith.truncf %27 : vector<128x512xf32> to vector<128x512xbf16>
    %c0_19 = arith.constant 0 : index
    %c0_20 = arith.constant 0 : index
    %29 = vector.load %arg5[%c0_19, %c0_20] : memref<256x128xbf16, #tpu.memory_space<vmem>>, vector<256x128xbf16>
    %cst_21 = arith.constant dense<0.000000e+00> : vector<256x512xf32>
    %30 = tpu.matmul %29, %28, %cst_21 {dimension_numbers = #tpu.dot_dimension_numbers<[1], [0], [0], [1], [0, 0, 1, 1], [], []>} : vector<256x128xbf16>, vector<128x512xbf16>, vector<256x512xf32> -> vector<256x512xf32>
    %31 = arith.truncf %30 : vector<256x512xf32> to vector<256x512xbf16>
    %32 = vector.extract_strided_slice %31 {offsets = [0, 0], sizes = [64, 512], strides = [1, 1]} : vector<256x512xbf16> to vector<64x512xbf16>
    %c0_22 = arith.constant 0 : index
    %c0_23 = arith.constant 0 : index
    %c0_24 = arith.constant 0 : index
    %33 = vector.load %arg6[%c0_22, %c0_23, %c0_24] : memref<4x512x512xbf16, #tpu.memory_space<vmem>>, vector<1x512x512xbf16>
    %34 = vector.shape_cast %33 : vector<1x512x512xbf16> to vector<512x512xbf16>
    %cst_25 = arith.constant dense<0.000000e+00> : vector<64x512xf32>
    %35 = tpu.matmul %32, %34, %cst_25 {dimension_numbers = #tpu.dot_dimension_numbers<[1], [0], [0], [1], [0, 0, 1, 1], [], []>} : vector<64x512xbf16>, vector<512x512xbf16>, vector<64x512xf32> -> vector<64x512xf32>
    %36 = vector.extract_strided_slice %31 {offsets = [64, 0], sizes = [64, 512], strides = [1, 1]} : vector<256x512xbf16> to vector<64x512xbf16>
    %c1_26 = arith.constant 1 : index
    %c0_27 = arith.constant 0 : index
    %c0_28 = arith.constant 0 : index
    %37 = vector.load %arg6[%c1_26, %c0_27, %c0_28] : memref<4x512x512xbf16, #tpu.memory_space<vmem>>, vector<1x512x512xbf16>
    %38 = vector.shape_cast %37 : vector<1x512x512xbf16> to vector<512x512xbf16>
    %cst_29 = arith.constant dense<0.000000e+00> : vector<64x512xf32>
    %39 = tpu.matmul %36, %38, %cst_29 {dimension_numbers = #tpu.dot_dimension_numbers<[1], [0], [0], [1], [0, 0, 1, 1], [], []>} : vector<64x512xbf16>, vector<512x512xbf16>, vector<64x512xf32> -> vector<64x512xf32>
    %40 = arith.addf %35, %39 : vector<64x512xf32>
    %41 = vector.extract_strided_slice %31 {offsets = [128, 0], sizes = [64, 512], strides = [1, 1]} : vector<256x512xbf16> to vector<64x512xbf16>
    %c2_30 = arith.constant 2 : index
    %c0_31 = arith.constant 0 : index
    %c0_32 = arith.constant 0 : index
    %42 = vector.load %arg6[%c2_30, %c0_31, %c0_32] : memref<4x512x512xbf16, #tpu.memory_space<vmem>>, vector<1x512x512xbf16>
    %43 = vector.shape_cast %42 : vector<1x512x512xbf16> to vector<512x512xbf16>
    %cst_33 = arith.constant dense<0.000000e+00> : vector<64x512xf32>
    %44 = tpu.matmul %41, %43, %cst_33 {dimension_numbers = #tpu.dot_dimension_numbers<[1], [0], [0], [1], [0, 0, 1, 1], [], []>} : vector<64x512xbf16>, vector<512x512xbf16>, vector<64x512xf32> -> vector<64x512xf32>
    %45 = arith.addf %40, %44 : vector<64x512xf32>
    %46 = vector.extract_strided_slice %31 {offsets = [192, 0], sizes = [64, 512], strides = [1, 1]} : vector<256x512xbf16> to vector<64x512xbf16>
    %c3_34 = arith.constant 3 : index
    %c0_35 = arith.constant 0 : index
    %c0_36 = arith.constant 0 : index
    %47 = vector.load %arg6[%c3_34, %c0_35, %c0_36] : memref<4x512x512xbf16, #tpu.memory_space<vmem>>, vector<1x512x512xbf16>
    %48 = vector.shape_cast %47 : vector<1x512x512xbf16> to vector<512x512xbf16>
    %cst_37 = arith.constant dense<0.000000e+00> : vector<64x512xf32>
    %49 = tpu.matmul %46, %48, %cst_37 {dimension_numbers = #tpu.dot_dimension_numbers<[1], [0], [0], [1], [0, 0, 1, 1], [], []>} : vector<64x512xbf16>, vector<512x512xbf16>, vector<64x512xf32> -> vector<64x512xf32>
    %50 = arith.addf %45, %49 : vector<64x512xf32>
    %c0_38 = arith.constant 0 : index
    %c0_39 = arith.constant 0 : index
    %51 = vector.load %arg7[%c0_38, %c0_39] : memref<1x512xf32, #tpu.memory_space<vmem>>, vector<1x512xf32>
    %52 = vector.broadcast %51 : vector<1x512xf32> to vector<64x512xf32>
    %53 = arith.addf %50, %52 : vector<64x512xf32>
    %cst_40 = arith.constant 0.000000e+00 : f32
    %54 = vector.broadcast %cst_40 : f32 to vector<64x512xf32>
    %55 = arith.maximumf %53, %54 : vector<64x512xf32>
    %56 = arith.truncf %55 : vector<64x512xf32> to vector<64x512xbf16>
    %c0_41 = arith.constant 0 : index
    %c0_42 = arith.constant 0 : index
    %57 = vector.load %arg8[%c0_41, %c0_42] : memref<128x64xbf16, #tpu.memory_space<vmem>>, vector<128x64xbf16>
    %cst_43 = arith.constant dense<0.000000e+00> : vector<128x512xf32>
    %58 = tpu.matmul %57, %56, %cst_43 {dimension_numbers = #tpu.dot_dimension_numbers<[1], [0], [0], [1], [0, 0, 1, 1], [], []>} : vector<128x64xbf16>, vector<64x512xbf16>, vector<128x512xf32> -> vector<128x512xf32>
    %59 = arith.truncf %58 : vector<128x512xf32> to vector<128x512xbf16>
    %60 = vector.extract_strided_slice %59 {offsets = [0, 0], sizes = [32, 512], strides = [1, 1]} : vector<128x512xbf16> to vector<32x512xbf16>
    %c0_44 = arith.constant 0 : index
    %c0_45 = arith.constant 0 : index
    %c0_46 = arith.constant 0 : index
    %61 = vector.load %arg9[%c0_44, %c0_45, %c0_46] : memref<4x512x256xbf16, #tpu.memory_space<vmem>>, vector<1x512x256xbf16>
    %62 = vector.shape_cast %61 : vector<1x512x256xbf16> to vector<512x256xbf16>
    %cst_47 = arith.constant dense<0.000000e+00> : vector<32x256xf32>
    %63 = tpu.matmul %60, %62, %cst_47 {dimension_numbers = #tpu.dot_dimension_numbers<[1], [0], [0], [1], [0, 0, 1, 1], [], []>} : vector<32x512xbf16>, vector<512x256xbf16>, vector<32x256xf32> -> vector<32x256xf32>
    %64 = vector.extract_strided_slice %59 {offsets = [32, 0], sizes = [32, 512], strides = [1, 1]} : vector<128x512xbf16> to vector<32x512xbf16>
    %c1_48 = arith.constant 1 : index
    %c0_49 = arith.constant 0 : index
    %c0_50 = arith.constant 0 : index
    %65 = vector.load %arg9[%c1_48, %c0_49, %c0_50] : memref<4x512x256xbf16, #tpu.memory_space<vmem>>, vector<1x512x256xbf16>
    %66 = vector.shape_cast %65 : vector<1x512x256xbf16> to vector<512x256xbf16>
    %cst_51 = arith.constant dense<0.000000e+00> : vector<32x256xf32>
    %67 = tpu.matmul %64, %66, %cst_51 {dimension_numbers = #tpu.dot_dimension_numbers<[1], [0], [0], [1], [0, 0, 1, 1], [], []>} : vector<32x512xbf16>, vector<512x256xbf16>, vector<32x256xf32> -> vector<32x256xf32>
    %68 = arith.addf %63, %67 : vector<32x256xf32>
    %69 = vector.extract_strided_slice %59 {offsets = [64, 0], sizes = [32, 512], strides = [1, 1]} : vector<128x512xbf16> to vector<32x512xbf16>
    %c2_52 = arith.constant 2 : index
    %c0_53 = arith.constant 0 : index
    %c0_54 = arith.constant 0 : index
    %70 = vector.load %arg9[%c2_52, %c0_53, %c0_54] : memref<4x512x256xbf16, #tpu.memory_space<vmem>>, vector<1x512x256xbf16>
    %71 = vector.shape_cast %70 : vector<1x512x256xbf16> to vector<512x256xbf16>
    %cst_55 = arith.constant dense<0.000000e+00> : vector<32x256xf32>
    %72 = tpu.matmul %69, %71, %cst_55 {dimension_numbers = #tpu.dot_dimension_numbers<[1], [0], [0], [1], [0, 0, 1, 1], [], []>} : vector<32x512xbf16>, vector<512x256xbf16>, vector<32x256xf32> -> vector<32x256xf32>
    %73 = arith.addf %68, %72 : vector<32x256xf32>
    %74 = vector.extract_strided_slice %59 {offsets = [96, 0], sizes = [32, 512], strides = [1, 1]} : vector<128x512xbf16> to vector<32x512xbf16>
    %c3_56 = arith.constant 3 : index
    %c0_57 = arith.constant 0 : index
    %c0_58 = arith.constant 0 : index
    %75 = vector.load %arg9[%c3_56, %c0_57, %c0_58] : memref<4x512x256xbf16, #tpu.memory_space<vmem>>, vector<1x512x256xbf16>
    %76 = vector.shape_cast %75 : vector<1x512x256xbf16> to vector<512x256xbf16>
    %cst_59 = arith.constant dense<0.000000e+00> : vector<32x256xf32>
    %77 = tpu.matmul %74, %76, %cst_59 {dimension_numbers = #tpu.dot_dimension_numbers<[1], [0], [0], [1], [0, 0, 1, 1], [], []>} : vector<32x512xbf16>, vector<512x256xbf16>, vector<32x256xf32> -> vector<32x256xf32>
    %78 = arith.addf %73, %77 : vector<32x256xf32>
    %c0_60 = arith.constant 0 : index
    %c0_61 = arith.constant 0 : index
    %79 = vector.load %arg10[%c0_60, %c0_61] : memref<1x256xf32, #tpu.memory_space<vmem>>, vector<1x256xf32>
    %80 = vector.broadcast %79 : vector<1x256xf32> to vector<32x256xf32>
    %81 = arith.addf %78, %80 : vector<32x256xf32>
    %cst_62 = arith.constant 0.000000e+00 : f32
    %82 = vector.broadcast %cst_62 : f32 to vector<32x256xf32>
    %83 = arith.maximumf %81, %82 : vector<32x256xf32>
    %84 = arith.truncf %83 : vector<32x256xf32> to vector<32x256xbf16>
    %c0_63 = arith.constant 0 : index
    %c0_64 = arith.constant 0 : index
    %85 = vector.load %arg11[%c0_63, %c0_64] : memref<32x32xbf16, #tpu.memory_space<vmem>>, vector<32x32xbf16>
    %cst_65 = arith.constant dense<0.000000e+00> : vector<32x256xf32>
    %86 = tpu.matmul %85, %84, %cst_65 {dimension_numbers = #tpu.dot_dimension_numbers<[1], [0], [0], [1], [0, 0, 1, 1], [], []>} : vector<32x32xbf16>, vector<32x256xbf16>, vector<32x256xf32> -> vector<32x256xf32>
    %87 = arith.truncf %86 : vector<32x256xf32> to vector<32x256xbf16>
    %88 = vector.extract_strided_slice %87 {offsets = [0, 0], sizes = [8, 256], strides = [1, 1]} : vector<32x256xbf16> to vector<8x256xbf16>
    %c0_66 = arith.constant 0 : index
    %c0_67 = arith.constant 0 : index
    %c0_68 = arith.constant 0 : index
    %89 = vector.load %arg12[%c0_66, %c0_67, %c0_68] : memref<4x256x128xbf16, #tpu.memory_space<vmem>>, vector<1x256x128xbf16>
    %90 = vector.shape_cast %89 : vector<1x256x128xbf16> to vector<256x128xbf16>
    %cst_69 = arith.constant dense<0.000000e+00> : vector<8x128xf32>
    %91 = tpu.matmul %88, %90, %cst_69 {dimension_numbers = #tpu.dot_dimension_numbers<[1], [0], [0], [1], [0, 0, 1, 1], [], []>} : vector<8x256xbf16>, vector<256x128xbf16>, vector<8x128xf32> -> vector<8x128xf32>
    %92 = vector.extract_strided_slice %87 {offsets = [8, 0], sizes = [8, 256], strides = [1, 1]} : vector<32x256xbf16> to vector<8x256xbf16>
    %c1_70 = arith.constant 1 : index
    %c0_71 = arith.constant 0 : index
    %c0_72 = arith.constant 0 : index
    %93 = vector.load %arg12[%c1_70, %c0_71, %c0_72] : memref<4x256x128xbf16, #tpu.memory_space<vmem>>, vector<1x256x128xbf16>
    %94 = vector.shape_cast %93 : vector<1x256x128xbf16> to vector<256x128xbf16>
    %cst_73 = arith.constant dense<0.000000e+00> : vector<8x128xf32>
    %95 = tpu.matmul %92, %94, %cst_73 {dimension_numbers = #tpu.dot_dimension_numbers<[1], [0], [0], [1], [0, 0, 1, 1], [], []>} : vector<8x256xbf16>, vector<256x128xbf16>, vector<8x128xf32> -> vector<8x128xf32>
    %96 = arith.addf %91, %95 : vector<8x128xf32>
    %97 = vector.extract_strided_slice %87 {offsets = [16, 0], sizes = [8, 256], strides = [1, 1]} : vector<32x256xbf16> to vector<8x256xbf16>
    %c2_74 = arith.constant 2 : index
    %c0_75 = arith.constant 0 : index
    %c0_76 = arith.constant 0 : index
    %98 = vector.load %arg12[%c2_74, %c0_75, %c0_76] : memref<4x256x128xbf16, #tpu.memory_space<vmem>>, vector<1x256x128xbf16>
    %99 = vector.shape_cast %98 : vector<1x256x128xbf16> to vector<256x128xbf16>
    %cst_77 = arith.constant dense<0.000000e+00> : vector<8x128xf32>
    %100 = tpu.matmul %97, %99, %cst_77 {dimension_numbers = #tpu.dot_dimension_numbers<[1], [0], [0], [1], [0, 0, 1, 1], [], []>} : vector<8x256xbf16>, vector<256x128xbf16>, vector<8x128xf32> -> vector<8x128xf32>
    %101 = arith.addf %96, %100 : vector<8x128xf32>
    %102 = vector.extract_strided_slice %87 {offsets = [24, 0], sizes = [8, 256], strides = [1, 1]} : vector<32x256xbf16> to vector<8x256xbf16>
    %c3_78 = arith.constant 3 : index
    %c0_79 = arith.constant 0 : index
    %c0_80 = arith.constant 0 : index
    %103 = vector.load %arg12[%c3_78, %c0_79, %c0_80] : memref<4x256x128xbf16, #tpu.memory_space<vmem>>, vector<1x256x128xbf16>
    %104 = vector.shape_cast %103 : vector<1x256x128xbf16> to vector<256x128xbf16>
    %cst_81 = arith.constant dense<0.000000e+00> : vector<8x128xf32>
    %105 = tpu.matmul %102, %104, %cst_81 {dimension_numbers = #tpu.dot_dimension_numbers<[1], [0], [0], [1], [0, 0, 1, 1], [], []>} : vector<8x256xbf16>, vector<256x128xbf16>, vector<8x128xf32> -> vector<8x128xf32>
    %106 = arith.addf %101, %105 : vector<8x128xf32>
    %c0_82 = arith.constant 0 : index
    %c0_83 = arith.constant 0 : index
    %107 = vector.load %arg13[%c0_82, %c0_83] : memref<1x128xf32, #tpu.memory_space<vmem>>, vector<1x128xf32>
    %108 = vector.broadcast %107 : vector<1x128xf32> to vector<8x128xf32>
    %109 = arith.addf %106, %108 : vector<8x128xf32>
    %cst_84 = arith.constant 0.000000e+00 : f32
    %110 = vector.broadcast %cst_84 : f32 to vector<8x128xf32>
    %111 = arith.maximumf %109, %110 : vector<8x128xf32>
    %112 = arith.truncf %111 : vector<8x128xf32> to vector<8x128xbf16>
    %c0_85 = arith.constant 0 : index
    %c0_86 = arith.constant 0 : index
    %113 = vector.load %arg14[%c0_85, %c0_86] : memref<128x128xbf16, #tpu.memory_space<vmem>>, vector<128x128xbf16>
    %cst_87 = arith.constant dense<0.000000e+00> : vector<8x128xf32>
    %114 = tpu.matmul %112, %113, %cst_87 {dimension_numbers = #tpu.dot_dimension_numbers<[1], [0], [0], [1], [0, 0, 1, 1], [], []>} : vector<8x128xbf16>, vector<128x128xbf16>, vector<8x128xf32> -> vector<8x128xf32>
    %c0_88 = arith.constant 0 : index
    %c0_89 = arith.constant 0 : index
    %115 = vector.load %arg15[%c0_88, %c0_89] : memref<1x128xf32, #tpu.memory_space<vmem>>, vector<1x128xf32>
    %116 = vector.broadcast %115 : vector<1x128xf32> to vector<8x128xf32>
    %117 = arith.addf %114, %116 : vector<8x128xf32>
    %118 = tpu.iota {dimensions = array<i32: 1>} : vector<8x128xi32>
    %c16_i32 = arith.constant 16 : i32
    %119 = vector.broadcast %c16_i32 : i32 to vector<8x128xi32>
    %120 = arith.cmpi slt, %118, %119 : vector<8x128xi32>
    %c16_i32_90 = arith.constant 16 : i32
    %121 = vector.broadcast %c16_i32_90 : i32 to vector<8x128xi32>
    %122 = arith.cmpi sge, %118, %121 : vector<8x128xi32>
    %c32_i32 = arith.constant 32 : i32
    %123 = vector.broadcast %c32_i32 : i32 to vector<8x128xi32>
    %124 = arith.cmpi slt, %118, %123 : vector<8x128xi32>
    %125 = arith.andi %122, %124 : vector<8x128xi1>
    %cst_91 = arith.constant -1.000000e+30 : f32
    %126 = vector.broadcast %cst_91 : f32 to vector<8x128xf32>
    %127 = arith.select %125, %117, %126 : vector<8x128xi1>, vector<8x128xf32>
    %cst_92 = arith.constant dense<0xFF800000> : vector<8xf32>
    %128 = vector.multi_reduction <maximumf>, %127, %cst_92 [1] : vector<8x128xf32> to vector<8xf32>
    %129 = vector.shape_cast %128 : vector<8xf32> to vector<8x1xf32>
    %130 = vector.broadcast %129 : vector<8x1xf32> to vector<8x128xf32>
    %131 = arith.subf %117, %130 : vector<8x128xf32>
    %132 = math.exp %131 : vector<8x128xf32>
    %cst_93 = arith.constant 0.000000e+00 : f32
    %133 = vector.broadcast %cst_93 : f32 to vector<8x128xf32>
    %134 = arith.select %125, %132, %133 : vector<8x128xi1>, vector<8x128xf32>
    %cst_94 = arith.constant dense<0.000000e+00> : vector<8xf32>
    %135 = vector.multi_reduction <add>, %134, %cst_94 [1] : vector<8x128xf32> to vector<8xf32>
    %136 = vector.shape_cast %135 : vector<8xf32> to vector<8x1xf32>
    %137 = tpu.reciprocal %136 {approx = true} : vector<8x1xf32> -> vector<8x1xf32>
    %138 = vector.broadcast %137 : vector<8x1xf32> to vector<8x128xf32>
    %139 = arith.mulf %134, %138 : vector<8x128xf32>
    %cst_95 = arith.constant 9.99999997E-7 : f32
    %140 = vector.broadcast %cst_95 : f32 to vector<8x128xf32>
    %141 = arith.addf %139, %140 : vector<8x128xf32>
    %cst_96 = arith.constant 0.000000e+00 : f32
    %142 = vector.broadcast %cst_96 : f32 to vector<8x128xf32>
    %143 = arith.select %120, %117, %142 : vector<8x128xi1>, vector<8x128xf32>
    %144 = arith.select %125, %141, %143 : vector<8x128xi1>, vector<8x128xf32>
    %c0_97 = arith.constant 0 : index
    %c0_98 = arith.constant 0 : index
    %145 = vector.load %arg16[%c0_97, %c0_98] : memref<8x128xf32, #tpu.memory_space<vmem>>, vector<8x128xf32>
    tpu.vector_store %arg16[%c0_97, %c0_98], %144 {strides = array<i32>} : memref<8x128xf32, #tpu.memory_space<vmem>>, vector<8x128xf32>,
    return
  }
  func.func @transform_0(%arg0: i32) -> (i32, i32) {
    %c0_i32 = arith.constant 0 : i32
    %c0_i32_0 = arith.constant 0 : i32
    return %arg0, %c0_i32 : i32, i32
  }
  func.func @transform_1(%arg0: i32) -> (i32, i32) {
    %c0_i32 = arith.constant 0 : i32
    %c0_i32_0 = arith.constant 0 : i32
    %c0_i32_1 = arith.constant 0 : i32
    return %c0_i32, %c0_i32_0 : i32, i32
  }
  func.func @transform_2(%arg0: i32) -> (i32, i32, i32) {
    %c0_i32 = arith.constant 0 : i32
    %c0_i32_0 = arith.constant 0 : i32
    %c0_i32_1 = arith.constant 0 : i32
    %c0_i32_2 = arith.constant 0 : i32
    return %c0_i32, %c0_i32_0, %c0_i32_1 : i32, i32, i32
  }
  func.func @transform_3(%arg0: i32) -> (i32, i32) {
    %c0_i32 = arith.constant 0 : i32
    %c0_i32_0 = arith.constant 0 : i32
    %c0_i32_1 = arith.constant 0 : i32
    return %c0_i32, %c0_i32_0 : i32, i32
  }
  func.func @transform_4(%arg0: i32) -> (i32, i32) {
    %c0_i32 = arith.constant 0 : i32
    %c0_i32_0 = arith.constant 0 : i32
    %c0_i32_1 = arith.constant 0 : i32
    return %c0_i32, %c0_i32_0 : i32, i32
  }
  func.func @transform_5(%arg0: i32) -> (i32, i32, i32) {
    %c0_i32 = arith.constant 0 : i32
    %c0_i32_0 = arith.constant 0 : i32
    %c0_i32_1 = arith.constant 0 : i32
    %c0_i32_2 = arith.constant 0 : i32
    return %c0_i32, %c0_i32_0, %c0_i32_1 : i32, i32, i32
  }
  func.func @transform_6(%arg0: i32) -> (i32, i32) {
    %c0_i32 = arith.constant 0 : i32
    %c0_i32_0 = arith.constant 0 : i32
    %c0_i32_1 = arith.constant 0 : i32
    return %c0_i32, %c0_i32_0 : i32, i32
  }
  func.func @transform_7(%arg0: i32) -> (i32, i32) {
    %c0_i32 = arith.constant 0 : i32
    %c0_i32_0 = arith.constant 0 : i32
    %c0_i32_1 = arith.constant 0 : i32
    return %c0_i32, %c0_i32_0 : i32, i32
  }
  func.func @transform_8(%arg0: i32) -> (i32, i32, i32) {
    %c0_i32 = arith.constant 0 : i32
    %c0_i32_0 = arith.constant 0 : i32
    %c0_i32_1 = arith.constant 0 : i32
    %c0_i32_2 = arith.constant 0 : i32
    return %c0_i32, %c0_i32_0, %c0_i32_1 : i32, i32, i32
  }
  func.func @transform_9(%arg0: i32) -> (i32, i32) {
    %c0_i32 = arith.constant 0 : i32
    %c0_i32_0 = arith.constant 0 : i32
    %c0_i32_1 = arith.constant 0 : i32
    return %c0_i32, %c0_i32_0 : i32, i32
  }
  func.func @transform_10(%arg0: i32) -> (i32, i32) {
    %c0_i32 = arith.constant 0 : i32
    %c0_i32_0 = arith.constant 0 : i32
    %c0_i32_1 = arith.constant 0 : i32
    return %c0_i32, %c0_i32_0 : i32, i32
  }
  func.func @transform_11(%arg0: i32) -> (i32, i32, i32) {
    %c0_i32 = arith.constant 0 : i32
    %c0_i32_0 = arith.constant 0 : i32
    %c0_i32_1 = arith.constant 0 : i32
    %c0_i32_2 = arith.constant 0 : i32
    return %c0_i32, %c0_i32_0, %c0_i32_1 : i32, i32, i32
  }
  func.func @transform_12(%arg0: i32) -> (i32, i32) {
    %c0_i32 = arith.constant 0 : i32
    %c0_i32_0 = arith.constant 0 : i32
    %c0_i32_1 = arith.constant 0 : i32
    return %c0_i32, %c0_i32_0 : i32, i32
  }
  func.func @transform_13(%arg0: i32) -> (i32, i32) {
    %c0_i32 = arith.constant 0 : i32
    %c0_i32_0 = arith.constant 0 : i32
    %c0_i32_1 = arith.constant 0 : i32
    return %c0_i32, %c0_i32_0 : i32, i32
  }
  func.func @transform_14(%arg0: i32) -> (i32, i32) {
    %c0_i32 = arith.constant 0 : i32
    %c0_i32_0 = arith.constant 0 : i32
    %c0_i32_1 = arith.constant 0 : i32
    return %c0_i32, %c0_i32_0 : i32, i32
  }
  func.func @transform_15(%arg0: i32) -> (i32, i32) {
    %c0_i32 = arith.constant 0 : i32
    %c0_i32_0 = arith.constant 0 : i32
    return %arg0, %c0_i32 : i32, i32
  }
}

</mosaic_0001>

<llo_original>
// kernel: enc_svhn_forward.1
$region0: #{enc_svhn_forward.1}
  #allocation0 [shape = 'u32[]', space=smem, size = 0x4, offset = 0x4, fixed_abs, tag = 'smem constant byte address 0x4 - core index']
  #allocation1 [shape = 'u32[72,128]{1,0:T(1,128)}', space=vmem, size = 0x9000, scoped, tag = 'internal scratch']
  %s0 = inlined_call_operand.vmem [shape: bf16[512,128], index: 0, kind: input, shape index: {}]
  %s1 = inlined_call_operand.vmem [shape: bf16[512,256], index: 1, kind: input, shape index: {}]
  %s2 = inlined_call_operand.vmem [shape: bf16[4,128,512], index: 2, kind: input, shape index: {}]
  %s3 = inlined_call_operand.vmem [shape: f32[1,512], index: 3, kind: input, shape index: {}]
  %s4 = inlined_call_operand.vmem [shape: bf16[256,128], index: 4, kind: input, shape index: {}]
  %s5 = inlined_call_operand.vmem [shape: bf16[4,512,512], index: 5, kind: input, shape index: {}]
  %s6 = inlined_call_operand.vmem [shape: f32[1,512], index: 6, kind: input, shape index: {}]
  %s7 = inlined_call_operand.vmem [shape: bf16[128,64], index: 7, kind: input, shape index: {}]
  %s8 = inlined_call_operand.hbm [shape: bf16[4,512,256], index: 8, kind: input, shape index: {}]
  %s9 = inlined_call_operand.vmem [shape: f32[1,256], index: 9, kind: input, shape index: {}]
  %s10 = inlined_call_operand.hbm [shape: bf16[32,32], index: 10, kind: input, shape index: {}]
  %s11 = inlined_call_operand.hbm [shape: bf16[4,256,128], index: 11, kind: input, shape index: {}]
  %s12 = inlined_call_operand.vmem [shape: f32[1,128], index: 12, kind: input, shape index: {}]
  %s13 = inlined_call_operand.vmem [shape: bf16[128,128], index: 13, kind: input, shape index: {}]
  %s14 = inlined_call_operand.vmem [shape: f32[1,128], index: 14, kind: input, shape index: {}]
  %s15 = inlined_call_operand.vmem [shape: f32[16,128], index: 15, kind: output, shape index: {}]
  %s16 = sld [smem:[#allocation0]]
  $region105: #{enc_svhn_forward.1} parent=0
    _
  %s18 = ssub.s32 1, %s16
  %s19 = scalar_select 0, %s18, %s16
  $region1: #{enc_svhn_forward.1} parent=0
    #allocation2 [shape = 'u8[1048576]{0}', space=vmem, size = 0x100000, scoped, tag = 'input window, operand 8, single buffered']
    #allocation3 [shape = 's32[2]{0}', space=sflag, size = 0x8, scoped, tag = 'scoped memory for enc_svhn_forward.1']
    #allocation4 [shape = 'u8[8192]{0}', space=vmem, size = 0x2000, scoped, tag = 'input window, operand 10, single buffered']
    #allocation5 [shape = 's32[1]{0}', space=sflag, size = 0x4, scoped, tag = 'scoped memory for enc_svhn_forward.1']
    #allocation6 [shape = 'u8[262144]{0}', space=vmem, size = 0x40000, scoped, tag = 'input window, operand 11, single buffered']
    %20 = vsyncpa [#allocation3], 0
    %21 = vsyncpa [#allocation5], 0
    loop: start=0, step=1, limit=4
    $region2: #{enc_svhn_forward.1} parent=1 // loop_pre_header
      _
    $region3: #{enc_svhn_forward.1} parent=1 // loop_header
      %s23 = sphi 0, %s27
      %p24 = scmp.ge.s32.totalorder %s23, 4
      %s33 = sphi 0, %s35
      %s36 = sphi 0, %s33
      %s37 = sphi 0, %s36
      %s53 = sphi 0, %s37
      %s57 = sphi 0, %s57
      %s59 = sphi 0, %s57
      %s60 = sphi 0, %s59
      %s74 = sphi 0, %s60
      %s78 = sphi 0, %s78
      %s80 = sphi 0, %s78
      %s81 = sphi 0, %s80
      %s95 = sphi 0, %s81
      %s99 = sphi 0, %s99
      %s101 = sphi 0, %s99
      %s102 = sphi 0, %s101
      %s116 = sphi 0, %s102
      %s120 = sphi 0, %s120
      %s122 = sphi 0, %s120
      %s123 = sphi 0, %s122
      %s137 = sphi 0, %s123
      %s141 = sphi 0, %s141
      %s143 = sphi 0, %s141
      %s144 = sphi 0, %s143
      %s158 = sphi 0, %s144
      %s162 = sphi 0, %s162
      %s164 = sphi 0, %s162
      %s165 = sphi 0, %s164
      %s179 = sphi 0, %s165
      %s183 = sphi 0, %s183
      %s185 = sphi 0, %s183
      %s186 = sphi 0, %s185
      %s200 = sphi 0, %s186
      %s204 = sphi 0, %s204
      %s206 = sphi 0, %s204
      %s207 = sphi 0, %s206
      %s221 = sphi 0, %s207
      %s225 = sphi 0, %s225
      %s227 = sphi 0, %s225
      %s228 = sphi 0, %s227
      %s242 = sphi 0, %s228
      %s246 = sphi 0, %s246
      %s248 = sphi 0, %s246
      %s249 = sphi 0, %s248
      %s263 = sphi 0, %s249
      %s267 = sphi 0, %s267
      %s269 = sphi 0, %s267
      %s270 = sphi 0, %s269
      %s284 = sphi 0, %s270
      %s288 = sphi 0, %s288
      %s290 = sphi 0, %s288
      %s291 = sphi 0, %s290
      %s305 = sphi 0, %s291
      %s309 = sphi 0, %s309
      %s311 = sphi 0, %s309
      %s312 = sphi 0, %s311
      %s326 = sphi 0, %s312
      %s330 = sphi 0, %s330
      %s332 = sphi 0, %s330
      %s333 = sphi 0, %s332
      %s347 = sphi 0, %s333
      %s353 = sphi 0, %s355
      %s356 = sphi 0, %s353
      %s357 = sphi 0, %s356
      %s373 = sphi 0, %s357
    $region4: #{enc_svhn_forward.1} parent=1 // loop_header_branch
      %26 = sbr.rel (%p24) target = $region8
    $region5: #{enc_svhn_forward.1} parent=1 // loop_body
      %s28 = ssub.s32 %s23, 1
      %s29 = ssub.s32 %s23, 2
      %s30 = sadd.s32 %s23, 1
      %s31 = ssub.s32 %s23, %s30
      %p32 = scmp.eq.s32.totalorder %s31, 0
      %s34 = sadd.s32 %s33, 1
      %s35 = scalar_select %p32, %s33, %s34
      %p38 = pneg %p32
      %p39 = scmp.eq.s32.totalorder %s23, 1
      %p40 = por %p38, %p39
      %p41 = scmp.ne.s32.totalorder %s33, %s36
      %p42 = scmp.eq.s32.totalorder %s23, 0
      %p43 = por %p41, %p42
      %p44 = scmp.ne.s32.totalorder %s33, %s36
      %p45 = scmp.eq.s32.totalorder %s28, 1
      %p46 = por %p44, %p45
      %p47 = scmp.ne.s32.totalorder %s36, %s37
      %p48 = scmp.eq.s32.totalorder %s28, 0
      %p49 = por %p47, %p48
      %p50 = scmp.ne.s32.totalorder %s36, %s37
      %p51 = scmp.eq.s32.totalorder %s29, 1
      %p52 = por %p50, %p51
      %p54 = scmp.ne.s32.totalorder %s37, %s53
      %p55 = scmp.eq.s32.totalorder %s29, 0
      %p56 = por %p54, %p55
      %s58 = sadd.s32 %s57, 1
      %p61 = scmp.eq.s32.totalorder %s23, 1
      %p62 = scmp.ne.s32.totalorder %s57, %s59
      %p63 = scmp.eq.s32.totalorder %s23, 0
      %p64 = por %p62, %p63
      %p65 = scmp.ne.s32.totalorder %s57, %s59
      %p66 = scmp.eq.s32.totalorder %s28, 1
      %p67 = por %p65, %p66
      %p68 = scmp.ne.s32.totalorder %s59, %s60
      %p69 = scmp.eq.s32.totalorder %s28, 0
      %p70 = por %p68, %p69
      %p71 = scmp.ne.s32.totalorder %s59, %s60
      %p72 = scmp.eq.s32.totalorder %s29, 1
      %p73 = por %p71, %p72
      %p75 = scmp.ne.s32.totalorder %s60, %s74
      %p76 = scmp.eq.s32.totalorder %s29, 0
      %p77 = por %p75, %p76
      %s79 = sadd.s32 %s78, 1
      %p82 = scmp.eq.s32.totalorder %s23, 1
      %p83 = scmp.ne.s32.totalorder %s78, %s80
      %p84 = scmp.eq.s32.totalorder %s23, 0
      %p85 = por %p83, %p84
      %p86 = scmp.ne.s32.totalorder %s78, %s80
      %p87 = scmp.eq.s32.totalorder %s28, 1
      %p88 = por %p86, %p87
      %p89 = scmp.ne.s32.totalorder %s80, %s81
      %p90 = scmp.eq.s32.totalorder %s28, 0
      %p91 = por %p89, %p90
      %p92 = scmp.ne.s32.totalorder %s80, %s81
      %p93 = scmp.eq.s32.totalorder %s29, 1
      %p94 = por %p92, %p93
      %p96 = scmp.ne.s32.totalorder %s81, %s95
      %p97 = scmp.eq.s32.totalorder %s29, 0
      %p98 = por %p96, %p97
      %s100 = sadd.s32 %s99, 1
      %p103 = scmp.eq.s32.totalorder %s23, 1
      %p104 = scmp.ne.s32.totalorder %s99, %s101
      %p105 = scmp.eq.s32.totalorder %s23, 0
      %p106 = por %p104, %p105
      %p107 = scmp.ne.s32.totalorder %s99, %s101
      %p108 = scmp.eq.s32.totalorder %s28, 1
      %p109 = por %p107, %p108
      %p110 = scmp.ne.s32.totalorder %s101, %s102
      %p111 = scmp.eq.s32.totalorder %s28, 0
      %p112 = por %p110, %p111
      %p113 = scmp.ne.s32.totalorder %s101, %s102
      %p114 = scmp.eq.s32.totalorder %s29, 1
      %p115 = por %p113, %p114
      %p117 = scmp.ne.s32.totalorder %s102, %s116
      %p118 = scmp.eq.s32.totalorder %s29, 0
      %p119 = por %p117, %p118
      %s121 = sadd.s32 %s120, 1
      %p124 = scmp.eq.s32.totalorder %s23, 1
      %p125 = scmp.ne.s32.totalorder %s120, %s122
      %p126 = scmp.eq.s32.totalorder %s23, 0
      %p127 = por %p125, %p126
      %p128 = scmp.ne.s32.totalorder %s120, %s122
      %p129 = scmp.eq.s32.totalorder %s28, 1
      %p130 = por %p128, %p129
      %p131 = scmp.ne.s32.totalorder %s122, %s123
      %p132 = scmp.eq.s32.totalorder %s28, 0
      %p133 = por %p131, %p132
      %p134 = scmp.ne.s32.totalorder %s122, %s123
      %p135 = scmp.eq.s32.totalorder %s29, 1
      %p136 = por %p134, %p135
      %p138 = scmp.ne.s32.totalorder %s123, %s137
      %p139 = scmp.eq.s32.totalorder %s29, 0
      %p140 = por %p138, %p139
      %s142 = sadd.s32 %s141, 1
      %p145 = scmp.eq.s32.totalorder %s23, 1
      %p146 = scmp.ne.s32.totalorder %s141, %s143
      %p147 = scmp.eq.s32.totalorder %s23, 0
      %p148 = por %p146, %p147
      %p149 = scmp.ne.s32.totalorder %s141, %s143
      %p150 = scmp.eq.s32.totalorder %s28, 1
      %p151 = por %p149, %p150
      %p152 = scmp.ne.s32.totalorder %s143, %s144
      %p153 = scmp.eq.s32.totalorder %s28, 0
      %p154 = por %p152, %p153
      %p155 = scmp.ne.s32.totalorder %s143, %s144
      %p156 = scmp.eq.s32.totalorder %s29, 1
      %p157 = por %p155, %p156
      %p159 = scmp.ne.s32.totalorder %s144, %s158
      %p160 = scmp.eq.s32.totalorder %s29, 0
      %p161 = por %p159, %p160
      %s163 = sadd.s32 %s162, 1
      %p166 = scmp.eq.s32.totalorder %s23, 1
      %p167 = scmp.ne.s32.totalorder %s162, %s164
      %p168 = scmp.eq.s32.totalorder %s23, 0
      %p169 = por %p167, %p168
      %p170 = scmp.ne.s32.totalorder %s162, %s164
      %p171 = scmp.eq.s32.totalorder %s28, 1
      %p172 = por %p170, %p171
      %p173 = scmp.ne.s32.totalorder %s164, %s165
      %p174 = scmp.eq.s32.totalorder %s28, 0
      %p175 = por %p173, %p174
      %p176 = scmp.ne.s32.totalorder %s164, %s165
      %p177 = scmp.eq.s32.totalorder %s29, 1
      %p178 = por %p176, %p177
      %p180 = scmp.ne.s32.totalorder %s165, %s179
      %p181 = scmp.eq.s32.totalorder %s29, 0
      %p182 = por %p180, %p181
      %s184 = sadd.s32 %s183, 1
      %p187 = scmp.eq.s32.totalorder %s23, 1
      %p188 = scmp.ne.s32.totalorder %s183, %s185
      %p189 = scmp.eq.s32.totalorder %s23, 0
      %p190 = por %p188, %p189
      %p191 = scmp.ne.s32.totalorder %s183, %s185
      %p192 = scmp.eq.s32.totalorder %s28, 1
      %p193 = por %p191, %p192
      %p194 = scmp.ne.s32.totalorder %s185, %s186
      %p195 = scmp.eq.s32.totalorder %s28, 0
      %p196 = por %p194, %p195
      %p197 = scmp.ne.s32.totalorder %s185, %s186
      %p198 = scmp.eq.s32.totalorder %s29, 1
      %p199 = por %p197, %p198
      %p201 = scmp.ne.s32.totalorder %s186, %s200
      %p202 = scmp.eq.s32.totalorder %s29, 0
      %p203 = por %p201, %p202
      %s205 = sadd.s32 %s204, 1
      %p208 = scmp.eq.s32.totalorder %s23, 1
      %p209 = scmp.ne.s32.totalorder %s204, %s206
      %p210 = scmp.eq.s32.totalorder %s23, 0
      %p211 = por %p209, %p210
      %p212 = scmp.ne.s32.totalorder %s204, %s206
      %p213 = scmp.eq.s32.totalorder %s28, 1
      %p214 = por %p212, %p213
      %p215 = scmp.ne.s32.totalorder %s206, %s207
      %p216 = scmp.eq.s32.totalorder %s28, 0
      %p217 = por %p215, %p216
      %p218 = scmp.ne.s32.totalorder %s206, %s207
      %p219 = scmp.eq.s32.totalorder %s29, 1
      %p220 = por %p218, %p219
      %p222 = scmp.ne.s32.totalorder %s207, %s221
      %p223 = scmp.eq.s32.totalorder %s29, 0
      %p224 = por %p222, %p223
      %s226 = sadd.s32 %s225, 1
      %p229 = scmp.eq.s32.totalorder %s23, 1
      %p230 = scmp.ne.s32.totalorder %s225, %s227
      %p231 = scmp.eq.s32.totalorder %s23, 0
      %p232 = por %p230, %p231
      %p233 = scmp.ne.s32.totalorder %s225, %s227
      %p234 = scmp.eq.s32.totalorder %s28, 1
      %p235 = por %p233, %p234
      %p236 = scmp.ne.s32.totalorder %s227, %s228
      %p237 = scmp.eq.s32.totalorder %s28, 0
      %p238 = por %p236, %p237
      %p239 = scmp.ne.s32.totalorder %s227, %s228
      %p240 = scmp.eq.s32.totalorder %s29, 1
      %p241 = por %p239, %p240
      %p243 = scmp.ne.s32.totalorder %s228, %s242
      %p244 = scmp.eq.s32.totalorder %s29, 0
      %p245 = por %p243, %p244
      %s247 = sadd.s32 %s246, 1
      %p250 = scmp.eq.s32.totalorder %s23, 1
      %p251 = scmp.ne.s32.totalorder %s246, %s248
      %p252 = scmp.eq.s32.totalorder %s23, 0
      %p253 = por %p251, %p252
      %p254 = scmp.ne.s32.totalorder %s246, %s248
      %p255 = scmp.eq.s32.totalorder %s28, 1
      %p256 = por %p254, %p255
      %p257 = scmp.ne.s32.totalorder %s248, %s249
      %p258 = scmp.eq.s32.totalorder %s28, 0
      %p259 = por %p257, %p258
      %p260 = scmp.ne.s32.totalorder %s248, %s249
      %p261 = scmp.eq.s32.totalorder %s29, 1
      %p262 = por %p260, %p261
      %p264 = scmp.ne.s32.totalorder %s249, %s263
      %p265 = scmp.eq.s32.totalorder %s29, 0
      %p266 = por %p264, %p265
      %s268 = sadd.s32 %s267, 1
      %p271 = scmp.eq.s32.totalorder %s23, 1
      %p272 = scmp.ne.s32.totalorder %s267, %s269
      %p273 = scmp.eq.s32.totalorder %s23, 0
      %p274 = por %p272, %p273
      %p275 = scmp.ne.s32.totalorder %s267, %s269
      %p276 = scmp.eq.s32.totalorder %s28, 1
      %p277 = por %p275, %p276
      %p278 = scmp.ne.s32.totalorder %s269, %s270
      %p279 = scmp.eq.s32.totalorder %s28, 0
      %p280 = por %p278, %p279
      %p281 = scmp.ne.s32.totalorder %s269, %s270
      %p282 = scmp.eq.s32.totalorder %s29, 1
      %p283 = por %p281, %p282
      %p285 = scmp.ne.s32.totalorder %s270, %s284
      %p286 = scmp.eq.s32.totalorder %s29, 0
      %p287 = por %p285, %p286
      %s289 = sadd.s32 %s288, 1
      %p292 = scmp.eq.s32.totalorder %s23, 1
      %p293 = scmp.ne.s32.totalorder %s288, %s290
      %p294 = scmp.eq.s32.totalorder %s23, 0
      %p295 = por %p293, %p294
      %p296 = scmp.ne.s32.totalorder %s288, %s290
      %p297 = scmp.eq.s32.totalorder %s28, 1
      %p298 = por %p296, %p297
      %p299 = scmp.ne.s32.totalorder %s290, %s291
      %p300 = scmp.eq.s32.totalorder %s28, 0
      %p301 = por %p299, %p300
      %p302 = scmp.ne.s32.totalorder %s290, %s291
      %p303 = scmp.eq.s32.totalorder %s29, 1
      %p304 = por %p302, %p303
      %p306 = scmp.ne.s32.totalorder %s291, %s305
      %p307 = scmp.eq.s32.totalorder %s29, 0
      %p308 = por %p306, %p307
      %s310 = sadd.s32 %s309, 1
      %p313 = scmp.eq.s32.totalorder %s23, 1
      %p314 = scmp.ne.s32.totalorder %s309, %s311
      %p315 = scmp.eq.s32.totalorder %s23, 0
      %p316 = por %p314, %p315
      %p317 = scmp.ne.s32.totalorder %s309, %s311
      %p318 = scmp.eq.s32.totalorder %s28, 1
      %p319 = por %p317, %p318
      %p320 = scmp.ne.s32.totalorder %s311, %s312
      %p321 = scmp.eq.s32.totalorder %s28, 0
      %p322 = por %p320, %p321
      %p323 = scmp.ne.s32.totalorder %s311, %s312
      %p324 = scmp.eq.s32.totalorder %s29, 1
      %p325 = por %p323, %p324
      %p327 = scmp.ne.s32.totalorder %s312, %s326
      %p328 = scmp.eq.s32.totalorder %s29, 0
      %p329 = por %p327, %p328
      %s331 = sadd.s32 %s330, 1
      %p334 = scmp.eq.s32.totalorder %s23, 1
      %p335 = scmp.ne.s32.totalorder %s330, %s332
      %p336 = scmp.eq.s32.totalorder %s23, 0
      %p337 = por %p335, %p336
      %p338 = scmp.ne.s32.totalorder %s330, %s332
      %p339 = scmp.eq.s32.totalorder %s28, 1
      %p340 = por %p338, %p339
      %p341 = scmp.ne.s32.totalorder %s332, %s333
      %p342 = scmp.eq.s32.totalorder %s28, 0
      %p343 = por %p341, %p342
      %p344 = scmp.ne.s32.totalorder %s332, %s333
      %p345 = scmp.eq.s32.totalorder %s29, 1
      %p346 = por %p344, %p345
      %p348 = scmp.ne.s32.totalorder %s333, %s347
      %p349 = scmp.eq.s32.totalorder %s29, 0
      %p350 = por %p348, %p349
      %s351 = ssub.s32 %s23, %s30
      %p352 = scmp.eq.s32.totalorder %s351, 0
      %s354 = sadd.s32 %s353, 1
      %s355 = scalar_select %p352, %s353, %s354
      %p358 = pneg %p352
      %p359 = scmp.eq.s32.totalorder %s23, 1
      %p360 = por %p358, %p359
      %p361 = scmp.ne.s32.totalorder %s353, %s356
      %p362 = scmp.eq.s32.totalorder %s23, 0
      %p363 = por %p361, %p362
      %p364 = scmp.ne.s32.totalorder %s353, %s356
      %p365 = scmp.eq.s32.totalorder %s28, 1
      %p366 = por %p364, %p365
      %p367 = scmp.ne.s32.totalorder %s356, %s357
      %p368 = scmp.eq.s32.totalorder %s28, 0
      %p369 = por %p367, %p368
      %p370 = scmp.ne.s32.totalorder %s356, %s357
      %p371 = scmp.eq.s32.totalorder %s29, 1
      %p372 = por %p370, %p371
      %p374 = scmp.ne.s32.totalorder %s357, %s373
      %p375 = scmp.eq.s32.totalorder %s29, 0
      %p376 = por %p374, %p375
      %p377 = scmp.le.s32.totalorder 1, %s23
      %p378 = scmp.lt.s32.totalorder %s23, 3
      %p379 = pnand %p377, %p378
      %p380 = pneg %p379
      // Predicated region
      $region9: #{enc_svhn_forward.1} parent=5 // pred_check
        _
      $region10: #{enc_svhn_forward.1} parent=5 // pred_check_branch
        %382 = sbr.rel (%p379) target = $region12
      $region11: #{enc_svhn_forward.1} parent=5 // pred_region
        %s383 = ssub.s32 %s23, 1
        // Predicated region
        $region13: #{enc_svhn_forward.1} parent=11 // pred_check
          %p384 = pneg %p70
        $region14: #{enc_svhn_forward.1} parent=11 // pred_check_branch
          %386 = sbr.rel (%p384) target = $region16
        $region15: #{enc_svhn_forward.1} parent=11 // pred_region
          _
        $region16: #{enc_svhn_forward.1} parent=11 // pred_fallthru
          _
        // Predicated region
        $region17: #{enc_svhn_forward.1} parent=11 // pred_check
          %p387 = pneg %p91
        $region18: #{enc_svhn_forward.1} parent=11 // pred_check_branch
          %389 = sbr.rel (%p387) target = $region20
        $region19: #{enc_svhn_forward.1} parent=11 // pred_region
          _
        $region20: #{enc_svhn_forward.1} parent=11 // pred_fallthru
          _
        // Predicated region
        $region21: #{enc_svhn_forward.1} parent=11 // pred_check
          %p390 = pneg %p112
        $region22: #{enc_svhn_forward.1} parent=11 // pred_check_branch
          %392 = sbr.rel (%p390) target = $region24
        $region23: #{enc_svhn_forward.1} parent=11 // pred_region
          _
        $region24: #{enc_svhn_forward.1} parent=11 // pred_fallthru
          _
        // Predicated region
        $region25: #{enc_svhn_forward.1} parent=11 // pred_check
          %p393 = pneg %p133
        $region26: #{enc_svhn_forward.1} parent=11 // pred_check_branch
          %395 = sbr.rel (%p393) target = $region28
        $region27: #{enc_svhn_forward.1} parent=11 // pred_region
          _
        $region28: #{enc_svhn_forward.1} parent=11 // pred_fallthru
          _
        // Predicated region
        $region29: #{enc_svhn_forward.1} parent=11 // pred_check
          %p396 = pneg %p154
        $region30: #{enc_svhn_forward.1} parent=11 // pred_check_branch
          %398 = sbr.rel (%p396) target = $region32
        $region31: #{enc_svhn_forward.1} parent=11 // pred_region
          _
        $region32: #{enc_svhn_forward.1} parent=11 // pred_fallthru
          _
        // Predicated region
        $region33: #{enc_svhn_forward.1} parent=11 // pred_check
          %p399 = pneg %p175
        $region34: #{enc_svhn_forward.1} parent=11 // pred_check_branch
          %401 = sbr.rel (%p399) target = $region36
        $region35: #{enc_svhn_forward.1} parent=11 // pred_region
          _
        $region36: #{enc_svhn_forward.1} parent=11 // pred_fallthru
          _
        // Predicated region
        $region37: #{enc_svhn_forward.1} parent=11 // pred_check
          %p402 = pneg %p196
        $region38: #{enc_svhn_forward.1} parent=11 // pred_check_branch
          %404 = sbr.rel (%p402) target = $region40
        $region39: #{enc_svhn_forward.1} parent=11 // pred_region
          _
        $region40: #{enc_svhn_forward.1} parent=11 // pred_fallthru
          _
        // Predicated region
        $region41: #{enc_svhn_forward.1} parent=11 // pred_check
          %p405 = pneg %p217
        $region42: #{enc_svhn_forward.1} parent=11 // pred_check_branch
          %407 = sbr.rel (%p405) target = $region44
        $region43: #{enc_svhn_forward.1} parent=11 // pred_region
          %409 = vsyncadd [#allocation3], 0
          %s410 = sshll.u32 %s8, 4
          %s411 = int_to_ptr.hbm [resolvable:$true] %s410
          %s412 = sshll.u32 [#allocation2], 4
          %s413 = int_to_ptr.vmem [resolvable:$true] %s412
          %418 = dma.hbm_to_vmem [thread:$0]  %s411, 32768, %s413, [#allocation3], 128, 128, 8
        $region44: #{enc_svhn_forward.1} parent=11 // pred_fallthru
          _
        // Predicated region
        $region45: #{enc_svhn_forward.1} parent=11 // pred_check
          %p419 = pneg %p238
        $region46: #{enc_svhn_forward.1} parent=11 // pred_check_branch
          %421 = sbr.rel (%p419) target = $region48
        $region47: #{enc_svhn_forward.1} parent=11 // pred_region
          _
        $region48: #{enc_svhn_forward.1} parent=11 // pred_fallthru
          _
        // Predicated region
        $region49: #{enc_svhn_forward.1} parent=11 // pred_check
          %p422 = pneg %p259
        $region50: #{enc_svhn_forward.1} parent=11 // pred_check_branch
          %424 = sbr.rel (%p422) target = $region52
        $region51: #{enc_svhn_forward.1} parent=11 // pred_region
          %426 = vsyncadd [#allocation5], 0
          %s427 = sshll.u32 %s10, 4
          %s428 = int_to_ptr.hbm [resolvable:$true] %s427
          %s429 = sshll.u32 [#allocation4], 4
          %s430 = int_to_ptr.vmem [resolvable:$true] %s429
          %435 = dma.hbm_to_vmem [thread:$0]  %s428, 256, %s430, [#allocation5], 64, 64, 4
        $region52: #{enc_svhn_forward.1} parent=11 // pred_fallthru
          _
        // Predicated region
        $region53: #{enc_svhn_forward.1} parent=11 // pred_check
          %p436 = pneg %p280
        $region54: #{enc_svhn_forward.1} parent=11 // pred_check_branch
          %438 = sbr.rel (%p436) target = $region56
        $region55: #{enc_svhn_forward.1} parent=11 // pred_region
          %440 = vsyncadd [#allocation5], 0
          %s441 = sshll.u32 %s11, 4
          %s442 = int_to_ptr.hbm [resolvable:$true] %s441
          %s443 = sshll.u32 [#allocation6], 4
          %s444 = int_to_ptr.vmem [resolvable:$true] %s443
          %449 = dma.hbm_to_vmem [thread:$0]  %s442, 8192, %s444, [#allocation5], 64, 64, 4
        $region56: #{enc_svhn_forward.1} parent=11 // pred_fallthru
          _
        // Predicated region
        $region57: #{enc_svhn_forward.1} parent=11 // pred_check
          %p450 = pneg %p301
        $region58: #{enc_svhn_forward.1} parent=11 // pred_check_branch
          %452 = sbr.rel (%p450) target = $region60
        $region59: #{enc_svhn_forward.1} parent=11 // pred_region
          _
        $region60: #{enc_svhn_forward.1} parent=11 // pred_fallthru
          _
        // Predicated region
        $region61: #{enc_svhn_forward.1} parent=11 // pred_check
          %p453 = pneg %p322
        $region62: #{enc_svhn_forward.1} parent=11 // pred_check_branch
          %455 = sbr.rel (%p453) target = $region64
        $region63: #{enc_svhn_forward.1} parent=11 // pred_region
          _
        $region64: #{enc_svhn_forward.1} parent=11 // pred_fallthru
          _
        // Predicated region
        $region65: #{enc_svhn_forward.1} parent=11 // pred_check
          %p456 = pneg %p343
        $region66: #{enc_svhn_forward.1} parent=11 // pred_check_branch
          %458 = sbr.rel (%p456) target = $region68
        $region67: #{enc_svhn_forward.1} parent=11 // pred_region
          _
        $region68: #{enc_svhn_forward.1} parent=11 // pred_fallthru
          _
      $region12: #{enc_svhn_forward.1} parent=5 // pred_fallthru
        _
      %p459 = scmp.lt.s32.totalorder %s23, 2
      // Predicated region
      $region69: #{enc_svhn_forward.1} parent=5 // pred_check
        %p460 = pneg %p459
      $region70: #{enc_svhn_forward.1} parent=5 // pred_check_branch
        %462 = sbr.rel (%p460) target = $region72
      $region71: #{enc_svhn_forward.1} parent=5 // pred_region
        // Predicated region
        $region73: #{enc_svhn_forward.1} parent=71 // pred_check
          %p463 = pneg %p43
        $region74: #{enc_svhn_forward.1} parent=71 // pred_check_branch
          %465 = sbr.rel (%p463) target = $region76
        $region75: #{enc_svhn_forward.1} parent=71 // pred_region
          %s466 = smul.u32 32, %s23
          %p467 = scmp.lt.s32.totalorder %s466, 63
          %s468 = scalar_select %p467, %s466, 63
          %s469 = smul.addr %s468, 4
          %s470 = scalar_lea.vmem %s0, %s469
          %s471 = smul.u32 32, %s23
        $region76: #{enc_svhn_forward.1} parent=71 // pred_fallthru
          _
      $region72: #{enc_svhn_forward.1} parent=5 // pred_fallthru
        _
      %p472 = scmp.le.s32.totalorder 1, %s23
      %p473 = scmp.lt.s32.totalorder %s23, 3
      %p474 = pnand %p472, %p473
      %p475 = pneg %p474
      // Predicated region
      $region77: #{enc_svhn_forward.1} parent=5 // pred_check
        _
      $region78: #{enc_svhn_forward.1} parent=5 // pred_check_branch
        %477 = sbr.rel (%p474) target = $region80
      $region79: #{enc_svhn_forward.1} parent=5 // pred_region
        %s478 = ssub.s32 %s23, 1
        // Predicated region
        $region81: #{enc_svhn_forward.1} parent=79 // pred_check
          %p479 = pneg %p217
        $region82: #{enc_svhn_forward.1} parent=79 // pred_check_branch
          %481 = sbr.rel (%p479) target = $region84
        $region83: #{enc_svhn_forward.1} parent=79 // pred_region
          %483 = dma.done [#allocation3], 32768
        $region84: #{enc_svhn_forward.1} parent=79 // pred_fallthru
          _
        // Predicated region
        $region85: #{enc_svhn_forward.1} parent=79 // pred_check
          %p484 = pneg %p259
        $region86: #{enc_svhn_forward.1} parent=79 // pred_check_branch
          %486 = sbr.rel (%p484) target = $region88
        $region87: #{enc_svhn_forward.1} parent=79 // pred_region
          %488 = dma.done [#allocation5], 256
        $region88: #{enc_svhn_forward.1} parent=79 // pred_fallthru
          _
        // Predicated region
        $region89: #{enc_svhn_forward.1} parent=79 // pred_check
          %p489 = pneg %p280
        $region90: #{enc_svhn_forward.1} parent=79 // pred_check_branch
          %491 = sbr.rel (%p489) target = $region92
        $region91: #{enc_svhn_forward.1} parent=79 // pred_region
          %493 = dma.done [#allocation5], 8192
        $region92: #{enc_svhn_forward.1} parent=79 // pred_fallthru
          _
        %s494 = smul.u32 32, %s28
        %p495 = scmp.lt.s32.totalorder %s494, 63
        %s496 = scalar_select %p495, %s494, 63
        %s497 = smul.addr %s496, 4
        %s498 = scalar_lea.vmem %s0, %s497
        %p499 = pneg %p49
        %p500 = pneg %p46
        %p501 = pneg %p70
        %p502 = pneg %p67
        %p503 = pneg %p91
        %p504 = pneg %p88
        %p505 = pneg %p112
        %p506 = pneg %p109
        %p507 = pneg %p133
        %p508 = pneg %p130
        %p509 = pneg %p154
        %p510 = pneg %p151
        %p511 = pneg %p175
        %p512 = pneg %p172
        %p513 = pneg %p196
        %p514 = pneg %p193
        %p515 = pneg %p217
        %p516 = pneg %p214
        %p517 = pneg %p238
        %p518 = pneg %p235
        %p519 = pneg %p259
        %p520 = pneg %p256
        %p521 = pneg %p280
        %p522 = pneg %p277
        %p523 = pneg %p301
        %p524 = pneg %p298
        %p525 = pneg %p322
        %p526 = pneg %p319
        %p527 = pneg %p343
        %p528 = pneg %p340
        %p529 = pneg %p369
        %p530 = pneg %p366
        %p531 = scmp.lt.s32.totalorder %s28, 1
        %s532 = scalar_select %p531, %s28, 1
        %s533 = smul.addr %s532, 8
        %s534 = scalar_lea.vmem %s15, %s533
        %s535 = smul.u32 32, %s28
        %p536 = scmp.lt.s32.totalorder %s535, 63
        %s537 = scalar_select %p536, %s535, 63
        %s538 = smul.addr %s537, 4
        %s539 = scalar_lea.vmem %s0, %s538
        %s540 = smul.u32 32, %s28
        %p541 = scmp.lt.s32.totalorder %s28, 1
        %s542 = scalar_select %p541, %s28, 1
        %s543 = smul.addr %s542, 8
        %s544 = scalar_lea.vmem %s15, %s543
        %v546 = vld [vmem:[%s539] sm:$0xf]
        %v547 = vld [vmem:[%s539 + $0x4] sm:$0xf]
        %v548 = vld [vmem:[%s539 + $0x8] sm:$0xf]
        %v549 = vld [vmem:[%s539 + $0xc] sm:$0xf]
        %v550 = vld [vmem:[%s539 + $0x10] sm:$0xf]
        %v551 = vld [vmem:[%s539 + $0x14] sm:$0xf]
        %v552 = vld [vmem:[%s539 + $0x18] sm:$0xf]
        %v553 = vld [vmem:[%s539 + $0x1c] sm:$0xf]
        %v554 = vld [vmem:[%s539 + $0x20] sm:$0xf]
        %v555 = vld [vmem:[%s539 + $0x24] sm:$0xf]
        %v556 = vld [vmem:[%s539 + $0x28] sm:$0xf]
        %v557 = vld [vmem:[%s539 + $0x2c] sm:$0xf]
        %v558 = vld [vmem:[%s539 + $0x30] sm:$0xf]
        %v559 = vld [vmem:[%s539 + $0x34] sm:$0xf]
        %v560 = vld [vmem:[%s539 + $0x38] sm:$0xf]
        %v561 = vld [vmem:[%s539 + $0x3c] sm:$0xf]
        %v562 = vld [vmem:[%s539 + $0x40] sm:$0xf]
        %v563 = vld [vmem:[%s539 + $0x44] sm:$0xf]
        %v564 = vld [vmem:[%s539 + $0x48] sm:$0xf]
        %v565 = vld [vmem:[%s539 + $0x4c] sm:$0xf]
        %v566 = vld [vmem:[%s539 + $0x50] sm:$0xf]
        %v567 = vld [vmem:[%s539 + $0x54] sm:$0xf]
        %v568 = vld [vmem:[%s539 + $0x58] sm:$0xf]
        %v569 = vld [vmem:[%s539 + $0x5c] sm:$0xf]
        %v570 = vld [vmem:[%s539 + $0x60] sm:$0xf]
        %v571 = vld [vmem:[%s539 + $0x64] sm:$0xf]
        %v572 = vld [vmem:[%s539 + $0x68] sm:$0xf]
        %v573 = vld [vmem:[%s539 + $0x6c] sm:$0xf]
        %v574 = vld [vmem:[%s539 + $0x70] sm:$0xf]
        %v575 = vld [vmem:[%s539 + $0x74] sm:$0xf]
        %v576 = vld [vmem:[%s539 + $0x78] sm:$0xf]
        %v577 = vld [vmem:[%s539 + $0x7c] sm:$0xf]
        %v578 = vld [vmem:[%s1] sm:$0xff]
        %v579 = vld [vmem:[%s1 + $0x8] sm:$0xff]
        %v580 = vld [vmem:[%s1 + $0x10] sm:$0xff]
        %v581 = vld [vmem:[%s1 + $0x18] sm:$0xff]
        %v582 = vld [vmem:[%s1 + $0x20] sm:$0xff]
        %v583 = vld [vmem:[%s1 + $0x28] sm:$0xff]
        %v584 = vld [vmem:[%s1 + $0x30] sm:$0xff]
        %v585 = vld [vmem:[%s1 + $0x38] sm:$0xff]
        %v586 = vld [vmem:[%s1 + $0x40] sm:$0xff]
        %v587 = vld [vmem:[%s1 + $0x48] sm:$0xff]
        %v588 = vld [vmem:[%s1 + $0x50] sm:$0xff]
        %v589 = vld [vmem:[%s1 + $0x58] sm:$0xff]
        %v590 = vld [vmem:[%s1 + $0x60] sm:$0xff]
        %v591 = vld [vmem:[%s1 + $0x68] sm:$0xff]
        %v592 = vld [vmem:[%s1 + $0x70] sm:$0xff]
        %v593 = vld [vmem:[%s1 + $0x78] sm:$0xff]
        %v594 = vld [vmem:[%s1 + $0x80] sm:$0xff]
        %v595 = vld [vmem:[%s1 + $0x88] sm:$0xff]
        %v596 = vld [vmem:[%s1 + $0x90] sm:$0xff]
        %v597 = vld [vmem:[%s1 + $0x98] sm:$0xff]
        %v598 = vld [vmem:[%s1 + $0xa0] sm:$0xff]
        %v599 = vld [vmem:[%s1 + $0xa8] sm:$0xff]
        %v600 = vld [vmem:[%s1 + $0xb0] sm:$0xff]
        %v601 = vld [vmem:[%s1 + $0xb8] sm:$0xff]
        %v602 = vld [vmem:[%s1 + $0xc0] sm:$0xff]
        %v603 = vld [vmem:[%s1 + $0xc8] sm:$0xff]
        %v604 = vld [vmem:[%s1 + $0xd0] sm:$0xff]
        %v605 = vld [vmem:[%s1 + $0xd8] sm:$0xff]
        %v606 = vld [vmem:[%s1 + $0xe0] sm:$0xff]
        %v607 = vld [vmem:[%s1 + $0xe8] sm:$0xff]
        %v608 = vld [vmem:[%s1 + $0xf0] sm:$0xff]
        %v609 = vld [vmem:[%s1 + $0xf8] sm:$0xff]
        %v610 = vld [vmem:[%s1 + $0x100] sm:$0xff]
        %v611 = vld [vmem:[%s1 + $0x108] sm:$0xff]
        %v612 = vld [vmem:[%s1 + $0x110] sm:$0xff]
        %v613 = vld [vmem:[%s1 + $0x118] sm:$0xff]
        %v614 = vld [vmem:[%s1 + $0x120] sm:$0xff]
        %v615 = vld [vmem:[%s1 + $0x128] sm:$0xff]
        %v616 = vld [vmem:[%s1 + $0x130] sm:$0xff]
        %v617 = vld [vmem:[%s1 + $0x138] sm:$0xff]
        %v618 = vld [vmem:[%s1 + $0x140] sm:$0xff]
        %v619 = vld [vmem:[%s1 + $0x148] sm:$0xff]
        %v620 = vld [vmem:[%s1 + $0x150] sm:$0xff]
        %v621 = vld [vmem:[%s1 + $0x158] sm:$0xff]
        %v622 = vld [vmem:[%s1 + $0x160] sm:$0xff]
        %v623 = vld [vmem:[%s1 + $0x168] sm:$0xff]
        %v624 = vld [vmem:[%s1 + $0x170] sm:$0xff]
        %v625 = vld [vmem:[%s1 + $0x178] sm:$0xff]
        %v626 = vld [vmem:[%s1 + $0x180] sm:$0xff]
        %v627 = vld [vmem:[%s1 + $0x188] sm:$0xff]
        %v628 = vld [vmem:[%s1 + $0x190] sm:$0xff]
        %v629 = vld [vmem:[%s1 + $0x198] sm:$0xff]
        %v630 = vld [vmem:[%s1 + $0x1a0] sm:$0xff]
        %v631 = vld [vmem:[%s1 + $0x1a8] sm:$0xff]
        %v632 = vld [vmem:[%s1 + $0x1b0] sm:$0xff]
        %v633 = vld [vmem:[%s1 + $0x1b8] sm:$0xff]
        %v634 = vld [vmem:[%s1 + $0x1c0] sm:$0xff]
        %v635 = vld [vmem:[%s1 + $0x1c8] sm:$0xff]
        %v636 = vld [vmem:[%s1 + $0x1d0] sm:$0xff]
        %v637 = vld [vmem:[%s1 + $0x1d8] sm:$0xff]
        %v638 = vld [vmem:[%s1 + $0x1e0] sm:$0xff]
        %v639 = vld [vmem:[%s1 + $0x1e8] sm:$0xff]
        %v640 = vld [vmem:[%s1 + $0x1f0] sm:$0xff]
        %v641 = vld [vmem:[%s1 + $0x1f8] sm:$0xff]
        %v706 = vunpack.c.l.b16 %v578
        %v707 = vunpack.c.h.b16 %v578
        %v708 = vunpack.c.l.b16 %v579
        %v709 = vunpack.c.h.b16 %v579
        %v710 = vunpack.c.l.b16 %v580
        %v711 = vunpack.c.h.b16 %v580
        %v712 = vunpack.c.l.b16 %v581
        %v713 = vunpack.c.h.b16 %v581
        %v714 = vunpack.c.l.b16 %v582
        %v715 = vunpack.c.h.b16 %v582
        %v716 = vunpack.c.l.b16 %v583
        %v717 = vunpack.c.h.b16 %v583
        %v718 = vunpack.c.l.b16 %v584
        %v719 = vunpack.c.h.b16 %v584
        %v720 = vunpack.c.l.b16 %v585
        %v721 = vunpack.c.h.b16 %v585
        %v722 = vunpack.c.l.b16 %v586
        %v723 = vunpack.c.h.b16 %v586
        %v724 = vunpack.c.l.b16 %v587
        %v725 = vunpack.c.h.b16 %v587
        %v726 = vunpack.c.l.b16 %v588
        %v727 = vunpack.c.h.b16 %v588
        %v728 = vunpack.c.l.b16 %v589
        %v729 = vunpack.c.h.b16 %v589
        %v730 = vunpack.c.l.b16 %v590
        %v731 = vunpack.c.h.b16 %v590
        %v732 = vunpack.c.l.b16 %v591
        %v733 = vunpack.c.h.b16 %v591
        %v734 = vunpack.c.l.b16 %v592
        %v735 = vunpack.c.h.b16 %v592
        %v736 = vunpack.c.l.b16 %v593
        %v737 = vunpack.c.h.b16 %v593
        %v738 = vunpack.c.l.b16 %v594
        %v739 = vunpack.c.h.b16 %v594
        %v740 = vunpack.c.l.b16 %v595
        %v741 = vunpack.c.h.b16 %v595
        %v742 = vunpack.c.l.b16 %v596
        %v743 = vunpack.c.h.b16 %v596
        %v744 = vunpack.c.l.b16 %v597
        %v745 = vunpack.c.h.b16 %v597
        %v746 = vunpack.c.l.b16 %v598
        %v747 = vunpack.c.h.b16 %v598
        %v748 = vunpack.c.l.b16 %v599
        %v749 = vunpack.c.h.b16 %v599
        %v750 = vunpack.c.l.b16 %v600
        %v751 = vunpack.c.h.b16 %v600
        %v752 = vunpack.c.l.b16 %v601
        %v753 = vunpack.c.h.b16 %v601
        %v754 = vunpack.c.l.b16 %v602
        %v755 = vunpack.c.h.b16 %v602
        %v756 = vunpack.c.l.b16 %v603
        %v757 = vunpack.c.h.b16 %v603
        %v758 = vunpack.c.l.b16 %v604
        %v759 = vunpack.c.h.b16 %v604
        %v760 = vunpack.c.l.b16 %v605
        %v761 = vunpack.c.h.b16 %v605
        %v762 = vunpack.c.l.b16 %v606
        %v763 = vunpack.c.h.b16 %v606
        %v764 = vunpack.c.l.b16 %v607
        %v765 = vunpack.c.h.b16 %v607
        %v766 = vunpack.c.l.b16 %v608
        %v767 = vunpack.c.h.b16 %v608
        %v768 = vunpack.c.l.b16 %v609
        %v769 = vunpack.c.h.b16 %v609
        %v770 = vunpack.c.l.b16 %v610
        %v771 = vunpack.c.h.b16 %v610
        %v772 = vunpack.c.l.b16 %v611
        %v773 = vunpack.c.h.b16 %v611
        %v774 = vunpack.c.l.b16 %v612
        %v775 = vunpack.c.h.b16 %v612
        %v776 = vunpack.c.l.b16 %v613
        %v777 = vunpack.c.h.b16 %v613
        %v778 = vunpack.c.l.b16 %v614
        %v779 = vunpack.c.h.b16 %v614
        %v780 = vunpack.c.l.b16 %v615
        %v781 = vunpack.c.h.b16 %v615
        %v782 = vunpack.c.l.b16 %v616
        %v783 = vunpack.c.h.b16 %v616
        %v784 = vunpack.c.l.b16 %v617
        %v785 = vunpack.c.h.b16 %v617
        %v786 = vunpack.c.l.b16 %v618
        %v787 = vunpack.c.h.b16 %v618
        %v788 = vunpack.c.l.b16 %v619
        %v789 = vunpack.c.h.b16 %v619
        %v790 = vunpack.c.l.b16 %v620
        %v791 = vunpack.c.h.b16 %v620
        %v792 = vunpack.c.l.b16 %v621
        %v793 = vunpack.c.h.b16 %v621
        %v794 = vunpack.c.l.b16 %v622
        %v795 = vunpack.c.h.b16 %v622
        %v796 = vunpack.c.l.b16 %v623
        %v797 = vunpack.c.h.b16 %v623
        %v798 = vunpack.c.l.b16 %v624
        %v799 = vunpack.c.h.b16 %v624
        %v800 = vunpack.c.l.b16 %v625
        %v801 = vunpack.c.h.b16 %v625
        %v802 = vunpack.c.l.b16 %v626
        %v803 = vunpack.c.h.b16 %v626
        %v804 = vunpack.c.l.b16 %v627
        %v805 = vunpack.c.h.b16 %v627
        %v806 = vunpack.c.l.b16 %v628
        %v807 = vunpack.c.h.b16 %v628
        %v808 = vunpack.c.l.b16 %v629
        %v809 = vunpack.c.h.b16 %v629
        %v810 = vunpack.c.l.b16 %v630
        %v811 = vunpack.c.h.b16 %v630
        %v812 = vunpack.c.l.b16 %v631
        %v813 = vunpack.c.h.b16 %v631
        %v814 = vunpack.c.l.b16 %v632
        %v815 = vunpack.c.h.b16 %v632
        %v816 = vunpack.c.l.b16 %v633
        %v817 = vunpack.c.h.b16 %v633
        %v818 = vunpack.c.l.b16 %v634
        %v819 = vunpack.c.h.b16 %v634
        %v820 = vunpack.c.l.b16 %v635
        %v821 = vunpack.c.h.b16 %v635
        %v822 = vunpack.c.l.b16 %v636
        %v823 = vunpack.c.h.b16 %v636
        %v824 = vunpack.c.l.b16 %v637
        %v825 = vunpack.c.h.b16 %v637
        %v826 = vunpack.c.l.b16 %v638
        %v827 = vunpack.c.h.b16 %v638
        %v828 = vunpack.c.l.b16 %v639
        %v829 = vunpack.c.h.b16 %v639
        %v830 = vunpack.c.l.b16 %v640
        %v831 = vunpack.c.h.b16 %v640
        %v832 = vunpack.c.l.b16 %v641
        %v833 = vunpack.c.h.b16 %v641
        %v834 = vpack.c.b16 %v708, %v706
        %v835 = vpack.c.b16 %v709, %v707
        %v836 = vpack.c.b16 %v712, %v710
        %v837 = vpack.c.b16 %v713, %v711
        %v838 = vpack.c.b16 %v716, %v714
        %v839 = vpack.c.b16 %v717, %v715
        %v840 = vpack.c.b16 %v720, %v718
        %v841 = vpack.c.b16 %v721, %v719
        %v842 = vpack.c.b16 %v724, %v722
        %v843 = vpack.c.b16 %v725, %v723
        %v844 = vpack.c.b16 %v728, %v726
        %v845 = vpack.c.b16 %v729, %v727
        %v846 = vpack.c.b16 %v732, %v730
        %v847 = vpack.c.b16 %v733, %v731
        %v848 = vpack.c.b16 %v736, %v734
        %v849 = vpack.c.b16 %v737, %v735
        %v850 = vpack.c.b16 %v740, %v738
        %v851 = vpack.c.b16 %v741, %v739
        %v852 = vpack.c.b16 %v744, %v742
        %v853 = vpack.c.b16 %v745, %v743
        %v854 = vpack.c.b16 %v748, %v746
        %v855 = vpack.c.b16 %v749, %v747
        %v856 = vpack.c.b16 %v752, %v750
        %v857 = vpack.c.b16 %v753, %v751
        %v858 = vpack.c.b16 %v756, %v754
        %v859 = vpack.c.b16 %v757, %v755
        %v860 = vpack.c.b16 %v760, %v758
        %v861 = vpack.c.b16 %v761, %v759
        %v862 = vpack.c.b16 %v764, %v762
        %v863 = vpack.c.b16 %v765, %v763
        %v864 = vpack.c.b16 %v768, %v766
        %v865 = vpack.c.b16 %v769, %v767
        %v866 = vpack.c.b16 %v772, %v770
        %v867 = vpack.c.b16 %v773, %v771
        %v868 = vpack.c.b16 %v776, %v774
        %v869 = vpack.c.b16 %v777, %v775
        %v870 = vpack.c.b16 %v780, %v778
        %v871 = vpack.c.b16 %v781, %v779
        %v872 = vpack.c.b16 %v784, %v782
        %v873 = vpack.c.b16 %v785, %v783
        %v874 = vpack.c.b16 %v788, %v786
        %v875 = vpack.c.b16 %v789, %v787
        %v876 = vpack.c.b16 %v792, %v790
        %v877 = vpack.c.b16 %v793, %v791
        %v878 = vpack.c.b16 %v796, %v794
        %v879 = vpack.c.b16 %v797, %v795
        %v880 = vpack.c.b16 %v800, %v798
        %v881 = vpack.c.b16 %v801, %v799
        %v882 = vpack.c.b16 %v804, %v802
        %v883 = vpack.c.b16 %v805, %v803
        %v884 = vpack.c.b16 %v808, %v806
        %v885 = vpack.c.b16 %v809, %v807
        %v886 = vpack.c.b16 %v812, %v810
        %v887 = vpack.c.b16 %v813, %v811
        %v888 = vpack.c.b16 %v816, %v814
        %v889 = vpack.c.b16 %v817, %v815
        %v890 = vpack.c.b16 %v820, %v818
        %v891 = vpack.c.b16 %v821, %v819
        %v892 = vpack.c.b16 %v824, %v822
        %v893 = vpack.c.b16 %v825, %v823
        %v894 = vpack.c.b16 %v828, %v826
        %v895 = vpack.c.b16 %v829, %v827
        %v896 = vpack.c.b16 %v832, %v830
        %v897 = vpack.c.b16 %v833, %v831
        %v994 = vunpack.c.l.b16 %v546
        %v995 = vunpack.c.l.b16 %v547
        %v996 = vunpack.c.l.b16 %v548
        %v997 = vunpack.c.l.b16 %v549
        %v998 = vunpack.c.l.b16 %v550
        %v999 = vunpack.c.l.b16 %v551
        %v1000 = vunpack.c.l.b16 %v552
        %v1001 = vunpack.c.l.b16 %v553
        %v1002 = vunpack.c.l.b16 %v554
        %v1003 = vunpack.c.l.b16 %v555
        %v1004 = vunpack.c.l.b16 %v556
        %v1005 = vunpack.c.l.b16 %v557
        %v1006 = vunpack.c.l.b16 %v558
        %v1007 = vunpack.c.l.b16 %v559
        %v1008 = vunpack.c.l.b16 %v560
        %v1009 = vunpack.c.l.b16 %v561
        %v1010 = vunpack.c.l.b16 %v562
        %v1011 = vunpack.c.l.b16 %v563
        %v1012 = vunpack.c.l.b16 %v564
        %v1013 = vunpack.c.l.b16 %v565
        %v1014 = vunpack.c.l.b16 %v566
        %v1015 = vunpack.c.l.b16 %v567
        %v1016 = vunpack.c.l.b16 %v568
        %v1017 = vunpack.c.l.b16 %v569
        %v1018 = vunpack.c.l.b16 %v570
        %v1019 = vunpack.c.l.b16 %v571
        %v1020 = vunpack.c.l.b16 %v572
        %v1021 = vunpack.c.l.b16 %v573
        %v1022 = vunpack.c.l.b16 %v574
        %v1023 = vunpack.c.l.b16 %v575
        %v1024 = vunpack.c.l.b16 %v576
        %v1025 = vunpack.c.l.b16 %v577
        %v1026 = vpack.c.b16 %v995, %v994
        %v1027 = vpack.c.b16 %v997, %v996
        %v1028 = vpack.c.b16 %v999, %v998
        %v1029 = vpack.c.b16 %v1001, %v1000
        %v1030 = vpack.c.b16 %v1003, %v1002
        %v1031 = vpack.c.b16 %v1005, %v1004
        %v1032 = vpack.c.b16 %v1007, %v1006
        %v1033 = vpack.c.b16 %v1009, %v1008
        %v1034 = vpack.c.b16 %v1011, %v1010
        %v1035 = vpack.c.b16 %v1013, %v1012
        %v1036 = vpack.c.b16 %v1015, %v1014
        %v1037 = vpack.c.b16 %v1017, %v1016
        %v1038 = vpack.c.b16 %v1019, %v1018
        %v1039 = vpack.c.b16 %v1021, %v1020
        %v1040 = vpack.c.b16 %v1023, %v1022
        %v1041 = vpack.c.b16 %v1025, %v1024
        %1058 = vmatpush.bf16.msra.mxu0 %v1033
        %1059 = vmatpush.bf16.msra.mxu0 %v1032
        %1060 = vmatpush.bf16.msra.mxu0 %v1031
        %1061 = vmatpush.bf16.msra.mxu0 %v1030
        %1062 = vmatpush.bf16.msra.mxu0 %v1029
        %1063 = vmatpush.bf16.msra.mxu0 %v1028
        %1064 = vmatpush.bf16.msra.mxu0 %v1027
        %1065 = vmatpush.bf16.msra.mxu0 %v1026
        %1066 = vmatmul.bf16.gmra.mxu0 %v834
        %v1067 = vpop.f32.mrf.mxu0
        %v1068 = vadd.f32 0.0, %v1067
        %v1069 = vpop.f32.mrf.mxu0
        %v1070 = vadd.f32 0.0, %v1069
        %1071 = vmatmul.bf16.gmra.mxu0 %v836
        %v1072 = vpop.f32.mrf.mxu0
        %v1073 = vadd.f32 0.0, %v1072
        %v1074 = vpop.f32.mrf.mxu0
        %v1075 = vadd.f32 0.0, %v1074
        %1076 = vmatmul.bf16.gmra.mxu0 %v838
        %v1077 = vpop.f32.mrf.mxu0
        %v1078 = vadd.f32 0.0, %v1077
        %v1079 = vpop.f32.mrf.mxu0
        %v1080 = vadd.f32 0.0, %v1079
        %1081 = vmatmul.bf16.gmra.mxu0 %v840
        %v1082 = vpop.f32.mrf.mxu0
        %v1083 = vadd.f32 0.0, %v1082
        %v1084 = vpop.f32.mrf.mxu0
        %v1085 = vadd.f32 0.0, %v1084
        %1086 = vmatmul.bf16.gmra.mxu0 %v842
        %v1087 = vpop.f32.mrf.mxu0
        %v1088 = vadd.f32 0.0, %v1087
        %v1089 = vpop.f32.mrf.mxu0
        %v1090 = vadd.f32 0.0, %v1089
        %1091 = vmatmul.bf16.gmra.mxu0 %v844
        %v1092 = vpop.f32.mrf.mxu0
        %v1093 = vadd.f32 0.0, %v1092
        %v1094 = vpop.f32.mrf.mxu0
        %v1095 = vadd.f32 0.0, %v1094
        %1096 = vmatmul.bf16.gmra.mxu0 %v846
        %v1097 = vpop.f32.mrf.mxu0
        %v1098 = vadd.f32 0.0, %v1097
        %v1099 = vpop.f32.mrf.mxu0
        %v1100 = vadd.f32 0.0, %v1099
        %1101 = vmatmul.bf16.gmra.mxu0 %v848
        %v1102 = vpop.f32.mrf.mxu0
        %v1103 = vadd.f32 0.0, %v1102
        %v1104 = vpop.f32.mrf.mxu0
        %v1105 = vadd.f32 0.0, %v1104
        %1106 = vmatmul.bf16.gmra.mxu0 %v850
        %v1107 = vpop.f32.mrf.mxu0
        %v1108 = vadd.f32 0.0, %v1107
        %v1109 = vpop.f32.mrf.mxu0
        %v1110 = vadd.f32 0.0, %v1109
        %1111 = vmatmul.bf16.gmra.mxu0 %v852
        %v1112 = vpop.f32.mrf.mxu0
        %v1113 = vadd.f32 0.0, %v1112
        %v1114 = vpop.f32.mrf.mxu0
        %v1115 = vadd.f32 0.0, %v1114
        %1116 = vmatmul.bf16.gmra.mxu0 %v854
        %v1117 = vpop.f32.mrf.mxu0
        %v1118 = vadd.f32 0.0, %v1117
        %v1119 = vpop.f32.mrf.mxu0
        %v1120 = vadd.f32 0.0, %v1119
        %1121 = vmatmul.bf16.gmra.mxu0 %v856
        %v1122 = vpop.f32.mrf.mxu0
        %v1123 = vadd.f32 0.0, %v1122
        %v1124 = vpop.f32.mrf.mxu0
        %v1125 = vadd.f32 0.0, %v1124
        %1126 = vmatmul.bf16.gmra.mxu0 %v858
        %v1127 = vpop.f32.mrf.mxu0
        %v1128 = vadd.f32 0.0, %v1127
        %v1129 = vpop.f32.mrf.mxu0
        %v1130 = vadd.f32 0.0, %v1129
        %1131 = vmatmul.bf16.gmra.mxu0 %v860
        %v1132 = vpop.f32.mrf.mxu0
        %v1133 = vadd.f32 0.0, %v1132
        %v1134 = vpop.f32.mrf.mxu0
        %v1135 = vadd.f32 0.0, %v1134
        %1136 = vmatmul.bf16.gmra.mxu0 %v862
        %v1137 = vpop.f32.mrf.mxu0
        %v1138 = vadd.f32 0.0, %v1137
        %v1139 = vpop.f32.mrf.mxu0
        %v1140 = vadd.f32 0.0, %v1139
        %1141 = vmatmul.bf16.gmra.mxu0 %v864
        %v1142 = vpop.f32.mrf.mxu0
        %v1143 = vadd.f32 0.0, %v1142
        %v1144 = vpop.f32.mrf.mxu0
        %v1145 = vadd.f32 0.0, %v1144
        %1146 = vmatmul.bf16.gmra.mxu0 %v866
        %v1147 = vpop.f32.mrf.mxu0
        %v1148 = vadd.f32 0.0, %v1147
        %v1149 = vpop.f32.mrf.mxu0
        %v1150 = vadd.f32 0.0, %v1149
        %1151 = vmatmul.bf16.gmra.mxu0 %v868
        %v1152 = vpop.f32.mrf.mxu0
        %v1153 = vadd.f32 0.0, %v1152
        %v1154 = vpop.f32.mrf.mxu0
        %v1155 = vadd.f32 0.0, %v1154
        %1156 = vmatmul.bf16.gmra.mxu0 %v870
        %v1157 = vpop.f32.mrf.mxu0
        %v1158 = vadd.f32 0.0, %v1157
        %v1159 = vpop.f32.mrf.mxu0
        %v1160 = vadd.f32 0.0, %v1159
        %1161 = vmatmul.bf16.gmra.mxu0 %v872
        %v1162 = vpop.f32.mrf.mxu0
        %v1163 = vadd.f32 0.0, %v1162
        %v1164 = vpop.f32.mrf.mxu0
        %v1165 = vadd.f32 0.0, %v1164
        %1166 = vmatmul.bf16.gmra.mxu0 %v874
        %v1167 = vpop.f32.mrf.mxu0
        %v1168 = vadd.f32 0.0, %v1167
        %v1169 = vpop.f32.mrf.mxu0
        %v1170 = vadd.f32 0.0, %v1169
        %1171 = vmatmul.bf16.gmra.mxu0 %v876
        %v1172 = vpop.f32.mrf.mxu0
        %v1173 = vadd.f32 0.0, %v1172
        %v1174 = vpop.f32.mrf.mxu0
        %v1175 = vadd.f32 0.0, %v1174
        %1176 = vmatmul.bf16.gmra.mxu0 %v878
        %v1177 = vpop.f32.mrf.mxu0
        %v1178 = vadd.f32 0.0, %v1177
        %v1179 = vpop.f32.mrf.mxu0
        %v1180 = vadd.f32 0.0, %v1179
        %1181 = vmatmul.bf16.gmra.mxu0 %v880
        %v1182 = vpop.f32.mrf.mxu0
        %v1183 = vadd.f32 0.0, %v1182
        %v1184 = vpop.f32.mrf.mxu0
        %v1185 = vadd.f32 0.0, %v1184
        %1186 = vmatmul.bf16.gmra.mxu0 %v882
        %v1187 = vpop.f32.mrf.mxu0
        %v1188 = vadd.f32 0.0, %v1187
        %v1189 = vpop.f32.mrf.mxu0
        %v1190 = vadd.f32 0.0, %v1189
        %1191 = vmatmul.bf16.gmra.mxu0 %v884
        %v1192 = vpop.f32.mrf.mxu0
        %v1193 = vadd.f32 0.0, %v1192
        %v1194 = vpop.f32.mrf.mxu0
        %v1195 = vadd.f32 0.0, %v1194
        %1196 = vmatmul.bf16.gmra.mxu0 %v886
        %v1197 = vpop.f32.mrf.mxu0
        %v1198 = vadd.f32 0.0, %v1197
        %v1199 = vpop.f32.mrf.mxu0
        %v1200 = vadd.f32 0.0, %v1199
        %1201 = vmatmul.bf16.gmra.mxu0 %v888
        %v1202 = vpop.f32.mrf.mxu0
        %v1203 = vadd.f32 0.0, %v1202
        %v1204 = vpop.f32.mrf.mxu0
        %v1205 = vadd.f32 0.0, %v1204
        %1206 = vmatmul.bf16.gmra.mxu0 %v890
        %v1207 = vpop.f32.mrf.mxu0
        %v1208 = vadd.f32 0.0, %v1207
        %v1209 = vpop.f32.mrf.mxu0
        %v1210 = vadd.f32 0.0, %v1209
        %1211 = vmatmul.bf16.gmra.mxu0 %v892
        %v1212 = vpop.f32.mrf.mxu0
        %v1213 = vadd.f32 0.0, %v1212
        %v1214 = vpop.f32.mrf.mxu0
        %v1215 = vadd.f32 0.0, %v1214
        %1216 = vmatmul.bf16.gmra.mxu0 %v894
        %v1217 = vpop.f32.mrf.mxu0
        %v1218 = vadd.f32 0.0, %v1217
        %v1219 = vpop.f32.mrf.mxu0
        %v1220 = vadd.f32 0.0, %v1219
        %1221 = vmatmul.bf16.gmra.mxu0 %v896
        %v1222 = vpop.f32.mrf.mxu0
        %v1223 = vadd.f32 0.0, %v1222
        %v1224 = vpop.f32.mrf.mxu0
        %v1225 = vadd.f32 0.0, %v1224
        %1226 = vdwg.mxu0
        %1227 = vmatpush.bf16.msra.mxu0 %v1041
        %1228 = vmatpush.bf16.msra.mxu0 %v1040
        %1229 = vmatpush.bf16.msra.mxu0 %v1039
        %1230 = vmatpush.bf16.msra.mxu0 %v1038
        %1231 = vmatpush.bf16.msra.mxu0 %v1037
        %1232 = vmatpush.bf16.msra.mxu0 %v1036
        %1233 = vmatpush.bf16.msra.mxu0 %v1035
        %1234 = vmatpush.bf16.msra.mxu0 %v1034
        %1235 = vmatmul.bf16.gmra.mxu0 %v835
        %v1236 = vpop.f32.mrf.mxu0
        %v1237 = vadd.f32 %v1068, %v1236
        %v1238 = vpop.f32.mrf.mxu0
        %v1239 = vadd.f32 %v1070, %v1238
        %1240 = vmatmul.bf16.gmra.mxu0 %v837
        %v1241 = vpop.f32.mrf.mxu0
        %v1242 = vadd.f32 %v1073, %v1241
        %v1243 = vpop.f32.mrf.mxu0
        %v1244 = vadd.f32 %v1075, %v1243
        %1245 = vmatmul.bf16.gmra.mxu0 %v839
        %v1246 = vpop.f32.mrf.mxu0
        %v1247 = vadd.f32 %v1078, %v1246
        %v1248 = vpop.f32.mrf.mxu0
        %v1249 = vadd.f32 %v1080, %v1248
        %1250 = vmatmul.bf16.gmra.mxu0 %v841
        %v1251 = vpop.f32.mrf.mxu0
        %v1252 = vadd.f32 %v1083, %v1251
        %v1253 = vpop.f32.mrf.mxu0
        %v1254 = vadd.f32 %v1085, %v1253
        %1255 = vmatmul.bf16.gmra.mxu0 %v843
        %v1256 = vpop.f32.mrf.mxu0
        %v1257 = vadd.f32 %v1088, %v1256
        %v1258 = vpop.f32.mrf.mxu0
        %v1259 = vadd.f32 %v1090, %v1258
        %1260 = vmatmul.bf16.gmra.mxu0 %v845
        %v1261 = vpop.f32.mrf.mxu0
        %v1262 = vadd.f32 %v1093, %v1261
        %v1263 = vpop.f32.mrf.mxu0
        %v1264 = vadd.f32 %v1095, %v1263
        %1265 = vmatmul.bf16.gmra.mxu0 %v847
        %v1266 = vpop.f32.mrf.mxu0
        %v1267 = vadd.f32 %v1098, %v1266
        %v1268 = vpop.f32.mrf.mxu0
        %v1269 = vadd.f32 %v1100, %v1268
        %1270 = vmatmul.bf16.gmra.mxu0 %v849
        %v1271 = vpop.f32.mrf.mxu0
        %v1272 = vadd.f32 %v1103, %v1271
        %v1273 = vpop.f32.mrf.mxu0
        %v1274 = vadd.f32 %v1105, %v1273
        %1275 = vmatmul.bf16.gmra.mxu0 %v851
        %v1276 = vpop.f32.mrf.mxu0
        %v1277 = vadd.f32 %v1108, %v1276
        %v1278 = vpop.f32.mrf.mxu0
        %v1279 = vadd.f32 %v1110, %v1278
        %1280 = vmatmul.bf16.gmra.mxu0 %v853
        %v1281 = vpop.f32.mrf.mxu0
        %v1282 = vadd.f32 %v1113, %v1281
        %v1283 = vpop.f32.mrf.mxu0
        %v1284 = vadd.f32 %v1115, %v1283
        %1285 = vmatmul.bf16.gmra.mxu0 %v855
        %v1286 = vpop.f32.mrf.mxu0
        %v1287 = vadd.f32 %v1118, %v1286
        %v1288 = vpop.f32.mrf.mxu0
        %v1289 = vadd.f32 %v1120, %v1288
        %1290 = vmatmul.bf16.gmra.mxu0 %v857
        %v1291 = vpop.f32.mrf.mxu0
        %v1292 = vadd.f32 %v1123, %v1291
        %v1293 = vpop.f32.mrf.mxu0
        %v1294 = vadd.f32 %v1125, %v1293
        %1295 = vmatmul.bf16.gmra.mxu0 %v859
        %v1296 = vpop.f32.mrf.mxu0
        %v1297 = vadd.f32 %v1128, %v1296
        %v1298 = vpop.f32.mrf.mxu0
        %v1299 = vadd.f32 %v1130, %v1298
        %1300 = vmatmul.bf16.gmra.mxu0 %v861
        %v1301 = vpop.f32.mrf.mxu0
        %v1302 = vadd.f32 %v1133, %v1301
        %v1303 = vpop.f32.mrf.mxu0
        %v1304 = vadd.f32 %v1135, %v1303
        %1305 = vmatmul.bf16.gmra.mxu0 %v863
        %v1306 = vpop.f32.mrf.mxu0
        %v1307 = vadd.f32 %v1138, %v1306
        %v1308 = vpop.f32.mrf.mxu0
        %v1309 = vadd.f32 %v1140, %v1308
        %1310 = vmatmul.bf16.gmra.mxu0 %v865
        %v1311 = vpop.f32.mrf.mxu0
        %v1312 = vadd.f32 %v1143, %v1311
        %v1313 = vpop.f32.mrf.mxu0
        %v1314 = vadd.f32 %v1145, %v1313
        %1315 = vmatmul.bf16.gmra.mxu0 %v867
        %v1316 = vpop.f32.mrf.mxu0
        %v1317 = vadd.f32 %v1148, %v1316
        %v1318 = vpop.f32.mrf.mxu0
        %v1319 = vadd.f32 %v1150, %v1318
        %1320 = vmatmul.bf16.gmra.mxu0 %v869
        %v1321 = vpop.f32.mrf.mxu0
        %v1322 = vadd.f32 %v1153, %v1321
        %v1323 = vpop.f32.mrf.mxu0
        %v1324 = vadd.f32 %v1155, %v1323
        %1325 = vmatmul.bf16.gmra.mxu0 %v871
        %v1326 = vpop.f32.mrf.mxu0
        %v1327 = vadd.f32 %v1158, %v1326
        %v1328 = vpop.f32.mrf.mxu0
        %v1329 = vadd.f32 %v1160, %v1328
        %1330 = vmatmul.bf16.gmra.mxu0 %v873
        %v1331 = vpop.f32.mrf.mxu0
        %v1332 = vadd.f32 %v1163, %v1331
        %v1333 = vpop.f32.mrf.mxu0
        %v1334 = vadd.f32 %v1165, %v1333
        %1335 = vmatmul.bf16.gmra.mxu0 %v875
        %v1336 = vpop.f32.mrf.mxu0
        %v1337 = vadd.f32 %v1168, %v1336
        %v1338 = vpop.f32.mrf.mxu0
        %v1339 = vadd.f32 %v1170, %v1338
        %1340 = vmatmul.bf16.gmra.mxu0 %v877
        %v1341 = vpop.f32.mrf.mxu0
        %v1342 = vadd.f32 %v1173, %v1341
        %v1343 = vpop.f32.mrf.mxu0
        %v1344 = vadd.f32 %v1175, %v1343
        %1345 = vmatmul.bf16.gmra.mxu0 %v879
        %v1346 = vpop.f32.mrf.mxu0
        %v1347 = vadd.f32 %v1178, %v1346
        %v1348 = vpop.f32.mrf.mxu0
        %v1349 = vadd.f32 %v1180, %v1348
        %1350 = vmatmul.bf16.gmra.mxu0 %v881
        %v1351 = vpop.f32.mrf.mxu0
        %v1352 = vadd.f32 %v1183, %v1351
        %v1353 = vpop.f32.mrf.mxu0
        %v1354 = vadd.f32 %v1185, %v1353
        %1355 = vmatmul.bf16.gmra.mxu0 %v883
        %v1356 = vpop.f32.mrf.mxu0
        %v1357 = vadd.f32 %v1188, %v1356
        %v1358 = vpop.f32.mrf.mxu0
        %v1359 = vadd.f32 %v1190, %v1358
        %1360 = vmatmul.bf16.gmra.mxu0 %v885
        %v1361 = vpop.f32.mrf.mxu0
        %v1362 = vadd.f32 %v1193, %v1361
        %v1363 = vpop.f32.mrf.mxu0
        %v1364 = vadd.f32 %v1195, %v1363
        %1365 = vmatmul.bf16.gmra.mxu0 %v887
        %v1366 = vpop.f32.mrf.mxu0
        %v1367 = vadd.f32 %v1198, %v1366
        %v1368 = vpop.f32.mrf.mxu0
        %v1369 = vadd.f32 %v1200, %v1368
        %1370 = vmatmul.bf16.gmra.mxu0 %v889
        %v1371 = vpop.f32.mrf.mxu0
        %v1372 = vadd.f32 %v1203, %v1371
        %v1373 = vpop.f32.mrf.mxu0
        %v1374 = vadd.f32 %v1205, %v1373
        %1375 = vmatmul.bf16.gmra.mxu0 %v891
        %v1376 = vpop.f32.mrf.mxu0
        %v1377 = vadd.f32 %v1208, %v1376
        %v1378 = vpop.f32.mrf.mxu0
        %v1379 = vadd.f32 %v1210, %v1378
        %1380 = vmatmul.bf16.gmra.mxu0 %v893
        %v1381 = vpop.f32.mrf.mxu0
        %v1382 = vadd.f32 %v1213, %v1381
        %v1383 = vpop.f32.mrf.mxu0
        %v1384 = vadd.f32 %v1215, %v1383
        %1385 = vmatmul.bf16.gmra.mxu0 %v895
        %v1386 = vpop.f32.mrf.mxu0
        %v1387 = vadd.f32 %v1218, %v1386
        %v1388 = vpop.f32.mrf.mxu0
        %v1389 = vadd.f32 %v1220, %v1388
        %1390 = vmatmul.bf16.gmra.mxu0 %v897
        %v1391 = vpop.f32.mrf.mxu0
        %v1392 = vadd.f32 %v1223, %v1391
        %v1393 = vpop.f32.mrf.mxu0
        %v1394 = vadd.f32 %v1225, %v1393
        %1395 = vdwg.mxu0
        %v1396 = vpack.c.bf16 %v1237, %v1237
        %v1397 = vpack.c.bf16 %v1239, %v1239
        %v1398 = vpack.c.bf16 %v1242, %v1242
        %v1399 = vpack.c.bf16 %v1244, %v1244
        %v1400 = vpack.c.bf16 %v1247, %v1247
        %v1401 = vpack.c.bf16 %v1249, %v1249
        %v1402 = vpack.c.bf16 %v1252, %v1252
        %v1403 = vpack.c.bf16 %v1254, %v1254
        %v1404 = vpack.c.bf16 %v1257, %v1257
        %v1405 = vpack.c.bf16 %v1259, %v1259
        %v1406 = vpack.c.bf16 %v1262, %v1262
        %v1407 = vpack.c.bf16 %v1264, %v1264
        %v1408 = vpack.c.bf16 %v1267, %v1267
        %v1409 = vpack.c.bf16 %v1269, %v1269
        %v1410 = vpack.c.bf16 %v1272, %v1272
        %v1411 = vpack.c.bf16 %v1274, %v1274
        %v1412 = vpack.c.bf16 %v1277, %v1277
        %v1413 = vpack.c.bf16 %v1279, %v1279
        %v1414 = vpack.c.bf16 %v1282, %v1282
        %v1415 = vpack.c.bf16 %v1284, %v1284
        %v1416 = vpack.c.bf16 %v1287, %v1287
        %v1417 = vpack.c.bf16 %v1289, %v1289
        %v1418 = vpack.c.bf16 %v1292, %v1292
        %v1419 = vpack.c.bf16 %v1294, %v1294
        %v1420 = vpack.c.bf16 %v1297, %v1297
        %v1421 = vpack.c.bf16 %v1299, %v1299
        %v1422 = vpack.c.bf16 %v1302, %v1302
        %v1423 = vpack.c.bf16 %v1304, %v1304
        %v1424 = vpack.c.bf16 %v1307, %v1307
        %v1425 = vpack.c.bf16 %v1309, %v1309
        %v1426 = vpack.c.bf16 %v1312, %v1312
        %v1427 = vpack.c.bf16 %v1314, %v1314
        %v1428 = vpack.c.bf16 %v1317, %v1317
        %v1429 = vpack.c.bf16 %v1319, %v1319
        %v1430 = vpack.c.bf16 %v1322, %v1322
        %v1431 = vpack.c.bf16 %v1324, %v1324
        %v1432 = vpack.c.bf16 %v1327, %v1327
        %v1433 = vpack.c.bf16 %v1329, %v1329
        %v1434 = vpack.c.bf16 %v1332, %v1332
        %v1435 = vpack.c.bf16 %v1334, %v1334
        %v1436 = vpack.c.bf16 %v1337, %v1337
        %v1437 = vpack.c.bf16 %v1339, %v1339
        %v1438 = vpack.c.bf16 %v1342, %v1342
        %v1439 = vpack.c.bf16 %v1344, %v1344
        %v1440 = vpack.c.bf16 %v1347, %v1347
        %v1441 = vpack.c.bf16 %v1349, %v1349
        %v1442 = vpack.c.bf16 %v1352, %v1352
        %v1443 = vpack.c.bf16 %v1354, %v1354
        %v1444 = vpack.c.bf16 %v1357, %v1357
        %v1445 = vpack.c.bf16 %v1359, %v1359
        %v1446 = vpack.c.bf16 %v1362, %v1362
        %v1447 = vpack.c.bf16 %v1364, %v1364
        %v1448 = vpack.c.bf16 %v1367, %v1367
        %v1449 = vpack.c.bf16 %v1369, %v1369
        %v1450 = vpack.c.bf16 %v1372, %v1372
        %v1451 = vpack.c.bf16 %v1374, %v1374
        %v1452 = vpack.c.bf16 %v1377, %v1377
        %v1453 = vpack.c.bf16 %v1379, %v1379
        %v1454 = vpack.c.bf16 %v1382, %v1382
        %v1455 = vpack.c.bf16 %v1384, %v1384
        %v1456 = vpack.c.bf16 %v1387, %v1387
        %v1457 = vpack.c.bf16 %v1389, %v1389
        %v1458 = vpack.c.bf16 %v1392, %v1392
        %v1459 = vpack.c.bf16 %v1394, %v1394
        %v1460 = vld [vmem:[%s2] sm:$0xff]
        %v1461 = vld [vmem:[%s2 + $0x8] sm:$0xff]
        %v1462 = vld [vmem:[%s2 + $0x10] sm:$0xff]
        %v1463 = vld [vmem:[%s2 + $0x18] sm:$0xff]
        %v1464 = vld [vmem:[%s2 + $0x20] sm:$0xff]
        %v1465 = vld [vmem:[%s2 + $0x28] sm:$0xff]
        %v1466 = vld [vmem:[%s2 + $0x30] sm:$0xff]
        %v1467 = vld [vmem:[%s2 + $0x38] sm:$0xff]
        %v1468 = vld [vmem:[%s2 + $0x40] sm:$0xff]
        %v1469 = vld [vmem:[%s2 + $0x48] sm:$0xff]
        %v1470 = vld [vmem:[%s2 + $0x50] sm:$0xff]
        %v1471 = vld [vmem:[%s2 + $0x58] sm:$0xff]
        %v1472 = vld [vmem:[%s2 + $0x60] sm:$0xff]
        %v1473 = vld [vmem:[%s2 + $0x68] sm:$0xff]
        %v1474 = vld [vmem:[%s2 + $0x70] sm:$0xff]
        %v1475 = vld [vmem:[%s2 + $0x78] sm:$0xff]
        %v1476 = vld [vmem:[%s2 + $0x80] sm:$0xff]
        %v1477 = vld [vmem:[%s2 + $0x88] sm:$0xff]
        %v1478 = vld [vmem:[%s2 + $0x90] sm:$0xff]
        %v1479 = vld [vmem:[%s2 + $0x98] sm:$0xff]
        %v1480 = vld [vmem:[%s2 + $0xa0] sm:$0xff]
        %v1481 = vld [vmem:[%s2 + $0xa8] sm:$0xff]
        %v1482 = vld [vmem:[%s2 + $0xb0] sm:$0xff]
        %v1483 = vld [vmem:[%s2 + $0xb8] sm:$0xff]
        %v1484 = vld [vmem:[%s2 + $0xc0] sm:$0xff]
        %v1485 = vld [vmem:[%s2 + $0xc8] sm:$0xff]
        %v1486 = vld [vmem:[%s2 + $0xd0] sm:$0xff]
        %v1487 = vld [vmem:[%s2 + $0xd8] sm:$0xff]
        %v1488 = vld [vmem:[%s2 + $0xe0] sm:$0xff]
        %v1489 = vld [vmem:[%s2 + $0xe8] sm:$0xff]
        %v1490 = vld [vmem:[%s2 + $0xf0] sm:$0xff]
        %v1491 = vld [vmem:[%s2 + $0xf8] sm:$0xff]
        %s1492 = scalar_lea.vmem %s2, 256
        %v1493 = vld [vmem:[%s1492] sm:$0xff]
        %v1494 = vld [vmem:[%s1492 + $0x8] sm:$0xff]
        %v1495 = vld [vmem:[%s1492 + $0x10] sm:$0xff]
        %v1496 = vld [vmem:[%s1492 + $0x18] sm:$0xff]
        %v1497 = vld [vmem:[%s1492 + $0x20] sm:$0xff]
        %v1498 = vld [vmem:[%s1492 + $0x28] sm:$0xff]
        %v1499 = vld [vmem:[%s1492 + $0x30] sm:$0xff]
        %v1500 = vld [vmem:[%s1492 + $0x38] sm:$0xff]
        %v1501 = vld [vmem:[%s1492 + $0x40] sm:$0xff]
        %v1502 = vld [vmem:[%s1492 + $0x48] sm:$0xff]
        %v1503 = vld [vmem:[%s1492 + $0x50] sm:$0xff]
        %v1504 = vld [vmem:[%s1492 + $0x58] sm:$0xff]
        %v1505 = vld [vmem:[%s1492 + $0x60] sm:$0xff]
        %v1506 = vld [vmem:[%s1492 + $0x68] sm:$0xff]
        %v1507 = vld [vmem:[%s1492 + $0x70] sm:$0xff]
        %v1508 = vld [vmem:[%s1492 + $0x78] sm:$0xff]
        %v1509 = vld [vmem:[%s1492 + $0x80] sm:$0xff]
        %v1510 = vld [vmem:[%s1492 + $0x88] sm:$0xff]
        %v1511 = vld [vmem:[%s1492 + $0x90] sm:$0xff]
        %v1512 = vld [vmem:[%s1492 + $0x98] sm:$0xff]
        %v1513 = vld [vmem:[%s1492 + $0xa0] sm:$0xff]
        %v1514 = vld [vmem:[%s1492 + $0xa8] sm:$0xff]
        %v1515 = vld [vmem:[%s1492 + $0xb0] sm:$0xff]
        %v1516 = vld [vmem:[%s1492 + $0xb8] sm:$0xff]
        %v1517 = vld [vmem:[%s1492 + $0xc0] sm:$0xff]
        %v1518 = vld [vmem:[%s1492 + $0xc8] sm:$0xff]
        %v1519 = vld [vmem:[%s1492 + $0xd0] sm:$0xff]
        %v1520 = vld [vmem:[%s1492 + $0xd8] sm:$0xff]
        %v1521 = vld [vmem:[%s1492 + $0xe0] sm:$0xff]
        %v1522 = vld [vmem:[%s1492 + $0xe8] sm:$0xff]
        %v1523 = vld [vmem:[%s1492 + $0xf0] sm:$0xff]
        %v1524 = vld [vmem:[%s1492 + $0xf8] sm:$0xff]
        %v1541 = vunpack.c.l.b16 %v1412
        %v1542 = vunpack.c.l.b16 %v1413
        %v1543 = vunpack.c.l.b16 %v1414
        %v1544 = vunpack.c.l.b16 %v1415
        %v1545 = vunpack.c.l.b16 %v1416
        %v1546 = vunpack.c.l.b16 %v1417
        %v1547 = vunpack.c.l.b16 %v1418
        %v1548 = vunpack.c.l.b16 %v1419
        %v1549 = vunpack.c.l.b16 %v1420
        %v1550 = vunpack.c.l.b16 %v1421
        %v1551 = vunpack.c.l.b16 %v1422
        %v1552 = vunpack.c.l.b16 %v1423
        %v1553 = vunpack.c.l.b16 %v1424
        %v1554 = vunpack.c.l.b16 %v1425
        %v1555 = vunpack.c.l.b16 %v1426
        %v1556 = vunpack.c.l.b16 %v1427
        %v1557 = vpack.c.b16 %v1542, %v1541
        %v1558 = vpack.c.b16 %v1544, %v1543
        %v1559 = vpack.c.b16 %v1546, %v1545
        %v1560 = vpack.c.b16 %v1548, %v1547
        %v1561 = vpack.c.b16 %v1550, %v1549
        %v1562 = vpack.c.b16 %v1552, %v1551
        %v1563 = vpack.c.b16 %v1554, %v1553
        %v1564 = vpack.c.b16 %v1556, %v1555
        %v1605 = vunpack.c.l.b16 %v1493
        %v1606 = vunpack.c.h.b16 %v1493
        %v1607 = vunpack.c.l.b16 %v1494
        %v1608 = vunpack.c.h.b16 %v1494
        %v1609 = vunpack.c.l.b16 %v1495
        %v1610 = vunpack.c.h.b16 %v1495
        %v1611 = vunpack.c.l.b16 %v1496
        %v1612 = vunpack.c.h.b16 %v1496
        %v1613 = vunpack.c.l.b16 %v1497
        %v1614 = vunpack.c.h.b16 %v1497
        %v1615 = vunpack.c.l.b16 %v1498
        %v1616 = vunpack.c.h.b16 %v1498
        %v1617 = vunpack.c.l.b16 %v1499
        %v1618 = vunpack.c.h.b16 %v1499
        %v1619 = vunpack.c.l.b16 %v1500
        %v1620 = vunpack.c.h.b16 %v1500
        %v1621 = vunpack.c.l.b16 %v1501
        %v1622 = vunpack.c.h.b16 %v1501
        %v1623 = vunpack.c.l.b16 %v1502
        %v1624 = vunpack.c.h.b16 %v1502
        %v1625 = vunpack.c.l.b16 %v1503
        %v1626 = vunpack.c.h.b16 %v1503
        %v1627 = vunpack.c.l.b16 %v1504
        %v1628 = vunpack.c.h.b16 %v1504
        %v1629 = vunpack.c.l.b16 %v1505
        %v1630 = vunpack.c.h.b16 %v1505
        %v1631 = vunpack.c.l.b16 %v1506
        %v1632 = vunpack.c.h.b16 %v1506
        %v1633 = vunpack.c.l.b16 %v1507
        %v1634 = vunpack.c.h.b16 %v1507
        %v1635 = vunpack.c.l.b16 %v1508
        %v1636 = vunpack.c.h.b16 %v1508
        %v1637 = vunpack.c.l.b16 %v1509
        %v1638 = vunpack.c.h.b16 %v1509
        %v1639 = vunpack.c.l.b16 %v1510
        %v1640 = vunpack.c.h.b16 %v1510
        %v1641 = vunpack.c.l.b16 %v1511
        %v1642 = vunpack.c.h.b16 %v1511
        %v1643 = vunpack.c.l.b16 %v1512
        %v1644 = vunpack.c.h.b16 %v1512
        %v1645 = vunpack.c.l.b16 %v1513
        %v1646 = vunpack.c.h.b16 %v1513
        %v1647 = vunpack.c.l.b16 %v1514
        %v1648 = vunpack.c.h.b16 %v1514
        %v1649 = vunpack.c.l.b16 %v1515
        %v1650 = vunpack.c.h.b16 %v1515
        %v1651 = vunpack.c.l.b16 %v1516
        %v1652 = vunpack.c.h.b16 %v1516
        %v1653 = vunpack.c.l.b16 %v1517
        %v1654 = vunpack.c.h.b16 %v1517
        %v1655 = vunpack.c.l.b16 %v1518
        %v1656 = vunpack.c.h.b16 %v1518
        %v1657 = vunpack.c.l.b16 %v1519
        %v1658 = vunpack.c.h.b16 %v1519
        %v1659 = vunpack.c.l.b16 %v1520
        %v1660 = vunpack.c.h.b16 %v1520
        %v1661 = vunpack.c.l.b16 %v1521
        %v1662 = vunpack.c.h.b16 %v1521
        %v1663 = vunpack.c.l.b16 %v1522
        %v1664 = vunpack.c.h.b16 %v1522
        %v1665 = vunpack.c.l.b16 %v1523
        %v1666 = vunpack.c.h.b16 %v1523
        %v1667 = vunpack.c.l.b16 %v1524
        %v1668 = vunpack.c.h.b16 %v1524
        %v1669 = vpack.c.b16 %v1609, %v1605
        %v1670 = vpack.c.b16 %v1610, %v1606
        %v1671 = vpack.c.b16 %v1611, %v1607
        %v1672 = vpack.c.b16 %v1612, %v1608
        %v1673 = vpack.c.b16 %v1617, %v1613
        %v1674 = vpack.c.b16 %v1618, %v1614
        %v1675 = vpack.c.b16 %v1619, %v1615
        %v1676 = vpack.c.b16 %v1620, %v1616
        %v1677 = vpack.c.b16 %v1625, %v1621
        %v1678 = vpack.c.b16 %v1626, %v1622
        %v1679 = vpack.c.b16 %v1627, %v1623
        %v1680 = vpack.c.b16 %v1628, %v1624
        %v1681 = vpack.c.b16 %v1633, %v1629
        %v1682 = vpack.c.b16 %v1634, %v1630
        %v1683 = vpack.c.b16 %v1635, %v1631
        %v1684 = vpack.c.b16 %v1636, %v1632
        %v1685 = vpack.c.b16 %v1641, %v1637
        %v1686 = vpack.c.b16 %v1642, %v1638
        %v1687 = vpack.c.b16 %v1643, %v1639
        %v1688 = vpack.c.b16 %v1644, %v1640
        %v1689 = vpack.c.b16 %v1649, %v1645
        %v1690 = vpack.c.b16 %v1650, %v1646
        %v1691 = vpack.c.b16 %v1651, %v1647
        %v1692 = vpack.c.b16 %v1652, %v1648
        %v1693 = vpack.c.b16 %v1657, %v1653
        %v1694 = vpack.c.b16 %v1658, %v1654
        %v1695 = vpack.c.b16 %v1659, %v1655
        %v1696 = vpack.c.b16 %v1660, %v1656
        %v1697 = vpack.c.b16 %v1665, %v1661
        %v1698 = vpack.c.b16 %v1666, %v1662
        %v1699 = vpack.c.b16 %v1667, %v1663
        %v1700 = vpack.c.b16 %v1668, %v1664
        %1733 = vmatpush.bf16.msra.mxu0 %v1697
        %1734 = vmatpush.bf16.msra.mxu0 %v1693
        %1735 = vmatpush.bf16.msra.mxu0 %v1689
        %1736 = vmatpush.bf16.msra.mxu0 %v1685
        %1737 = vmatpush.bf16.msra.mxu0 %v1681
        %1738 = vmatpush.bf16.msra.mxu0 %v1677
        %1739 = vmatpush.bf16.msra.mxu0 %v1673
        %1740 = vmatpush.bf16.msra.mxu0 %v1669
        %1741 = vmatmul.bf16.gmra.mxu0 %v1557
        %v1742 = vpop.f32.mrf.mxu0
        %v1743 = vadd.f32 0.0, %v1742
        %v1744 = vpop.f32.mrf.mxu0
        %v1745 = vadd.f32 0.0, %v1744
        %1746 = vmatmul.bf16.gmra.mxu0 %v1558
        %v1747 = vpop.f32.mrf.mxu0
        %v1748 = vadd.f32 0.0, %v1747
        %v1749 = vpop.f32.mrf.mxu0
        %v1750 = vadd.f32 0.0, %v1749
        %1751 = vmatmul.bf16.gmra.mxu0 %v1559
        %v1752 = vpop.f32.mrf.mxu0
        %v1753 = vadd.f32 0.0, %v1752
        %v1754 = vpop.f32.mrf.mxu0
        %v1755 = vadd.f32 0.0, %v1754
        %1756 = vmatmul.bf16.gmra.mxu0 %v1560
        %v1757 = vpop.f32.mrf.mxu0
        %v1758 = vadd.f32 0.0, %v1757
        %v1759 = vpop.f32.mrf.mxu0
        %v1760 = vadd.f32 0.0, %v1759
        %1761 = vmatmul.bf16.gmra.mxu0 %v1561
        %v1762 = vpop.f32.mrf.mxu0
        %v1763 = vadd.f32 0.0, %v1762
        %v1764 = vpop.f32.mrf.mxu0
        %v1765 = vadd.f32 0.0, %v1764
        %1766 = vmatmul.bf16.gmra.mxu0 %v1562
        %v1767 = vpop.f32.mrf.mxu0
        %v1768 = vadd.f32 0.0, %v1767
        %v1769 = vpop.f32.mrf.mxu0
        %v1770 = vadd.f32 0.0, %v1769
        %1771 = vmatmul.bf16.gmra.mxu0 %v1563
        %v1772 = vpop.f32.mrf.mxu0
        %v1773 = vadd.f32 0.0, %v1772
        %v1774 = vpop.f32.mrf.mxu0
        %v1775 = vadd.f32 0.0, %v1774
        %1776 = vmatmul.bf16.gmra.mxu0 %v1564
        %v1777 = vpop.f32.mrf.mxu0
        %v1778 = vadd.f32 0.0, %v1777
        %v1779 = vpop.f32.mrf.mxu0
        %v1780 = vadd.f32 0.0, %v1779
        %1781 = vdwg.mxu0
        %1782 = vmatpush.bf16.msra.mxu0 %v1698
        %1783 = vmatpush.bf16.msra.mxu0 %v1694
        %1784 = vmatpush.bf16.msra.mxu0 %v1690
        %1785 = vmatpush.bf16.msra.mxu0 %v1686
        %1786 = vmatpush.bf16.msra.mxu0 %v1682
        %1787 = vmatpush.bf16.msra.mxu0 %v1678
        %1788 = vmatpush.bf16.msra.mxu0 %v1674
        %1789 = vmatpush.bf16.msra.mxu0 %v1670
        %1790 = vmatmul.bf16.gmra.mxu0 %v1557
        %v1791 = vpop.f32.mrf.mxu0
        %v1792 = vadd.f32 0.0, %v1791
        %v1793 = vpop.f32.mrf.mxu0
        %v1794 = vadd.f32 0.0, %v1793
        %1795 = vmatmul.bf16.gmra.mxu0 %v1558
        %v1796 = vpop.f32.mrf.mxu0
        %v1797 = vadd.f32 0.0, %v1796
        %v1798 = vpop.f32.mrf.mxu0
        %v1799 = vadd.f32 0.0, %v1798
        %1800 = vmatmul.bf16.gmra.mxu0 %v1559
        %v1801 = vpop.f32.mrf.mxu0
        %v1802 = vadd.f32 0.0, %v1801
        %v1803 = vpop.f32.mrf.mxu0
        %v1804 = vadd.f32 0.0, %v1803
        %1805 = vmatmul.bf16.gmra.mxu0 %v1560
        %v1806 = vpop.f32.mrf.mxu0
        %v1807 = vadd.f32 0.0, %v1806
        %v1808 = vpop.f32.mrf.mxu0
        %v1809 = vadd.f32 0.0, %v1808
        %1810 = vmatmul.bf16.gmra.mxu0 %v1561
        %v1811 = vpop.f32.mrf.mxu0
        %v1812 = vadd.f32 0.0, %v1811
        %v1813 = vpop.f32.mrf.mxu0
        %v1814 = vadd.f32 0.0, %v1813
        %1815 = vmatmul.bf16.gmra.mxu0 %v1562
        %v1816 = vpop.f32.mrf.mxu0
        %v1817 = vadd.f32 0.0, %v1816
        %v1818 = vpop.f32.mrf.mxu0
        %v1819 = vadd.f32 0.0, %v1818
        %1820 = vmatmul.bf16.gmra.mxu0 %v1563
        %v1821 = vpop.f32.mrf.mxu0
        %v1822 = vadd.f32 0.0, %v1821
        %v1823 = vpop.f32.mrf.mxu0
        %v1824 = vadd.f32 0.0, %v1823
        %1825 = vmatmul.bf16.gmra.mxu0 %v1564
        %v1826 = vpop.f32.mrf.mxu0
        %v1827 = vadd.f32 0.0, %v1826
        %v1828 = vpop.f32.mrf.mxu0
        %v1829 = vadd.f32 0.0, %v1828
        %1830 = vdwg.mxu0
        %1831 = vmatpush.bf16.msra.mxu0 %v1699
        %1832 = vmatpush.bf16.msra.mxu0 %v1695
        %1833 = vmatpush.bf16.msra.mxu0 %v1691
        %1834 = vmatpush.bf16.msra.mxu0 %v1687
        %1835 = vmatpush.bf16.msra.mxu0 %v1683
        %1836 = vmatpush.bf16.msra.mxu0 %v1679
        %1837 = vmatpush.bf16.msra.mxu0 %v1675
        %1838 = vmatpush.bf16.msra.mxu0 %v1671
        %1839 = vmatmul.bf16.gmra.mxu0 %v1557
        %v1840 = vpop.f32.mrf.mxu0
        %v1841 = vadd.f32 0.0, %v1840
        %v1842 = vpop.f32.mrf.mxu0
        %v1843 = vadd.f32 0.0, %v1842
        %1844 = vmatmul.bf16.gmra.mxu0 %v1558
        %v1845 = vpop.f32.mrf.mxu0
        %v1846 = vadd.f32 0.0, %v1845
        %v1847 = vpop.f32.mrf.mxu0
        %v1848 = vadd.f32 0.0, %v1847
        %1849 = vmatmul.bf16.gmra.mxu0 %v1559
        %v1850 = vpop.f32.mrf.mxu0
        %v1851 = vadd.f32 0.0, %v1850
        %v1852 = vpop.f32.mrf.mxu0
        %v1853 = vadd.f32 0.0, %v1852
        %1854 = vmatmul.bf16.gmra.mxu0 %v1560
        %v1855 = vpop.f32.mrf.mxu0
        %v1856 = vadd.f32 0.0, %v1855
        %v1857 = vpop.f32.mrf.mxu0
        %v1858 = vadd.f32 0.0, %v1857
        %1859 = vmatmul.bf16.gmra.mxu0 %v1561
        %v1860 = vpop.f32.mrf.mxu0
        %v1861 = vadd.f32 0.0, %v1860
        %v1862 = vpop.f32.mrf.mxu0
        %v1863 = vadd.f32 0.0, %v1862
        %1864 = vmatmul.bf16.gmra.mxu0 %v1562
        %v1865 = vpop.f32.mrf.mxu0
        %v1866 = vadd.f32 0.0, %v1865
        %v1867 = vpop.f32.mrf.mxu0
        %v1868 = vadd.f32 0.0, %v1867
        %1869 = vmatmul.bf16.gmra.mxu0 %v1563
        %v1870 = vpop.f32.mrf.mxu0
        %v1871 = vadd.f32 0.0, %v1870
        %v1872 = vpop.f32.mrf.mxu0
        %v1873 = vadd.f32 0.0, %v1872
        %1874 = vmatmul.bf16.gmra.mxu0 %v1564
        %v1875 = vpop.f32.mrf.mxu0
        %v1876 = vadd.f32 0.0, %v1875
        %v1877 = vpop.f32.mrf.mxu0
        %v1878 = vadd.f32 0.0, %v1877
        %1879 = vdwg.mxu0
        %1880 = vmatpush.bf16.msra.mxu0 %v1700
        %1881 = vmatpush.bf16.msra.mxu0 %v1696
        %1882 = vmatpush.bf16.msra.mxu0 %v1692
        %1883 = vmatpush.bf16.msra.mxu0 %v1688
        %1884 = vmatpush.bf16.msra.mxu0 %v1684
        %1885 = vmatpush.bf16.msra.mxu0 %v1680
        %1886 = vmatpush.bf16.msra.mxu0 %v1676
        %1887 = vmatpush.bf16.msra.mxu0 %v1672
        %1888 = vmatmul.bf16.gmra.mxu0 %v1557
        %v1889 = vpop.f32.mrf.mxu0
        %v1890 = vadd.f32 0.0, %v1889
        %v1891 = vpop.f32.mrf.mxu0
        %v1892 = vadd.f32 0.0, %v1891
        %1893 = vmatmul.bf16.gmra.mxu0 %v1558
        %v1894 = vpop.f32.mrf.mxu0
        %v1895 = vadd.f32 0.0, %v1894
        %v1896 = vpop.f32.mrf.mxu0
        %v1897 = vadd.f32 0.0, %v1896
        %1898 = vmatmul.bf16.gmra.mxu0 %v1559
        %v1899 = vpop.f32.mrf.mxu0
        %v1900 = vadd.f32 0.0, %v1899
        %v1901 = vpop.f32.mrf.mxu0
        %v1902 = vadd.f32 0.0, %v1901
        %1903 = vmatmul.bf16.gmra.mxu0 %v1560
        %v1904 = vpop.f32.mrf.mxu0
        %v1905 = vadd.f32 0.0, %v1904
        %v1906 = vpop.f32.mrf.mxu0
        %v1907 = vadd.f32 0.0, %v1906
        %1908 = vmatmul.bf16.gmra.mxu0 %v1561
        %v1909 = vpop.f32.mrf.mxu0
        %v1910 = vadd.f32 0.0, %v1909
        %v1911 = vpop.f32.mrf.mxu0
        %v1912 = vadd.f32 0.0, %v1911
        %1913 = vmatmul.bf16.gmra.mxu0 %v1562
        %v1914 = vpop.f32.mrf.mxu0
        %v1915 = vadd.f32 0.0, %v1914
        %v1916 = vpop.f32.mrf.mxu0
        %v1917 = vadd.f32 0.0, %v1916
        %1918 = vmatmul.bf16.gmra.mxu0 %v1563
        %v1919 = vpop.f32.mrf.mxu0
        %v1920 = vadd.f32 0.0, %v1919
        %v1921 = vpop.f32.mrf.mxu0
        %v1922 = vadd.f32 0.0, %v1921
        %1923 = vmatmul.bf16.gmra.mxu0 %v1564
        %v1924 = vpop.f32.mrf.mxu0
        %v1925 = vadd.f32 0.0, %v1924
        %v1926 = vpop.f32.mrf.mxu0
        %v1927 = vadd.f32 0.0, %v1926
        %1928 = vdwg.mxu0
        %v1945 = vunpack.c.l.b16 %v1396
        %v1946 = vunpack.c.l.b16 %v1397
        %v1947 = vunpack.c.l.b16 %v1398
        %v1948 = vunpack.c.l.b16 %v1399
        %v1949 = vunpack.c.l.b16 %v1400
        %v1950 = vunpack.c.l.b16 %v1401
        %v1951 = vunpack.c.l.b16 %v1402
        %v1952 = vunpack.c.l.b16 %v1403
        %v1953 = vunpack.c.l.b16 %v1404
        %v1954 = vunpack.c.l.b16 %v1405
        %v1955 = vunpack.c.l.b16 %v1406
        %v1956 = vunpack.c.l.b16 %v1407
        %v1957 = vunpack.c.l.b16 %v1408
        %v1958 = vunpack.c.l.b16 %v1409
        %v1959 = vunpack.c.l.b16 %v1410
        %v1960 = vunpack.c.l.b16 %v1411
        %v1961 = vpack.c.b16 %v1946, %v1945
        %v1962 = vpack.c.b16 %v1948, %v1947
        %v1963 = vpack.c.b16 %v1950, %v1949
        %v1964 = vpack.c.b16 %v1952, %v1951
        %v1965 = vpack.c.b16 %v1954, %v1953
        %v1966 = vpack.c.b16 %v1956, %v1955
        %v1967 = vpack.c.b16 %v1958, %v1957
        %v1968 = vpack.c.b16 %v1960, %v1959
        %v2009 = vunpack.c.l.b16 %v1460
        %v2010 = vunpack.c.h.b16 %v1460
        %v2011 = vunpack.c.l.b16 %v1461
        %v2012 = vunpack.c.h.b16 %v1461
        %v2013 = vunpack.c.l.b16 %v1462
        %v2014 = vunpack.c.h.b16 %v1462
        %v2015 = vunpack.c.l.b16 %v1463
        %v2016 = vunpack.c.h.b16 %v1463
        %v2017 = vunpack.c.l.b16 %v1464
        %v2018 = vunpack.c.h.b16 %v1464
        %v2019 = vunpack.c.l.b16 %v1465
        %v2020 = vunpack.c.h.b16 %v1465
        %v2021 = vunpack.c.l.b16 %v1466
        %v2022 = vunpack.c.h.b16 %v1466
        %v2023 = vunpack.c.l.b16 %v1467
        %v2024 = vunpack.c.h.b16 %v1467
        %v2025 = vunpack.c.l.b16 %v1468
        %v2026 = vunpack.c.h.b16 %v1468
        %v2027 = vunpack.c.l.b16 %v1469
        %v2028 = vunpack.c.h.b16 %v1469
        %v2029 = vunpack.c.l.b16 %v1470
        %v2030 = vunpack.c.h.b16 %v1470
        %v2031 = vunpack.c.l.b16 %v1471
        %v2032 = vunpack.c.h.b16 %v1471
        %v2033 = vunpack.c.l.b16 %v1472
        %v2034 = vunpack.c.h.b16 %v1472
        %v2035 = vunpack.c.l.b16 %v1473
        %v2036 = vunpack.c.h.b16 %v1473
        %v2037 = vunpack.c.l.b16 %v1474
        %v2038 = vunpack.c.h.b16 %v1474
        %v2039 = vunpack.c.l.b16 %v1475
        %v2040 = vunpack.c.h.b16 %v1475
        %v2041 = vunpack.c.l.b16 %v1476
        %v2042 = vunpack.c.h.b16 %v1476
        %v2043 = vunpack.c.l.b16 %v1477
        %v2044 = vunpack.c.h.b16 %v1477
        %v2045 = vunpack.c.l.b16 %v1478
        %v2046 = vunpack.c.h.b16 %v1478
        %v2047 = vunpack.c.l.b16 %v1479
        %v2048 = vunpack.c.h.b16 %v1479
        %v2049 = vunpack.c.l.b16 %v1480
        %v2050 = vunpack.c.h.b16 %v1480
        %v2051 = vunpack.c.l.b16 %v1481
        %v2052 = vunpack.c.h.b16 %v1481
        %v2053 = vunpack.c.l.b16 %v1482
        %v2054 = vunpack.c.h.b16 %v1482
        %v2055 = vunpack.c.l.b16 %v1483
        %v2056 = vunpack.c.h.b16 %v1483
        %v2057 = vunpack.c.l.b16 %v1484
        %v2058 = vunpack.c.h.b16 %v1484
        %v2059 = vunpack.c.l.b16 %v1485
        %v2060 = vunpack.c.h.b16 %v1485
        %v2061 = vunpack.c.l.b16 %v1486
        %v2062 = vunpack.c.h.b16 %v1486
        %v2063 = vunpack.c.l.b16 %v1487
        %v2064 = vunpack.c.h.b16 %v1487
        %v2065 = vunpack.c.l.b16 %v1488
        %v2066 = vunpack.c.h.b16 %v1488
        %v2067 = vunpack.c.l.b16 %v1489
        %v2068 = vunpack.c.h.b16 %v1489
        %v2069 = vunpack.c.l.b16 %v1490
        %v2070 = vunpack.c.h.b16 %v1490
        %v2071 = vunpack.c.l.b16 %v1491
        %v2072 = vunpack.c.h.b16 %v1491
        %v2073 = vpack.c.b16 %v2013, %v2009
        %v2074 = vpack.c.b16 %v2014, %v2010
        %v2075 = vpack.c.b16 %v2015, %v2011
        %v2076 = vpack.c.b16 %v2016, %v2012
        %v2077 = vpack.c.b16 %v2021, %v2017
        %v2078 = vpack.c.b16 %v2022, %v2018
        %v2079 = vpack.c.b16 %v2023, %v2019
        %v2080 = vpack.c.b16 %v2024, %v2020
        %v2081 = vpack.c.b16 %v2029, %v2025
        %v2082 = vpack.c.b16 %v2030, %v2026
        %v2083 = vpack.c.b16 %v2031, %v2027
        %v2084 = vpack.c.b16 %v2032, %v2028
        %v2085 = vpack.c.b16 %v2037, %v2033
        %v2086 = vpack.c.b16 %v2038, %v2034
        %v2087 = vpack.c.b16 %v2039, %v2035
        %v2088 = vpack.c.b16 %v2040, %v2036
        %v2089 = vpack.c.b16 %v2045, %v2041
        %v2090 = vpack.c.b16 %v2046, %v2042
        %v2091 = vpack.c.b16 %v2047, %v2043
        %v2092 = vpack.c.b16 %v2048, %v2044
        %v2093 = vpack.c.b16 %v2053, %v2049
        %v2094 = vpack.c.b16 %v2054, %v2050
        %v2095 = vpack.c.b16 %v2055, %v2051
        %v2096 = vpack.c.b16 %v2056, %v2052
        %v2097 = vpack.c.b16 %v2061, %v2057
        %v2098 = vpack.c.b16 %v2062, %v2058
        %v2099 = vpack.c.b16 %v2063, %v2059
        %v2100 = vpack.c.b16 %v2064, %v2060
        %v2101 = vpack.c.b16 %v2069, %v2065
        %v2102 = vpack.c.b16 %v2070, %v2066
        %v2103 = vpack.c.b16 %v2071, %v2067
        %v2104 = vpack.c.b16 %v2072, %v2068
        %2137 = vmatpush.bf16.msra.mxu0 %v2101
        %2138 = vmatpush.bf16.msra.mxu0 %v2097
        %2139 = vmatpush.bf16.msra.mxu0 %v2093
        %2140 = vmatpush.bf16.msra.mxu0 %v2089
        %2141 = vmatpush.bf16.msra.mxu0 %v2085
        %2142 = vmatpush.bf16.msra.mxu0 %v2081
        %2143 = vmatpush.bf16.msra.mxu0 %v2077
        %2144 = vmatpush.bf16.msra.mxu0 %v2073
        %2145 = vmatmul.bf16.gmra.mxu0 %v1961
        %v2146 = vpop.f32.mrf.mxu0
        %v2147 = vadd.f32 %v1743, %v2146
        %v2148 = vpop.f32.mrf.mxu0
        %v2149 = vadd.f32 %v1745, %v2148
        %2150 = vmatmul.bf16.gmra.mxu0 %v1962
        %v2151 = vpop.f32.mrf.mxu0
        %v2152 = vadd.f32 %v1748, %v2151
        %v2153 = vpop.f32.mrf.mxu0
        %v2154 = vadd.f32 %v1750, %v2153
        %2155 = vmatmul.bf16.gmra.mxu0 %v1963
        %v2156 = vpop.f32.mrf.mxu0
        %v2157 = vadd.f32 %v1753, %v2156
        %v2158 = vpop.f32.mrf.mxu0
        %v2159 = vadd.f32 %v1755, %v2158
        %2160 = vmatmul.bf16.gmra.mxu0 %v1964
        %v2161 = vpop.f32.mrf.mxu0
        %v2162 = vadd.f32 %v1758, %v2161
        %v2163 = vpop.f32.mrf.mxu0
        %v2164 = vadd.f32 %v1760, %v2163
        %2165 = vmatmul.bf16.gmra.mxu0 %v1965
        %v2166 = vpop.f32.mrf.mxu0
        %v2167 = vadd.f32 %v1763, %v2166
        %v2168 = vpop.f32.mrf.mxu0
        %v2169 = vadd.f32 %v1765, %v2168
        %2170 = vmatmul.bf16.gmra.mxu0 %v1966
        %v2171 = vpop.f32.mrf.mxu0
        %v2172 = vadd.f32 %v1768, %v2171
        %v2173 = vpop.f32.mrf.mxu0
        %v2174 = vadd.f32 %v1770, %v2173
        %2175 = vmatmul.bf16.gmra.mxu0 %v1967
        %v2176 = vpop.f32.mrf.mxu0
        %v2177 = vadd.f32 %v1773, %v2176
        %v2178 = vpop.f32.mrf.mxu0
        %v2179 = vadd.f32 %v1775, %v2178
        %2180 = vmatmul.bf16.gmra.mxu0 %v1968
        %v2181 = vpop.f32.mrf.mxu0
        %v2182 = vadd.f32 %v1778, %v2181
        %v2183 = vpop.f32.mrf.mxu0
        %v2184 = vadd.f32 %v1780, %v2183
        %2185 = vdwg.mxu0
        %2186 = vmatpush.bf16.msra.mxu0 %v2102
        %2187 = vmatpush.bf16.msra.mxu0 %v2098
        %2188 = vmatpush.bf16.msra.mxu0 %v2094
        %2189 = vmatpush.bf16.msra.mxu0 %v2090
        %2190 = vmatpush.bf16.msra.mxu0 %v2086
        %2191 = vmatpush.bf16.msra.mxu0 %v2082
        %2192 = vmatpush.bf16.msra.mxu0 %v2078
        %2193 = vmatpush.bf16.msra.mxu0 %v2074
        %2194 = vmatmul.bf16.gmra.mxu0 %v1961
        %v2195 = vpop.f32.mrf.mxu0
        %v2196 = vadd.f32 %v1792, %v2195
        %v2197 = vpop.f32.mrf.mxu0
        %v2198 = vadd.f32 %v1794, %v2197
        %2199 = vmatmul.bf16.gmra.mxu0 %v1962
        %v2200 = vpop.f32.mrf.mxu0
        %v2201 = vadd.f32 %v1797, %v2200
        %v2202 = vpop.f32.mrf.mxu0
        %v2203 = vadd.f32 %v1799, %v2202
        %2204 = vmatmul.bf16.gmra.mxu0 %v1963
        %v2205 = vpop.f32.mrf.mxu0
        %v2206 = vadd.f32 %v1802, %v2205
        %v2207 = vpop.f32.mrf.mxu0
        %v2208 = vadd.f32 %v1804, %v2207
        %2209 = vmatmul.bf16.gmra.mxu0 %v1964
        %v2210 = vpop.f32.mrf.mxu0
        %v2211 = vadd.f32 %v1807, %v2210
        %v2212 = vpop.f32.mrf.mxu0
        %v2213 = vadd.f32 %v1809, %v2212
        %2214 = vmatmul.bf16.gmra.mxu0 %v1965
        %v2215 = vpop.f32.mrf.mxu0
        %v2216 = vadd.f32 %v1812, %v2215
        %v2217 = vpop.f32.mrf.mxu0
        %v2218 = vadd.f32 %v1814, %v2217
        %2219 = vmatmul.bf16.gmra.mxu0 %v1966
        %v2220 = vpop.f32.mrf.mxu0
        %v2221 = vadd.f32 %v1817, %v2220
        %v2222 = vpop.f32.mrf.mxu0
        %v2223 = vadd.f32 %v1819, %v2222
        %2224 = vmatmul.bf16.gmra.mxu0 %v1967
        %v2225 = vpop.f32.mrf.mxu0
        %v2226 = vadd.f32 %v1822, %v2225
        %v2227 = vpop.f32.mrf.mxu0
        %v2228 = vadd.f32 %v1824, %v2227
        %2229 = vmatmul.bf16.gmra.mxu0 %v1968
        %v2230 = vpop.f32.mrf.mxu0
        %v2231 = vadd.f32 %v1827, %v2230
        %v2232 = vpop.f32.mrf.mxu0
        %v2233 = vadd.f32 %v1829, %v2232
        %2234 = vdwg.mxu0
        %2235 = vmatpush.bf16.msra.mxu0 %v2103
        %2236 = vmatpush.bf16.msra.mxu0 %v2099
        %2237 = vmatpush.bf16.msra.mxu0 %v2095
        %2238 = vmatpush.bf16.msra.mxu0 %v2091
        %2239 = vmatpush.bf16.msra.mxu0 %v2087
        %2240 = vmatpush.bf16.msra.mxu0 %v2083
        %2241 = vmatpush.bf16.msra.mxu0 %v2079
        %2242 = vmatpush.bf16.msra.mxu0 %v2075
        %2243 = vmatmul.bf16.gmra.mxu0 %v1961
        %v2244 = vpop.f32.mrf.mxu0
        %v2245 = vadd.f32 %v1841, %v2244
        %v2246 = vpop.f32.mrf.mxu0
        %v2247 = vadd.f32 %v1843, %v2246
        %2248 = vmatmul.bf16.gmra.mxu0 %v1962
        %v2249 = vpop.f32.mrf.mxu0
        %v2250 = vadd.f32 %v1846, %v2249
        %v2251 = vpop.f32.mrf.mxu0
        %v2252 = vadd.f32 %v1848, %v2251
        %2253 = vmatmul.bf16.gmra.mxu0 %v1963
        %v2254 = vpop.f32.mrf.mxu0
        %v2255 = vadd.f32 %v1851, %v2254
        %v2256 = vpop.f32.mrf.mxu0
        %v2257 = vadd.f32 %v1853, %v2256
        %2258 = vmatmul.bf16.gmra.mxu0 %v1964
        %v2259 = vpop.f32.mrf.mxu0
        %v2260 = vadd.f32 %v1856, %v2259
        %v2261 = vpop.f32.mrf.mxu0
        %v2262 = vadd.f32 %v1858, %v2261
        %2263 = vmatmul.bf16.gmra.mxu0 %v1965
        %v2264 = vpop.f32.mrf.mxu0
        %v2265 = vadd.f32 %v1861, %v2264
        %v2266 = vpop.f32.mrf.mxu0
        %v2267 = vadd.f32 %v1863, %v2266
        %2268 = vmatmul.bf16.gmra.mxu0 %v1966
        %v2269 = vpop.f32.mrf.mxu0
        %v2270 = vadd.f32 %v1866, %v2269
        %v2271 = vpop.f32.mrf.mxu0
        %v2272 = vadd.f32 %v1868, %v2271
        %2273 = vmatmul.bf16.gmra.mxu0 %v1967
        %v2274 = vpop.f32.mrf.mxu0
        %v2275 = vadd.f32 %v1871, %v2274
        %v2276 = vpop.f32.mrf.mxu0
        %v2277 = vadd.f32 %v1873, %v2276
        %2278 = vmatmul.bf16.gmra.mxu0 %v1968
        %v2279 = vpop.f32.mrf.mxu0
        %v2280 = vadd.f32 %v1876, %v2279
        %v2281 = vpop.f32.mrf.mxu0
        %v2282 = vadd.f32 %v1878, %v2281
        %2283 = vdwg.mxu0
        %2284 = vmatpush.bf16.msra.mxu0 %v2104
        %2285 = vmatpush.bf16.msra.mxu0 %v2100
        %2286 = vmatpush.bf16.msra.mxu0 %v2096
        %2287 = vmatpush.bf16.msra.mxu0 %v2092
        %2288 = vmatpush.bf16.msra.mxu0 %v2088
        %2289 = vmatpush.bf16.msra.mxu0 %v2084
        %2290 = vmatpush.bf16.msra.mxu0 %v2080
        %2291 = vmatpush.bf16.msra.mxu0 %v2076
        %2292 = vmatmul.bf16.gmra.mxu0 %v1961
        %v2293 = vpop.f32.mrf.mxu0
        %v2294 = vadd.f32 %v1890, %v2293
        %v2295 = vpop.f32.mrf.mxu0
        %v2296 = vadd.f32 %v1892, %v2295
        %2297 = vmatmul.bf16.gmra.mxu0 %v1962
        %v2298 = vpop.f32.mrf.mxu0
        %v2299 = vadd.f32 %v1895, %v2298
        %v2300 = vpop.f32.mrf.mxu0
        %v2301 = vadd.f32 %v1897, %v2300
        %2302 = vmatmul.bf16.gmra.mxu0 %v1963
        %v2303 = vpop.f32.mrf.mxu0
        %v2304 = vadd.f32 %v1900, %v2303
        %v2305 = vpop.f32.mrf.mxu0
        %v2306 = vadd.f32 %v1902, %v2305
        %2307 = vmatmul.bf16.gmra.mxu0 %v1964
        %v2308 = vpop.f32.mrf.mxu0
        %v2309 = vadd.f32 %v1905, %v2308
        %v2310 = vpop.f32.mrf.mxu0
        %v2311 = vadd.f32 %v1907, %v2310
        %2312 = vmatmul.bf16.gmra.mxu0 %v1965
        %v2313 = vpop.f32.mrf.mxu0
        %v2314 = vadd.f32 %v1910, %v2313
        %v2315 = vpop.f32.mrf.mxu0
        %v2316 = vadd.f32 %v1912, %v2315
        %2317 = vmatmul.bf16.gmra.mxu0 %v1966
        %v2318 = vpop.f32.mrf.mxu0
        %v2319 = vadd.f32 %v1915, %v2318
        %v2320 = vpop.f32.mrf.mxu0
        %v2321 = vadd.f32 %v1917, %v2320
        %2322 = vmatmul.bf16.gmra.mxu0 %v1967
        %v2323 = vpop.f32.mrf.mxu0
        %v2324 = vadd.f32 %v1920, %v2323
        %v2325 = vpop.f32.mrf.mxu0
        %v2326 = vadd.f32 %v1922, %v2325
        %2327 = vmatmul.bf16.gmra.mxu0 %v1968
        %v2328 = vpop.f32.mrf.mxu0
        %v2329 = vadd.f32 %v1925, %v2328
        %v2330 = vpop.f32.mrf.mxu0
        %v2331 = vadd.f32 %v1927, %v2330
        %2332 = vdwg.mxu0
        %s2333 = scalar_lea.vmem %s2, 512
        %v2334 = vld [vmem:[%s2333] sm:$0xff]
        %v2335 = vld [vmem:[%s2333 + $0x8] sm:$0xff]
        %v2336 = vld [vmem:[%s2333 + $0x10] sm:$0xff]
        %v2337 = vld [vmem:[%s2333 + $0x18] sm:$0xff]
        %v2338 = vld [vmem:[%s2333 + $0x20] sm:$0xff]
        %v2339 = vld [vmem:[%s2333 + $0x28] sm:$0xff]
        %v2340 = vld [vmem:[%s2333 + $0x30] sm:$0xff]
        %v2341 = vld [vmem:[%s2333 + $0x38] sm:$0xff]
        %v2342 = vld [vmem:[%s2333 + $0x40] sm:$0xff]
        %v2343 = vld [vmem:[%s2333 + $0x48] sm:$0xff]
        %v2344 = vld [vmem:[%s2333 + $0x50] sm:$0xff]
        %v2345 = vld [vmem:[%s2333 + $0x58] sm:$0xff]
        %v2346 = vld [vmem:[%s2333 + $0x60] sm:$0xff]
        %v2347 = vld [vmem:[%s2333 + $0x68] sm:$0xff]
        %v2348 = vld [vmem:[%s2333 + $0x70] sm:$0xff]
        %v2349 = vld [vmem:[%s2333 + $0x78] sm:$0xff]
        %v2350 = vld [vmem:[%s2333 + $0x80] sm:$0xff]
        %v2351 = vld [vmem:[%s2333 + $0x88] sm:$0xff]
        %v2352 = vld [vmem:[%s2333 + $0x90] sm:$0xff]
        %v2353 = vld [vmem:[%s2333 + $0x98] sm:$0xff]
        %v2354 = vld [vmem:[%s2333 + $0xa0] sm:$0xff]
        %v2355 = vld [vmem:[%s2333 + $0xa8] sm:$0xff]
        %v2356 = vld [vmem:[%s2333 + $0xb0] sm:$0xff]
        %v2357 = vld [vmem:[%s2333 + $0xb8] sm:$0xff]
        %v2358 = vld [vmem:[%s2333 + $0xc0] sm:$0xff]
        %v2359 = vld [vmem:[%s2333 + $0xc8] sm:$0xff]
        %v2360 = vld [vmem:[%s2333 + $0xd0] sm:$0xff]
        %v2361 = vld [vmem:[%s2333 + $0xd8] sm:$0xff]
        %v2362 = vld [vmem:[%s2333 + $0xe0] sm:$0xff]
        %v2363 = vld [vmem:[%s2333 + $0xe8] sm:$0xff]
        %v2364 = vld [vmem:[%s2333 + $0xf0] sm:$0xff]
        %v2365 = vld [vmem:[%s2333 + $0xf8] sm:$0xff]
        %v2382 = vunpack.c.l.b16 %v1428
        %v2383 = vunpack.c.l.b16 %v1429
        %v2384 = vunpack.c.l.b16 %v1430
        %v2385 = vunpack.c.l.b16 %v1431
        %v2386 = vunpack.c.l.b16 %v1432
        %v2387 = vunpack.c.l.b16 %v1433
        %v2388 = vunpack.c.l.b16 %v1434
        %v2389 = vunpack.c.l.b16 %v1435
        %v2390 = vunpack.c.l.b16 %v1436
        %v2391 = vunpack.c.l.b16 %v1437
        %v2392 = vunpack.c.l.b16 %v1438
        %v2393 = vunpack.c.l.b16 %v1439
        %v2394 = vunpack.c.l.b16 %v1440
        %v2395 = vunpack.c.l.b16 %v1441
        %v2396 = vunpack.c.l.b16 %v1442
        %v2397 = vunpack.c.l.b16 %v1443
        %v2398 = vpack.c.b16 %v2383, %v2382
        %v2399 = vpack.c.b16 %v2385, %v2384
        %v2400 = vpack.c.b16 %v2387, %v2386
        %v2401 = vpack.c.b16 %v2389, %v2388
        %v2402 = vpack.c.b16 %v2391, %v2390
        %v2403 = vpack.c.b16 %v2393, %v2392
        %v2404 = vpack.c.b16 %v2395, %v2394
        %v2405 = vpack.c.b16 %v2397, %v2396
        %v2446 = vunpack.c.l.b16 %v2334
        %v2447 = vunpack.c.h.b16 %v2334
        %v2448 = vunpack.c.l.b16 %v2335
        %v2449 = vunpack.c.h.b16 %v2335
        %v2450 = vunpack.c.l.b16 %v2336
        %v2451 = vunpack.c.h.b16 %v2336
        %v2452 = vunpack.c.l.b16 %v2337
        %v2453 = vunpack.c.h.b16 %v2337
        %v2454 = vunpack.c.l.b16 %v2338
        %v2455 = vunpack.c.h.b16 %v2338
        %v2456 = vunpack.c.l.b16 %v2339
        %v2457 = vunpack.c.h.b16 %v2339
        %v2458 = vunpack.c.l.b16 %v2340
        %v2459 = vunpack.c.h.b16 %v2340
        %v2460 = vunpack.c.l.b16 %v2341
        %v2461 = vunpack.c.h.b16 %v2341
        %v2462 = vunpack.c.l.b16 %v2342
        %v2463 = vunpack.c.h.b16 %v2342
        %v2464 = vunpack.c.l.b16 %v2343
        %v2465 = vunpack.c.h.b16 %v2343
        %v2466 = vunpack.c.l.b16 %v2344
        %v2467 = vunpack.c.h.b16 %v2344
        %v2468 = vunpack.c.l.b16 %v2345
        %v2469 = vunpack.c.h.b16 %v2345
        %v2470 = vunpack.c.l.b16 %v2346
        %v2471 = vunpack.c.h.b16 %v2346
        %v2472 = vunpack.c.l.b16 %v2347
        %v2473 = vunpack.c.h.b16 %v2347
        %v2474 = vunpack.c.l.b16 %v2348
        %v2475 = vunpack.c.h.b16 %v2348
        %v2476 = vunpack.c.l.b16 %v2349
        %v2477 = vunpack.c.h.b16 %v2349
        %v2478 = vunpack.c.l.b16 %v2350
        %v2479 = vunpack.c.h.b16 %v2350
        %v2480 = vunpack.c.l.b16 %v2351
        %v2481 = vunpack.c.h.b16 %v2351
        %v2482 = vunpack.c.l.b16 %v2352
        %v2483 = vunpack.c.h.b16 %v2352
        %v2484 = vunpack.c.l.b16 %v2353
        %v2485 = vunpack.c.h.b16 %v2353
        %v2486 = vunpack.c.l.b16 %v2354
        %v2487 = vunpack.c.h.b16 %v2354
        %v2488 = vunpack.c.l.b16 %v2355
        %v2489 = vunpack.c.h.b16 %v2355
        %v2490 = vunpack.c.l.b16 %v2356
        %v2491 = vunpack.c.h.b16 %v2356
        %v2492 = vunpack.c.l.b16 %v2357
        %v2493 = vunpack.c.h.b16 %v2357
        %v2494 = vunpack.c.l.b16 %v2358
        %v2495 = vunpack.c.h.b16 %v2358
        %v2496 = vunpack.c.l.b16 %v2359
        %v2497 = vunpack.c.h.b16 %v2359
        %v2498 = vunpack.c.l.b16 %v2360
        %v2499 = vunpack.c.h.b16 %v2360
        %v2500 = vunpack.c.l.b16 %v2361
        %v2501 = vunpack.c.h.b16 %v2361
        %v2502 = vunpack.c.l.b16 %v2362
        %v2503 = vunpack.c.h.b16 %v2362
        %v2504 = vunpack.c.l.b16 %v2363
        %v2505 = vunpack.c.h.b16 %v2363
        %v2506 = vunpack.c.l.b16 %v2364
        %v2507 = vunpack.c.h.b16 %v2364
        %v2508 = vunpack.c.l.b16 %v2365
        %v2509 = vunpack.c.h.b16 %v2365
        %v2510 = vpack.c.b16 %v2450, %v2446
        %v2511 = vpack.c.b16 %v2451, %v2447
        %v2512 = vpack.c.b16 %v2452, %v2448
        %v2513 = vpack.c.b16 %v2453, %v2449
        %v2514 = vpack.c.b16 %v2458, %v2454
        %v2515 = vpack.c.b16 %v2459, %v2455
        %v2516 = vpack.c.b16 %v2460, %v2456
        %v2517 = vpack.c.b16 %v2461, %v2457
        %v2518 = vpack.c.b16 %v2466, %v2462
        %v2519 = vpack.c.b16 %v2467, %v2463
        %v2520 = vpack.c.b16 %v2468, %v2464
        %v2521 = vpack.c.b16 %v2469, %v2465
        %v2522 = vpack.c.b16 %v2474, %v2470
        %v2523 = vpack.c.b16 %v2475, %v2471
        %v2524 = vpack.c.b16 %v2476, %v2472
        %v2525 = vpack.c.b16 %v2477, %v2473
        %v2526 = vpack.c.b16 %v2482, %v2478
        %v2527 = vpack.c.b16 %v2483, %v2479
        %v2528 = vpack.c.b16 %v2484, %v2480
        %v2529 = vpack.c.b16 %v2485, %v2481
        %v2530 = vpack.c.b16 %v2490, %v2486
        %v2531 = vpack.c.b16 %v2491, %v2487
        %v2532 = vpack.c.b16 %v2492, %v2488
        %v2533 = vpack.c.b16 %v2493, %v2489
        %v2534 = vpack.c.b16 %v2498, %v2494
        %v2535 = vpack.c.b16 %v2499, %v2495
        %v2536 = vpack.c.b16 %v2500, %v2496
        %v2537 = vpack.c.b16 %v2501, %v2497
        %v2538 = vpack.c.b16 %v2506, %v2502
        %v2539 = vpack.c.b16 %v2507, %v2503
        %v2540 = vpack.c.b16 %v2508, %v2504
        %v2541 = vpack.c.b16 %v2509, %v2505
        %2574 = vmatpush.bf16.msra.mxu0 %v2538
        %2575 = vmatpush.bf16.msra.mxu0 %v2534
        %2576 = vmatpush.bf16.msra.mxu0 %v2530
        %2577 = vmatpush.bf16.msra.mxu0 %v2526
        %2578 = vmatpush.bf16.msra.mxu0 %v2522
        %2579 = vmatpush.bf16.msra.mxu0 %v2518
        %2580 = vmatpush.bf16.msra.mxu0 %v2514
        %2581 = vmatpush.bf16.msra.mxu0 %v2510
        %2582 = vmatmul.bf16.gmra.mxu0 %v2398
        %v2583 = vpop.f32.mrf.mxu0
        %v2584 = vadd.f32 0.0, %v2583
        %v2585 = vpop.f32.mrf.mxu0
        %v2586 = vadd.f32 0.0, %v2585
        %2587 = vmatmul.bf16.gmra.mxu0 %v2399
        %v2588 = vpop.f32.mrf.mxu0
        %v2589 = vadd.f32 0.0, %v2588
        %v2590 = vpop.f32.mrf.mxu0
        %v2591 = vadd.f32 0.0, %v2590
        %2592 = vmatmul.bf16.gmra.mxu0 %v2400
        %v2593 = vpop.f32.mrf.mxu0
        %v2594 = vadd.f32 0.0, %v2593
        %v2595 = vpop.f32.mrf.mxu0
        %v2596 = vadd.f32 0.0, %v2595
        %2597 = vmatmul.bf16.gmra.mxu0 %v2401
        %v2598 = vpop.f32.mrf.mxu0
        %v2599 = vadd.f32 0.0, %v2598
        %v2600 = vpop.f32.mrf.mxu0
        %v2601 = vadd.f32 0.0, %v2600
        %2602 = vmatmul.bf16.gmra.mxu0 %v2402
        %v2603 = vpop.f32.mrf.mxu0
        %v2604 = vadd.f32 0.0, %v2603
        %v2605 = vpop.f32.mrf.mxu0
        %v2606 = vadd.f32 0.0, %v2605
        %2607 = vmatmul.bf16.gmra.mxu0 %v2403
        %v2608 = vpop.f32.mrf.mxu0
        %v2609 = vadd.f32 0.0, %v2608
        %v2610 = vpop.f32.mrf.mxu0
        %v2611 = vadd.f32 0.0, %v2610
        %2612 = vmatmul.bf16.gmra.mxu0 %v2404
        %v2613 = vpop.f32.mrf.mxu0
        %v2614 = vadd.f32 0.0, %v2613
        %v2615 = vpop.f32.mrf.mxu0
        %v2616 = vadd.f32 0.0, %v2615
        %2617 = vmatmul.bf16.gmra.mxu0 %v2405
        %v2618 = vpop.f32.mrf.mxu0
        %v2619 = vadd.f32 0.0, %v2618
        %v2620 = vpop.f32.mrf.mxu0
        %v2621 = vadd.f32 0.0, %v2620
        %2622 = vdwg.mxu0
        %2623 = vmatpush.bf16.msra.mxu0 %v2539
        %2624 = vmatpush.bf16.msra.mxu0 %v2535
        %2625 = vmatpush.bf16.msra.mxu0 %v2531
        %2626 = vmatpush.bf16.msra.mxu0 %v2527
        %2627 = vmatpush.bf16.msra.mxu0 %v2523
        %2628 = vmatpush.bf16.msra.mxu0 %v2519
        %2629 = vmatpush.bf16.msra.mxu0 %v2515
        %2630 = vmatpush.bf16.msra.mxu0 %v2511
        %2631 = vmatmul.bf16.gmra.mxu0 %v2398
        %v2632 = vpop.f32.mrf.mxu0
        %v2633 = vadd.f32 0.0, %v2632
        %v2634 = vpop.f32.mrf.mxu0
        %v2635 = vadd.f32 0.0, %v2634
        %2636 = vmatmul.bf16.gmra.mxu0 %v2399
        %v2637 = vpop.f32.mrf.mxu0
        %v2638 = vadd.f32 0.0, %v2637
        %v2639 = vpop.f32.mrf.mxu0
        %v2640 = vadd.f32 0.0, %v2639
        %2641 = vmatmul.bf16.gmra.mxu0 %v2400
        %v2642 = vpop.f32.mrf.mxu0
        %v2643 = vadd.f32 0.0, %v2642
        %v2644 = vpop.f32.mrf.mxu0
        %v2645 = vadd.f32 0.0, %v2644
        %2646 = vmatmul.bf16.gmra.mxu0 %v2401
        %v2647 = vpop.f32.mrf.mxu0
        %v2648 = vadd.f32 0.0, %v2647
        %v2649 = vpop.f32.mrf.mxu0
        %v2650 = vadd.f32 0.0, %v2649
        %2651 = vmatmul.bf16.gmra.mxu0 %v2402
        %v2652 = vpop.f32.mrf.mxu0
        %v2653 = vadd.f32 0.0, %v2652
        %v2654 = vpop.f32.mrf.mxu0
        %v2655 = vadd.f32 0.0, %v2654
        %2656 = vmatmul.bf16.gmra.mxu0 %v2403
        %v2657 = vpop.f32.mrf.mxu0
        %v2658 = vadd.f32 0.0, %v2657
        %v2659 = vpop.f32.mrf.mxu0
        %v2660 = vadd.f32 0.0, %v2659
        %2661 = vmatmul.bf16.gmra.mxu0 %v2404
        %v2662 = vpop.f32.mrf.mxu0
        %v2663 = vadd.f32 0.0, %v2662
        %v2664 = vpop.f32.mrf.mxu0
        %v2665 = vadd.f32 0.0, %v2664
        %2666 = vmatmul.bf16.gmra.mxu0 %v2405
        %v2667 = vpop.f32.mrf.mxu0
        %v2668 = vadd.f32 0.0, %v2667
        %v2669 = vpop.f32.mrf.mxu0
        %v2670 = vadd.f32 0.0, %v2669
        %2671 = vdwg.mxu0
        %2672 = vmatpush.bf16.msra.mxu0 %v2540
        %2673 = vmatpush.bf16.msra.mxu0 %v2536
        %2674 = vmatpush.bf16.msra.mxu0 %v2532
        %2675 = vmatpush.bf16.msra.mxu0 %v2528
        %2676 = vmatpush.bf16.msra.mxu0 %v2524
        %2677 = vmatpush.bf16.msra.mxu0 %v2520
        %2678 = vmatpush.bf16.msra.mxu0 %v2516
        %2679 = vmatpush.bf16.msra.mxu0 %v2512
        %2680 = vmatmul.bf16.gmra.mxu0 %v2398
        %v2681 = vpop.f32.mrf.mxu0
        %v2682 = vadd.f32 0.0, %v2681
        %v2683 = vpop.f32.mrf.mxu0
        %v2684 = vadd.f32 0.0, %v2683
        %2685 = vmatmul.bf16.gmra.mxu0 %v2399
        %v2686 = vpop.f32.mrf.mxu0
        %v2687 = vadd.f32 0.0, %v2686
        %v2688 = vpop.f32.mrf.mxu0
        %v2689 = vadd.f32 0.0, %v2688
        %2690 = vmatmul.bf16.gmra.mxu0 %v2400
        %v2691 = vpop.f32.mrf.mxu0
        %v2692 = vadd.f32 0.0, %v2691
        %v2693 = vpop.f32.mrf.mxu0
        %v2694 = vadd.f32 0.0, %v2693
        %2695 = vmatmul.bf16.gmra.mxu0 %v2401
        %v2696 = vpop.f32.mrf.mxu0
        %v2697 = vadd.f32 0.0, %v2696
        %v2698 = vpop.f32.mrf.mxu0
        %v2699 = vadd.f32 0.0, %v2698
        %2700 = vmatmul.bf16.gmra.mxu0 %v2402
        %v2701 = vpop.f32.mrf.mxu0
        %v2702 = vadd.f32 0.0, %v2701
        %v2703 = vpop.f32.mrf.mxu0
        %v2704 = vadd.f32 0.0, %v2703
        %2705 = vmatmul.bf16.gmra.mxu0 %v2403
        %v2706 = vpop.f32.mrf.mxu0
        %v2707 = vadd.f32 0.0, %v2706
        %v2708 = vpop.f32.mrf.mxu0
        %v2709 = vadd.f32 0.0, %v2708
        %2710 = vmatmul.bf16.gmra.mxu0 %v2404
        %v2711 = vpop.f32.mrf.mxu0
        %v2712 = vadd.f32 0.0, %v2711
        %v2713 = vpop.f32.mrf.mxu0
        %v2714 = vadd.f32 0.0, %v2713
        %2715 = vmatmul.bf16.gmra.mxu0 %v2405
        %v2716 = vpop.f32.mrf.mxu0
        %v2717 = vadd.f32 0.0, %v2716
        %v2718 = vpop.f32.mrf.mxu0
        %v2719 = vadd.f32 0.0, %v2718
        %2720 = vdwg.mxu0
        %2721 = vmatpush.bf16.msra.mxu0 %v2541
        %2722 = vmatpush.bf16.msra.mxu0 %v2537
        %2723 = vmatpush.bf16.msra.mxu0 %v2533
        %2724 = vmatpush.bf16.msra.mxu0 %v2529
        %2725 = vmatpush.bf16.msra.mxu0 %v2525
        %2726 = vmatpush.bf16.msra.mxu0 %v2521
        %2727 = vmatpush.bf16.msra.mxu0 %v2517
        %2728 = vmatpush.bf16.msra.mxu0 %v2513
        %2729 = vmatmul.bf16.gmra.mxu0 %v2398
        %v2730 = vpop.f32.mrf.mxu0
        %v2731 = vadd.f32 0.0, %v2730
        %v2732 = vpop.f32.mrf.mxu0
        %v2733 = vadd.f32 0.0, %v2732
        %2734 = vmatmul.bf16.gmra.mxu0 %v2399
        %v2735 = vpop.f32.mrf.mxu0
        %v2736 = vadd.f32 0.0, %v2735
        %v2737 = vpop.f32.mrf.mxu0
        %v2738 = vadd.f32 0.0, %v2737
        %2739 = vmatmul.bf16.gmra.mxu0 %v2400
        %v2740 = vpop.f32.mrf.mxu0
        %v2741 = vadd.f32 0.0, %v2740
        %v2742 = vpop.f32.mrf.mxu0
        %v2743 = vadd.f32 0.0, %v2742
        %2744 = vmatmul.bf16.gmra.mxu0 %v2401
        %v2745 = vpop.f32.mrf.mxu0
        %v2746 = vadd.f32 0.0, %v2745
        %v2747 = vpop.f32.mrf.mxu0
        %v2748 = vadd.f32 0.0, %v2747
        %2749 = vmatmul.bf16.gmra.mxu0 %v2402
        %v2750 = vpop.f32.mrf.mxu0
        %v2751 = vadd.f32 0.0, %v2750
        %v2752 = vpop.f32.mrf.mxu0
        %v2753 = vadd.f32 0.0, %v2752
        %2754 = vmatmul.bf16.gmra.mxu0 %v2403
        %v2755 = vpop.f32.mrf.mxu0
        %v2756 = vadd.f32 0.0, %v2755
        %v2757 = vpop.f32.mrf.mxu0
        %v2758 = vadd.f32 0.0, %v2757
        %2759 = vmatmul.bf16.gmra.mxu0 %v2404
        %v2760 = vpop.f32.mrf.mxu0
        %v2761 = vadd.f32 0.0, %v2760
        %v2762 = vpop.f32.mrf.mxu0
        %v2763 = vadd.f32 0.0, %v2762
        %2764 = vmatmul.bf16.gmra.mxu0 %v2405
        %v2765 = vpop.f32.mrf.mxu0
        %v2766 = vadd.f32 0.0, %v2765
        %v2767 = vpop.f32.mrf.mxu0
        %v2768 = vadd.f32 0.0, %v2767
        %2769 = vdwg.mxu0
        %v2770 = vadd.f32 %v2147, %v2584
        %v2771 = vadd.f32 %v2196, %v2633
        %v2772 = vadd.f32 %v2245, %v2682
        %v2773 = vadd.f32 %v2294, %v2731
        %v2774 = vadd.f32 %v2149, %v2586
        %v2775 = vadd.f32 %v2198, %v2635
        %v2776 = vadd.f32 %v2247, %v2684
        %v2777 = vadd.f32 %v2296, %v2733
        %v2778 = vadd.f32 %v2152, %v2589
        %v2779 = vadd.f32 %v2201, %v2638
        %v2780 = vadd.f32 %v2250, %v2687
        %v2781 = vadd.f32 %v2299, %v2736
        %v2782 = vadd.f32 %v2154, %v2591
        %v2783 = vadd.f32 %v2203, %v2640
        %v2784 = vadd.f32 %v2252, %v2689
        %v2785 = vadd.f32 %v2301, %v2738
        %v2786 = vadd.f32 %v2157, %v2594
        %v2787 = vadd.f32 %v2206, %v2643
        %v2788 = vadd.f32 %v2255, %v2692
        %v2789 = vadd.f32 %v2304, %v2741
        %v2790 = vadd.f32 %v2159, %v2596
        %v2791 = vadd.f32 %v2208, %v2645
        %v2792 = vadd.f32 %v2257, %v2694
        %v2793 = vadd.f32 %v2306, %v2743
        %v2794 = vadd.f32 %v2162, %v2599
        %v2795 = vadd.f32 %v2211, %v2648
        %v2796 = vadd.f32 %v2260, %v2697
        %v2797 = vadd.f32 %v2309, %v2746
        %v2798 = vadd.f32 %v2164, %v2601
        %v2799 = vadd.f32 %v2213, %v2650
        %v2800 = vadd.f32 %v2262, %v2699
        %v2801 = vadd.f32 %v2311, %v2748
        %v2802 = vadd.f32 %v2167, %v2604
        %v2803 = vadd.f32 %v2216, %v2653
        %v2804 = vadd.f32 %v2265, %v2702
        %v2805 = vadd.f32 %v2314, %v2751
        %v2806 = vadd.f32 %v2169, %v2606
        %v2807 = vadd.f32 %v2218, %v2655
        %v2808 = vadd.f32 %v2267, %v2704
        %v2809 = vadd.f32 %v2316, %v2753
        %v2810 = vadd.f32 %v2172, %v2609
        %v2811 = vadd.f32 %v2221, %v2658
        %v2812 = vadd.f32 %v2270, %v2707
        %v2813 = vadd.f32 %v2319, %v2756
        %v2814 = vadd.f32 %v2174, %v2611
        %v2815 = vadd.f32 %v2223, %v2660
        %v2816 = vadd.f32 %v2272, %v2709
        %v2817 = vadd.f32 %v2321, %v2758
        %v2818 = vadd.f32 %v2177, %v2614
        %v2819 = vadd.f32 %v2226, %v2663
        %v2820 = vadd.f32 %v2275, %v2712
        %v2821 = vadd.f32 %v2324, %v2761
        %v2822 = vadd.f32 %v2179, %v2616
        %v2823 = vadd.f32 %v2228, %v2665
        %v2824 = vadd.f32 %v2277, %v2714
        %v2825 = vadd.f32 %v2326, %v2763
        %v2826 = vadd.f32 %v2182, %v2619
        %v2827 = vadd.f32 %v2231, %v2668
        %v2828 = vadd.f32 %v2280, %v2717
        %v2829 = vadd.f32 %v2329, %v2766
        %v2830 = vadd.f32 %v2184, %v2621
        %v2831 = vadd.f32 %v2233, %v2670
        %v2832 = vadd.f32 %v2282, %v2719
        %v2833 = vadd.f32 %v2331, %v2768
        %s2834 = scalar_lea.vmem %s2, 768
        %v2835 = vld [vmem:[%s2834] sm:$0xff]
        %v2836 = vld [vmem:[%s2834 + $0x8] sm:$0xff]
        %v2837 = vld [vmem:[%s2834 + $0x10] sm:$0xff]
        %v2838 = vld [vmem:[%s2834 + $0x18] sm:$0xff]
        %v2839 = vld [vmem:[%s2834 + $0x20] sm:$0xff]
        %v2840 = vld [vmem:[%s2834 + $0x28] sm:$0xff]
        %v2841 = vld [vmem:[%s2834 + $0x30] sm:$0xff]
        %v2842 = vld [vmem:[%s2834 + $0x38] sm:$0xff]
        %v2843 = vld [vmem:[%s2834 + $0x40] sm:$0xff]
        %v2844 = vld [vmem:[%s2834 + $0x48] sm:$0xff]
        %v2845 = vld [vmem:[%s2834 + $0x50] sm:$0xff]
        %v2846 = vld [vmem:[%s2834 + $0x58] sm:$0xff]
        %v2847 = vld [vmem:[%s2834 + $0x60] sm:$0xff]
        %v2848 = vld [vmem:[%s2834 + $0x68] sm:$0xff]
        %v2849 = vld [vmem:[%s2834 + $0x70] sm:$0xff]
        %v2850 = vld [vmem:[%s2834 + $0x78] sm:$0xff]
        %v2851 = vld [vmem:[%s2834 + $0x80] sm:$0xff]
        %v2852 = vld [vmem:[%s2834 + $0x88] sm:$0xff]
        %v2853 = vld [vmem:[%s2834 + $0x90] sm:$0xff]
        %v2854 = vld [vmem:[%s2834 + $0x98] sm:$0xff]
        %v2855 = vld [vmem:[%s2834 + $0xa0] sm:$0xff]
        %v2856 = vld [vmem:[%s2834 + $0xa8] sm:$0xff]
        %v2857 = vld [vmem:[%s2834 + $0xb0] sm:$0xff]
        %v2858 = vld [vmem:[%s2834 + $0xb8] sm:$0xff]
        %v2859 = vld [vmem:[%s2834 + $0xc0] sm:$0xff]
        %v2860 = vld [vmem:[%s2834 + $0xc8] sm:$0xff]
        %v2861 = vld [vmem:[%s2834 + $0xd0] sm:$0xff]
        %v2862 = vld [vmem:[%s2834 + $0xd8] sm:$0xff]
        %v2863 = vld [vmem:[%s2834 + $0xe0] sm:$0xff]
        %v2864 = vld [vmem:[%s2834 + $0xe8] sm:$0xff]
        %v2865 = vld [vmem:[%s2834 + $0xf0] sm:$0xff]
        %v2866 = vld [vmem:[%s2834 + $0xf8] sm:$0xff]
        %v2883 = vunpack.c.l.b16 %v1444
        %v2884 = vunpack.c.l.b16 %v1445
        %v2885 = vunpack.c.l.b16 %v1446
        %v2886 = vunpack.c.l.b16 %v1447
        %v2887 = vunpack.c.l.b16 %v1448
        %v2888 = vunpack.c.l.b16 %v1449
        %v2889 = vunpack.c.l.b16 %v1450
        %v2890 = vunpack.c.l.b16 %v1451
        %v2891 = vunpack.c.l.b16 %v1452
        %v2892 = vunpack.c.l.b16 %v1453
        %v2893 = vunpack.c.l.b16 %v1454
        %v2894 = vunpack.c.l.b16 %v1455
        %v2895 = vunpack.c.l.b16 %v1456
        %v2896 = vunpack.c.l.b16 %v1457
        %v2897 = vunpack.c.l.b16 %v1458
        %v2898 = vunpack.c.l.b16 %v1459
        %v2899 = vpack.c.b16 %v2884, %v2883
        %v2900 = vpack.c.b16 %v2886, %v2885
        %v2901 = vpack.c.b16 %v2888, %v2887
        %v2902 = vpack.c.b16 %v2890, %v2889
        %v2903 = vpack.c.b16 %v2892, %v2891
        %v2904 = vpack.c.b16 %v2894, %v2893
        %v2905 = vpack.c.b16 %v2896, %v2895
        %v2906 = vpack.c.b16 %v2898, %v2897
        %v2947 = vunpack.c.l.b16 %v2835
        %v2948 = vunpack.c.h.b16 %v2835
        %v2949 = vunpack.c.l.b16 %v2836
        %v2950 = vunpack.c.h.b16 %v2836
        %v2951 = vunpack.c.l.b16 %v2837
        %v2952 = vunpack.c.h.b16 %v2837
        %v2953 = vunpack.c.l.b16 %v2838
        %v2954 = vunpack.c.h.b16 %v2838
        %v2955 = vunpack.c.l.b16 %v2839
        %v2956 = vunpack.c.h.b16 %v2839
        %v2957 = vunpack.c.l.b16 %v2840
        %v2958 = vunpack.c.h.b16 %v2840
        %v2959 = vunpack.c.l.b16 %v2841
        %v2960 = vunpack.c.h.b16 %v2841
        %v2961 = vunpack.c.l.b16 %v2842
        %v2962 = vunpack.c.h.b16 %v2842
        %v2963 = vunpack.c.l.b16 %v2843
        %v2964 = vunpack.c.h.b16 %v2843
        %v2965 = vunpack.c.l.b16 %v2844
        %v2966 = vunpack.c.h.b16 %v2844
        %v2967 = vunpack.c.l.b16 %v2845
        %v2968 = vunpack.c.h.b16 %v2845
        %v2969 = vunpack.c.l.b16 %v2846
        %v2970 = vunpack.c.h.b16 %v2846
        %v2971 = vunpack.c.l.b16 %v2847
        %v2972 = vunpack.c.h.b16 %v2847
        %v2973 = vunpack.c.l.b16 %v2848
        %v2974 = vunpack.c.h.b16 %v2848
        %v2975 = vunpack.c.l.b16 %v2849
        %v2976 = vunpack.c.h.b16 %v2849
        %v2977 = vunpack.c.l.b16 %v2850
        %v2978 = vunpack.c.h.b16 %v2850
        %v2979 = vunpack.c.l.b16 %v2851
        %v2980 = vunpack.c.h.b16 %v2851
        %v2981 = vunpack.c.l.b16 %v2852
        %v2982 = vunpack.c.h.b16 %v2852
        %v2983 = vunpack.c.l.b16 %v2853
        %v2984 = vunpack.c.h.b16 %v2853
        %v2985 = vunpack.c.l.b16 %v2854
        %v2986 = vunpack.c.h.b16 %v2854
        %v2987 = vunpack.c.l.b16 %v2855
        %v2988 = vunpack.c.h.b16 %v2855
        %v2989 = vunpack.c.l.b16 %v2856
        %v2990 = vunpack.c.h.b16 %v2856
        %v2991 = vunpack.c.l.b16 %v2857
        %v2992 = vunpack.c.h.b16 %v2857
        %v2993 = vunpack.c.l.b16 %v2858
        %v2994 = vunpack.c.h.b16 %v2858
        %v2995 = vunpack.c.l.b16 %v2859
        %v2996 = vunpack.c.h.b16 %v2859
        %v2997 = vunpack.c.l.b16 %v2860
        %v2998 = vunpack.c.h.b16 %v2860
        %v2999 = vunpack.c.l.b16 %v2861
        %v3000 = vunpack.c.h.b16 %v2861
        %v3001 = vunpack.c.l.b16 %v2862
        %v3002 = vunpack.c.h.b16 %v2862
        %v3003 = vunpack.c.l.b16 %v2863
        %v3004 = vunpack.c.h.b16 %v2863
        %v3005 = vunpack.c.l.b16 %v2864
        %v3006 = vunpack.c.h.b16 %v2864
        %v3007 = vunpack.c.l.b16 %v2865
        %v3008 = vunpack.c.h.b16 %v2865
        %v3009 = vunpack.c.l.b16 %v2866
        %v3010 = vunpack.c.h.b16 %v2866
        %v3011 = vpack.c.b16 %v2951, %v2947
        %v3012 = vpack.c.b16 %v2952, %v2948
        %v3013 = vpack.c.b16 %v2953, %v2949
        %v3014 = vpack.c.b16 %v2954, %v2950
        %v3015 = vpack.c.b16 %v2959, %v2955
        %v3016 = vpack.c.b16 %v2960, %v2956
        %v3017 = vpack.c.b16 %v2961, %v2957
        %v3018 = vpack.c.b16 %v2962, %v2958
        %v3019 = vpack.c.b16 %v2967, %v2963
        %v3020 = vpack.c.b16 %v2968, %v2964
        %v3021 = vpack.c.b16 %v2969, %v2965
        %v3022 = vpack.c.b16 %v2970, %v2966
        %v3023 = vpack.c.b16 %v2975, %v2971
        %v3024 = vpack.c.b16 %v2976, %v2972
        %v3025 = vpack.c.b16 %v2977, %v2973
        %v3026 = vpack.c.b16 %v2978, %v2974
        %v3027 = vpack.c.b16 %v2983, %v2979
        %v3028 = vpack.c.b16 %v2984, %v2980
        %v3029 = vpack.c.b16 %v2985, %v2981
        %v3030 = vpack.c.b16 %v2986, %v2982
        %v3031 = vpack.c.b16 %v2991, %v2987
        %v3032 = vpack.c.b16 %v2992, %v2988
        %v3033 = vpack.c.b16 %v2993, %v2989
        %v3034 = vpack.c.b16 %v2994, %v2990
        %v3035 = vpack.c.b16 %v2999, %v2995
        %v3036 = vpack.c.b16 %v3000, %v2996
        %v3037 = vpack.c.b16 %v3001, %v2997
        %v3038 = vpack.c.b16 %v3002, %v2998
        %v3039 = vpack.c.b16 %v3007, %v3003
        %v3040 = vpack.c.b16 %v3008, %v3004
        %v3041 = vpack.c.b16 %v3009, %v3005
        %v3042 = vpack.c.b16 %v3010, %v3006
        %3075 = vmatpush.bf16.msra.mxu0 %v3039
        %3076 = vmatpush.bf16.msra.mxu0 %v3035
        %3077 = vmatpush.bf16.msra.mxu0 %v3031
        %3078 = vmatpush.bf16.msra.mxu0 %v3027
        %3079 = vmatpush.bf16.msra.mxu0 %v3023
        %3080 = vmatpush.bf16.msra.mxu0 %v3019
        %3081 = vmatpush.bf16.msra.mxu0 %v3015
        %3082 = vmatpush.bf16.msra.mxu0 %v3011
        %3083 = vmatmul.bf16.gmra.mxu0 %v2899
        %v3084 = vpop.f32.mrf.mxu0
        %v3085 = vadd.f32 0.0, %v3084
        %v3086 = vpop.f32.mrf.mxu0
        %v3087 = vadd.f32 0.0, %v3086
        %3088 = vmatmul.bf16.gmra.mxu0 %v2900
        %v3089 = vpop.f32.mrf.mxu0
        %v3090 = vadd.f32 0.0, %v3089
        %v3091 = vpop.f32.mrf.mxu0
        %v3092 = vadd.f32 0.0, %v3091
        %3093 = vmatmul.bf16.gmra.mxu0 %v2901
        %v3094 = vpop.f32.mrf.mxu0
        %v3095 = vadd.f32 0.0, %v3094
        %v3096 = vpop.f32.mrf.mxu0
        %v3097 = vadd.f32 0.0, %v3096
        %3098 = vmatmul.bf16.gmra.mxu0 %v2902
        %v3099 = vpop.f32.mrf.mxu0
        %v3100 = vadd.f32 0.0, %v3099
        %v3101 = vpop.f32.mrf.mxu0
        %v3102 = vadd.f32 0.0, %v3101
        %3103 = vmatmul.bf16.gmra.mxu0 %v2903
        %v3104 = vpop.f32.mrf.mxu0
        %v3105 = vadd.f32 0.0, %v3104
        %v3106 = vpop.f32.mrf.mxu0
        %v3107 = vadd.f32 0.0, %v3106
        %3108 = vmatmul.bf16.gmra.mxu0 %v2904
        %v3109 = vpop.f32.mrf.mxu0
        %v3110 = vadd.f32 0.0, %v3109
        %v3111 = vpop.f32.mrf.mxu0
        %v3112 = vadd.f32 0.0, %v3111
        %3113 = vmatmul.bf16.gmra.mxu0 %v2905
        %v3114 = vpop.f32.mrf.mxu0
        %v3115 = vadd.f32 0.0, %v3114
        %v3116 = vpop.f32.mrf.mxu0
        %v3117 = vadd.f32 0.0, %v3116
        %3118 = vmatmul.bf16.gmra.mxu0 %v2906
        %v3119 = vpop.f32.mrf.mxu0
        %v3120 = vadd.f32 0.0, %v3119
        %v3121 = vpop.f32.mrf.mxu0
        %v3122 = vadd.f32 0.0, %v3121
        %3123 = vdwg.mxu0
        %3124 = vmatpush.bf16.msra.mxu0 %v3040
        %3125 = vmatpush.bf16.msra.mxu0 %v3036
        %3126 = vmatpush.bf16.msra.mxu0 %v3032
        %3127 = vmatpush.bf16.msra.mxu0 %v3028
        %3128 = vmatpush.bf16.msra.mxu0 %v3024
        %3129 = vmatpush.bf16.msra.mxu0 %v3020
        %3130 = vmatpush.bf16.msra.mxu0 %v3016
        %3131 = vmatpush.bf16.msra.mxu0 %v3012
        %3132 = vmatmul.bf16.gmra.mxu0 %v2899
        %v3133 = vpop.f32.mrf.mxu0
        %v3134 = vadd.f32 0.0, %v3133
        %v3135 = vpop.f32.mrf.mxu0
        %v3136 = vadd.f32 0.0, %v3135
        %3137 = vmatmul.bf16.gmra.mxu0 %v2900
        %v3138 = vpop.f32.mrf.mxu0
        %v3139 = vadd.f32 0.0, %v3138
        %v3140 = vpop.f32.mrf.mxu0
        %v3141 = vadd.f32 0.0, %v3140
        %3142 = vmatmul.bf16.gmra.mxu0 %v2901
        %v3143 = vpop.f32.mrf.mxu0
        %v3144 = vadd.f32 0.0, %v3143
        %v3145 = vpop.f32.mrf.mxu0
        %v3146 = vadd.f32 0.0, %v3145
        %3147 = vmatmul.bf16.gmra.mxu0 %v2902
        %v3148 = vpop.f32.mrf.mxu0
        %v3149 = vadd.f32 0.0, %v3148
        %v3150 = vpop.f32.mrf.mxu0
        %v3151 = vadd.f32 0.0, %v3150
        %3152 = vmatmul.bf16.gmra.mxu0 %v2903
        %v3153 = vpop.f32.mrf.mxu0
        %v3154 = vadd.f32 0.0, %v3153
        %v3155 = vpop.f32.mrf.mxu0
        %v3156 = vadd.f32 0.0, %v3155
        %3157 = vmatmul.bf16.gmra.mxu0 %v2904
        %v3158 = vpop.f32.mrf.mxu0
        %v3159 = vadd.f32 0.0, %v3158
        %v3160 = vpop.f32.mrf.mxu0
        %v3161 = vadd.f32 0.0, %v3160
        %3162 = vmatmul.bf16.gmra.mxu0 %v2905
        %v3163 = vpop.f32.mrf.mxu0
        %v3164 = vadd.f32 0.0, %v3163
        %v3165 = vpop.f32.mrf.mxu0
        %v3166 = vadd.f32 0.0, %v3165
        %3167 = vmatmul.bf16.gmra.mxu0 %v2906
        %v3168 = vpop.f32.mrf.mxu0
        %v3169 = vadd.f32 0.0, %v3168
        %v3170 = vpop.f32.mrf.mxu0
        %v3171 = vadd.f32 0.0, %v3170
        %3172 = vdwg.mxu0
        %3173 = vmatpush.bf16.msra.mxu0 %v3041
        %3174 = vmatpush.bf16.msra.mxu0 %v3037
        %3175 = vmatpush.bf16.msra.mxu0 %v3033
        %3176 = vmatpush.bf16.msra.mxu0 %v3029
        %3177 = vmatpush.bf16.msra.mxu0 %v3025
        %3178 = vmatpush.bf16.msra.mxu0 %v3021
        %3179 = vmatpush.bf16.msra.mxu0 %v3017
        %3180 = vmatpush.bf16.msra.mxu0 %v3013
        %3181 = vmatmul.bf16.gmra.mxu0 %v2899
        %v3182 = vpop.f32.mrf.mxu0
        %v3183 = vadd.f32 0.0, %v3182
        %v3184 = vpop.f32.mrf.mxu0
        %v3185 = vadd.f32 0.0, %v3184
        %3186 = vmatmul.bf16.gmra.mxu0 %v2900
        %v3187 = vpop.f32.mrf.mxu0
        %v3188 = vadd.f32 0.0, %v3187
        %v3189 = vpop.f32.mrf.mxu0
        %v3190 = vadd.f32 0.0, %v3189
        %3191 = vmatmul.bf16.gmra.mxu0 %v2901
        %v3192 = vpop.f32.mrf.mxu0
        %v3193 = vadd.f32 0.0, %v3192
        %v3194 = vpop.f32.mrf.mxu0
        %v3195 = vadd.f32 0.0, %v3194
        %3196 = vmatmul.bf16.gmra.mxu0 %v2902
        %v3197 = vpop.f32.mrf.mxu0
        %v3198 = vadd.f32 0.0, %v3197
        %v3199 = vpop.f32.mrf.mxu0
        %v3200 = vadd.f32 0.0, %v3199
        %3201 = vmatmul.bf16.gmra.mxu0 %v2903
        %v3202 = vpop.f32.mrf.mxu0
        %v3203 = vadd.f32 0.0, %v3202
        %v3204 = vpop.f32.mrf.mxu0
        %v3205 = vadd.f32 0.0, %v3204
        %3206 = vmatmul.bf16.gmra.mxu0 %v2904
        %v3207 = vpop.f32.mrf.mxu0
        %v3208 = vadd.f32 0.0, %v3207
        %v3209 = vpop.f32.mrf.mxu0
        %v3210 = vadd.f32 0.0, %v3209
        %3211 = vmatmul.bf16.gmra.mxu0 %v2905
        %v3212 = vpop.f32.mrf.mxu0
        %v3213 = vadd.f32 0.0, %v3212
        %v3214 = vpop.f32.mrf.mxu0
        %v3215 = vadd.f32 0.0, %v3214
        %3216 = vmatmul.bf16.gmra.mxu0 %v2906
        %v3217 = vpop.f32.mrf.mxu0
        %v3218 = vadd.f32 0.0, %v3217
        %v3219 = vpop.f32.mrf.mxu0
        %v3220 = vadd.f32 0.0, %v3219
        %3221 = vdwg.mxu0
        %3222 = vmatpush.bf16.msra.mxu0 %v3042
        %3223 = vmatpush.bf16.msra.mxu0 %v3038
        %3224 = vmatpush.bf16.msra.mxu0 %v3034
        %3225 = vmatpush.bf16.msra.mxu0 %v3030
        %3226 = vmatpush.bf16.msra.mxu0 %v3026
        %3227 = vmatpush.bf16.msra.mxu0 %v3022
        %3228 = vmatpush.bf16.msra.mxu0 %v3018
        %3229 = vmatpush.bf16.msra.mxu0 %v3014
        %3230 = vmatmul.bf16.gmra.mxu0 %v2899
        %v3231 = vpop.f32.mrf.mxu0
        %v3232 = vadd.f32 0.0, %v3231
        %v3233 = vpop.f32.mrf.mxu0
        %v3234 = vadd.f32 0.0, %v3233
        %3235 = vmatmul.bf16.gmra.mxu0 %v2900
        %v3236 = vpop.f32.mrf.mxu0
        %v3237 = vadd.f32 0.0, %v3236
        %v3238 = vpop.f32.mrf.mxu0
        %v3239 = vadd.f32 0.0, %v3238
        %3240 = vmatmul.bf16.gmra.mxu0 %v2901
        %v3241 = vpop.f32.mrf.mxu0
        %v3242 = vadd.f32 0.0, %v3241
        %v3243 = vpop.f32.mrf.mxu0
        %v3244 = vadd.f32 0.0, %v3243
        %3245 = vmatmul.bf16.gmra.mxu0 %v2902
        %v3246 = vpop.f32.mrf.mxu0
        %v3247 = vadd.f32 0.0, %v3246
        %v3248 = vpop.f32.mrf.mxu0
        %v3249 = vadd.f32 0.0, %v3248
        %3250 = vmatmul.bf16.gmra.mxu0 %v2903
        %v3251 = vpop.f32.mrf.mxu0
        %v3252 = vadd.f32 0.0, %v3251
        %v3253 = vpop.f32.mrf.mxu0
        %v3254 = vadd.f32 0.0, %v3253
        %3255 = vmatmul.bf16.gmra.mxu0 %v2904
        %v3256 = vpop.f32.mrf.mxu0
        %v3257 = vadd.f32 0.0, %v3256
        %v3258 = vpop.f32.mrf.mxu0
        %v3259 = vadd.f32 0.0, %v3258
        %3260 = vmatmul.bf16.gmra.mxu0 %v2905
        %v3261 = vpop.f32.mrf.mxu0
        %v3262 = vadd.f32 0.0, %v3261
        %v3263 = vpop.f32.mrf.mxu0
        %v3264 = vadd.f32 0.0, %v3263
        %3265 = vmatmul.bf16.gmra.mxu0 %v2906
        %v3266 = vpop.f32.mrf.mxu0
        %v3267 = vadd.f32 0.0, %v3266
        %v3268 = vpop.f32.mrf.mxu0
        %v3269 = vadd.f32 0.0, %v3268
        %3270 = vdwg.mxu0
        %v3271 = vadd.f32 %v2770, %v3085
        %v3272 = vadd.f32 %v2771, %v3134
        %v3273 = vadd.f32 %v2772, %v3183
        %v3274 = vadd.f32 %v2773, %v3232
        %v3275 = vadd.f32 %v2774, %v3087
        %v3276 = vadd.f32 %v2775, %v3136
        %v3277 = vadd.f32 %v2776, %v3185
        %v3278 = vadd.f32 %v2777, %v3234
        %v3279 = vadd.f32 %v2778, %v3090
        %v3280 = vadd.f32 %v2779, %v3139
        %v3281 = vadd.f32 %v2780, %v3188
        %v3282 = vadd.f32 %v2781, %v3237
        %v3283 = vadd.f32 %v2782, %v3092
        %v3284 = vadd.f32 %v2783, %v3141
        %v3285 = vadd.f32 %v2784, %v3190
        %v3286 = vadd.f32 %v2785, %v3239
        %v3287 = vadd.f32 %v2786, %v3095
        %v3288 = vadd.f32 %v2787, %v3144
        %v3289 = vadd.f32 %v2788, %v3193
        %v3290 = vadd.f32 %v2789, %v3242
        %v3291 = vadd.f32 %v2790, %v3097
        %v3292 = vadd.f32 %v2791, %v3146
        %v3293 = vadd.f32 %v2792, %v3195
        %v3294 = vadd.f32 %v2793, %v3244
        %v3295 = vadd.f32 %v2794, %v3100
        %v3296 = vadd.f32 %v2795, %v3149
        %v3297 = vadd.f32 %v2796, %v3198
        %v3298 = vadd.f32 %v2797, %v3247
        %v3299 = vadd.f32 %v2798, %v3102
        %v3300 = vadd.f32 %v2799, %v3151
        %v3301 = vadd.f32 %v2800, %v3200
        %v3302 = vadd.f32 %v2801, %v3249
        %v3303 = vadd.f32 %v2802, %v3105
        %v3304 = vadd.f32 %v2803, %v3154
        %v3305 = vadd.f32 %v2804, %v3203
        %v3306 = vadd.f32 %v2805, %v3252
        %v3307 = vadd.f32 %v2806, %v3107
        %v3308 = vadd.f32 %v2807, %v3156
        %v3309 = vadd.f32 %v2808, %v3205
        %v3310 = vadd.f32 %v2809, %v3254
        %v3311 = vadd.f32 %v2810, %v3110
        %v3312 = vadd.f32 %v2811, %v3159
        %v3313 = vadd.f32 %v2812, %v3208
        %v3314 = vadd.f32 %v2813, %v3257
        %v3315 = vadd.f32 %v2814, %v3112
        %v3316 = vadd.f32 %v2815, %v3161
        %v3317 = vadd.f32 %v2816, %v3210
        %v3318 = vadd.f32 %v2817, %v3259
        %v3319 = vadd.f32 %v2818, %v3115
        %v3320 = vadd.f32 %v2819, %v3164
        %v3321 = vadd.f32 %v2820, %v3213
        %v3322 = vadd.f32 %v2821, %v3262
        %v3323 = vadd.f32 %v2822, %v3117
        %v3324 = vadd.f32 %v2823, %v3166
        %v3325 = vadd.f32 %v2824, %v3215
        %v3326 = vadd.f32 %v2825, %v3264
        %v3327 = vadd.f32 %v2826, %v3120
        %v3328 = vadd.f32 %v2827, %v3169
        %v3329 = vadd.f32 %v2828, %v3218
        %v3330 = vadd.f32 %v2829, %v3267
        %v3331 = vadd.f32 %v2830, %v3122
        %v3332 = vadd.f32 %v2831, %v3171
        %v3333 = vadd.f32 %v2832, %v3220
        %v3334 = vadd.f32 %v2833, %v3269
        %v3335 = vld [vmem:[%s3] sm:$0xf]
        %v3337 = vperm.slane %v3335, 0
        %v3338 = vperm.slane %v3335, 1
        %v3339 = vperm.slane %v3335, 2
        %v3340 = vperm.slane %v3335, 3
        %v3345 = vadd.f32 %v3271, %v3337
        %v3346 = vadd.f32 %v3272, %v3338
        %v3347 = vadd.f32 %v3273, %v3339
        %v3348 = vadd.f32 %v3274, %v3340
        %v3349 = vadd.f32 %v3275, %v3337
        %v3350 = vadd.f32 %v3276, %v3338
        %v3351 = vadd.f32 %v3277, %v3339
        %v3352 = vadd.f32 %v3278, %v3340
        %v3353 = vadd.f32 %v3279, %v3337
        %v3354 = vadd.f32 %v3280, %v3338
        %v3355 = vadd.f32 %v3281, %v3339
        %v3356 = vadd.f32 %v3282, %v3340
        %v3357 = vadd.f32 %v3283, %v3337
        %v3358 = vadd.f32 %v3284, %v3338
        %v3359 = vadd.f32 %v3285, %v3339
        %v3360 = vadd.f32 %v3286, %v3340
        %v3361 = vadd.f32 %v3287, %v3337
        %v3362 = vadd.f32 %v3288, %v3338
        %v3363 = vadd.f32 %v3289, %v3339
        %v3364 = vadd.f32 %v3290, %v3340
        %v3365 = vadd.f32 %v3291, %v3337
        %v3366 = vadd.f32 %v3292, %v3338
        %v3367 = vadd.f32 %v3293, %v3339
        %v3368 = vadd.f32 %v3294, %v3340
        %v3369 = vadd.f32 %v3295, %v3337
        %v3370 = vadd.f32 %v3296, %v3338
        %v3371 = vadd.f32 %v3297, %v3339
        %v3372 = vadd.f32 %v3298, %v3340
        %v3373 = vadd.f32 %v3299, %v3337
        %v3374 = vadd.f32 %v3300, %v3338
        %v3375 = vadd.f32 %v3301, %v3339
        %v3376 = vadd.f32 %v3302, %v3340
        %v3377 = vadd.f32 %v3303, %v3337
        %v3378 = vadd.f32 %v3304, %v3338
        %v3379 = vadd.f32 %v3305, %v3339
        %v3380 = vadd.f32 %v3306, %v3340
        %v3381 = vadd.f32 %v3307, %v3337
        %v3382 = vadd.f32 %v3308, %v3338
        %v3383 = vadd.f32 %v3309, %v3339
        %v3384 = vadd.f32 %v3310, %v3340
        %v3385 = vadd.f32 %v3311, %v3337
        %v3386 = vadd.f32 %v3312, %v3338
        %v3387 = vadd.f32 %v3313, %v3339
        %v3388 = vadd.f32 %v3314, %v3340
        %v3389 = vadd.f32 %v3315, %v3337
        %v3390 = vadd.f32 %v3316, %v3338
        %v3391 = vadd.f32 %v3317, %v3339
        %v3392 = vadd.f32 %v3318, %v3340
        %v3393 = vadd.f32 %v3319, %v3337
        %v3394 = vadd.f32 %v3320, %v3338
        %v3395 = vadd.f32 %v3321, %v3339
        %v3396 = vadd.f32 %v3322, %v3340
        %v3397 = vadd.f32 %v3323, %v3337
        %v3398 = vadd.f32 %v3324, %v3338
        %v3399 = vadd.f32 %v3325, %v3339
        %v3400 = vadd.f32 %v3326, %v3340
        %v3401 = vadd.f32 %v3327, %v3337
        %v3402 = vadd.f32 %v3328, %v3338
        %v3403 = vadd.f32 %v3329, %v3339
        %v3404 = vadd.f32 %v3330, %v3340
        %v3405 = vadd.f32 %v3331, %v3337
        %v3406 = vadd.f32 %v3332, %v3338
        %v3407 = vadd.f32 %v3333, %v3339
        %v3408 = vadd.f32 %v3334, %v3340
        %v3409 = vmax.f32 %v3345, 0.0
        %v3410 = vmax.f32 %v3346, 0.0
        %v3411 = vmax.f32 %v3347, 0.0
        %v3412 = vmax.f32 %v3348, 0.0
        %v3413 = vmax.f32 %v3349, 0.0
        %v3414 = vmax.f32 %v3350, 0.0
        %v3415 = vmax.f32 %v3351, 0.0
        %v3416 = vmax.f32 %v3352, 0.0
        %v3417 = vmax.f32 %v3353, 0.0
        %v3418 = vmax.f32 %v3354, 0.0
        %v3419 = vmax.f32 %v3355, 0.0
        %v3420 = vmax.f32 %v3356, 0.0
        %v3421 = vmax.f32 %v3357, 0.0
        %v3422 = vmax.f32 %v3358, 0.0
        %v3423 = vmax.f32 %v3359, 0.0
        %v3424 = vmax.f32 %v3360, 0.0
        %v3425 = vmax.f32 %v3361, 0.0
        %v3426 = vmax.f32 %v3362, 0.0
        %v3427 = vmax.f32 %v3363, 0.0
        %v3428 = vmax.f32 %v3364, 0.0
        %v3429 = vmax.f32 %v3365, 0.0
        %v3430 = vmax.f32 %v3366, 0.0
        %v3431 = vmax.f32 %v3367, 0.0
        %v3432 = vmax.f32 %v3368, 0.0
        %v3433 = vmax.f32 %v3369, 0.0
        %v3434 = vmax.f32 %v3370, 0.0
        %v3435 = vmax.f32 %v3371, 0.0
        %v3436 = vmax.f32 %v3372, 0.0
        %v3437 = vmax.f32 %v3373, 0.0
        %v3438 = vmax.f32 %v3374, 0.0
        %v3439 = vmax.f32 %v3375, 0.0
        %v3440 = vmax.f32 %v3376, 0.0
        %v3441 = vmax.f32 %v3377, 0.0
        %v3442 = vmax.f32 %v3378, 0.0
        %v3443 = vmax.f32 %v3379, 0.0
        %v3444 = vmax.f32 %v3380, 0.0
        %v3445 = vmax.f32 %v3381, 0.0
        %v3446 = vmax.f32 %v3382, 0.0
        %v3447 = vmax.f32 %v3383, 0.0
        %v3448 = vmax.f32 %v3384, 0.0
        %v3449 = vmax.f32 %v3385, 0.0
        %v3450 = vmax.f32 %v3386, 0.0
        %v3451 = vmax.f32 %v3387, 0.0
        %v3452 = vmax.f32 %v3388, 0.0
        %v3453 = vmax.f32 %v3389, 0.0
        %v3454 = vmax.f32 %v3390, 0.0
        %v3455 = vmax.f32 %v3391, 0.0
        %v3456 = vmax.f32 %v3392, 0.0
        %v3457 = vmax.f32 %v3393, 0.0
        %v3458 = vmax.f32 %v3394, 0.0
        %v3459 = vmax.f32 %v3395, 0.0
        %v3460 = vmax.f32 %v3396, 0.0
        %v3461 = vmax.f32 %v3397, 0.0
        %v3462 = vmax.f32 %v3398, 0.0
        %v3463 = vmax.f32 %v3399, 0.0
        %v3464 = vmax.f32 %v3400, 0.0
        %v3465 = vmax.f32 %v3401, 0.0
        %v3466 = vmax.f32 %v3402, 0.0
        %v3467 = vmax.f32 %v3403, 0.0
        %v3468 = vmax.f32 %v3404, 0.0
        %v3469 = vmax.f32 %v3405, 0.0
        %v3470 = vmax.f32 %v3406, 0.0
        %v3471 = vmax.f32 %v3407, 0.0
        %v3472 = vmax.f32 %v3408, 0.0
        %v3473 = vpack.c.bf16 %v3413, %v3409
        %v3474 = vpack.c.bf16 %v3414, %v3410
        %v3475 = vpack.c.bf16 %v3415, %v3411
        %v3476 = vpack.c.bf16 %v3416, %v3412
        %v3477 = vpack.c.bf16 %v3421, %v3417
        %v3478 = vpack.c.bf16 %v3422, %v3418
        %v3479 = vpack.c.bf16 %v3423, %v3419
        %v3480 = vpack.c.bf16 %v3424, %v3420
        %v3481 = vpack.c.bf16 %v3429, %v3425
        %v3482 = vpack.c.bf16 %v3430, %v3426
        %v3483 = vpack.c.bf16 %v3431, %v3427
        %v3484 = vpack.c.bf16 %v3432, %v3428
        %v3485 = vpack.c.bf16 %v3437, %v3433
        %v3486 = vpack.c.bf16 %v3438, %v3434
        %v3487 = vpack.c.bf16 %v3439, %v3435
        %v3488 = vpack.c.bf16 %v3440, %v3436
        %v3489 = vpack.c.bf16 %v3445, %v3441
        %v3490 = vpack.c.bf16 %v3446, %v3442
        %v3491 = vpack.c.bf16 %v3447, %v3443
        %v3492 = vpack.c.bf16 %v3448, %v3444
        %v3493 = vpack.c.bf16 %v3453, %v3449
        %v3494 = vpack.c.bf16 %v3454, %v3450
        %v3495 = vpack.c.bf16 %v3455, %v3451
        %v3496 = vpack.c.bf16 %v3456, %v3452
        %v3497 = vpack.c.bf16 %v3461, %v3457
        %v3498 = vpack.c.bf16 %v3462, %v3458
        %v3499 = vpack.c.bf16 %v3463, %v3459
        %v3500 = vpack.c.bf16 %v3464, %v3460
        %v3501 = vpack.c.bf16 %v3469, %v3465
        %v3502 = vpack.c.bf16 %v3470, %v3466
        %v3503 = vpack.c.bf16 %v3471, %v3467
        %v3504 = vpack.c.bf16 %v3472, %v3468
        %v3505 = vld [vmem:[%s4] sm:$0xf]
        %v3506 = vld [vmem:[%s4 + $0x4] sm:$0xf]
        %v3507 = vld [vmem:[%s4 + $0x8] sm:$0xf]
        %v3508 = vld [vmem:[%s4 + $0xc] sm:$0xf]
        %v3509 = vld [vmem:[%s4 + $0x10] sm:$0xf]
        %v3510 = vld [vmem:[%s4 + $0x14] sm:$0xf]
        %v3511 = vld [vmem:[%s4 + $0x18] sm:$0xf]
        %v3512 = vld [vmem:[%s4 + $0x1c] sm:$0xf]
        %v3513 = vld [vmem:[%s4 + $0x20] sm:$0xf]
        %v3514 = vld [vmem:[%s4 + $0x24] sm:$0xf]
        %v3515 = vld [vmem:[%s4 + $0x28] sm:$0xf]
        %v3516 = vld [vmem:[%s4 + $0x2c] sm:$0xf]
        %v3517 = vld [vmem:[%s4 + $0x30] sm:$0xf]
        %v3518 = vld [vmem:[%s4 + $0x34] sm:$0xf]
        %v3519 = vld [vmem:[%s4 + $0x38] sm:$0xf]
        %v3520 = vld [vmem:[%s4 + $0x3c] sm:$0xf]
        %v3521 = vld [vmem:[%s4 + $0x40] sm:$0xf]
        %v3522 = vld [vmem:[%s4 + $0x44] sm:$0xf]
        %v3523 = vld [vmem:[%s4 + $0x48] sm:$0xf]
        %v3524 = vld [vmem:[%s4 + $0x4c] sm:$0xf]
        %v3525 = vld [vmem:[%s4 + $0x50] sm:$0xf]
        %v3526 = vld [vmem:[%s4 + $0x54] sm:$0xf]
        %v3527 = vld [vmem:[%s4 + $0x58] sm:$0xf]
        %v3528 = vld [vmem:[%s4 + $0x5c] sm:$0xf]
        %v3529 = vld [vmem:[%s4 + $0x60] sm:$0xf]
        %v3530 = vld [vmem:[%s4 + $0x64] sm:$0xf]
        %v3531 = vld [vmem:[%s4 + $0x68] sm:$0xf]
        %v3532 = vld [vmem:[%s4 + $0x6c] sm:$0xf]
        %v3533 = vld [vmem:[%s4 + $0x70] sm:$0xf]
        %v3534 = vld [vmem:[%s4 + $0x74] sm:$0xf]
        %v3535 = vld [vmem:[%s4 + $0x78] sm:$0xf]
        %v3536 = vld [vmem:[%s4 + $0x7c] sm:$0xf]
        %v3569 = vunpack.c.l.b16 %v3505
        %v3570 = vunpack.c.l.b16 %v3506
        %v3571 = vunpack.c.l.b16 %v3507
        %v3572 = vunpack.c.l.b16 %v3508
        %v3573 = vunpack.c.l.b16 %v3509
        %v3574 = vunpack.c.l.b16 %v3510
        %v3575 = vunpack.c.l.b16 %v3511
        %v3576 = vunpack.c.l.b16 %v3512
        %v3577 = vunpack.c.l.b16 %v3513
        %v3578 = vunpack.c.l.b16 %v3514
        %v3579 = vunpack.c.l.b16 %v3515
        %v3580 = vunpack.c.l.b16 %v3516
        %v3581 = vunpack.c.l.b16 %v3517
        %v3582 = vunpack.c.l.b16 %v3518
        %v3583 = vunpack.c.l.b16 %v3519
        %v3584 = vunpack.c.l.b16 %v3520
        %v3585 = vunpack.c.l.b16 %v3521
        %v3586 = vunpack.c.l.b16 %v3522
        %v3587 = vunpack.c.l.b16 %v3523
        %v3588 = vunpack.c.l.b16 %v3524
        %v3589 = vunpack.c.l.b16 %v3525
        %v3590 = vunpack.c.l.b16 %v3526
        %v3591 = vunpack.c.l.b16 %v3527
        %v3592 = vunpack.c.l.b16 %v3528
        %v3593 = vunpack.c.l.b16 %v3529
        %v3594 = vunpack.c.l.b16 %v3530
        %v3595 = vunpack.c.l.b16 %v3531
        %v3596 = vunpack.c.l.b16 %v3532
        %v3597 = vunpack.c.l.b16 %v3533
        %v3598 = vunpack.c.l.b16 %v3534
        %v3599 = vunpack.c.l.b16 %v3535
        %v3600 = vunpack.c.l.b16 %v3536
        %v3601 = vpack.c.b16 %v3570, %v3569
        %v3602 = vpack.c.b16 %v3572, %v3571
        %v3603 = vpack.c.b16 %v3574, %v3573
        %v3604 = vpack.c.b16 %v3576, %v3575
        %v3605 = vpack.c.b16 %v3578, %v3577
        %v3606 = vpack.c.b16 %v3580, %v3579
        %v3607 = vpack.c.b16 %v3582, %v3581
        %v3608 = vpack.c.b16 %v3584, %v3583
        %v3609 = vpack.c.b16 %v3586, %v3585
        %v3610 = vpack.c.b16 %v3588, %v3587
        %v3611 = vpack.c.b16 %v3590, %v3589
        %v3612 = vpack.c.b16 %v3592, %v3591
        %v3613 = vpack.c.b16 %v3594, %v3593
        %v3614 = vpack.c.b16 %v3596, %v3595
        %v3615 = vpack.c.b16 %v3598, %v3597
        %v3616 = vpack.c.b16 %v3600, %v3599
        %3633 = vmatpush.bf16.msra.mxu0 %v3501
        %3634 = vmatpush.bf16.msra.mxu0 %v3497
        %3635 = vmatpush.bf16.msra.mxu0 %v3493
        %3636 = vmatpush.bf16.msra.mxu0 %v3489
        %3637 = vmatpush.bf16.msra.mxu0 %v3485
        %3638 = vmatpush.bf16.msra.mxu0 %v3481
        %3639 = vmatpush.bf16.msra.mxu0 %v3477
        %3640 = vmatpush.bf16.msra.mxu0 %v3473
        %3641 = vmatmul.bf16.gmra.mxu0 %v3601
        %v3642 = vpop.f32.mrf.mxu0
        %v3643 = vadd.f32 0.0, %v3642
        %v3644 = vpop.f32.mrf.mxu0
        %v3645 = vadd.f32 0.0, %v3644
        %3646 = vmatmul.bf16.gmra.mxu0 %v3602
        %v3647 = vpop.f32.mrf.mxu0
        %v3648 = vadd.f32 0.0, %v3647
        %v3649 = vpop.f32.mrf.mxu0
        %v3650 = vadd.f32 0.0, %v3649
        %3651 = vmatmul.bf16.gmra.mxu0 %v3603
        %v3652 = vpop.f32.mrf.mxu0
        %v3653 = vadd.f32 0.0, %v3652
        %v3654 = vpop.f32.mrf.mxu0
        %v3655 = vadd.f32 0.0, %v3654
        %3656 = vmatmul.bf16.gmra.mxu0 %v3604
        %v3657 = vpop.f32.mrf.mxu0
        %v3658 = vadd.f32 0.0, %v3657
        %v3659 = vpop.f32.mrf.mxu0
        %v3660 = vadd.f32 0.0, %v3659
        %3661 = vmatmul.bf16.gmra.mxu0 %v3605
        %v3662 = vpop.f32.mrf.mxu0
        %v3663 = vadd.f32 0.0, %v3662
        %v3664 = vpop.f32.mrf.mxu0
        %v3665 = vadd.f32 0.0, %v3664
        %3666 = vmatmul.bf16.gmra.mxu0 %v3606
        %v3667 = vpop.f32.mrf.mxu0
        %v3668 = vadd.f32 0.0, %v3667
        %v3669 = vpop.f32.mrf.mxu0
        %v3670 = vadd.f32 0.0, %v3669
        %3671 = vmatmul.bf16.gmra.mxu0 %v3607
        %v3672 = vpop.f32.mrf.mxu0
        %v3673 = vadd.f32 0.0, %v3672
        %v3674 = vpop.f32.mrf.mxu0
        %v3675 = vadd.f32 0.0, %v3674
        %3676 = vmatmul.bf16.gmra.mxu0 %v3608
        %v3677 = vpop.f32.mrf.mxu0
        %v3678 = vadd.f32 0.0, %v3677
        %v3679 = vpop.f32.mrf.mxu0
        %v3680 = vadd.f32 0.0, %v3679
        %3681 = vmatmul.bf16.gmra.mxu0 %v3609
        %v3682 = vpop.f32.mrf.mxu0
        %v3683 = vadd.f32 0.0, %v3682
        %v3684 = vpop.f32.mrf.mxu0
        %v3685 = vadd.f32 0.0, %v3684
        %3686 = vmatmul.bf16.gmra.mxu0 %v3610
        %v3687 = vpop.f32.mrf.mxu0
        %v3688 = vadd.f32 0.0, %v3687
        %v3689 = vpop.f32.mrf.mxu0
        %v3690 = vadd.f32 0.0, %v3689
        %3691 = vmatmul.bf16.gmra.mxu0 %v3611
        %v3692 = vpop.f32.mrf.mxu0
        %v3693 = vadd.f32 0.0, %v3692
        %v3694 = vpop.f32.mrf.mxu0
        %v3695 = vadd.f32 0.0, %v3694
        %3696 = vmatmul.bf16.gmra.mxu0 %v3612
        %v3697 = vpop.f32.mrf.mxu0
        %v3698 = vadd.f32 0.0, %v3697
        %v3699 = vpop.f32.mrf.mxu0
        %v3700 = vadd.f32 0.0, %v3699
        %3701 = vmatmul.bf16.gmra.mxu0 %v3613
        %v3702 = vpop.f32.mrf.mxu0
        %v3703 = vadd.f32 0.0, %v3702
        %v3704 = vpop.f32.mrf.mxu0
        %v3705 = vadd.f32 0.0, %v3704
        %3706 = vmatmul.bf16.gmra.mxu0 %v3614
        %v3707 = vpop.f32.mrf.mxu0
        %v3708 = vadd.f32 0.0, %v3707
        %v3709 = vpop.f32.mrf.mxu0
        %v3710 = vadd.f32 0.0, %v3709
        %3711 = vmatmul.bf16.gmra.mxu0 %v3615
        %v3712 = vpop.f32.mrf.mxu0
        %v3713 = vadd.f32 0.0, %v3712
        %v3714 = vpop.f32.mrf.mxu0
        %v3715 = vadd.f32 0.0, %v3714
        %3716 = vmatmul.bf16.gmra.mxu0 %v3616
        %v3717 = vpop.f32.mrf.mxu0
        %v3718 = vadd.f32 0.0, %v3717
        %v3719 = vpop.f32.mrf.mxu0
        %v3720 = vadd.f32 0.0, %v3719
        %3721 = vdwg.mxu0
        %3722 = vmatpush.bf16.msra.mxu0 %v3502
        %3723 = vmatpush.bf16.msra.mxu0 %v3498
        %3724 = vmatpush.bf16.msra.mxu0 %v3494
        %3725 = vmatpush.bf16.msra.mxu0 %v3490
        %3726 = vmatpush.bf16.msra.mxu0 %v3486
        %3727 = vmatpush.bf16.msra.mxu0 %v3482
        %3728 = vmatpush.bf16.msra.mxu0 %v3478
        %3729 = vmatpush.bf16.msra.mxu0 %v3474
        %3730 = vmatmul.bf16.gmra.mxu0 %v3601
        %v3731 = vpop.f32.mrf.mxu0
        %v3732 = vadd.f32 0.0, %v3731
        %v3733 = vpop.f32.mrf.mxu0
        %v3734 = vadd.f32 0.0, %v3733
        %3735 = vmatmul.bf16.gmra.mxu0 %v3602
        %v3736 = vpop.f32.mrf.mxu0
        %v3737 = vadd.f32 0.0, %v3736
        %v3738 = vpop.f32.mrf.mxu0
        %v3739 = vadd.f32 0.0, %v3738
        %3740 = vmatmul.bf16.gmra.mxu0 %v3603
        %v3741 = vpop.f32.mrf.mxu0
        %v3742 = vadd.f32 0.0, %v3741
        %v3743 = vpop.f32.mrf.mxu0
        %v3744 = vadd.f32 0.0, %v3743
        %3745 = vmatmul.bf16.gmra.mxu0 %v3604
        %v3746 = vpop.f32.mrf.mxu0
        %v3747 = vadd.f32 0.0, %v3746
        %v3748 = vpop.f32.mrf.mxu0
        %v3749 = vadd.f32 0.0, %v3748
        %3750 = vmatmul.bf16.gmra.mxu0 %v3605
        %v3751 = vpop.f32.mrf.mxu0
        %v3752 = vadd.f32 0.0, %v3751
        %v3753 = vpop.f32.mrf.mxu0
        %v3754 = vadd.f32 0.0, %v3753
        %3755 = vmatmul.bf16.gmra.mxu0 %v3606
        %v3756 = vpop.f32.mrf.mxu0
        %v3757 = vadd.f32 0.0, %v3756
        %v3758 = vpop.f32.mrf.mxu0
        %v3759 = vadd.f32 0.0, %v3758
        %3760 = vmatmul.bf16.gmra.mxu0 %v3607
        %v3761 = vpop.f32.mrf.mxu0
        %v3762 = vadd.f32 0.0, %v3761
        %v3763 = vpop.f32.mrf.mxu0
        %v3764 = vadd.f32 0.0, %v3763
        %3765 = vmatmul.bf16.gmra.mxu0 %v3608
        %v3766 = vpop.f32.mrf.mxu0
        %v3767 = vadd.f32 0.0, %v3766
        %v3768 = vpop.f32.mrf.mxu0
        %v3769 = vadd.f32 0.0, %v3768
        %3770 = vmatmul.bf16.gmra.mxu0 %v3609
        %v3771 = vpop.f32.mrf.mxu0
        %v3772 = vadd.f32 0.0, %v3771
        %v3773 = vpop.f32.mrf.mxu0
        %v3774 = vadd.f32 0.0, %v3773
        %3775 = vmatmul.bf16.gmra.mxu0 %v3610
        %v3776 = vpop.f32.mrf.mxu0
        %v3777 = vadd.f32 0.0, %v3776
        %v3778 = vpop.f32.mrf.mxu0
        %v3779 = vadd.f32 0.0, %v3778
        %3780 = vmatmul.bf16.gmra.mxu0 %v3611
        %v3781 = vpop.f32.mrf.mxu0
        %v3782 = vadd.f32 0.0, %v3781
        %v3783 = vpop.f32.mrf.mxu0
        %v3784 = vadd.f32 0.0, %v3783
        %3785 = vmatmul.bf16.gmra.mxu0 %v3612
        %v3786 = vpop.f32.mrf.mxu0
        %v3787 = vadd.f32 0.0, %v3786
        %v3788 = vpop.f32.mrf.mxu0
        %v3789 = vadd.f32 0.0, %v3788
        %3790 = vmatmul.bf16.gmra.mxu0 %v3613
        %v3791 = vpop.f32.mrf.mxu0
        %v3792 = vadd.f32 0.0, %v3791
        %v3793 = vpop.f32.mrf.mxu0
        %v3794 = vadd.f32 0.0, %v3793
        %3795 = vmatmul.bf16.gmra.mxu0 %v3614
        %v3796 = vpop.f32.mrf.mxu0
        %v3797 = vadd.f32 0.0, %v3796
        %v3798 = vpop.f32.mrf.mxu0
        %v3799 = vadd.f32 0.0, %v3798
        %3800 = vmatmul.bf16.gmra.mxu0 %v3615
        %v3801 = vpop.f32.mrf.mxu0
        %v3802 = vadd.f32 0.0, %v3801
        %v3803 = vpop.f32.mrf.mxu0
        %v3804 = vadd.f32 0.0, %v3803
        %3805 = vmatmul.bf16.gmra.mxu0 %v3616
        %v3806 = vpop.f32.mrf.mxu0
        %v3807 = vadd.f32 0.0, %v3806
        %v3808 = vpop.f32.mrf.mxu0
        %v3809 = vadd.f32 0.0, %v3808
        %3810 = vdwg.mxu0
        %3811 = vmatpush.bf16.msra.mxu0 %v3503
        %3812 = vmatpush.bf16.msra.mxu0 %v3499
        %3813 = vmatpush.bf16.msra.mxu0 %v3495
        %3814 = vmatpush.bf16.msra.mxu0 %v3491
        %3815 = vmatpush.bf16.msra.mxu0 %v3487
        %3816 = vmatpush.bf16.msra.mxu0 %v3483
        %3817 = vmatpush.bf16.msra.mxu0 %v3479
        %3818 = vmatpush.bf16.msra.mxu0 %v3475
        %3819 = vmatmul.bf16.gmra.mxu0 %v3601
        %v3820 = vpop.f32.mrf.mxu0
        %v3821 = vadd.f32 0.0, %v3820
        %v3822 = vpop.f32.mrf.mxu0
        %v3823 = vadd.f32 0.0, %v3822
        %3824 = vmatmul.bf16.gmra.mxu0 %v3602
        %v3825 = vpop.f32.mrf.mxu0
        %v3826 = vadd.f32 0.0, %v3825
        %v3827 = vpop.f32.mrf.mxu0
        %v3828 = vadd.f32 0.0, %v3827
        %3829 = vmatmul.bf16.gmra.mxu0 %v3603
        %v3830 = vpop.f32.mrf.mxu0
        %v3831 = vadd.f32 0.0, %v3830
        %v3832 = vpop.f32.mrf.mxu0
        %v3833 = vadd.f32 0.0, %v3832
        %3834 = vmatmul.bf16.gmra.mxu0 %v3604
        %v3835 = vpop.f32.mrf.mxu0
        %v3836 = vadd.f32 0.0, %v3835
        %v3837 = vpop.f32.mrf.mxu0
        %v3838 = vadd.f32 0.0, %v3837
        %3839 = vmatmul.bf16.gmra.mxu0 %v3605
        %v3840 = vpop.f32.mrf.mxu0
        %v3841 = vadd.f32 0.0, %v3840
        %v3842 = vpop.f32.mrf.mxu0
        %v3843 = vadd.f32 0.0, %v3842
        %3844 = vmatmul.bf16.gmra.mxu0 %v3606
        %v3845 = vpop.f32.mrf.mxu0
        %v3846 = vadd.f32 0.0, %v3845
        %v3847 = vpop.f32.mrf.mxu0
        %v3848 = vadd.f32 0.0, %v3847
        %3849 = vmatmul.bf16.gmra.mxu0 %v3607
        %v3850 = vpop.f32.mrf.mxu0
        %v3851 = vadd.f32 0.0, %v3850
        %v3852 = vpop.f32.mrf.mxu0
        %v3853 = vadd.f32 0.0, %v3852
        %3854 = vmatmul.bf16.gmra.mxu0 %v3608
        %v3855 = vpop.f32.mrf.mxu0
        %v3856 = vadd.f32 0.0, %v3855
        %v3857 = vpop.f32.mrf.mxu0
        %v3858 = vadd.f32 0.0, %v3857
        %3859 = vmatmul.bf16.gmra.mxu0 %v3609
        %v3860 = vpop.f32.mrf.mxu0
        %v3861 = vadd.f32 0.0, %v3860
        %v3862 = vpop.f32.mrf.mxu0
        %v3863 = vadd.f32 0.0, %v3862
        %3864 = vmatmul.bf16.gmra.mxu0 %v3610
        %v3865 = vpop.f32.mrf.mxu0
        %v3866 = vadd.f32 0.0, %v3865
        %v3867 = vpop.f32.mrf.mxu0
        %v3868 = vadd.f32 0.0, %v3867
        %3869 = vmatmul.bf16.gmra.mxu0 %v3611
        %v3870 = vpop.f32.mrf.mxu0
        %v3871 = vadd.f32 0.0, %v3870
        %v3872 = vpop.f32.mrf.mxu0
        %v3873 = vadd.f32 0.0, %v3872
        %3874 = vmatmul.bf16.gmra.mxu0 %v3612
        %v3875 = vpop.f32.mrf.mxu0
        %v3876 = vadd.f32 0.0, %v3875
        %v3877 = vpop.f32.mrf.mxu0
        %v3878 = vadd.f32 0.0, %v3877
        %3879 = vmatmul.bf16.gmra.mxu0 %v3613
        %v3880 = vpop.f32.mrf.mxu0
        %v3881 = vadd.f32 0.0, %v3880
        %v3882 = vpop.f32.mrf.mxu0
        %v3883 = vadd.f32 0.0, %v3882
        %3884 = vmatmul.bf16.gmra.mxu0 %v3614
        %v3885 = vpop.f32.mrf.mxu0
        %v3886 = vadd.f32 0.0, %v3885
        %v3887 = vpop.f32.mrf.mxu0
        %v3888 = vadd.f32 0.0, %v3887
        %3889 = vmatmul.bf16.gmra.mxu0 %v3615
        %v3890 = vpop.f32.mrf.mxu0
        %v3891 = vadd.f32 0.0, %v3890
        %v3892 = vpop.f32.mrf.mxu0
        %v3893 = vadd.f32 0.0, %v3892
        %3894 = vmatmul.bf16.gmra.mxu0 %v3616
        %v3895 = vpop.f32.mrf.mxu0
        %v3896 = vadd.f32 0.0, %v3895
        %v3897 = vpop.f32.mrf.mxu0
        %v3898 = vadd.f32 0.0, %v3897
        %3899 = vdwg.mxu0
        %3900 = vmatpush.bf16.msra.mxu0 %v3504
        %3901 = vmatpush.bf16.msra.mxu0 %v3500
        %3902 = vmatpush.bf16.msra.mxu0 %v3496
        %3903 = vmatpush.bf16.msra.mxu0 %v3492
        %3904 = vmatpush.bf16.msra.mxu0 %v3488
        %3905 = vmatpush.bf16.msra.mxu0 %v3484
        %3906 = vmatpush.bf16.msra.mxu0 %v3480
        %3907 = vmatpush.bf16.msra.mxu0 %v3476
        %3908 = vmatmul.bf16.gmra.mxu0 %v3601
        %v3909 = vpop.f32.mrf.mxu0
        %v3910 = vadd.f32 0.0, %v3909
        %v3911 = vpop.f32.mrf.mxu0
        %v3912 = vadd.f32 0.0, %v3911
        %3913 = vmatmul.bf16.gmra.mxu0 %v3602
        %v3914 = vpop.f32.mrf.mxu0
        %v3915 = vadd.f32 0.0, %v3914
        %v3916 = vpop.f32.mrf.mxu0
        %v3917 = vadd.f32 0.0, %v3916
        %3918 = vmatmul.bf16.gmra.mxu0 %v3603
        %v3919 = vpop.f32.mrf.mxu0
        %v3920 = vadd.f32 0.0, %v3919
        %v3921 = vpop.f32.mrf.mxu0
        %v3922 = vadd.f32 0.0, %v3921
        %3923 = vmatmul.bf16.gmra.mxu0 %v3604
        %v3924 = vpop.f32.mrf.mxu0
        %v3925 = vadd.f32 0.0, %v3924
        %v3926 = vpop.f32.mrf.mxu0
        %v3927 = vadd.f32 0.0, %v3926
        %3928 = vmatmul.bf16.gmra.mxu0 %v3605
        %v3929 = vpop.f32.mrf.mxu0
        %v3930 = vadd.f32 0.0, %v3929
        %v3931 = vpop.f32.mrf.mxu0
        %v3932 = vadd.f32 0.0, %v3931
        %3933 = vmatmul.bf16.gmra.mxu0 %v3606
        %v3934 = vpop.f32.mrf.mxu0
        %v3935 = vadd.f32 0.0, %v3934
        %v3936 = vpop.f32.mrf.mxu0
        %v3937 = vadd.f32 0.0, %v3936
        %3938 = vmatmul.bf16.gmra.mxu0 %v3607
        %v3939 = vpop.f32.mrf.mxu0
        %v3940 = vadd.f32 0.0, %v3939
        %v3941 = vpop.f32.mrf.mxu0
        %v3942 = vadd.f32 0.0, %v3941
        %3943 = vmatmul.bf16.gmra.mxu0 %v3608
        %v3944 = vpop.f32.mrf.mxu0
        %v3945 = vadd.f32 0.0, %v3944
        %v3946 = vpop.f32.mrf.mxu0
        %v3947 = vadd.f32 0.0, %v3946
        %3948 = vmatmul.bf16.gmra.mxu0 %v3609
        %v3949 = vpop.f32.mrf.mxu0
        %v3950 = vadd.f32 0.0, %v3949
        %v3951 = vpop.f32.mrf.mxu0
        %v3952 = vadd.f32 0.0, %v3951
        %3953 = vmatmul.bf16.gmra.mxu0 %v3610
        %v3954 = vpop.f32.mrf.mxu0
        %v3955 = vadd.f32 0.0, %v3954
        %v3956 = vpop.f32.mrf.mxu0
        %v3957 = vadd.f32 0.0, %v3956
        %3958 = vmatmul.bf16.gmra.mxu0 %v3611
        %v3959 = vpop.f32.mrf.mxu0
        %v3960 = vadd.f32 0.0, %v3959
        %v3961 = vpop.f32.mrf.mxu0
        %v3962 = vadd.f32 0.0, %v3961
        %3963 = vmatmul.bf16.gmra.mxu0 %v3612
        %v3964 = vpop.f32.mrf.mxu0
        %v3965 = vadd.f32 0.0, %v3964
        %v3966 = vpop.f32.mrf.mxu0
        %v3967 = vadd.f32 0.0, %v3966
        %3968 = vmatmul.bf16.gmra.mxu0 %v3613
        %v3969 = vpop.f32.mrf.mxu0
        %v3970 = vadd.f32 0.0, %v3969
        %v3971 = vpop.f32.mrf.mxu0
        %v3972 = vadd.f32 0.0, %v3971
        %3973 = vmatmul.bf16.gmra.mxu0 %v3614
        %v3974 = vpop.f32.mrf.mxu0
        %v3975 = vadd.f32 0.0, %v3974
        %v3976 = vpop.f32.mrf.mxu0
        %v3977 = vadd.f32 0.0, %v3976
        %3978 = vmatmul.bf16.gmra.mxu0 %v3615
        %v3979 = vpop.f32.mrf.mxu0
        %v3980 = vadd.f32 0.0, %v3979
        %v3981 = vpop.f32.mrf.mxu0
        %v3982 = vadd.f32 0.0, %v3981
        %3983 = vmatmul.bf16.gmra.mxu0 %v3616
        %v3984 = vpop.f32.mrf.mxu0
        %v3985 = vadd.f32 0.0, %v3984
        %v3986 = vpop.f32.mrf.mxu0
        %v3987 = vadd.f32 0.0, %v3986
        %3988 = vdwg.mxu0
        %v3989 = vpack.c.bf16 %v3732, %v3643
        %v3990 = vpack.c.bf16 %v3910, %v3821
        %v3991 = vpack.c.bf16 %v3734, %v3645
        %v3992 = vpack.c.bf16 %v3912, %v3823
        %v3993 = vpack.c.bf16 %v3737, %v3648
        %v3994 = vpack.c.bf16 %v3915, %v3826
        %v3995 = vpack.c.bf16 %v3739, %v3650
        %v3996 = vpack.c.bf16 %v3917, %v3828
        %v3997 = vpack.c.bf16 %v3742, %v3653
        %v3998 = vpack.c.bf16 %v3920, %v3831
        %v3999 = vpack.c.bf16 %v3744, %v3655
        %v4000 = vpack.c.bf16 %v3922, %v3833
        %v4001 = vpack.c.bf16 %v3747, %v3658
        %v4002 = vpack.c.bf16 %v3925, %v3836
        %v4003 = vpack.c.bf16 %v3749, %v3660
        %v4004 = vpack.c.bf16 %v3927, %v3838
        %v4005 = vpack.c.bf16 %v3752, %v3663
        %v4006 = vpack.c.bf16 %v3930, %v3841
        %v4007 = vpack.c.bf16 %v3754, %v3665
        %v4008 = vpack.c.bf16 %v3932, %v3843
        %v4009 = vpack.c.bf16 %v3757, %v3668
        %v4010 = vpack.c.bf16 %v3935, %v3846
        %v4011 = vpack.c.bf16 %v3759, %v3670
        %v4012 = vpack.c.bf16 %v3937, %v3848
        %v4013 = vpack.c.bf16 %v3762, %v3673
        %v4014 = vpack.c.bf16 %v3940, %v3851
        %v4015 = vpack.c.bf16 %v3764, %v3675
        %v4016 = vpack.c.bf16 %v3942, %v3853
        %v4017 = vpack.c.bf16 %v3767, %v3678
        %v4018 = vpack.c.bf16 %v3945, %v3856
        %v4019 = vpack.c.bf16 %v3769, %v3680
        %v4020 = vpack.c.bf16 %v3947, %v3858
        %v4021 = vpack.c.bf16 %v3772, %v3683
        %v4022 = vpack.c.bf16 %v3950, %v3861
        %v4023 = vpack.c.bf16 %v3774, %v3685
        %v4024 = vpack.c.bf16 %v3952, %v3863
        %v4025 = vpack.c.bf16 %v3777, %v3688
        %v4026 = vpack.c.bf16 %v3955, %v3866
        %v4027 = vpack.c.bf16 %v3779, %v3690
        %v4028 = vpack.c.bf16 %v3957, %v3868
        %v4029 = vpack.c.bf16 %v3782, %v3693
        %v4030 = vpack.c.bf16 %v3960, %v3871
        %v4031 = vpack.c.bf16 %v3784, %v3695
        %v4032 = vpack.c.bf16 %v3962, %v3873
        %v4033 = vpack.c.bf16 %v3787, %v3698
        %v4034 = vpack.c.bf16 %v3965, %v3876
        %v4035 = vpack.c.bf16 %v3789, %v3700
        %v4036 = vpack.c.bf16 %v3967, %v3878
        %v4037 = vpack.c.bf16 %v3792, %v3703
        %v4038 = vpack.c.bf16 %v3970, %v3881
        %v4039 = vpack.c.bf16 %v3794, %v3705
        %v4040 = vpack.c.bf16 %v3972, %v3883
        %v4041 = vpack.c.bf16 %v3797, %v3708
        %v4042 = vpack.c.bf16 %v3975, %v3886
        %v4043 = vpack.c.bf16 %v3799, %v3710
        %v4044 = vpack.c.bf16 %v3977, %v3888
        %v4045 = vpack.c.bf16 %v3802, %v3713
        %v4046 = vpack.c.bf16 %v3980, %v3891
        %v4047 = vpack.c.bf16 %v3804, %v3715
        %v4048 = vpack.c.bf16 %v3982, %v3893
        %v4049 = vpack.c.bf16 %v3807, %v3718
        %v4050 = vpack.c.bf16 %v3985, %v3896
        %v4051 = vpack.c.bf16 %v3809, %v3720
        %v4052 = vpack.c.bf16 %v3987, %v3898
        %v4053 = vld [vmem:[%s5] sm:$0xff]
        %v4054 = vld [vmem:[%s5 + $0x8] sm:$0xff]
        %v4055 = vld [vmem:[%s5 + $0x10] sm:$0xff]
        %v4056 = vld [vmem:[%s5 + $0x18] sm:$0xff]
        %v4057 = vld [vmem:[%s5 + $0x20] sm:$0xff]
        %v4058 = vld [vmem:[%s5 + $0x28] sm:$0xff]
        %v4059 = vld [vmem:[%s5 + $0x30] sm:$0xff]
        %v4060 = vld [vmem:[%s5 + $0x38] sm:$0xff]
        %v4061 = vld [vmem:[%s5 + $0x40] sm:$0xff]
        %v4062 = vld [vmem:[%s5 + $0x48] sm:$0xff]
        %v4063 = vld [vmem:[%s5 + $0x50] sm:$0xff]
        %v4064 = vld [vmem:[%s5 + $0x58] sm:$0xff]
        %v4065 = vld [vmem:[%s5 + $0x60] sm:$0xff]
        %v4066 = vld [vmem:[%s5 + $0x68] sm:$0xff]
        %v4067 = vld [vmem:[%s5 + $0x70] sm:$0xff]
        %v4068 = vld [vmem:[%s5 + $0x78] sm:$0xff]
        %v4069 = vld [vmem:[%s5 + $0x80] sm:$0xff]
        %v4070 = vld [vmem:[%s5 + $0x88] sm:$0xff]
        %v4071 = vld [vmem:[%s5 + $0x90] sm:$0xff]
        %v4072 = vld [vmem:[%s5 + $0x98] sm:$0xff]
        %v4073 = vld [vmem:[%s5 + $0xa0] sm:$0xff]
        %v4074 = vld [vmem:[%s5 + $0xa8] sm:$0xff]
        %v4075 = vld [vmem:[%s5 + $0xb0] sm:$0xff]
        %v4076 = vld [vmem:[%s5 + $0xb8] sm:$0xff]
        %v4077 = vld [vmem:[%s5 + $0xc0] sm:$0xff]
        %v4078 = vld [vmem:[%s5 + $0xc8] sm:$0xff]
        %v4079 = vld [vmem:[%s5 + $0xd0] sm:$0xff]
        %v4080 = vld [vmem:[%s5 + $0xd8] sm:$0xff]
        %v4081 = vld [vmem:[%s5 + $0xe0] sm:$0xff]
        %v4082 = vld [vmem:[%s5 + $0xe8] sm:$0xff]
        %v4083 = vld [vmem:[%s5 + $0xf0] sm:$0xff]
        %v4084 = vld [vmem:[%s5 + $0xf8] sm:$0xff]
        %v4085 = vld [vmem:[%s5 + $0x100] sm:$0xff]
        %v4086 = vld [vmem:[%s5 + $0x108] sm:$0xff]
        %v4087 = vld [vmem:[%s5 + $0x110] sm:$0xff]
        %v4088 = vld [vmem:[%s5 + $0x118] sm:$0xff]
        %v4089 = vld [vmem:[%s5 + $0x120] sm:$0xff]
        %v4090 = vld [vmem:[%s5 + $0x128] sm:$0xff]
        %v4091 = vld [vmem:[%s5 + $0x130] sm:$0xff]
        %v4092 = vld [vmem:[%s5 + $0x138] sm:$0xff]
        %v4093 = vld [vmem:[%s5 + $0x140] sm:$0xff]
        %v4094 = vld [vmem:[%s5 + $0x148] sm:$0xff]
        %v4095 = vld [vmem:[%s5 + $0x150] sm:$0xff]
        %v4096 = vld [vmem:[%s5 + $0x158] sm:$0xff]
        %v4097 = vld [vmem:[%s5 + $0x160] sm:$0xff]
        %v4098 = vld [vmem:[%s5 + $0x168] sm:$0xff]
        %v4099 = vld [vmem:[%s5 + $0x170] sm:$0xff]
        %v4100 = vld [vmem:[%s5 + $0x178] sm:$0xff]
        %v4101 = vld [vmem:[%s5 + $0x180] sm:$0xff]
        %v4102 = vld [vmem:[%s5 + $0x188] sm:$0xff]
        %v4103 = vld [vmem:[%s5 + $0x190] sm:$0xff]
        %v4104 = vld [vmem:[%s5 + $0x198] sm:$0xff]
        %v4105 = vld [vmem:[%s5 + $0x1a0] sm:$0xff]
        %v4106 = vld [vmem:[%s5 + $0x1a8] sm:$0xff]
        %v4107 = vld [vmem:[%s5 + $0x1b0] sm:$0xff]
        %v4108 = vld [vmem:[%s5 + $0x1b8] sm:$0xff]
        %v4109 = vld [vmem:[%s5 + $0x1c0] sm:$0xff]
        %v4110 = vld [vmem:[%s5 + $0x1c8] sm:$0xff]
        %v4111 = vld [vmem:[%s5 + $0x1d0] sm:$0xff]
        %v4112 = vld [vmem:[%s5 + $0x1d8] sm:$0xff]
        %v4113 = vld [vmem:[%s5 + $0x1e0] sm:$0xff]
        %v4114 = vld [vmem:[%s5 + $0x1e8] sm:$0xff]
        %v4115 = vld [vmem:[%s5 + $0x1f0] sm:$0xff]
        %v4116 = vld [vmem:[%s5 + $0x1f8] sm:$0xff]
        %v4117 = vld [vmem:[%s5 + $0x200] sm:$0xff]
        %v4118 = vld [vmem:[%s5 + $0x208] sm:$0xff]
        %v4119 = vld [vmem:[%s5 + $0x210] sm:$0xff]
        %v4120 = vld [vmem:[%s5 + $0x218] sm:$0xff]
        %v4121 = vld [vmem:[%s5 + $0x220] sm:$0xff]
        %v4122 = vld [vmem:[%s5 + $0x228] sm:$0xff]
        %v4123 = vld [vmem:[%s5 + $0x230] sm:$0xff]
        %v4124 = vld [vmem:[%s5 + $0x238] sm:$0xff]
        %v4125 = vld [vmem:[%s5 + $0x240] sm:$0xff]
        %v4126 = vld [vmem:[%s5 + $0x248] sm:$0xff]
        %v4127 = vld [vmem:[%s5 + $0x250] sm:$0xff]
        %v4128 = vld [vmem:[%s5 + $0x258] sm:$0xff]
        %v4129 = vld [vmem:[%s5 + $0x260] sm:$0xff]
        %v4130 = vld [vmem:[%s5 + $0x268] sm:$0xff]
        %v4131 = vld [vmem:[%s5 + $0x270] sm:$0xff]
        %v4132 = vld [vmem:[%s5 + $0x278] sm:$0xff]
        %v4133 = vld [vmem:[%s5 + $0x280] sm:$0xff]
        %v4134 = vld [vmem:[%s5 + $0x288] sm:$0xff]
        %v4135 = vld [vmem:[%s5 + $0x290] sm:$0xff]
        %v4136 = vld [vmem:[%s5 + $0x298] sm:$0xff]
        %v4137 = vld [vmem:[%s5 + $0x2a0] sm:$0xff]
        %v4138 = vld [vmem:[%s5 + $0x2a8] sm:$0xff]
        %v4139 = vld [vmem:[%s5 + $0x2b0] sm:$0xff]
        %v4140 = vld [vmem:[%s5 + $0x2b8] sm:$0xff]
        %v4141 = vld [vmem:[%s5 + $0x2c0] sm:$0xff]
        %v4142 = vld [vmem:[%s5 + $0x2c8] sm:$0xff]
        %v4143 = vld [vmem:[%s5 + $0x2d0] sm:$0xff]
        %v4144 = vld [vmem:[%s5 + $0x2d8] sm:$0xff]
        %v4145 = vld [vmem:[%s5 + $0x2e0] sm:$0xff]
        %v4146 = vld [vmem:[%s5 + $0x2e8] sm:$0xff]
        %v4147 = vld [vmem:[%s5 + $0x2f0] sm:$0xff]
        %v4148 = vld [vmem:[%s5 + $0x2f8] sm:$0xff]
        %v4149 = vld [vmem:[%s5 + $0x300] sm:$0xff]
        %v4150 = vld [vmem:[%s5 + $0x308] sm:$0xff]
        %v4151 = vld [vmem:[%s5 + $0x310] sm:$0xff]
        %v4152 = vld [vmem:[%s5 + $0x318] sm:$0xff]
        %v4153 = vld [vmem:[%s5 + $0x320] sm:$0xff]
        %v4154 = vld [vmem:[%s5 + $0x328] sm:$0xff]
        %v4155 = vld [vmem:[%s5 + $0x330] sm:$0xff]
        %v4156 = vld [vmem:[%s5 + $0x338] sm:$0xff]
        %v4157 = vld [vmem:[%s5 + $0x340] sm:$0xff]
        %v4158 = vld [vmem:[%s5 + $0x348] sm:$0xff]
        %v4159 = vld [vmem:[%s5 + $0x350] sm:$0xff]
        %v4160 = vld [vmem:[%s5 + $0x358] sm:$0xff]
        %v4161 = vld [vmem:[%s5 + $0x360] sm:$0xff]
        %v4162 = vld [vmem:[%s5 + $0x368] sm:$0xff]
        %v4163 = vld [vmem:[%s5 + $0x370] sm:$0xff]
        %v4164 = vld [vmem:[%s5 + $0x378] sm:$0xff]
        %v4165 = vld [vmem:[%s5 + $0x380] sm:$0xff]
        %v4166 = vld [vmem:[%s5 + $0x388] sm:$0xff]
        %v4167 = vld [vmem:[%s5 + $0x390] sm:$0xff]
        %v4168 = vld [vmem:[%s5 + $0x398] sm:$0xff]
        %v4169 = vld [vmem:[%s5 + $0x3a0] sm:$0xff]
        %v4170 = vld [vmem:[%s5 + $0x3a8] sm:$0xff]
        %v4171 = vld [vmem:[%s5 + $0x3b0] sm:$0xff]
        %v4172 = vld [vmem:[%s5 + $0x3b8] sm:$0xff]
        %v4173 = vld [vmem:[%s5 + $0x3c0] sm:$0xff]
        %v4174 = vld [vmem:[%s5 + $0x3c8] sm:$0xff]
        %v4175 = vld [vmem:[%s5 + $0x3d0] sm:$0xff]
        %v4176 = vld [vmem:[%s5 + $0x3d8] sm:$0xff]
        %v4177 = vld [vmem:[%s5 + $0x3e0] sm:$0xff]
        %v4178 = vld [vmem:[%s5 + $0x3e8] sm:$0xff]
        %v4179 = vld [vmem:[%s5 + $0x3f0] sm:$0xff]
        %v4180 = vld [vmem:[%s5 + $0x3f8] sm:$0xff]
        %s4181 = scalar_lea.vmem %s5, 1024
        %v4182 = vld [vmem:[%s4181] sm:$0xff]
        %v4183 = vld [vmem:[%s4181 + $0x8] sm:$0xff]
        %v4184 = vld [vmem:[%s4181 + $0x10] sm:$0xff]
        %v4185 = vld [vmem:[%s4181 + $0x18] sm:$0xff]
        %v4186 = vld [vmem:[%s4181 + $0x20] sm:$0xff]
        %v4187 = vld [vmem:[%s4181 + $0x28] sm:$0xff]
        %v4188 = vld [vmem:[%s4181 + $0x30] sm:$0xff]
        %v4189 = vld [vmem:[%s4181 + $0x38] sm:$0xff]
        %v4190 = vld [vmem:[%s4181 + $0x40] sm:$0xff]
        %v4191 = vld [vmem:[%s4181 + $0x48] sm:$0xff]
        %v4192 = vld [vmem:[%s4181 + $0x50] sm:$0xff]
        %v4193 = vld [vmem:[%s4181 + $0x58] sm:$0xff]
        %v4194 = vld [vmem:[%s4181 + $0x60] sm:$0xff]
        %v4195 = vld [vmem:[%s4181 + $0x68] sm:$0xff]
        %v4196 = vld [vmem:[%s4181 + $0x70] sm:$0xff]
        %v4197 = vld [vmem:[%s4181 + $0x78] sm:$0xff]
        %v4198 = vld [vmem:[%s4181 + $0x80] sm:$0xff]
        %v4199 = vld [vmem:[%s4181 + $0x88] sm:$0xff]
        %v4200 = vld [vmem:[%s4181 + $0x90] sm:$0xff]
        %v4201 = vld [vmem:[%s4181 + $0x98] sm:$0xff]
        %v4202 = vld [vmem:[%s4181 + $0xa0] sm:$0xff]
        %v4203 = vld [vmem:[%s4181 + $0xa8] sm:$0xff]
        %v4204 = vld [vmem:[%s4181 + $0xb0] sm:$0xff]
        %v4205 = vld [vmem:[%s4181 + $0xb8] sm:$0xff]
        %v4206 = vld [vmem:[%s4181 + $0xc0] sm:$0xff]
        %v4207 = vld [vmem:[%s4181 + $0xc8] sm:$0xff]
        %v4208 = vld [vmem:[%s4181 + $0xd0] sm:$0xff]
        %v4209 = vld [vmem:[%s4181 + $0xd8] sm:$0xff]
        %v4210 = vld [vmem:[%s4181 + $0xe0] sm:$0xff]
        %v4211 = vld [vmem:[%s4181 + $0xe8] sm:$0xff]
        %v4212 = vld [vmem:[%s4181 + $0xf0] sm:$0xff]
        %v4213 = vld [vmem:[%s4181 + $0xf8] sm:$0xff]
        %v4214 = vld [vmem:[%s4181 + $0x100] sm:$0xff]
        %v4215 = vld [vmem:[%s4181 + $0x108] sm:$0xff]
        %v4216 = vld [vmem:[%s4181 + $0x110] sm:$0xff]
        %v4217 = vld [vmem:[%s4181 + $0x118] sm:$0xff]
        %v4218 = vld [vmem:[%s4181 + $0x120] sm:$0xff]
        %v4219 = vld [vmem:[%s4181 + $0x128] sm:$0xff]
        %v4220 = vld [vmem:[%s4181 + $0x130] sm:$0xff]
        %v4221 = vld [vmem:[%s4181 + $0x138] sm:$0xff]
        %v4222 = vld [vmem:[%s4181 + $0x140] sm:$0xff]
        %v4223 = vld [vmem:[%s4181 + $0x148] sm:$0xff]
        %v4224 = vld [vmem:[%s4181 + $0x150] sm:$0xff]
        %v4225 = vld [vmem:[%s4181 + $0x158] sm:$0xff]
        %v4226 = vld [vmem:[%s4181 + $0x160] sm:$0xff]
        %v4227 = vld [vmem:[%s4181 + $0x168] sm:$0xff]
        %v4228 = vld [vmem:[%s4181 + $0x170] sm:$0xff]
        %v4229 = vld [vmem:[%s4181 + $0x178] sm:$0xff]
        %v4230 = vld [vmem:[%s4181 + $0x180] sm:$0xff]
        %v4231 = vld [vmem:[%s4181 + $0x188] sm:$0xff]
        %v4232 = vld [vmem:[%s4181 + $0x190] sm:$0xff]
        %v4233 = vld [vmem:[%s4181 + $0x198] sm:$0xff]
        %v4234 = vld [vmem:[%s4181 + $0x1a0] sm:$0xff]
        %v4235 = vld [vmem:[%s4181 + $0x1a8] sm:$0xff]
        %v4236 = vld [vmem:[%s4181 + $0x1b0] sm:$0xff]
        %v4237 = vld [vmem:[%s4181 + $0x1b8] sm:$0xff]
        %v4238 = vld [vmem:[%s4181 + $0x1c0] sm:$0xff]
        %v4239 = vld [vmem:[%s4181 + $0x1c8] sm:$0xff]
        %v4240 = vld [vmem:[%s4181 + $0x1d0] sm:$0xff]
        %v4241 = vld [vmem:[%s4181 + $0x1d8] sm:$0xff]
        %v4242 = vld [vmem:[%s4181 + $0x1e0] sm:$0xff]
        %v4243 = vld [vmem:[%s4181 + $0x1e8] sm:$0xff]
        %v4244 = vld [vmem:[%s4181 + $0x1f0] sm:$0xff]
        %v4245 = vld [vmem:[%s4181 + $0x1f8] sm:$0xff]
        %v4246 = vld [vmem:[%s4181 + $0x200] sm:$0xff]
        %v4247 = vld [vmem:[%s4181 + $0x208] sm:$0xff]
        %v4248 = vld [vmem:[%s4181 + $0x210] sm:$0xff]
        %v4249 = vld [vmem:[%s4181 + $0x218] sm:$0xff]
        %v4250 = vld [vmem:[%s4181 + $0x220] sm:$0xff]
        %v4251 = vld [vmem:[%s4181 + $0x228] sm:$0xff]
        %v4252 = vld [vmem:[%s4181 + $0x230] sm:$0xff]
        %v4253 = vld [vmem:[%s4181 + $0x238] sm:$0xff]
        %v4254 = vld [vmem:[%s4181 + $0x240] sm:$0xff]
        %v4255 = vld [vmem:[%s4181 + $0x248] sm:$0xff]
        %v4256 = vld [vmem:[%s4181 + $0x250] sm:$0xff]
        %v4257 = vld [vmem:[%s4181 + $0x258] sm:$0xff]
        %v4258 = vld [vmem:[%s4181 + $0x260] sm:$0xff]
        %v4259 = vld [vmem:[%s4181 + $0x268] sm:$0xff]
        %v4260 = vld [vmem:[%s4181 + $0x270] sm:$0xff]
        %v4261 = vld [vmem:[%s4181 + $0x278] sm:$0xff]
        %v4262 = vld [vmem:[%s4181 + $0x280] sm:$0xff]
        %v4263 = vld [vmem:[%s4181 + $0x288] sm:$0xff]
        %v4264 = vld [vmem:[%s4181 + $0x290] sm:$0xff]
        %v4265 = vld [vmem:[%s4181 + $0x298] sm:$0xff]
        %v4266 = vld [vmem:[%s4181 + $0x2a0] sm:$0xff]
        %v4267 = vld [vmem:[%s4181 + $0x2a8] sm:$0xff]
        %v4268 = vld [vmem:[%s4181 + $0x2b0] sm:$0xff]
        %v4269 = vld [vmem:[%s4181 + $0x2b8] sm:$0xff]
        %v4270 = vld [vmem:[%s4181 + $0x2c0] sm:$0xff]
        %v4271 = vld [vmem:[%s4181 + $0x2c8] sm:$0xff]
        %v4272 = vld [vmem:[%s4181 + $0x2d0] sm:$0xff]
        %v4273 = vld [vmem:[%s4181 + $0x2d8] sm:$0xff]
        %v4274 = vld [vmem:[%s4181 + $0x2e0] sm:$0xff]
        %v4275 = vld [vmem:[%s4181 + $0x2e8] sm:$0xff]
        %v4276 = vld [vmem:[%s4181 + $0x2f0] sm:$0xff]
        %v4277 = vld [vmem:[%s4181 + $0x2f8] sm:$0xff]
        %v4278 = vld [vmem:[%s4181 + $0x300] sm:$0xff]
        %v4279 = vld [vmem:[%s4181 + $0x308] sm:$0xff]
        %v4280 = vld [vmem:[%s4181 + $0x310] sm:$0xff]
        %v4281 = vld [vmem:[%s4181 + $0x318] sm:$0xff]
        %v4282 = vld [vmem:[%s4181 + $0x320] sm:$0xff]
        %v4283 = vld [vmem:[%s4181 + $0x328] sm:$0xff]
        %v4284 = vld [vmem:[%s4181 + $0x330] sm:$0xff]
        %v4285 = vld [vmem:[%s4181 + $0x338] sm:$0xff]
        %v4286 = vld [vmem:[%s4181 + $0x340] sm:$0xff]
        %v4287 = vld [vmem:[%s4181 + $0x348] sm:$0xff]
        %v4288 = vld [vmem:[%s4181 + $0x350] sm:$0xff]
        %v4289 = vld [vmem:[%s4181 + $0x358] sm:$0xff]
        %v4290 = vld [vmem:[%s4181 + $0x360] sm:$0xff]
        %v4291 = vld [vmem:[%s4181 + $0x368] sm:$0xff]
        %v4292 = vld [vmem:[%s4181 + $0x370] sm:$0xff]
        %v4293 = vld [vmem:[%s4181 + $0x378] sm:$0xff]
        %v4294 = vld [vmem:[%s4181 + $0x380] sm:$0xff]
        %v4295 = vld [vmem:[%s4181 + $0x388] sm:$0xff]
        %v4296 = vld [vmem:[%s4181 + $0x390] sm:$0xff]
        %v4297 = vld [vmem:[%s4181 + $0x398] sm:$0xff]
        %v4298 = vld [vmem:[%s4181 + $0x3a0] sm:$0xff]
        %v4299 = vld [vmem:[%s4181 + $0x3a8] sm:$0xff]
        %v4300 = vld [vmem:[%s4181 + $0x3b0] sm:$0xff]
        %v4301 = vld [vmem:[%s4181 + $0x3b8] sm:$0xff]
        %v4302 = vld [vmem:[%s4181 + $0x3c0] sm:$0xff]
        %v4303 = vld [vmem:[%s4181 + $0x3c8] sm:$0xff]
        %v4304 = vld [vmem:[%s4181 + $0x3d0] sm:$0xff]
        %v4305 = vld [vmem:[%s4181 + $0x3d8] sm:$0xff]
        %v4306 = vld [vmem:[%s4181 + $0x3e0] sm:$0xff]
        %v4307 = vld [vmem:[%s4181 + $0x3e8] sm:$0xff]
        %v4308 = vld [vmem:[%s4181 + $0x3f0] sm:$0xff]
        %v4309 = vld [vmem:[%s4181 + $0x3f8] sm:$0xff]
        %v4326 = vunpack.c.l.b16 %v4005
        %v4327 = vunpack.c.h.b16 %v4005
        %v4328 = vunpack.c.l.b16 %v4006
        %v4329 = vunpack.c.h.b16 %v4006
        %v4330 = vunpack.c.l.b16 %v4007
        %v4331 = vunpack.c.h.b16 %v4007
        %v4332 = vunpack.c.l.b16 %v4008
        %v4333 = vunpack.c.h.b16 %v4008
        %v4334 = vunpack.c.l.b16 %v4009
        %v4335 = vunpack.c.h.b16 %v4009
        %v4336 = vunpack.c.l.b16 %v4010
        %v4337 = vunpack.c.h.b16 %v4010
        %v4338 = vunpack.c.l.b16 %v4011
        %v4339 = vunpack.c.h.b16 %v4011
        %v4340 = vunpack.c.l.b16 %v4012
        %v4341 = vunpack.c.h.b16 %v4012
        %v4342 = vunpack.c.l.b16 %v4013
        %v4343 = vunpack.c.h.b16 %v4013
        %v4344 = vunpack.c.l.b16 %v4014
        %v4345 = vunpack.c.h.b16 %v4014
        %v4346 = vunpack.c.l.b16 %v4015
        %v4347 = vunpack.c.h.b16 %v4015
        %v4348 = vunpack.c.l.b16 %v4016
        %v4349 = vunpack.c.h.b16 %v4016
        %v4350 = vunpack.c.l.b16 %v4017
        %v4351 = vunpack.c.h.b16 %v4017
        %v4352 = vunpack.c.l.b16 %v4018
        %v4353 = vunpack.c.h.b16 %v4018
        %v4354 = vunpack.c.l.b16 %v4019
        %v4355 = vunpack.c.h.b16 %v4019
        %v4356 = vunpack.c.l.b16 %v4020
        %v4357 = vunpack.c.h.b16 %v4020
        %v4358 = vpack.c.b16 %v4330, %v4326
        %v4359 = vpack.c.b16 %v4331, %v4327
        %v4360 = vpack.c.b16 %v4332, %v4328
        %v4361 = vpack.c.b16 %v4333, %v4329
        %v4362 = vpack.c.b16 %v4338, %v4334
        %v4363 = vpack.c.b16 %v4339, %v4335
        %v4364 = vpack.c.b16 %v4340, %v4336
        %v4365 = vpack.c.b16 %v4341, %v4337
        %v4366 = vpack.c.b16 %v4346, %v4342
        %v4367 = vpack.c.b16 %v4347, %v4343
        %v4368 = vpack.c.b16 %v4348, %v4344
        %v4369 = vpack.c.b16 %v4349, %v4345
        %v4370 = vpack.c.b16 %v4354, %v4350
        %v4371 = vpack.c.b16 %v4355, %v4351
        %v4372 = vpack.c.b16 %v4356, %v4352
        %v4373 = vpack.c.b16 %v4357, %v4353
        %v4518 = vunpack.c.l.b16 %v4182
        %v4519 = vunpack.c.h.b16 %v4182
        %v4520 = vunpack.c.l.b16 %v4183
        %v4521 = vunpack.c.h.b16 %v4183
        %v4522 = vunpack.c.l.b16 %v4184
        %v4523 = vunpack.c.h.b16 %v4184
        %v4524 = vunpack.c.l.b16 %v4185
        %v4525 = vunpack.c.h.b16 %v4185
        %v4526 = vunpack.c.l.b16 %v4186
        %v4527 = vunpack.c.h.b16 %v4186
        %v4528 = vunpack.c.l.b16 %v4187
        %v4529 = vunpack.c.h.b16 %v4187
        %v4530 = vunpack.c.l.b16 %v4188
        %v4531 = vunpack.c.h.b16 %v4188
        %v4532 = vunpack.c.l.b16 %v4189
        %v4533 = vunpack.c.h.b16 %v4189
        %v4534 = vunpack.c.l.b16 %v4190
        %v4535 = vunpack.c.h.b16 %v4190
        %v4536 = vunpack.c.l.b16 %v4191
        %v4537 = vunpack.c.h.b16 %v4191
        %v4538 = vunpack.c.l.b16 %v4192
        %v4539 = vunpack.c.h.b16 %v4192
        %v4540 = vunpack.c.l.b16 %v4193
        %v4541 = vunpack.c.h.b16 %v4193
        %v4542 = vunpack.c.l.b16 %v4194
        %v4543 = vunpack.c.h.b16 %v4194
        %v4544 = vunpack.c.l.b16 %v4195
        %v4545 = vunpack.c.h.b16 %v4195
        %v4546 = vunpack.c.l.b16 %v4196
        %v4547 = vunpack.c.h.b16 %v4196
        %v4548 = vunpack.c.l.b16 %v4197
        %v4549 = vunpack.c.h.b16 %v4197
        %v4550 = vunpack.c.l.b16 %v4198
        %v4551 = vunpack.c.h.b16 %v4198
        %v4552 = vunpack.c.l.b16 %v4199
        %v4553 = vunpack.c.h.b16 %v4199
        %v4554 = vunpack.c.l.b16 %v4200
        %v4555 = vunpack.c.h.b16 %v4200
        %v4556 = vunpack.c.l.b16 %v4201
        %v4557 = vunpack.c.h.b16 %v4201
        %v4558 = vunpack.c.l.b16 %v4202
        %v4559 = vunpack.c.h.b16 %v4202
        %v4560 = vunpack.c.l.b16 %v4203
        %v4561 = vunpack.c.h.b16 %v4203
        %v4562 = vunpack.c.l.b16 %v4204
        %v4563 = vunpack.c.h.b16 %v4204
        %v4564 = vunpack.c.l.b16 %v4205
        %v4565 = vunpack.c.h.b16 %v4205
        %v4566 = vunpack.c.l.b16 %v4206
        %v4567 = vunpack.c.h.b16 %v4206
        %v4568 = vunpack.c.l.b16 %v4207
        %v4569 = vunpack.c.h.b16 %v4207
        %v4570 = vunpack.c.l.b16 %v4208
        %v4571 = vunpack.c.h.b16 %v4208
        %v4572 = vunpack.c.l.b16 %v4209
        %v4573 = vunpack.c.h.b16 %v4209
        %v4574 = vunpack.c.l.b16 %v4210
        %v4575 = vunpack.c.h.b16 %v4210
        %v4576 = vunpack.c.l.b16 %v4211
        %v4577 = vunpack.c.h.b16 %v4211
        %v4578 = vunpack.c.l.b16 %v4212
        %v4579 = vunpack.c.h.b16 %v4212
        %v4580 = vunpack.c.l.b16 %v4213
        %v4581 = vunpack.c.h.b16 %v4213
        %v4582 = vunpack.c.l.b16 %v4214
        %v4583 = vunpack.c.h.b16 %v4214
        %v4584 = vunpack.c.l.b16 %v4215
        %v4585 = vunpack.c.h.b16 %v4215
        %v4586 = vunpack.c.l.b16 %v4216
        %v4587 = vunpack.c.h.b16 %v4216
        %v4588 = vunpack.c.l.b16 %v4217
        %v4589 = vunpack.c.h.b16 %v4217
        %v4590 = vunpack.c.l.b16 %v4218
        %v4591 = vunpack.c.h.b16 %v4218
        %v4592 = vunpack.c.l.b16 %v4219
        %v4593 = vunpack.c.h.b16 %v4219
        %v4594 = vunpack.c.l.b16 %v4220
        %v4595 = vunpack.c.h.b16 %v4220
        %v4596 = vunpack.c.l.b16 %v4221
        %v4597 = vunpack.c.h.b16 %v4221
        %v4598 = vunpack.c.l.b16 %v4222
        %v4599 = vunpack.c.h.b16 %v4222
        %v4600 = vunpack.c.l.b16 %v4223
        %v4601 = vunpack.c.h.b16 %v4223
        %v4602 = vunpack.c.l.b16 %v4224
        %v4603 = vunpack.c.h.b16 %v4224
        %v4604 = vunpack.c.l.b16 %v4225
        %v4605 = vunpack.c.h.b16 %v4225
        %v4606 = vunpack.c.l.b16 %v4226
        %v4607 = vunpack.c.h.b16 %v4226
        %v4608 = vunpack.c.l.b16 %v4227
        %v4609 = vunpack.c.h.b16 %v4227
        %v4610 = vunpack.c.l.b16 %v4228
        %v4611 = vunpack.c.h.b16 %v4228
        %v4612 = vunpack.c.l.b16 %v4229
        %v4613 = vunpack.c.h.b16 %v4229
        %v4614 = vunpack.c.l.b16 %v4230
        %v4615 = vunpack.c.h.b16 %v4230
        %v4616 = vunpack.c.l.b16 %v4231
        %v4617 = vunpack.c.h.b16 %v4231
        %v4618 = vunpack.c.l.b16 %v4232
        %v4619 = vunpack.c.h.b16 %v4232
        %v4620 = vunpack.c.l.b16 %v4233
        %v4621 = vunpack.c.h.b16 %v4233
        %v4622 = vunpack.c.l.b16 %v4234
        %v4623 = vunpack.c.h.b16 %v4234
        %v4624 = vunpack.c.l.b16 %v4235
        %v4625 = vunpack.c.h.b16 %v4235
        %v4626 = vunpack.c.l.b16 %v4236
        %v4627 = vunpack.c.h.b16 %v4236
        %v4628 = vunpack.c.l.b16 %v4237
        %v4629 = vunpack.c.h.b16 %v4237
        %v4630 = vunpack.c.l.b16 %v4238
        %v4631 = vunpack.c.h.b16 %v4238
        %v4632 = vunpack.c.l.b16 %v4239
        %v4633 = vunpack.c.h.b16 %v4239
        %v4634 = vunpack.c.l.b16 %v4240
        %v4635 = vunpack.c.h.b16 %v4240
        %v4636 = vunpack.c.l.b16 %v4241
        %v4637 = vunpack.c.h.b16 %v4241
        %v4638 = vunpack.c.l.b16 %v4242
        %v4639 = vunpack.c.h.b16 %v4242
        %v4640 = vunpack.c.l.b16 %v4243
        %v4641 = vunpack.c.h.b16 %v4243
        %v4642 = vunpack.c.l.b16 %v4244
        %v4643 = vunpack.c.h.b16 %v4244
        %v4644 = vunpack.c.l.b16 %v4245
        %v4645 = vunpack.c.h.b16 %v4245
        %v4646 = vunpack.c.l.b16 %v4246
        %v4647 = vunpack.c.h.b16 %v4246
        %v4648 = vunpack.c.l.b16 %v4247
        %v4649 = vunpack.c.h.b16 %v4247
        %v4650 = vunpack.c.l.b16 %v4248
        %v4651 = vunpack.c.h.b16 %v4248
        %v4652 = vunpack.c.l.b16 %v4249
        %v4653 = vunpack.c.h.b16 %v4249
        %v4654 = vunpack.c.l.b16 %v4250
        %v4655 = vunpack.c.h.b16 %v4250
        %v4656 = vunpack.c.l.b16 %v4251
        %v4657 = vunpack.c.h.b16 %v4251
        %v4658 = vunpack.c.l.b16 %v4252
        %v4659 = vunpack.c.h.b16 %v4252
        %v4660 = vunpack.c.l.b16 %v4253
        %v4661 = vunpack.c.h.b16 %v4253
        %v4662 = vunpack.c.l.b16 %v4254
        %v4663 = vunpack.c.h.b16 %v4254
        %v4664 = vunpack.c.l.b16 %v4255
        %v4665 = vunpack.c.h.b16 %v4255
        %v4666 = vunpack.c.l.b16 %v4256
        %v4667 = vunpack.c.h.b16 %v4256
        %v4668 = vunpack.c.l.b16 %v4257
        %v4669 = vunpack.c.h.b16 %v4257
        %v4670 = vunpack.c.l.b16 %v4258
        %v4671 = vunpack.c.h.b16 %v4258
        %v4672 = vunpack.c.l.b16 %v4259
        %v4673 = vunpack.c.h.b16 %v4259
        %v4674 = vunpack.c.l.b16 %v4260
        %v4675 = vunpack.c.h.b16 %v4260
        %v4676 = vunpack.c.l.b16 %v4261
        %v4677 = vunpack.c.h.b16 %v4261
        %v4678 = vunpack.c.l.b16 %v4262
        %v4679 = vunpack.c.h.b16 %v4262
        %v4680 = vunpack.c.l.b16 %v4263
        %v4681 = vunpack.c.h.b16 %v4263
        %v4682 = vunpack.c.l.b16 %v4264
        %v4683 = vunpack.c.h.b16 %v4264
        %v4684 = vunpack.c.l.b16 %v4265
        %v4685 = vunpack.c.h.b16 %v4265
        %v4686 = vunpack.c.l.b16 %v4266
        %v4687 = vunpack.c.h.b16 %v4266
        %v4688 = vunpack.c.l.b16 %v4267
        %v4689 = vunpack.c.h.b16 %v4267
        %v4690 = vunpack.c.l.b16 %v4268
        %v4691 = vunpack.c.h.b16 %v4268
        %v4692 = vunpack.c.l.b16 %v4269
        %v4693 = vunpack.c.h.b16 %v4269
        %v4694 = vunpack.c.l.b16 %v4270
        %v4695 = vunpack.c.h.b16 %v4270
        %v4696 = vunpack.c.l.b16 %v4271
        %v4697 = vunpack.c.h.b16 %v4271
        %v4698 = vunpack.c.l.b16 %v4272
        %v4699 = vunpack.c.h.b16 %v4272
        %v4700 = vunpack.c.l.b16 %v4273
        %v4701 = vunpack.c.h.b16 %v4273
        %v4702 = vunpack.c.l.b16 %v4274
        %v4703 = vunpack.c.h.b16 %v4274
        %v4704 = vunpack.c.l.b16 %v4275
        %v4705 = vunpack.c.h.b16 %v4275
        %v4706 = vunpack.c.l.b16 %v4276
        %v4707 = vunpack.c.h.b16 %v4276
        %v4708 = vunpack.c.l.b16 %v4277
        %v4709 = vunpack.c.h.b16 %v4277
        %v4710 = vunpack.c.l.b16 %v4278
        %v4711 = vunpack.c.h.b16 %v4278
        %v4712 = vunpack.c.l.b16 %v4279
        %v4713 = vunpack.c.h.b16 %v4279
        %v4714 = vunpack.c.l.b16 %v4280
        %v4715 = vunpack.c.h.b16 %v4280
        %v4716 = vunpack.c.l.b16 %v4281
        %v4717 = vunpack.c.h.b16 %v4281
        %v4718 = vunpack.c.l.b16 %v4282
        %v4719 = vunpack.c.h.b16 %v4282
        %v4720 = vunpack.c.l.b16 %v4283
        %v4721 = vunpack.c.h.b16 %v4283
        %v4722 = vunpack.c.l.b16 %v4284
        %v4723 = vunpack.c.h.b16 %v4284
        %v4724 = vunpack.c.l.b16 %v4285
        %v4725 = vunpack.c.h.b16 %v4285
        %v4726 = vunpack.c.l.b16 %v4286
        %v4727 = vunpack.c.h.b16 %v4286
        %v4728 = vunpack.c.l.b16 %v4287
        %v4729 = vunpack.c.h.b16 %v4287
        %v4730 = vunpack.c.l.b16 %v4288
        %v4731 = vunpack.c.h.b16 %v4288
        %v4732 = vunpack.c.l.b16 %v4289
        %v4733 = vunpack.c.h.b16 %v4289
        %v4734 = vunpack.c.l.b16 %v4290
        %v4735 = vunpack.c.h.b16 %v4290
        %v4736 = vunpack.c.l.b16 %v4291
        %v4737 = vunpack.c.h.b16 %v4291
        %v4738 = vunpack.c.l.b16 %v4292
        %v4739 = vunpack.c.h.b16 %v4292
        %v4740 = vunpack.c.l.b16 %v4293
        %v4741 = vunpack.c.h.b16 %v4293
        %v4742 = vunpack.c.l.b16 %v4294
        %v4743 = vunpack.c.h.b16 %v4294
        %v4744 = vunpack.c.l.b16 %v4295
        %v4745 = vunpack.c.h.b16 %v4295
        %v4746 = vunpack.c.l.b16 %v4296
        %v4747 = vunpack.c.h.b16 %v4296
        %v4748 = vunpack.c.l.b16 %v4297
        %v4749 = vunpack.c.h.b16 %v4297
        %v4750 = vunpack.c.l.b16 %v4298
        %v4751 = vunpack.c.h.b16 %v4298
        %v4752 = vunpack.c.l.b16 %v4299
        %v4753 = vunpack.c.h.b16 %v4299
        %v4754 = vunpack.c.l.b16 %v4300
        %v4755 = vunpack.c.h.b16 %v4300
        %v4756 = vunpack.c.l.b16 %v4301
        %v4757 = vunpack.c.h.b16 %v4301
        %v4758 = vunpack.c.l.b16 %v4302
        %v4759 = vunpack.c.h.b16 %v4302
        %v4760 = vunpack.c.l.b16 %v4303
        %v4761 = vunpack.c.h.b16 %v4303
        %v4762 = vunpack.c.l.b16 %v4304
        %v4763 = vunpack.c.h.b16 %v4304
        %v4764 = vunpack.c.l.b16 %v4305
        %v4765 = vunpack.c.h.b16 %v4305
        %v4766 = vunpack.c.l.b16 %v4306
        %v4767 = vunpack.c.h.b16 %v4306
        %v4768 = vunpack.c.l.b16 %v4307
        %v4769 = vunpack.c.h.b16 %v4307
        %v4770 = vunpack.c.l.b16 %v4308
        %v4771 = vunpack.c.h.b16 %v4308
        %v4772 = vunpack.c.l.b16 %v4309
        %v4773 = vunpack.c.h.b16 %v4309
        %v4774 = vpack.c.b16 %v4522, %v4518
        %v4775 = vpack.c.b16 %v4523, %v4519
        %v4776 = vpack.c.b16 %v4524, %v4520
        %v4777 = vpack.c.b16 %v4525, %v4521
        %v4778 = vpack.c.b16 %v4530, %v4526
        %v4779 = vpack.c.b16 %v4531, %v4527
        %v4780 = vpack.c.b16 %v4532, %v4528
        %v4781 = vpack.c.b16 %v4533, %v4529
        %v4782 = vpack.c.b16 %v4538, %v4534
        %v4783 = vpack.c.b16 %v4539, %v4535
        %v4784 = vpack.c.b16 %v4540, %v4536
        %v4785 = vpack.c.b16 %v4541, %v4537
        %v4786 = vpack.c.b16 %v4546, %v4542
        %v4787 = vpack.c.b16 %v4547, %v4543
        %v4788 = vpack.c.b16 %v4548, %v4544
        %v4789 = vpack.c.b16 %v4549, %v4545
        %v4790 = vpack.c.b16 %v4554, %v4550
        %v4791 = vpack.c.b16 %v4555, %v4551
        %v4792 = vpack.c.b16 %v4556, %v4552
        %v4793 = vpack.c.b16 %v4557, %v4553
        %v4794 = vpack.c.b16 %v4562, %v4558
        %v4795 = vpack.c.b16 %v4563, %v4559
        %v4796 = vpack.c.b16 %v4564, %v4560
        %v4797 = vpack.c.b16 %v4565, %v4561
        %v4798 = vpack.c.b16 %v4570, %v4566
        %v4799 = vpack.c.b16 %v4571, %v4567
        %v4800 = vpack.c.b16 %v4572, %v4568
        %v4801 = vpack.c.b16 %v4573, %v4569
        %v4802 = vpack.c.b16 %v4578, %v4574
        %v4803 = vpack.c.b16 %v4579, %v4575
        %v4804 = vpack.c.b16 %v4580, %v4576
        %v4805 = vpack.c.b16 %v4581, %v4577
        %v4806 = vpack.c.b16 %v4586, %v4582
        %v4807 = vpack.c.b16 %v4587, %v4583
        %v4808 = vpack.c.b16 %v4588, %v4584
        %v4809 = vpack.c.b16 %v4589, %v4585
        %v4810 = vpack.c.b16 %v4594, %v4590
        %v4811 = vpack.c.b16 %v4595, %v4591
        %v4812 = vpack.c.b16 %v4596, %v4592
        %v4813 = vpack.c.b16 %v4597, %v4593
        %v4814 = vpack.c.b16 %v4602, %v4598
        %v4815 = vpack.c.b16 %v4603, %v4599
        %v4816 = vpack.c.b16 %v4604, %v4600
        %v4817 = vpack.c.b16 %v4605, %v4601
        %v4818 = vpack.c.b16 %v4610, %v4606
        %v4819 = vpack.c.b16 %v4611, %v4607
        %v4820 = vpack.c.b16 %v4612, %v4608
        %v4821 = vpack.c.b16 %v4613, %v4609
        %v4822 = vpack.c.b16 %v4618, %v4614
        %v4823 = vpack.c.b16 %v4619, %v4615
        %v4824 = vpack.c.b16 %v4620, %v4616
        %v4825 = vpack.c.b16 %v4621, %v4617
        %v4826 = vpack.c.b16 %v4626, %v4622
        %v4827 = vpack.c.b16 %v4627, %v4623
        %v4828 = vpack.c.b16 %v4628, %v4624
        %v4829 = vpack.c.b16 %v4629, %v4625
        %v4830 = vpack.c.b16 %v4634, %v4630
        %v4831 = vpack.c.b16 %v4635, %v4631
        %v4832 = vpack.c.b16 %v4636, %v4632
        %v4833 = vpack.c.b16 %v4637, %v4633
        %v4834 = vpack.c.b16 %v4642, %v4638
        %v4835 = vpack.c.b16 %v4643, %v4639
        %v4836 = vpack.c.b16 %v4644, %v4640
        %v4837 = vpack.c.b16 %v4645, %v4641
        %v4838 = vpack.c.b16 %v4650, %v4646
        %v4839 = vpack.c.b16 %v4651, %v4647
        %v4840 = vpack.c.b16 %v4652, %v4648
        %v4841 = vpack.c.b16 %v4653, %v4649
        %v4842 = vpack.c.b16 %v4658, %v4654
        %v4843 = vpack.c.b16 %v4659, %v4655
        %v4844 = vpack.c.b16 %v4660, %v4656
        %v4845 = vpack.c.b16 %v4661, %v4657
        %v4846 = vpack.c.b16 %v4666, %v4662
        %v4847 = vpack.c.b16 %v4667, %v4663
        %v4848 = vpack.c.b16 %v4668, %v4664
        %v4849 = vpack.c.b16 %v4669, %v4665
        %v4850 = vpack.c.b16 %v4674, %v4670
        %v4851 = vpack.c.b16 %v4675, %v4671
        %v4852 = vpack.c.b16 %v4676, %v4672
        %v4853 = vpack.c.b16 %v4677, %v4673
        %v4854 = vpack.c.b16 %v4682, %v4678
        %v4855 = vpack.c.b16 %v4683, %v4679
        %v4856 = vpack.c.b16 %v4684, %v4680
        %v4857 = vpack.c.b16 %v4685, %v4681
        %v4858 = vpack.c.b16 %v4690, %v4686
        %v4859 = vpack.c.b16 %v4691, %v4687
        %v4860 = vpack.c.b16 %v4692, %v4688
        %v4861 = vpack.c.b16 %v4693, %v4689
        %v4862 = vpack.c.b16 %v4698, %v4694
        %v4863 = vpack.c.b16 %v4699, %v4695
        %v4864 = vpack.c.b16 %v4700, %v4696
        %v4865 = vpack.c.b16 %v4701, %v4697
        %v4866 = vpack.c.b16 %v4706, %v4702
        %v4867 = vpack.c.b16 %v4707, %v4703
        %v4868 = vpack.c.b16 %v4708, %v4704
        %v4869 = vpack.c.b16 %v4709, %v4705
        %v4870 = vpack.c.b16 %v4714, %v4710
        %v4871 = vpack.c.b16 %v4715, %v4711
        %v4872 = vpack.c.b16 %v4716, %v4712
        %v4873 = vpack.c.b16 %v4717, %v4713
        %v4874 = vpack.c.b16 %v4722, %v4718
        %v4875 = vpack.c.b16 %v4723, %v4719
        %v4876 = vpack.c.b16 %v4724, %v4720
        %v4877 = vpack.c.b16 %v4725, %v4721
        %v4878 = vpack.c.b16 %v4730, %v4726
        %v4879 = vpack.c.b16 %v4731, %v4727
        %v4880 = vpack.c.b16 %v4732, %v4728
        %v4881 = vpack.c.b16 %v4733, %v4729
        %v4882 = vpack.c.b16 %v4738, %v4734
        %v4883 = vpack.c.b16 %v4739, %v4735
        %v4884 = vpack.c.b16 %v4740, %v4736
        %v4885 = vpack.c.b16 %v4741, %v4737
        %v4886 = vpack.c.b16 %v4746, %v4742
        %v4887 = vpack.c.b16 %v4747, %v4743
        %v4888 = vpack.c.b16 %v4748, %v4744
        %v4889 = vpack.c.b16 %v4749, %v4745
        %v4890 = vpack.c.b16 %v4754, %v4750
        %v4891 = vpack.c.b16 %v4755, %v4751
        %v4892 = vpack.c.b16 %v4756, %v4752
        %v4893 = vpack.c.b16 %v4757, %v4753
        %v4894 = vpack.c.b16 %v4762, %v4758
        %v4895 = vpack.c.b16 %v4763, %v4759
        %v4896 = vpack.c.b16 %v4764, %v4760
        %v4897 = vpack.c.b16 %v4765, %v4761
        %v4898 = vpack.c.b16 %v4770, %v4766
        %v4899 = vpack.c.b16 %v4771, %v4767
        %v4900 = vpack.c.b16 %v4772, %v4768
        %v4901 = vpack.c.b16 %v4773, %v4769
        %5030 = vmatpush.bf16.msra.mxu0 %v4802
        %5031 = vmatpush.bf16.msra.mxu0 %v4798
        %5032 = vmatpush.bf16.msra.mxu0 %v4794
        %5033 = vmatpush.bf16.msra.mxu0 %v4790
        %5034 = vmatpush.bf16.msra.mxu0 %v4786
        %5035 = vmatpush.bf16.msra.mxu0 %v4782
        %5036 = vmatpush.bf16.msra.mxu0 %v4778
        %5037 = vmatpush.bf16.msra.mxu0 %v4774
        %5038 = vmatmul.bf16.gmra.mxu0 %v4358
        %v5039 = vpop.f32.mrf.mxu0
        %v5040 = vadd.f32 0.0, %v5039
        %v5041 = vpop.f32.mrf.mxu0
        %v5042 = vadd.f32 0.0, %v5041
        %5043 = vmatmul.bf16.gmra.mxu0 %v4362
        %v5044 = vpop.f32.mrf.mxu0
        %v5045 = vadd.f32 0.0, %v5044
        %v5046 = vpop.f32.mrf.mxu0
        %v5047 = vadd.f32 0.0, %v5046
        %5048 = vmatmul.bf16.gmra.mxu0 %v4366
        %v5049 = vpop.f32.mrf.mxu0
        %v5050 = vadd.f32 0.0, %v5049
        %v5051 = vpop.f32.mrf.mxu0
        %v5052 = vadd.f32 0.0, %v5051
        %5053 = vmatmul.bf16.gmra.mxu0 %v4370
        %v5054 = vpop.f32.mrf.mxu0
        %v5055 = vadd.f32 0.0, %v5054
        %v5056 = vpop.f32.mrf.mxu0
        %v5057 = vadd.f32 0.0, %v5056
        %5058 = vdwg.mxu0
        %5059 = vmatpush.bf16.msra.mxu0 %v4834
        %5060 = vmatpush.bf16.msra.mxu0 %v4830
        %5061 = vmatpush.bf16.msra.mxu0 %v4826
        %5062 = vmatpush.bf16.msra.mxu0 %v4822
        %5063 = vmatpush.bf16.msra.mxu0 %v4818
        %5064 = vmatpush.bf16.msra.mxu0 %v4814
        %5065 = vmatpush.bf16.msra.mxu0 %v4810
        %5066 = vmatpush.bf16.msra.mxu0 %v4806
        %5067 = vmatmul.bf16.gmra.mxu0 %v4359
        %v5068 = vpop.f32.mrf.mxu0
        %v5069 = vadd.f32 %v5040, %v5068
        %v5070 = vpop.f32.mrf.mxu0
        %v5071 = vadd.f32 %v5042, %v5070
        %5072 = vmatmul.bf16.gmra.mxu0 %v4363
        %v5073 = vpop.f32.mrf.mxu0
        %v5074 = vadd.f32 %v5045, %v5073
        %v5075 = vpop.f32.mrf.mxu0
        %v5076 = vadd.f32 %v5047, %v5075
        %5077 = vmatmul.bf16.gmra.mxu0 %v4367
        %v5078 = vpop.f32.mrf.mxu0
        %v5079 = vadd.f32 %v5050, %v5078
        %v5080 = vpop.f32.mrf.mxu0
        %v5081 = vadd.f32 %v5052, %v5080
        %5082 = vmatmul.bf16.gmra.mxu0 %v4371
        %v5083 = vpop.f32.mrf.mxu0
        %v5084 = vadd.f32 %v5055, %v5083
        %v5085 = vpop.f32.mrf.mxu0
        %v5086 = vadd.f32 %v5057, %v5085
        %5087 = vdwg.mxu0
        %5088 = vmatpush.bf16.msra.mxu0 %v4866
        %5089 = vmatpush.bf16.msra.mxu0 %v4862
        %5090 = vmatpush.bf16.msra.mxu0 %v4858
        %5091 = vmatpush.bf16.msra.mxu0 %v4854
        %5092 = vmatpush.bf16.msra.mxu0 %v4850
        %5093 = vmatpush.bf16.msra.mxu0 %v4846
        %5094 = vmatpush.bf16.msra.mxu0 %v4842
        %5095 = vmatpush.bf16.msra.mxu0 %v4838
        %5096 = vmatmul.bf16.gmra.mxu0 %v4360
        %v5097 = vpop.f32.mrf.mxu0
        %v5098 = vadd.f32 %v5069, %v5097
        %v5099 = vpop.f32.mrf.mxu0
        %v5100 = vadd.f32 %v5071, %v5099
        %5101 = vmatmul.bf16.gmra.mxu0 %v4364
        %v5102 = vpop.f32.mrf.mxu0
        %v5103 = vadd.f32 %v5074, %v5102
        %v5104 = vpop.f32.mrf.mxu0
        %v5105 = vadd.f32 %v5076, %v5104
        %5106 = vmatmul.bf16.gmra.mxu0 %v4368
        %v5107 = vpop.f32.mrf.mxu0
        %v5108 = vadd.f32 %v5079, %v5107
        %v5109 = vpop.f32.mrf.mxu0
        %v5110 = vadd.f32 %v5081, %v5109
        %5111 = vmatmul.bf16.gmra.mxu0 %v4372
        %v5112 = vpop.f32.mrf.mxu0
        %v5113 = vadd.f32 %v5084, %v5112
        %v5114 = vpop.f32.mrf.mxu0
        %v5115 = vadd.f32 %v5086, %v5114
        %5116 = vdwg.mxu0
        %5117 = vmatpush.bf16.msra.mxu0 %v4898
        %5118 = vmatpush.bf16.msra.mxu0 %v4894
        %5119 = vmatpush.bf16.msra.mxu0 %v4890
        %5120 = vmatpush.bf16.msra.mxu0 %v4886
        %5121 = vmatpush.bf16.msra.mxu0 %v4882
        %5122 = vmatpush.bf16.msra.mxu0 %v4878
        %5123 = vmatpush.bf16.msra.mxu0 %v4874
        %5124 = vmatpush.bf16.msra.mxu0 %v4870
        %5125 = vmatmul.bf16.gmra.mxu0 %v4361
        %v5126 = vpop.f32.mrf.mxu0
        %v5127 = vadd.f32 %v5098, %v5126
        %v5128 = vpop.f32.mrf.mxu0
        %v5129 = vadd.f32 %v5100, %v5128
        %5130 = vmatmul.bf16.gmra.mxu0 %v4365
        %v5131 = vpop.f32.mrf.mxu0
        %v5132 = vadd.f32 %v5103, %v5131
        %v5133 = vpop.f32.mrf.mxu0
        %v5134 = vadd.f32 %v5105, %v5133
        %5135 = vmatmul.bf16.gmra.mxu0 %v4369
        %v5136 = vpop.f32.mrf.mxu0
        %v5137 = vadd.f32 %v5108, %v5136
        %v5138 = vpop.f32.mrf.mxu0
        %v5139 = vadd.f32 %v5110, %v5138
        %5140 = vmatmul.bf16.gmra.mxu0 %v4373
        %v5141 = vpop.f32.mrf.mxu0
        %v5142 = vadd.f32 %v5113, %v5141
        %v5143 = vpop.f32.mrf.mxu0
        %v5144 = vadd.f32 %v5115, %v5143
        %5145 = vdwg.mxu0
        %5146 = vmatpush.bf16.msra.mxu0 %v4803
        %5147 = vmatpush.bf16.msra.mxu0 %v4799
        %5148 = vmatpush.bf16.msra.mxu0 %v4795
        %5149 = vmatpush.bf16.msra.mxu0 %v4791
        %5150 = vmatpush.bf16.msra.mxu0 %v4787
        %5151 = vmatpush.bf16.msra.mxu0 %v4783
        %5152 = vmatpush.bf16.msra.mxu0 %v4779
        %5153 = vmatpush.bf16.msra.mxu0 %v4775
        %5154 = vmatmul.bf16.gmra.mxu0 %v4358
        %v5155 = vpop.f32.mrf.mxu0
        %v5156 = vadd.f32 0.0, %v5155
        %v5157 = vpop.f32.mrf.mxu0
        %v5158 = vadd.f32 0.0, %v5157
        %5159 = vmatmul.bf16.gmra.mxu0 %v4362
        %v5160 = vpop.f32.mrf.mxu0
        %v5161 = vadd.f32 0.0, %v5160
        %v5162 = vpop.f32.mrf.mxu0
        %v5163 = vadd.f32 0.0, %v5162
        %5164 = vmatmul.bf16.gmra.mxu0 %v4366
        %v5165 = vpop.f32.mrf.mxu0
        %v5166 = vadd.f32 0.0, %v5165
        %v5167 = vpop.f32.mrf.mxu0
        %v5168 = vadd.f32 0.0, %v5167
        %5169 = vmatmul.bf16.gmra.mxu0 %v4370
        %v5170 = vpop.f32.mrf.mxu0
        %v5171 = vadd.f32 0.0, %v5170
        %v5172 = vpop.f32.mrf.mxu0
        %v5173 = vadd.f32 0.0, %v5172
        %5174 = vdwg.mxu0
        %5175 = vmatpush.bf16.msra.mxu0 %v4835
        %5176 = vmatpush.bf16.msra.mxu0 %v4831
        %5177 = vmatpush.bf16.msra.mxu0 %v4827
        %5178 = vmatpush.bf16.msra.mxu0 %v4823
        %5179 = vmatpush.bf16.msra.mxu0 %v4819
        %5180 = vmatpush.bf16.msra.mxu0 %v4815
        %5181 = vmatpush.bf16.msra.mxu0 %v4811
        %5182 = vmatpush.bf16.msra.mxu0 %v4807
        %5183 = vmatmul.bf16.gmra.mxu0 %v4359
        %v5184 = vpop.f32.mrf.mxu0
        %v5185 = vadd.f32 %v5156, %v5184
        %v5186 = vpop.f32.mrf.mxu0
        %v5187 = vadd.f32 %v5158, %v5186
        %5188 = vmatmul.bf16.gmra.mxu0 %v4363
        %v5189 = vpop.f32.mrf.mxu0
        %v5190 = vadd.f32 %v5161, %v5189
        %v5191 = vpop.f32.mrf.mxu0
        %v5192 = vadd.f32 %v5163, %v5191
        %5193 = vmatmul.bf16.gmra.mxu0 %v4367
        %v5194 = vpop.f32.mrf.mxu0
        %v5195 = vadd.f32 %v5166, %v5194
        %v5196 = vpop.f32.mrf.mxu0
        %v5197 = vadd.f32 %v5168, %v5196
        %5198 = vmatmul.bf16.gmra.mxu0 %v4371
        %v5199 = vpop.f32.mrf.mxu0
        %v5200 = vadd.f32 %v5171, %v5199
        %v5201 = vpop.f32.mrf.mxu0
        %v5202 = vadd.f32 %v5173, %v5201
        %5203 = vdwg.mxu0
        %5204 = vmatpush.bf16.msra.mxu0 %v4867
        %5205 = vmatpush.bf16.msra.mxu0 %v4863
        %5206 = vmatpush.bf16.msra.mxu0 %v4859
        %5207 = vmatpush.bf16.msra.mxu0 %v4855
        %5208 = vmatpush.bf16.msra.mxu0 %v4851
        %5209 = vmatpush.bf16.msra.mxu0 %v4847
        %5210 = vmatpush.bf16.msra.mxu0 %v4843
        %5211 = vmatpush.bf16.msra.mxu0 %v4839
        %5212 = vmatmul.bf16.gmra.mxu0 %v4360
        %v5213 = vpop.f32.mrf.mxu0
        %v5214 = vadd.f32 %v5185, %v5213
        %v5215 = vpop.f32.mrf.mxu0
        %v5216 = vadd.f32 %v5187, %v5215
        %5217 = vmatmul.bf16.gmra.mxu0 %v4364
        %v5218 = vpop.f32.mrf.mxu0
        %v5219 = vadd.f32 %v5190, %v5218
        %v5220 = vpop.f32.mrf.mxu0
        %v5221 = vadd.f32 %v5192, %v5220
        %5222 = vmatmul.bf16.gmra.mxu0 %v4368
        %v5223 = vpop.f32.mrf.mxu0
        %v5224 = vadd.f32 %v5195, %v5223
        %v5225 = vpop.f32.mrf.mxu0
        %v5226 = vadd.f32 %v5197, %v5225
        %5227 = vmatmul.bf16.gmra.mxu0 %v4372
        %v5228 = vpop.f32.mrf.mxu0
        %v5229 = vadd.f32 %v5200, %v5228
        %v5230 = vpop.f32.mrf.mxu0
        %v5231 = vadd.f32 %v5202, %v5230
        %5232 = vdwg.mxu0
        %5233 = vmatpush.bf16.msra.mxu0 %v4899
        %5234 = vmatpush.bf16.msra.mxu0 %v4895
        %5235 = vmatpush.bf16.msra.mxu0 %v4891
        %5236 = vmatpush.bf16.msra.mxu0 %v4887
        %5237 = vmatpush.bf16.msra.mxu0 %v4883
        %5238 = vmatpush.bf16.msra.mxu0 %v4879
        %5239 = vmatpush.bf16.msra.mxu0 %v4875
        %5240 = vmatpush.bf16.msra.mxu0 %v4871
        %5241 = vmatmul.bf16.gmra.mxu0 %v4361
        %v5242 = vpop.f32.mrf.mxu0
        %v5243 = vadd.f32 %v5214, %v5242
        %v5244 = vpop.f32.mrf.mxu0
        %v5245 = vadd.f32 %v5216, %v5244
        %5246 = vmatmul.bf16.gmra.mxu0 %v4365
        %v5247 = vpop.f32.mrf.mxu0
        %v5248 = vadd.f32 %v5219, %v5247
        %v5249 = vpop.f32.mrf.mxu0
        %v5250 = vadd.f32 %v5221, %v5249
        %5251 = vmatmul.bf16.gmra.mxu0 %v4369
        %v5252 = vpop.f32.mrf.mxu0
        %v5253 = vadd.f32 %v5224, %v5252
        %v5254 = vpop.f32.mrf.mxu0
        %v5255 = vadd.f32 %v5226, %v5254
        %5256 = vmatmul.bf16.gmra.mxu0 %v4373
        %v5257 = vpop.f32.mrf.mxu0
        %v5258 = vadd.f32 %v5229, %v5257
        %v5259 = vpop.f32.mrf.mxu0
        %v5260 = vadd.f32 %v5231, %v5259
        %5261 = vdwg.mxu0
        %5262 = vmatpush.bf16.msra.mxu0 %v4804
        %5263 = vmatpush.bf16.msra.mxu0 %v4800
        %5264 = vmatpush.bf16.msra.mxu0 %v4796
        %5265 = vmatpush.bf16.msra.mxu0 %v4792
        %5266 = vmatpush.bf16.msra.mxu0 %v4788
        %5267 = vmatpush.bf16.msra.mxu0 %v4784
        %5268 = vmatpush.bf16.msra.mxu0 %v4780
        %5269 = vmatpush.bf16.msra.mxu0 %v4776
        %5270 = vmatmul.bf16.gmra.mxu0 %v4358
        %v5271 = vpop.f32.mrf.mxu0
        %v5272 = vadd.f32 0.0, %v5271
        %v5273 = vpop.f32.mrf.mxu0
        %v5274 = vadd.f32 0.0, %v5273
        %5275 = vmatmul.bf16.gmra.mxu0 %v4362
        %v5276 = vpop.f32.mrf.mxu0
        %v5277 = vadd.f32 0.0, %v5276
        %v5278 = vpop.f32.mrf.mxu0
        %v5279 = vadd.f32 0.0, %v5278
        %5280 = vmatmul.bf16.gmra.mxu0 %v4366
        %v5281 = vpop.f32.mrf.mxu0
        %v5282 = vadd.f32 0.0, %v5281
        %v5283 = vpop.f32.mrf.mxu0
        %v5284 = vadd.f32 0.0, %v5283
        %5285 = vmatmul.bf16.gmra.mxu0 %v4370
        %v5286 = vpop.f32.mrf.mxu0
        %v5287 = vadd.f32 0.0, %v5286
        %v5288 = vpop.f32.mrf.mxu0
        %v5289 = vadd.f32 0.0, %v5288
        %5290 = vdwg.mxu0
        %5291 = vmatpush.bf16.msra.mxu0 %v4836
        %5292 = vmatpush.bf16.msra.mxu0 %v4832
        %5293 = vmatpush.bf16.msra.mxu0 %v4828
        %5294 = vmatpush.bf16.msra.mxu0 %v4824
        %5295 = vmatpush.bf16.msra.mxu0 %v4820
        %5296 = vmatpush.bf16.msra.mxu0 %v4816
        %5297 = vmatpush.bf16.msra.mxu0 %v4812
        %5298 = vmatpush.bf16.msra.mxu0 %v4808
        %5299 = vmatmul.bf16.gmra.mxu0 %v4359
        %v5300 = vpop.f32.mrf.mxu0
        %v5301 = vadd.f32 %v5272, %v5300
        %v5302 = vpop.f32.mrf.mxu0
        %v5303 = vadd.f32 %v5274, %v5302
        %5304 = vmatmul.bf16.gmra.mxu0 %v4363
        %v5305 = vpop.f32.mrf.mxu0
        %v5306 = vadd.f32 %v5277, %v5305
        %v5307 = vpop.f32.mrf.mxu0
        %v5308 = vadd.f32 %v5279, %v5307
        %5309 = vmatmul.bf16.gmra.mxu0 %v4367
        %v5310 = vpop.f32.mrf.mxu0
        %v5311 = vadd.f32 %v5282, %v5310
        %v5312 = vpop.f32.mrf.mxu0
        %v5313 = vadd.f32 %v5284, %v5312
        %5314 = vmatmul.bf16.gmra.mxu0 %v4371
        %v5315 = vpop.f32.mrf.mxu0
        %v5316 = vadd.f32 %v5287, %v5315
        %v5317 = vpop.f32.mrf.mxu0
        %v5318 = vadd.f32 %v5289, %v5317
        %5319 = vdwg.mxu0
        %5320 = vmatpush.bf16.msra.mxu0 %v4868
        %5321 = vmatpush.bf16.msra.mxu0 %v4864
        %5322 = vmatpush.bf16.msra.mxu0 %v4860
        %5323 = vmatpush.bf16.msra.mxu0 %v4856
        %5324 = vmatpush.bf16.msra.mxu0 %v4852
        %5325 = vmatpush.bf16.msra.mxu0 %v4848
        %5326 = vmatpush.bf16.msra.mxu0 %v4844
        %5327 = vmatpush.bf16.msra.mxu0 %v4840
        %5328 = vmatmul.bf16.gmra.mxu0 %v4360
        %v5329 = vpop.f32.mrf.mxu0
        %v5330 = vadd.f32 %v5301, %v5329
        %v5331 = vpop.f32.mrf.mxu0
        %v5332 = vadd.f32 %v5303, %v5331
        %5333 = vmatmul.bf16.gmra.mxu0 %v4364
        %v5334 = vpop.f32.mrf.mxu0
        %v5335 = vadd.f32 %v5306, %v5334
        %v5336 = vpop.f32.mrf.mxu0
        %v5337 = vadd.f32 %v5308, %v5336
        %5338 = vmatmul.bf16.gmra.mxu0 %v4368
        %v5339 = vpop.f32.mrf.mxu0
        %v5340 = vadd.f32 %v5311, %v5339
        %v5341 = vpop.f32.mrf.mxu0
        %v5342 = vadd.f32 %v5313, %v5341
        %5343 = vmatmul.bf16.gmra.mxu0 %v4372
        %v5344 = vpop.f32.mrf.mxu0
        %v5345 = vadd.f32 %v5316, %v5344
        %v5346 = vpop.f32.mrf.mxu0
        %v5347 = vadd.f32 %v5318, %v5346
        %5348 = vdwg.mxu0
        %5349 = vmatpush.bf16.msra.mxu0 %v4900
        %5350 = vmatpush.bf16.msra.mxu0 %v4896
        %5351 = vmatpush.bf16.msra.mxu0 %v4892
        %5352 = vmatpush.bf16.msra.mxu0 %v4888
        %5353 = vmatpush.bf16.msra.mxu0 %v4884
        %5354 = vmatpush.bf16.msra.mxu0 %v4880
        %5355 = vmatpush.bf16.msra.mxu0 %v4876
        %5356 = vmatpush.bf16.msra.mxu0 %v4872
        %5357 = vmatmul.bf16.gmra.mxu0 %v4361
        %v5358 = vpop.f32.mrf.mxu0
        %v5359 = vadd.f32 %v5330, %v5358
        %v5360 = vpop.f32.mrf.mxu0
        %v5361 = vadd.f32 %v5332, %v5360
        %5362 = vmatmul.bf16.gmra.mxu0 %v4365
        %v5363 = vpop.f32.mrf.mxu0
        %v5364 = vadd.f32 %v5335, %v5363
        %v5365 = vpop.f32.mrf.mxu0
        %v5366 = vadd.f32 %v5337, %v5365
        %5367 = vmatmul.bf16.gmra.mxu0 %v4369
        %v5368 = vpop.f32.mrf.mxu0
        %v5369 = vadd.f32 %v5340, %v5368
        %v5370 = vpop.f32.mrf.mxu0
        %v5371 = vadd.f32 %v5342, %v5370
        %5372 = vmatmul.bf16.gmra.mxu0 %v4373
        %v5373 = vpop.f32.mrf.mxu0
        %v5374 = vadd.f32 %v5345, %v5373
        %v5375 = vpop.f32.mrf.mxu0
        %v5376 = vadd.f32 %v5347, %v5375
        %5377 = vdwg.mxu0
        %5378 = vmatpush.bf16.msra.mxu0 %v4805
        %5379 = vmatpush.bf16.msra.mxu0 %v4801
        %5380 = vmatpush.bf16.msra.mxu0 %v4797
        %5381 = vmatpush.bf16.msra.mxu0 %v4793
        %5382 = vmatpush.bf16.msra.mxu0 %v4789
        %5383 = vmatpush.bf16.msra.mxu0 %v4785
        %5384 = vmatpush.bf16.msra.mxu0 %v4781
        %5385 = vmatpush.bf16.msra.mxu0 %v4777
        %5386 = vmatmul.bf16.gmra.mxu0 %v4358
        %v5387 = vpop.f32.mrf.mxu0
        %v5388 = vadd.f32 0.0, %v5387
        %v5389 = vpop.f32.mrf.mxu0
        %v5390 = vadd.f32 0.0, %v5389
        %5391 = vmatmul.bf16.gmra.mxu0 %v4362
        %v5392 = vpop.f32.mrf.mxu0
        %v5393 = vadd.f32 0.0, %v5392
        %v5394 = vpop.f32.mrf.mxu0
        %v5395 = vadd.f32 0.0, %v5394
        %5396 = vmatmul.bf16.gmra.mxu0 %v4366
        %v5397 = vpop.f32.mrf.mxu0
        %v5398 = vadd.f32 0.0, %v5397
        %v5399 = vpop.f32.mrf.mxu0
        %v5400 = vadd.f32 0.0, %v5399
        %5401 = vmatmul.bf16.gmra.mxu0 %v4370
        %v5402 = vpop.f32.mrf.mxu0
        %v5403 = vadd.f32 0.0, %v5402
        %v5404 = vpop.f32.mrf.mxu0
        %v5405 = vadd.f32 0.0, %v5404
        %5406 = vdwg.mxu0
        %5407 = vmatpush.bf16.msra.mxu0 %v4837
        %5408 = vmatpush.bf16.msra.mxu0 %v4833
        %5409 = vmatpush.bf16.msra.mxu0 %v4829
        %5410 = vmatpush.bf16.msra.mxu0 %v4825
        %5411 = vmatpush.bf16.msra.mxu0 %v4821
        %5412 = vmatpush.bf16.msra.mxu0 %v4817
        %5413 = vmatpush.bf16.msra.mxu0 %v4813
        %5414 = vmatpush.bf16.msra.mxu0 %v4809
        %5415 = vmatmul.bf16.gmra.mxu0 %v4359
        %v5416 = vpop.f32.mrf.mxu0
        %v5417 = vadd.f32 %v5388, %v5416
        %v5418 = vpop.f32.mrf.mxu0
        %v5419 = vadd.f32 %v5390, %v5418
        %5420 = vmatmul.bf16.gmra.mxu0 %v4363
        %v5421 = vpop.f32.mrf.mxu0
        %v5422 = vadd.f32 %v5393, %v5421
        %v5423 = vpop.f32.mrf.mxu0
        %v5424 = vadd.f32 %v5395, %v5423
        %5425 = vmatmul.bf16.gmra.mxu0 %v4367
        %v5426 = vpop.f32.mrf.mxu0
        %v5427 = vadd.f32 %v5398, %v5426
        %v5428 = vpop.f32.mrf.mxu0
        %v5429 = vadd.f32 %v5400, %v5428
        %5430 = vmatmul.bf16.gmra.mxu0 %v4371
        %v5431 = vpop.f32.mrf.mxu0
        %v5432 = vadd.f32 %v5403, %v5431
        %v5433 = vpop.f32.mrf.mxu0
        %v5434 = vadd.f32 %v5405, %v5433
        %5435 = vdwg.mxu0
        %5436 = vmatpush.bf16.msra.mxu0 %v4869
        %5437 = vmatpush.bf16.msra.mxu0 %v4865
        %5438 = vmatpush.bf16.msra.mxu0 %v4861
        %5439 = vmatpush.bf16.msra.mxu0 %v4857
        %5440 = vmatpush.bf16.msra.mxu0 %v4853
        %5441 = vmatpush.bf16.msra.mxu0 %v4849
        %5442 = vmatpush.bf16.msra.mxu0 %v4845
        %5443 = vmatpush.bf16.msra.mxu0 %v4841
        %5444 = vmatmul.bf16.gmra.mxu0 %v4360
        %v5445 = vpop.f32.mrf.mxu0
        %v5446 = vadd.f32 %v5417, %v5445
        %v5447 = vpop.f32.mrf.mxu0
        %v5448 = vadd.f32 %v5419, %v5447
        %5449 = vmatmul.bf16.gmra.mxu0 %v4364
        %v5450 = vpop.f32.mrf.mxu0
        %v5451 = vadd.f32 %v5422, %v5450
        %v5452 = vpop.f32.mrf.mxu0
        %v5453 = vadd.f32 %v5424, %v5452
        %5454 = vmatmul.bf16.gmra.mxu0 %v4368
        %v5455 = vpop.f32.mrf.mxu0
        %v5456 = vadd.f32 %v5427, %v5455
        %v5457 = vpop.f32.mrf.mxu0
        %v5458 = vadd.f32 %v5429, %v5457
        %5459 = vmatmul.bf16.gmra.mxu0 %v4372
        %v5460 = vpop.f32.mrf.mxu0
        %v5461 = vadd.f32 %v5432, %v5460
        %v5462 = vpop.f32.mrf.mxu0
        %v5463 = vadd.f32 %v5434, %v5462
        %5464 = vdwg.mxu0
        %5465 = vmatpush.bf16.msra.mxu0 %v4901
        %5466 = vmatpush.bf16.msra.mxu0 %v4897
        %5467 = vmatpush.bf16.msra.mxu0 %v4893
        %5468 = vmatpush.bf16.msra.mxu0 %v4889
        %5469 = vmatpush.bf16.msra.mxu0 %v4885
        %5470 = vmatpush.bf16.msra.mxu0 %v4881
        %5471 = vmatpush.bf16.msra.mxu0 %v4877
        %5472 = vmatpush.bf16.msra.mxu0 %v4873
        %5473 = vmatmul.bf16.gmra.mxu0 %v4361
        %v5474 = vpop.f32.mrf.mxu0
        %v5475 = vadd.f32 %v5446, %v5474
        %v5476 = vpop.f32.mrf.mxu0
        %v5477 = vadd.f32 %v5448, %v5476
        %5478 = vmatmul.bf16.gmra.mxu0 %v4365
        %v5479 = vpop.f32.mrf.mxu0
        %v5480 = vadd.f32 %v5451, %v5479
        %v5481 = vpop.f32.mrf.mxu0
        %v5482 = vadd.f32 %v5453, %v5481
        %5483 = vmatmul.bf16.gmra.mxu0 %v4369
        %v5484 = vpop.f32.mrf.mxu0
        %v5485 = vadd.f32 %v5456, %v5484
        %v5486 = vpop.f32.mrf.mxu0
        %v5487 = vadd.f32 %v5458, %v5486
        %5488 = vmatmul.bf16.gmra.mxu0 %v4373
        %v5489 = vpop.f32.mrf.mxu0
        %v5490 = vadd.f32 %v5461, %v5489
        %v5491 = vpop.f32.mrf.mxu0
        %v5492 = vadd.f32 %v5463, %v5491
        %5493 = vdwg.mxu0
        %v5510 = vunpack.c.l.b16 %v3989
        %v5511 = vunpack.c.h.b16 %v3989
        %v5512 = vunpack.c.l.b16 %v3990
        %v5513 = vunpack.c.h.b16 %v3990
        %v5514 = vunpack.c.l.b16 %v3991
        %v5515 = vunpack.c.h.b16 %v3991
        %v5516 = vunpack.c.l.b16 %v3992
        %v5517 = vunpack.c.h.b16 %v3992
        %v5518 = vunpack.c.l.b16 %v3993
        %v5519 = vunpack.c.h.b16 %v3993
        %v5520 = vunpack.c.l.b16 %v3994
        %v5521 = vunpack.c.h.b16 %v3994
        %v5522 = vunpack.c.l.b16 %v3995
        %v5523 = vunpack.c.h.b16 %v3995
        %v5524 = vunpack.c.l.b16 %v3996
        %v5525 = vunpack.c.h.b16 %v3996
        %v5526 = vunpack.c.l.b16 %v3997
        %v5527 = vunpack.c.h.b16 %v3997
        %v5528 = vunpack.c.l.b16 %v3998
        %v5529 = vunpack.c.h.b16 %v3998
        %v5530 = vunpack.c.l.b16 %v3999
        %v5531 = vunpack.c.h.b16 %v3999
        %v5532 = vunpack.c.l.b16 %v4000
        %v5533 = vunpack.c.h.b16 %v4000
        %v5534 = vunpack.c.l.b16 %v4001
        %v5535 = vunpack.c.h.b16 %v4001
        %v5536 = vunpack.c.l.b16 %v4002
        %v5537 = vunpack.c.h.b16 %v4002
        %v5538 = vunpack.c.l.b16 %v4003
        %v5539 = vunpack.c.h.b16 %v4003
        %v5540 = vunpack.c.l.b16 %v4004
        %v5541 = vunpack.c.h.b16 %v4004
        %v5542 = vpack.c.b16 %v5514, %v5510
        %v5543 = vpack.c.b16 %v5515, %v5511
        %v5544 = vpack.c.b16 %v5516, %v5512
        %v5545 = vpack.c.b16 %v5517, %v5513
        %v5546 = vpack.c.b16 %v5522, %v5518
        %v5547 = vpack.c.b16 %v5523, %v5519
        %v5548 = vpack.c.b16 %v5524, %v5520
        %v5549 = vpack.c.b16 %v5525, %v5521
        %v5550 = vpack.c.b16 %v5530, %v5526
        %v5551 = vpack.c.b16 %v5531, %v5527
        %v5552 = vpack.c.b16 %v5532, %v5528
        %v5553 = vpack.c.b16 %v5533, %v5529
        %v5554 = vpack.c.b16 %v5538, %v5534
        %v5555 = vpack.c.b16 %v5539, %v5535
        %v5556 = vpack.c.b16 %v5540, %v5536
        %v5557 = vpack.c.b16 %v5541, %v5537
        %v5702 = vunpack.c.l.b16 %v4053
        %v5703 = vunpack.c.h.b16 %v4053
        %v5704 = vunpack.c.l.b16 %v4054
        %v5705 = vunpack.c.h.b16 %v4054
        %v5706 = vunpack.c.l.b16 %v4055
        %v5707 = vunpack.c.h.b16 %v4055
        %v5708 = vunpack.c.l.b16 %v4056
        %v5709 = vunpack.c.h.b16 %v4056
        %v5710 = vunpack.c.l.b16 %v4057
        %v5711 = vunpack.c.h.b16 %v4057
        %v5712 = vunpack.c.l.b16 %v4058
        %v5713 = vunpack.c.h.b16 %v4058
        %v5714 = vunpack.c.l.b16 %v4059
        %v5715 = vunpack.c.h.b16 %v4059
        %v5716 = vunpack.c.l.b16 %v4060
        %v5717 = vunpack.c.h.b16 %v4060
        %v5718 = vunpack.c.l.b16 %v4061
        %v5719 = vunpack.c.h.b16 %v4061
        %v5720 = vunpack.c.l.b16 %v4062
        %v5721 = vunpack.c.h.b16 %v4062
        %v5722 = vunpack.c.l.b16 %v4063
        %v5723 = vunpack.c.h.b16 %v4063
        %v5724 = vunpack.c.l.b16 %v4064
        %v5725 = vunpack.c.h.b16 %v4064
        %v5726 = vunpack.c.l.b16 %v4065
        %v5727 = vunpack.c.h.b16 %v4065
        %v5728 = vunpack.c.l.b16 %v4066
        %v5729 = vunpack.c.h.b16 %v4066
        %v5730 = vunpack.c.l.b16 %v4067
        %v5731 = vunpack.c.h.b16 %v4067
        %v5732 = vunpack.c.l.b16 %v4068
        %v5733 = vunpack.c.h.b16 %v4068
        %v5734 = vunpack.c.l.b16 %v4069
        %v5735 = vunpack.c.h.b16 %v4069
        %v5736 = vunpack.c.l.b16 %v4070
        %v5737 = vunpack.c.h.b16 %v4070
        %v5738 = vunpack.c.l.b16 %v4071
        %v5739 = vunpack.c.h.b16 %v4071
        %v5740 = vunpack.c.l.b16 %v4072
        %v5741 = vunpack.c.h.b16 %v4072
        %v5742 = vunpack.c.l.b16 %v4073
        %v5743 = vunpack.c.h.b16 %v4073
        %v5744 = vunpack.c.l.b16 %v4074
        %v5745 = vunpack.c.h.b16 %v4074
        %v5746 = vunpack.c.l.b16 %v4075
        %v5747 = vunpack.c.h.b16 %v4075
        %v5748 = vunpack.c.l.b16 %v4076
        %v5749 = vunpack.c.h.b16 %v4076
        %v5750 = vunpack.c.l.b16 %v4077
        %v5751 = vunpack.c.h.b16 %v4077
        %v5752 = vunpack.c.l.b16 %v4078
        %v5753 = vunpack.c.h.b16 %v4078
        %v5754 = vunpack.c.l.b16 %v4079
        %v5755 = vunpack.c.h.b16 %v4079
        %v5756 = vunpack.c.l.b16 %v4080
        %v5757 = vunpack.c.h.b16 %v4080
        %v5758 = vunpack.c.l.b16 %v4081
        %v5759 = vunpack.c.h.b16 %v4081
        %v5760 = vunpack.c.l.b16 %v4082
        %v5761 = vunpack.c.h.b16 %v4082
        %v5762 = vunpack.c.l.b16 %v4083
        %v5763 = vunpack.c.h.b16 %v4083
        %v5764 = vunpack.c.l.b16 %v4084
        %v5765 = vunpack.c.h.b16 %v4084
        %v5766 = vunpack.c.l.b16 %v4085
        %v5767 = vunpack.c.h.b16 %v4085
        %v5768 = vunpack.c.l.b16 %v4086
        %v5769 = vunpack.c.h.b16 %v4086
        %v5770 = vunpack.c.l.b16 %v4087
        %v5771 = vunpack.c.h.b16 %v4087
        %v5772 = vunpack.c.l.b16 %v4088
        %v5773 = vunpack.c.h.b16 %v4088
        %v5774 = vunpack.c.l.b16 %v4089
        %v5775 = vunpack.c.h.b16 %v4089
        %v5776 = vunpack.c.l.b16 %v4090
        %v5777 = vunpack.c.h.b16 %v4090
        %v5778 = vunpack.c.l.b16 %v4091
        %v5779 = vunpack.c.h.b16 %v4091
        %v5780 = vunpack.c.l.b16 %v4092
        %v5781 = vunpack.c.h.b16 %v4092
        %v5782 = vunpack.c.l.b16 %v4093
        %v5783 = vunpack.c.h.b16 %v4093
        %v5784 = vunpack.c.l.b16 %v4094
        %v5785 = vunpack.c.h.b16 %v4094
        %v5786 = vunpack.c.l.b16 %v4095
        %v5787 = vunpack.c.h.b16 %v4095
        %v5788 = vunpack.c.l.b16 %v4096
        %v5789 = vunpack.c.h.b16 %v4096
        %v5790 = vunpack.c.l.b16 %v4097
        %v5791 = vunpack.c.h.b16 %v4097
        %v5792 = vunpack.c.l.b16 %v4098
        %v5793 = vunpack.c.h.b16 %v4098
        %v5794 = vunpack.c.l.b16 %v4099
        %v5795 = vunpack.c.h.b16 %v4099
        %v5796 = vunpack.c.l.b16 %v4100
        %v5797 = vunpack.c.h.b16 %v4100
        %v5798 = vunpack.c.l.b16 %v4101
        %v5799 = vunpack.c.h.b16 %v4101
        %v5800 = vunpack.c.l.b16 %v4102
        %v5801 = vunpack.c.h.b16 %v4102
        %v5802 = vunpack.c.l.b16 %v4103
        %v5803 = vunpack.c.h.b16 %v4103
        %v5804 = vunpack.c.l.b16 %v4104
        %v5805 = vunpack.c.h.b16 %v4104
        %v5806 = vunpack.c.l.b16 %v4105
        %v5807 = vunpack.c.h.b16 %v4105
        %v5808 = vunpack.c.l.b16 %v4106
        %v5809 = vunpack.c.h.b16 %v4106
        %v5810 = vunpack.c.l.b16 %v4107
        %v5811 = vunpack.c.h.b16 %v4107
        %v5812 = vunpack.c.l.b16 %v4108
        %v5813 = vunpack.c.h.b16 %v4108
        %v5814 = vunpack.c.l.b16 %v4109
        %v5815 = vunpack.c.h.b16 %v4109
        %v5816 = vunpack.c.l.b16 %v4110
        %v5817 = vunpack.c.h.b16 %v4110
        %v5818 = vunpack.c.l.b16 %v4111
        %v5819 = vunpack.c.h.b16 %v4111
        %v5820 = vunpack.c.l.b16 %v4112
        %v5821 = vunpack.c.h.b16 %v4112
        %v5822 = vunpack.c.l.b16 %v4113
        %v5823 = vunpack.c.h.b16 %v4113
        %v5824 = vunpack.c.l.b16 %v4114
        %v5825 = vunpack.c.h.b16 %v4114
        %v5826 = vunpack.c.l.b16 %v4115
        %v5827 = vunpack.c.h.b16 %v4115
        %v5828 = vunpack.c.l.b16 %v4116
        %v5829 = vunpack.c.h.b16 %v4116
        %v5830 = vunpack.c.l.b16 %v4117
        %v5831 = vunpack.c.h.b16 %v4117
        %v5832 = vunpack.c.l.b16 %v4118
        %v5833 = vunpack.c.h.b16 %v4118
        %v5834 = vunpack.c.l.b16 %v4119
        %v5835 = vunpack.c.h.b16 %v4119
        %v5836 = vunpack.c.l.b16 %v4120
        %v5837 = vunpack.c.h.b16 %v4120
        %v5838 = vunpack.c.l.b16 %v4121
        %v5839 = vunpack.c.h.b16 %v4121
        %v5840 = vunpack.c.l.b16 %v4122
        %v5841 = vunpack.c.h.b16 %v4122
        %v5842 = vunpack.c.l.b16 %v4123
        %v5843 = vunpack.c.h.b16 %v4123
        %v5844 = vunpack.c.l.b16 %v4124
        %v5845 = vunpack.c.h.b16 %v4124
        %v5846 = vunpack.c.l.b16 %v4125
        %v5847 = vunpack.c.h.b16 %v4125
        %v5848 = vunpack.c.l.b16 %v4126
        %v5849 = vunpack.c.h.b16 %v4126
        %v5850 = vunpack.c.l.b16 %v4127
        %v5851 = vunpack.c.h.b16 %v4127
        %v5852 = vunpack.c.l.b16 %v4128
        %v5853 = vunpack.c.h.b16 %v4128
        %v5854 = vunpack.c.l.b16 %v4129
        %v5855 = vunpack.c.h.b16 %v4129
        %v5856 = vunpack.c.l.b16 %v4130
        %v5857 = vunpack.c.h.b16 %v4130
        %v5858 = vunpack.c.l.b16 %v4131
        %v5859 = vunpack.c.h.b16 %v4131
        %v5860 = vunpack.c.l.b16 %v4132
        %v5861 = vunpack.c.h.b16 %v4132
        %v5862 = vunpack.c.l.b16 %v4133
        %v5863 = vunpack.c.h.b16 %v4133
        %v5864 = vunpack.c.l.b16 %v4134
        %v5865 = vunpack.c.h.b16 %v4134
        %v5866 = vunpack.c.l.b16 %v4135
        %v5867 = vunpack.c.h.b16 %v4135
        %v5868 = vunpack.c.l.b16 %v4136
        %v5869 = vunpack.c.h.b16 %v4136
        %v5870 = vunpack.c.l.b16 %v4137
        %v5871 = vunpack.c.h.b16 %v4137
        %v5872 = vunpack.c.l.b16 %v4138
        %v5873 = vunpack.c.h.b16 %v4138
        %v5874 = vunpack.c.l.b16 %v4139
        %v5875 = vunpack.c.h.b16 %v4139
        %v5876 = vunpack.c.l.b16 %v4140
        %v5877 = vunpack.c.h.b16 %v4140
        %v5878 = vunpack.c.l.b16 %v4141
        %v5879 = vunpack.c.h.b16 %v4141
        %v5880 = vunpack.c.l.b16 %v4142
        %v5881 = vunpack.c.h.b16 %v4142
        %v5882 = vunpack.c.l.b16 %v4143
        %v5883 = vunpack.c.h.b16 %v4143
        %v5884 = vunpack.c.l.b16 %v4144
        %v5885 = vunpack.c.h.b16 %v4144
        %v5886 = vunpack.c.l.b16 %v4145
        %v5887 = vunpack.c.h.b16 %v4145
        %v5888 = vunpack.c.l.b16 %v4146
        %v5889 = vunpack.c.h.b16 %v4146
        %v5890 = vunpack.c.l.b16 %v4147
        %v5891 = vunpack.c.h.b16 %v4147
        %v5892 = vunpack.c.l.b16 %v4148
        %v5893 = vunpack.c.h.b16 %v4148
        %v5894 = vunpack.c.l.b16 %v4149
        %v5895 = vunpack.c.h.b16 %v4149
        %v5896 = vunpack.c.l.b16 %v4150
        %v5897 = vunpack.c.h.b16 %v4150
        %v5898 = vunpack.c.l.b16 %v4151
        %v5899 = vunpack.c.h.b16 %v4151
        %v5900 = vunpack.c.l.b16 %v4152
        %v5901 = vunpack.c.h.b16 %v4152
        %v5902 = vunpack.c.l.b16 %v4153
        %v5903 = vunpack.c.h.b16 %v4153
        %v5904 = vunpack.c.l.b16 %v4154
        %v5905 = vunpack.c.h.b16 %v4154
        %v5906 = vunpack.c.l.b16 %v4155
        %v5907 = vunpack.c.h.b16 %v4155
        %v5908 = vunpack.c.l.b16 %v4156
        %v5909 = vunpack.c.h.b16 %v4156
        %v5910 = vunpack.c.l.b16 %v4157
        %v5911 = vunpack.c.h.b16 %v4157
        %v5912 = vunpack.c.l.b16 %v4158
        %v5913 = vunpack.c.h.b16 %v4158
        %v5914 = vunpack.c.l.b16 %v4159
        %v5915 = vunpack.c.h.b16 %v4159
        %v5916 = vunpack.c.l.b16 %v4160
        %v5917 = vunpack.c.h.b16 %v4160
        %v5918 = vunpack.c.l.b16 %v4161
        %v5919 = vunpack.c.h.b16 %v4161
        %v5920 = vunpack.c.l.b16 %v4162
        %v5921 = vunpack.c.h.b16 %v4162
        %v5922 = vunpack.c.l.b16 %v4163
        %v5923 = vunpack.c.h.b16 %v4163
        %v5924 = vunpack.c.l.b16 %v4164
        %v5925 = vunpack.c.h.b16 %v4164
        %v5926 = vunpack.c.l.b16 %v4165
        %v5927 = vunpack.c.h.b16 %v4165
        %v5928 = vunpack.c.l.b16 %v4166
        %v5929 = vunpack.c.h.b16 %v4166
        %v5930 = vunpack.c.l.b16 %v4167
        %v5931 = vunpack.c.h.b16 %v4167
        %v5932 = vunpack.c.l.b16 %v4168
        %v5933 = vunpack.c.h.b16 %v4168
        %v5934 = vunpack.c.l.b16 %v4169
        %v5935 = vunpack.c.h.b16 %v4169
        %v5936 = vunpack.c.l.b16 %v4170
        %v5937 = vunpack.c.h.b16 %v4170
        %v5938 = vunpack.c.l.b16 %v4171
        %v5939 = vunpack.c.h.b16 %v4171
        %v5940 = vunpack.c.l.b16 %v4172
        %v5941 = vunpack.c.h.b16 %v4172
        %v5942 = vunpack.c.l.b16 %v4173
        %v5943 = vunpack.c.h.b16 %v4173
        %v5944 = vunpack.c.l.b16 %v4174
        %v5945 = vunpack.c.h.b16 %v4174
        %v5946 = vunpack.c.l.b16 %v4175
        %v5947 = vunpack.c.h.b16 %v4175
        %v5948 = vunpack.c.l.b16 %v4176
        %v5949 = vunpack.c.h.b16 %v4176
        %v5950 = vunpack.c.l.b16 %v4177
        %v5951 = vunpack.c.h.b16 %v4177
        %v5952 = vunpack.c.l.b16 %v4178
        %v5953 = vunpack.c.h.b16 %v4178
        %v5954 = vunpack.c.l.b16 %v4179
        %v5955 = vunpack.c.h.b16 %v4179
        %v5956 = vunpack.c.l.b16 %v4180
        %v5957 = vunpack.c.h.b16 %v4180
        %v5958 = vpack.c.b16 %v5706, %v5702
        %v5959 = vpack.c.b16 %v5707, %v5703
        %v5960 = vpack.c.b16 %v5708, %v5704
        %v5961 = vpack.c.b16 %v5709, %v5705
        %v5962 = vpack.c.b16 %v5714, %v5710
        %v5963 = vpack.c.b16 %v5715, %v5711
        %v5964 = vpack.c.b16 %v5716, %v5712
        %v5965 = vpack.c.b16 %v5717, %v5713
        %v5966 = vpack.c.b16 %v5722, %v5718
        %v5967 = vpack.c.b16 %v5723, %v5719
        %v5968 = vpack.c.b16 %v5724, %v5720
        %v5969 = vpack.c.b16 %v5725, %v5721
        %v5970 = vpack.c.b16 %v5730, %v5726
        %v5971 = vpack.c.b16 %v5731, %v5727
        %v5972 = vpack.c.b16 %v5732, %v5728
        %v5973 = vpack.c.b16 %v5733, %v5729
        %v5974 = vpack.c.b16 %v5738, %v5734
        %v5975 = vpack.c.b16 %v5739, %v5735
        %v5976 = vpack.c.b16 %v5740, %v5736
        %v5977 = vpack.c.b16 %v5741, %v5737
        %v5978 = vpack.c.b16 %v5746, %v5742
        %v5979 = vpack.c.b16 %v5747, %v5743
        %v5980 = vpack.c.b16 %v5748, %v5744
        %v5981 = vpack.c.b16 %v5749, %v5745
        %v5982 = vpack.c.b16 %v5754, %v5750
        %v5983 = vpack.c.b16 %v5755, %v5751
        %v5984 = vpack.c.b16 %v5756, %v5752
        %v5985 = vpack.c.b16 %v5757, %v5753
        %v5986 = vpack.c.b16 %v5762, %v5758
        %v5987 = vpack.c.b16 %v5763, %v5759
        %v5988 = vpack.c.b16 %v5764, %v5760
        %v5989 = vpack.c.b16 %v5765, %v5761
        %v5990 = vpack.c.b16 %v5770, %v5766
        %v5991 = vpack.c.b16 %v5771, %v5767
        %v5992 = vpack.c.b16 %v5772, %v5768
        %v5993 = vpack.c.b16 %v5773, %v5769
        %v5994 = vpack.c.b16 %v5778, %v5774
        %v5995 = vpack.c.b16 %v5779, %v5775
        %v5996 = vpack.c.b16 %v5780, %v5776
        %v5997 = vpack.c.b16 %v5781, %v5777
        %v5998 = vpack.c.b16 %v5786, %v5782
        %v5999 = vpack.c.b16 %v5787, %v5783
        %v6000 = vpack.c.b16 %v5788, %v5784
        %v6001 = vpack.c.b16 %v5789, %v5785
        %v6002 = vpack.c.b16 %v5794, %v5790
        %v6003 = vpack.c.b16 %v5795, %v5791
        %v6004 = vpack.c.b16 %v5796, %v5792
        %v6005 = vpack.c.b16 %v5797, %v5793
        %v6006 = vpack.c.b16 %v5802, %v5798
        %v6007 = vpack.c.b16 %v5803, %v5799
        %v6008 = vpack.c.b16 %v5804, %v5800
        %v6009 = vpack.c.b16 %v5805, %v5801
        %v6010 = vpack.c.b16 %v5810, %v5806
        %v6011 = vpack.c.b16 %v5811, %v5807
        %v6012 = vpack.c.b16 %v5812, %v5808
        %v6013 = vpack.c.b16 %v5813, %v5809
        %v6014 = vpack.c.b16 %v5818, %v5814
        %v6015 = vpack.c.b16 %v5819, %v5815
        %v6016 = vpack.c.b16 %v5820, %v5816
        %v6017 = vpack.c.b16 %v5821, %v5817
        %v6018 = vpack.c.b16 %v5826, %v5822
        %v6019 = vpack.c.b16 %v5827, %v5823
        %v6020 = vpack.c.b16 %v5828, %v5824
        %v6021 = vpack.c.b16 %v5829, %v5825
        %v6022 = vpack.c.b16 %v5834, %v5830
        %v6023 = vpack.c.b16 %v5835, %v5831
        %v6024 = vpack.c.b16 %v5836, %v5832
        %v6025 = vpack.c.b16 %v5837, %v5833
        %v6026 = vpack.c.b16 %v5842, %v5838
        %v6027 = vpack.c.b16 %v5843, %v5839
        %v6028 = vpack.c.b16 %v5844, %v5840
        %v6029 = vpack.c.b16 %v5845, %v5841
        %v6030 = vpack.c.b16 %v5850, %v5846
        %v6031 = vpack.c.b16 %v5851, %v5847
        %v6032 = vpack.c.b16 %v5852, %v5848
        %v6033 = vpack.c.b16 %v5853, %v5849
        %v6034 = vpack.c.b16 %v5858, %v5854
        %v6035 = vpack.c.b16 %v5859, %v5855
        %v6036 = vpack.c.b16 %v5860, %v5856
        %v6037 = vpack.c.b16 %v5861, %v5857
        %v6038 = vpack.c.b16 %v5866, %v5862
        %v6039 = vpack.c.b16 %v5867, %v5863
        %v6040 = vpack.c.b16 %v5868, %v5864
        %v6041 = vpack.c.b16 %v5869, %v5865
        %v6042 = vpack.c.b16 %v5874, %v5870
        %v6043 = vpack.c.b16 %v5875, %v5871
        %v6044 = vpack.c.b16 %v5876, %v5872
        %v6045 = vpack.c.b16 %v5877, %v5873
        %v6046 = vpack.c.b16 %v5882, %v5878
        %v6047 = vpack.c.b16 %v5883, %v5879
        %v6048 = vpack.c.b16 %v5884, %v5880
        %v6049 = vpack.c.b16 %v5885, %v5881
        %v6050 = vpack.c.b16 %v5890, %v5886
        %v6051 = vpack.c.b16 %v5891, %v5887
        %v6052 = vpack.c.b16 %v5892, %v5888
        %v6053 = vpack.c.b16 %v5893, %v5889
        %v6054 = vpack.c.b16 %v5898, %v5894
        %v6055 = vpack.c.b16 %v5899, %v5895
        %v6056 = vpack.c.b16 %v5900, %v5896
        %v6057 = vpack.c.b16 %v5901, %v5897
        %v6058 = vpack.c.b16 %v5906, %v5902
        %v6059 = vpack.c.b16 %v5907, %v5903
        %v6060 = vpack.c.b16 %v5908, %v5904
        %v6061 = vpack.c.b16 %v5909, %v5905
        %v6062 = vpack.c.b16 %v5914, %v5910
        %v6063 = vpack.c.b16 %v5915, %v5911
        %v6064 = vpack.c.b16 %v5916, %v5912
        %v6065 = vpack.c.b16 %v5917, %v5913
        %v6066 = vpack.c.b16 %v5922, %v5918
        %v6067 = vpack.c.b16 %v5923, %v5919
        %v6068 = vpack.c.b16 %v5924, %v5920
        %v6069 = vpack.c.b16 %v5925, %v5921
        %v6070 = vpack.c.b16 %v5930, %v5926
        %v6071 = vpack.c.b16 %v5931, %v5927
        %v6072 = vpack.c.b16 %v5932, %v5928
        %v6073 = vpack.c.b16 %v5933, %v5929
        %v6074 = vpack.c.b16 %v5938, %v5934
        %v6075 = vpack.c.b16 %v5939, %v5935
        %v6076 = vpack.c.b16 %v5940, %v5936
        %v6077 = vpack.c.b16 %v5941, %v5937
        %v6078 = vpack.c.b16 %v5946, %v5942
        %v6079 = vpack.c.b16 %v5947, %v5943
        %v6080 = vpack.c.b16 %v5948, %v5944
        %v6081 = vpack.c.b16 %v5949, %v5945
        %v6082 = vpack.c.b16 %v5954, %v5950
        %v6083 = vpack.c.b16 %v5955, %v5951
        %v6084 = vpack.c.b16 %v5956, %v5952
        %v6085 = vpack.c.b16 %v5957, %v5953
        %6214 = vmatpush.bf16.msra.mxu0 %v5986
        %6215 = vmatpush.bf16.msra.mxu0 %v5982
        %6216 = vmatpush.bf16.msra.mxu0 %v5978
        %6217 = vmatpush.bf16.msra.mxu0 %v5974
        %6218 = vmatpush.bf16.msra.mxu0 %v5970
        %6219 = vmatpush.bf16.msra.mxu0 %v5966
        %6220 = vmatpush.bf16.msra.mxu0 %v5962
        %6221 = vmatpush.bf16.msra.mxu0 %v5958
        %6222 = vmatmul.bf16.gmra.mxu0 %v5542
        %v6223 = vpop.f32.mrf.mxu0
        %v6224 = vadd.f32 %v5127, %v6223
        %v6225 = vpop.f32.mrf.mxu0
        %v6226 = vadd.f32 %v5129, %v6225
        %6227 = vmatmul.bf16.gmra.mxu0 %v5546
        %v6228 = vpop.f32.mrf.mxu0
        %v6229 = vadd.f32 %v5132, %v6228
        %v6230 = vpop.f32.mrf.mxu0
        %v6231 = vadd.f32 %v5134, %v6230
        %6232 = vmatmul.bf16.gmra.mxu0 %v5550
        %v6233 = vpop.f32.mrf.mxu0
        %v6234 = vadd.f32 %v5137, %v6233
        %v6235 = vpop.f32.mrf.mxu0
        %v6236 = vadd.f32 %v5139, %v6235
        %6237 = vmatmul.bf16.gmra.mxu0 %v5554
        %v6238 = vpop.f32.mrf.mxu0
        %v6239 = vadd.f32 %v5142, %v6238
        %v6240 = vpop.f32.mrf.mxu0
        %v6241 = vadd.f32 %v5144, %v6240
        %6242 = vdwg.mxu0
        %6243 = vmatpush.bf16.msra.mxu0 %v6018
        %6244 = vmatpush.bf16.msra.mxu0 %v6014
        %6245 = vmatpush.bf16.msra.mxu0 %v6010
        %6246 = vmatpush.bf16.msra.mxu0 %v6006
        %6247 = vmatpush.bf16.msra.mxu0 %v6002
        %6248 = vmatpush.bf16.msra.mxu0 %v5998
        %6249 = vmatpush.bf16.msra.mxu0 %v5994
        %6250 = vmatpush.bf16.msra.mxu0 %v5990
        %6251 = vmatmul.bf16.gmra.mxu0 %v5543
        %v6252 = vpop.f32.mrf.mxu0
        %v6253 = vadd.f32 %v6224, %v6252
        %v6254 = vpop.f32.mrf.mxu0
        %v6255 = vadd.f32 %v6226, %v6254
        %6256 = vmatmul.bf16.gmra.mxu0 %v5547
        %v6257 = vpop.f32.mrf.mxu0
        %v6258 = vadd.f32 %v6229, %v6257
        %v6259 = vpop.f32.mrf.mxu0
        %v6260 = vadd.f32 %v6231, %v6259
        %6261 = vmatmul.bf16.gmra.mxu0 %v5551
        %v6262 = vpop.f32.mrf.mxu0
        %v6263 = vadd.f32 %v6234, %v6262
        %v6264 = vpop.f32.mrf.mxu0
        %v6265 = vadd.f32 %v6236, %v6264
        %6266 = vmatmul.bf16.gmra.mxu0 %v5555
        %v6267 = vpop.f32.mrf.mxu0
        %v6268 = vadd.f32 %v6239, %v6267
        %v6269 = vpop.f32.mrf.mxu0
        %v6270 = vadd.f32 %v6241, %v6269
        %6271 = vdwg.mxu0
        %6272 = vmatpush.bf16.msra.mxu0 %v6050
        %6273 = vmatpush.bf16.msra.mxu0 %v6046
        %6274 = vmatpush.bf16.msra.mxu0 %v6042
        %6275 = vmatpush.bf16.msra.mxu0 %v6038
        %6276 = vmatpush.bf16.msra.mxu0 %v6034
        %6277 = vmatpush.bf16.msra.mxu0 %v6030
        %6278 = vmatpush.bf16.msra.mxu0 %v6026
        %6279 = vmatpush.bf16.msra.mxu0 %v6022
        %6280 = vmatmul.bf16.gmra.mxu0 %v5544
        %v6281 = vpop.f32.mrf.mxu0
        %v6282 = vadd.f32 %v6253, %v6281
        %v6283 = vpop.f32.mrf.mxu0
        %v6284 = vadd.f32 %v6255, %v6283
        %6285 = vmatmul.bf16.gmra.mxu0 %v5548
        %v6286 = vpop.f32.mrf.mxu0
        %v6287 = vadd.f32 %v6258, %v6286
        %v6288 = vpop.f32.mrf.mxu0
        %v6289 = vadd.f32 %v6260, %v6288
        %6290 = vmatmul.bf16.gmra.mxu0 %v5552
        %v6291 = vpop.f32.mrf.mxu0
        %v6292 = vadd.f32 %v6263, %v6291
        %v6293 = vpop.f32.mrf.mxu0
        %v6294 = vadd.f32 %v6265, %v6293
        %6295 = vmatmul.bf16.gmra.mxu0 %v5556
        %v6296 = vpop.f32.mrf.mxu0
        %v6297 = vadd.f32 %v6268, %v6296
        %v6298 = vpop.f32.mrf.mxu0
        %v6299 = vadd.f32 %v6270, %v6298
        %6300 = vdwg.mxu0
        %6301 = vmatpush.bf16.msra.mxu0 %v6082
        %6302 = vmatpush.bf16.msra.mxu0 %v6078
        %6303 = vmatpush.bf16.msra.mxu0 %v6074
        %6304 = vmatpush.bf16.msra.mxu0 %v6070
        %6305 = vmatpush.bf16.msra.mxu0 %v6066
        %6306 = vmatpush.bf16.msra.mxu0 %v6062
        %6307 = vmatpush.bf16.msra.mxu0 %v6058
        %6308 = vmatpush.bf16.msra.mxu0 %v6054
        %6309 = vmatmul.bf16.gmra.mxu0 %v5545
        %v6310 = vpop.f32.mrf.mxu0
        %v6311 = vadd.f32 %v6282, %v6310
        %v6312 = vpop.f32.mrf.mxu0
        %v6313 = vadd.f32 %v6284, %v6312
        %6314 = vmatmul.bf16.gmra.mxu0 %v5549
        %v6315 = vpop.f32.mrf.mxu0
        %v6316 = vadd.f32 %v6287, %v6315
        %v6317 = vpop.f32.mrf.mxu0
        %v6318 = vadd.f32 %v6289, %v6317
        %6319 = vmatmul.bf16.gmra.mxu0 %v5553
        %v6320 = vpop.f32.mrf.mxu0
        %v6321 = vadd.f32 %v6292, %v6320
        %v6322 = vpop.f32.mrf.mxu0
        %v6323 = vadd.f32 %v6294, %v6322
        %6324 = vmatmul.bf16.gmra.mxu0 %v5557
        %v6325 = vpop.f32.mrf.mxu0
        %v6326 = vadd.f32 %v6297, %v6325
        %v6327 = vpop.f32.mrf.mxu0
        %v6328 = vadd.f32 %v6299, %v6327
        %6329 = vdwg.mxu0
        %6330 = vmatpush.bf16.msra.mxu0 %v5987
        %6331 = vmatpush.bf16.msra.mxu0 %v5983
        %6332 = vmatpush.bf16.msra.mxu0 %v5979
        %6333 = vmatpush.bf16.msra.mxu0 %v5975
        %6334 = vmatpush.bf16.msra.mxu0 %v5971
        %6335 = vmatpush.bf16.msra.mxu0 %v5967
        %6336 = vmatpush.bf16.msra.mxu0 %v5963
        %6337 = vmatpush.bf16.msra.mxu0 %v5959
        %6338 = vmatmul.bf16.gmra.mxu0 %v5542
        %v6339 = vpop.f32.mrf.mxu0
        %v6340 = vadd.f32 %v5243, %v6339
        %v6341 = vpop.f32.mrf.mxu0
        %v6342 = vadd.f32 %v5245, %v6341
        %6343 = vmatmul.bf16.gmra.mxu0 %v5546
        %v6344 = vpop.f32.mrf.mxu0
        %v6345 = vadd.f32 %v5248, %v6344
        %v6346 = vpop.f32.mrf.mxu0
        %v6347 = vadd.f32 %v5250, %v6346
        %6348 = vmatmul.bf16.gmra.mxu0 %v5550
        %v6349 = vpop.f32.mrf.mxu0
        %v6350 = vadd.f32 %v5253, %v6349
        %v6351 = vpop.f32.mrf.mxu0
        %v6352 = vadd.f32 %v5255, %v6351
        %6353 = vmatmul.bf16.gmra.mxu0 %v5554
        %v6354 = vpop.f32.mrf.mxu0
        %v6355 = vadd.f32 %v5258, %v6354
        %v6356 = vpop.f32.mrf.mxu0
        %v6357 = vadd.f32 %v5260, %v6356
        %6358 = vdwg.mxu0
        %6359 = vmatpush.bf16.msra.mxu0 %v6019
        %6360 = vmatpush.bf16.msra.mxu0 %v6015
        %6361 = vmatpush.bf16.msra.mxu0 %v6011
        %6362 = vmatpush.bf16.msra.mxu0 %v6007
        %6363 = vmatpush.bf16.msra.mxu0 %v6003
        %6364 = vmatpush.bf16.msra.mxu0 %v5999
        %6365 = vmatpush.bf16.msra.mxu0 %v5995
        %6366 = vmatpush.bf16.msra.mxu0 %v5991
        %6367 = vmatmul.bf16.gmra.mxu0 %v5543
        %v6368 = vpop.f32.mrf.mxu0
        %v6369 = vadd.f32 %v6340, %v6368
        %v6370 = vpop.f32.mrf.mxu0
        %v6371 = vadd.f32 %v6342, %v6370
        %6372 = vmatmul.bf16.gmra.mxu0 %v5547
        %v6373 = vpop.f32.mrf.mxu0
        %v6374 = vadd.f32 %v6345, %v6373
        %v6375 = vpop.f32.mrf.mxu0
        %v6376 = vadd.f32 %v6347, %v6375
        %6377 = vmatmul.bf16.gmra.mxu0 %v5551
        %v6378 = vpop.f32.mrf.mxu0
        %v6379 = vadd.f32 %v6350, %v6378
        %v6380 = vpop.f32.mrf.mxu0
        %v6381 = vadd.f32 %v6352, %v6380
        %6382 = vmatmul.bf16.gmra.mxu0 %v5555
        %v6383 = vpop.f32.mrf.mxu0
        %v6384 = vadd.f32 %v6355, %v6383
        %v6385 = vpop.f32.mrf.mxu0
        %v6386 = vadd.f32 %v6357, %v6385
        %6387 = vdwg.mxu0
        %6388 = vmatpush.bf16.msra.mxu0 %v6051
        %6389 = vmatpush.bf16.msra.mxu0 %v6047
        %6390 = vmatpush.bf16.msra.mxu0 %v6043
        %6391 = vmatpush.bf16.msra.mxu0 %v6039
        %6392 = vmatpush.bf16.msra.mxu0 %v6035
        %6393 = vmatpush.bf16.msra.mxu0 %v6031
        %6394 = vmatpush.bf16.msra.mxu0 %v6027
        %6395 = vmatpush.bf16.msra.mxu0 %v6023
        %6396 = vmatmul.bf16.gmra.mxu0 %v5544
        %v6397 = vpop.f32.mrf.mxu0
        %v6398 = vadd.f32 %v6369, %v6397
        %v6399 = vpop.f32.mrf.mxu0
        %v6400 = vadd.f32 %v6371, %v6399
        %6401 = vmatmul.bf16.gmra.mxu0 %v5548
        %v6402 = vpop.f32.mrf.mxu0
        %v6403 = vadd.f32 %v6374, %v6402
        %v6404 = vpop.f32.mrf.mxu0
        %v6405 = vadd.f32 %v6376, %v6404
        %6406 = vmatmul.bf16.gmra.mxu0 %v5552
        %v6407 = vpop.f32.mrf.mxu0
        %v6408 = vadd.f32 %v6379, %v6407
        %v6409 = vpop.f32.mrf.mxu0
        %v6410 = vadd.f32 %v6381, %v6409
        %6411 = vmatmul.bf16.gmra.mxu0 %v5556
        %v6412 = vpop.f32.mrf.mxu0
        %v6413 = vadd.f32 %v6384, %v6412
        %v6414 = vpop.f32.mrf.mxu0
        %v6415 = vadd.f32 %v6386, %v6414
        %6416 = vdwg.mxu0
        %6417 = vmatpush.bf16.msra.mxu0 %v6083
        %6418 = vmatpush.bf16.msra.mxu0 %v6079
        %6419 = vmatpush.bf16.msra.mxu0 %v6075
        %6420 = vmatpush.bf16.msra.mxu0 %v6071
        %6421 = vmatpush.bf16.msra.mxu0 %v6067
        %6422 = vmatpush.bf16.msra.mxu0 %v6063
        %6423 = vmatpush.bf16.msra.mxu0 %v6059
        %6424 = vmatpush.bf16.msra.mxu0 %v6055
        %6425 = vmatmul.bf16.gmra.mxu0 %v5545
        %v6426 = vpop.f32.mrf.mxu0
        %v6427 = vadd.f32 %v6398, %v6426
        %v6428 = vpop.f32.mrf.mxu0
        %v6429 = vadd.f32 %v6400, %v6428
        %6430 = vmatmul.bf16.gmra.mxu0 %v5549
        %v6431 = vpop.f32.mrf.mxu0
        %v6432 = vadd.f32 %v6403, %v6431
        %v6433 = vpop.f32.mrf.mxu0
        %v6434 = vadd.f32 %v6405, %v6433
        %6435 = vmatmul.bf16.gmra.mxu0 %v5553
        %v6436 = vpop.f32.mrf.mxu0
        %v6437 = vadd.f32 %v6408, %v6436
        %v6438 = vpop.f32.mrf.mxu0
        %v6439 = vadd.f32 %v6410, %v6438
        %6440 = vmatmul.bf16.gmra.mxu0 %v5557
        %v6441 = vpop.f32.mrf.mxu0
        %v6442 = vadd.f32 %v6413, %v6441
        %v6443 = vpop.f32.mrf.mxu0
        %v6444 = vadd.f32 %v6415, %v6443
        %6445 = vdwg.mxu0
        %6446 = vmatpush.bf16.msra.mxu0 %v5988
        %6447 = vmatpush.bf16.msra.mxu0 %v5984
        %6448 = vmatpush.bf16.msra.mxu0 %v5980
        %6449 = vmatpush.bf16.msra.mxu0 %v5976
        %6450 = vmatpush.bf16.msra.mxu0 %v5972
        %6451 = vmatpush.bf16.msra.mxu0 %v5968
        %6452 = vmatpush.bf16.msra.mxu0 %v5964
        %6453 = vmatpush.bf16.msra.mxu0 %v5960
        %6454 = vmatmul.bf16.gmra.mxu0 %v5542
        %v6455 = vpop.f32.mrf.mxu0
        %v6456 = vadd.f32 %v5359, %v6455
        %v6457 = vpop.f32.mrf.mxu0
        %v6458 = vadd.f32 %v5361, %v6457
        %6459 = vmatmul.bf16.gmra.mxu0 %v5546
        %v6460 = vpop.f32.mrf.mxu0
        %v6461 = vadd.f32 %v5364, %v6460
        %v6462 = vpop.f32.mrf.mxu0
        %v6463 = vadd.f32 %v5366, %v6462
        %6464 = vmatmul.bf16.gmra.mxu0 %v5550
        %v6465 = vpop.f32.mrf.mxu0
        %v6466 = vadd.f32 %v5369, %v6465
        %v6467 = vpop.f32.mrf.mxu0
        %v6468 = vadd.f32 %v5371, %v6467
        %6469 = vmatmul.bf16.gmra.mxu0 %v5554
        %v6470 = vpop.f32.mrf.mxu0
        %v6471 = vadd.f32 %v5374, %v6470
        %v6472 = vpop.f32.mrf.mxu0
        %v6473 = vadd.f32 %v5376, %v6472
        %6474 = vdwg.mxu0
        %6475 = vmatpush.bf16.msra.mxu0 %v6020
        %6476 = vmatpush.bf16.msra.mxu0 %v6016
        %6477 = vmatpush.bf16.msra.mxu0 %v6012
        %6478 = vmatpush.bf16.msra.mxu0 %v6008
        %6479 = vmatpush.bf16.msra.mxu0 %v6004
        %6480 = vmatpush.bf16.msra.mxu0 %v6000
        %6481 = vmatpush.bf16.msra.mxu0 %v5996
        %6482 = vmatpush.bf16.msra.mxu0 %v5992
        %6483 = vmatmul.bf16.gmra.mxu0 %v5543
        %v6484 = vpop.f32.mrf.mxu0
        %v6485 = vadd.f32 %v6456, %v6484
        %v6486 = vpop.f32.mrf.mxu0
        %v6487 = vadd.f32 %v6458, %v6486
        %6488 = vmatmul.bf16.gmra.mxu0 %v5547
        %v6489 = vpop.f32.mrf.mxu0
        %v6490 = vadd.f32 %v6461, %v6489
        %v6491 = vpop.f32.mrf.mxu0
        %v6492 = vadd.f32 %v6463, %v6491
        %6493 = vmatmul.bf16.gmra.mxu0 %v5551
        %v6494 = vpop.f32.mrf.mxu0
        %v6495 = vadd.f32 %v6466, %v6494
        %v6496 = vpop.f32.mrf.mxu0
        %v6497 = vadd.f32 %v6468, %v6496
        %6498 = vmatmul.bf16.gmra.mxu0 %v5555
        %v6499 = vpop.f32.mrf.mxu0
        %v6500 = vadd.f32 %v6471, %v6499
        %v6501 = vpop.f32.mrf.mxu0
        %v6502 = vadd.f32 %v6473, %v6501
        %6503 = vdwg.mxu0
        %6504 = vmatpush.bf16.msra.mxu0 %v6052
        %6505 = vmatpush.bf16.msra.mxu0 %v6048
        %6506 = vmatpush.bf16.msra.mxu0 %v6044
        %6507 = vmatpush.bf16.msra.mxu0 %v6040
        %6508 = vmatpush.bf16.msra.mxu0 %v6036
        %6509 = vmatpush.bf16.msra.mxu0 %v6032
        %6510 = vmatpush.bf16.msra.mxu0 %v6028
        %6511 = vmatpush.bf16.msra.mxu0 %v6024
        %6512 = vmatmul.bf16.gmra.mxu0 %v5544
        %v6513 = vpop.f32.mrf.mxu0
        %v6514 = vadd.f32 %v6485, %v6513
        %v6515 = vpop.f32.mrf.mxu0
        %v6516 = vadd.f32 %v6487, %v6515
        %6517 = vmatmul.bf16.gmra.mxu0 %v5548
        %v6518 = vpop.f32.mrf.mxu0
        %v6519 = vadd.f32 %v6490, %v6518
        %v6520 = vpop.f32.mrf.mxu0
        %v6521 = vadd.f32 %v6492, %v6520
        %6522 = vmatmul.bf16.gmra.mxu0 %v5552
        %v6523 = vpop.f32.mrf.mxu0
        %v6524 = vadd.f32 %v6495, %v6523
        %v6525 = vpop.f32.mrf.mxu0
        %v6526 = vadd.f32 %v6497, %v6525
        %6527 = vmatmul.bf16.gmra.mxu0 %v5556
        %v6528 = vpop.f32.mrf.mxu0
        %v6529 = vadd.f32 %v6500, %v6528
        %v6530 = vpop.f32.mrf.mxu0
        %v6531 = vadd.f32 %v6502, %v6530
        %6532 = vdwg.mxu0
        %6533 = vmatpush.bf16.msra.mxu0 %v6084
        %6534 = vmatpush.bf16.msra.mxu0 %v6080
        %6535 = vmatpush.bf16.msra.mxu0 %v6076
        %6536 = vmatpush.bf16.msra.mxu0 %v6072
        %6537 = vmatpush.bf16.msra.mxu0 %v6068
        %6538 = vmatpush.bf16.msra.mxu0 %v6064
        %6539 = vmatpush.bf16.msra.mxu0 %v6060
        %6540 = vmatpush.bf16.msra.mxu0 %v6056
        %6541 = vmatmul.bf16.gmra.mxu0 %v5545
        %v6542 = vpop.f32.mrf.mxu0
        %v6543 = vadd.f32 %v6514, %v6542
        %v6544 = vpop.f32.mrf.mxu0
        %v6545 = vadd.f32 %v6516, %v6544
        %6546 = vmatmul.bf16.gmra.mxu0 %v5549
        %v6547 = vpop.f32.mrf.mxu0
        %v6548 = vadd.f32 %v6519, %v6547
        %v6549 = vpop.f32.mrf.mxu0
        %v6550 = vadd.f32 %v6521, %v6549
        %6551 = vmatmul.bf16.gmra.mxu0 %v5553
        %v6552 = vpop.f32.mrf.mxu0
        %v6553 = vadd.f32 %v6524, %v6552
        %v6554 = vpop.f32.mrf.mxu0
        %v6555 = vadd.f32 %v6526, %v6554
        %6556 = vmatmul.bf16.gmra.mxu0 %v5557
        %v6557 = vpop.f32.mrf.mxu0
        %v6558 = vadd.f32 %v6529, %v6557
        %v6559 = vpop.f32.mrf.mxu0
        %v6560 = vadd.f32 %v6531, %v6559
        %6561 = vdwg.mxu0
        %6562 = vmatpush.bf16.msra.mxu0 %v5989
        %6563 = vmatpush.bf16.msra.mxu0 %v5985
        %6564 = vmatpush.bf16.msra.mxu0 %v5981
        %6565 = vmatpush.bf16.msra.mxu0 %v5977
        %6566 = vmatpush.bf16.msra.mxu0 %v5973
        %6567 = vmatpush.bf16.msra.mxu0 %v5969
        %6568 = vmatpush.bf16.msra.mxu0 %v5965
        %6569 = vmatpush.bf16.msra.mxu0 %v5961
        %6570 = vmatmul.bf16.gmra.mxu0 %v5542
        %v6571 = vpop.f32.mrf.mxu0
        %v6572 = vadd.f32 %v5475, %v6571
        %v6573 = vpop.f32.mrf.mxu0
        %v6574 = vadd.f32 %v5477, %v6573
        %6575 = vmatmul.bf16.gmra.mxu0 %v5546
        %v6576 = vpop.f32.mrf.mxu0
        %v6577 = vadd.f32 %v5480, %v6576
        %v6578 = vpop.f32.mrf.mxu0
        %v6579 = vadd.f32 %v5482, %v6578
        %6580 = vmatmul.bf16.gmra.mxu0 %v5550
        %v6581 = vpop.f32.mrf.mxu0
        %v6582 = vadd.f32 %v5485, %v6581
        %v6583 = vpop.f32.mrf.mxu0
        %v6584 = vadd.f32 %v5487, %v6583
        %6585 = vmatmul.bf16.gmra.mxu0 %v5554
        %v6586 = vpop.f32.mrf.mxu0
        %v6587 = vadd.f32 %v5490, %v6586
        %v6588 = vpop.f32.mrf.mxu0
        %v6589 = vadd.f32 %v5492, %v6588
        %6590 = vdwg.mxu0
        %6591 = vmatpush.bf16.msra.mxu0 %v6021
        %6592 = vmatpush.bf16.msra.mxu0 %v6017
        %6593 = vmatpush.bf16.msra.mxu0 %v6013
        %6594 = vmatpush.bf16.msra.mxu0 %v6009
        %6595 = vmatpush.bf16.msra.mxu0 %v6005
        %6596 = vmatpush.bf16.msra.mxu0 %v6001
        %6597 = vmatpush.bf16.msra.mxu0 %v5997
        %6598 = vmatpush.bf16.msra.mxu0 %v5993
        %6599 = vmatmul.bf16.gmra.mxu0 %v5543
        %v6600 = vpop.f32.mrf.mxu0
        %v6601 = vadd.f32 %v6572, %v6600
        %v6602 = vpop.f32.mrf.mxu0
        %v6603 = vadd.f32 %v6574, %v6602
        %6604 = vmatmul.bf16.gmra.mxu0 %v5547
        %v6605 = vpop.f32.mrf.mxu0
        %v6606 = vadd.f32 %v6577, %v6605
        %v6607 = vpop.f32.mrf.mxu0
        %v6608 = vadd.f32 %v6579, %v6607
        %6609 = vmatmul.bf16.gmra.mxu0 %v5551
        %v6610 = vpop.f32.mrf.mxu0
        %v6611 = vadd.f32 %v6582, %v6610
        %v6612 = vpop.f32.mrf.mxu0
        %v6613 = vadd.f32 %v6584, %v6612
        %6614 = vmatmul.bf16.gmra.mxu0 %v5555
        %v6615 = vpop.f32.mrf.mxu0
        %v6616 = vadd.f32 %v6587, %v6615
        %v6617 = vpop.f32.mrf.mxu0
        %v6618 = vadd.f32 %v6589, %v6617
        %6619 = vdwg.mxu0
        %6620 = vmatpush.bf16.msra.mxu0 %v6053
        %6621 = vmatpush.bf16.msra.mxu0 %v6049
        %6622 = vmatpush.bf16.msra.mxu0 %v6045
        %6623 = vmatpush.bf16.msra.mxu0 %v6041
        %6624 = vmatpush.bf16.msra.mxu0 %v6037
        %6625 = vmatpush.bf16.msra.mxu0 %v6033
        %6626 = vmatpush.bf16.msra.mxu0 %v6029
        %6627 = vmatpush.bf16.msra.mxu0 %v6025
        %6628 = vmatmul.bf16.gmra.mxu0 %v5544
        %v6629 = vpop.f32.mrf.mxu0
        %v6630 = vadd.f32 %v6601, %v6629
        %v6631 = vpop.f32.mrf.mxu0
        %v6632 = vadd.f32 %v6603, %v6631
        %6633 = vmatmul.bf16.gmra.mxu0 %v5548
        %v6634 = vpop.f32.mrf.mxu0
        %v6635 = vadd.f32 %v6606, %v6634
        %v6636 = vpop.f32.mrf.mxu0
        %v6637 = vadd.f32 %v6608, %v6636
        %6638 = vmatmul.bf16.gmra.mxu0 %v5552
        %v6639 = vpop.f32.mrf.mxu0
        %v6640 = vadd.f32 %v6611, %v6639
        %v6641 = vpop.f32.mrf.mxu0
        %v6642 = vadd.f32 %v6613, %v6641
        %6643 = vmatmul.bf16.gmra.mxu0 %v5556
        %v6644 = vpop.f32.mrf.mxu0
        %v6645 = vadd.f32 %v6616, %v6644
        %v6646 = vpop.f32.mrf.mxu0
        %v6647 = vadd.f32 %v6618, %v6646
        %6648 = vdwg.mxu0
        %6649 = vmatpush.bf16.msra.mxu0 %v6085
        %6650 = vmatpush.bf16.msra.mxu0 %v6081
        %6651 = vmatpush.bf16.msra.mxu0 %v6077
        %6652 = vmatpush.bf16.msra.mxu0 %v6073
        %6653 = vmatpush.bf16.msra.mxu0 %v6069
        %6654 = vmatpush.bf16.msra.mxu0 %v6065
        %6655 = vmatpush.bf16.msra.mxu0 %v6061
        %6656 = vmatpush.bf16.msra.mxu0 %v6057
        %6657 = vmatmul.bf16.gmra.mxu0 %v5545
        %v6658 = vpop.f32.mrf.mxu0
        %v6659 = vadd.f32 %v6630, %v6658
        %v6660 = vpop.f32.mrf.mxu0
        %v6661 = vadd.f32 %v6632, %v6660
        %6662 = vmatmul.bf16.gmra.mxu0 %v5549
        %v6663 = vpop.f32.mrf.mxu0
        %v6664 = vadd.f32 %v6635, %v6663
        %v6665 = vpop.f32.mrf.mxu0
        %v6666 = vadd.f32 %v6637, %v6665
        %6667 = vmatmul.bf16.gmra.mxu0 %v5553
        %v6668 = vpop.f32.mrf.mxu0
        %v6669 = vadd.f32 %v6640, %v6668
        %v6670 = vpop.f32.mrf.mxu0
        %v6671 = vadd.f32 %v6642, %v6670
        %6672 = vmatmul.bf16.gmra.mxu0 %v5557
        %v6673 = vpop.f32.mrf.mxu0
        %v6674 = vadd.f32 %v6645, %v6673
        %v6675 = vpop.f32.mrf.mxu0
        %v6676 = vadd.f32 %v6647, %v6675
        %6677 = vdwg.mxu0
        %s6678 = scalar_lea.vmem %s5, 2048
        %v6679 = vld [vmem:[%s6678] sm:$0xff]
        %v6680 = vld [vmem:[%s6678 + $0x8] sm:$0xff]
        %v6681 = vld [vmem:[%s6678 + $0x10] sm:$0xff]
        %v6682 = vld [vmem:[%s6678 + $0x18] sm:$0xff]
        %v6683 = vld [vmem:[%s6678 + $0x20] sm:$0xff]
        %v6684 = vld [vmem:[%s6678 + $0x28] sm:$0xff]
        %v6685 = vld [vmem:[%s6678 + $0x30] sm:$0xff]
        %v6686 = vld [vmem:[%s6678 + $0x38] sm:$0xff]
        %v6687 = vld [vmem:[%s6678 + $0x40] sm:$0xff]
        %v6688 = vld [vmem:[%s6678 + $0x48] sm:$0xff]
        %v6689 = vld [vmem:[%s6678 + $0x50] sm:$0xff]
        %v6690 = vld [vmem:[%s6678 + $0x58] sm:$0xff]
        %v6691 = vld [vmem:[%s6678 + $0x60] sm:$0xff]
        %v6692 = vld [vmem:[%s6678 + $0x68] sm:$0xff]
        %v6693 = vld [vmem:[%s6678 + $0x70] sm:$0xff]
        %v6694 = vld [vmem:[%s6678 + $0x78] sm:$0xff]
        %v6695 = vld [vmem:[%s6678 + $0x80] sm:$0xff]
        %v6696 = vld [vmem:[%s6678 + $0x88] sm:$0xff]
        %v6697 = vld [vmem:[%s6678 + $0x90] sm:$0xff]
        %v6698 = vld [vmem:[%s6678 + $0x98] sm:$0xff]
        %v6699 = vld [vmem:[%s6678 + $0xa0] sm:$0xff]
        %v6700 = vld [vmem:[%s6678 + $0xa8] sm:$0xff]
        %v6701 = vld [vmem:[%s6678 + $0xb0] sm:$0xff]
        %v6702 = vld [vmem:[%s6678 + $0xb8] sm:$0xff]
        %v6703 = vld [vmem:[%s6678 + $0xc0] sm:$0xff]
        %v6704 = vld [vmem:[%s6678 + $0xc8] sm:$0xff]
        %v6705 = vld [vmem:[%s6678 + $0xd0] sm:$0xff]
        %v6706 = vld [vmem:[%s6678 + $0xd8] sm:$0xff]
        %v6707 = vld [vmem:[%s6678 + $0xe0] sm:$0xff]
        %v6708 = vld [vmem:[%s6678 + $0xe8] sm:$0xff]
        %v6709 = vld [vmem:[%s6678 + $0xf0] sm:$0xff]
        %v6710 = vld [vmem:[%s6678 + $0xf8] sm:$0xff]
        %v6711 = vld [vmem:[%s6678 + $0x100] sm:$0xff]
        %v6712 = vld [vmem:[%s6678 + $0x108] sm:$0xff]
        %v6713 = vld [vmem:[%s6678 + $0x110] sm:$0xff]
        %v6714 = vld [vmem:[%s6678 + $0x118] sm:$0xff]
        %v6715 = vld [vmem:[%s6678 + $0x120] sm:$0xff]
        %v6716 = vld [vmem:[%s6678 + $0x128] sm:$0xff]
        %v6717 = vld [vmem:[%s6678 + $0x130] sm:$0xff]
        %v6718 = vld [vmem:[%s6678 + $0x138] sm:$0xff]
        %v6719 = vld [vmem:[%s6678 + $0x140] sm:$0xff]
        %v6720 = vld [vmem:[%s6678 + $0x148] sm:$0xff]
        %v6721 = vld [vmem:[%s6678 + $0x150] sm:$0xff]
        %v6722 = vld [vmem:[%s6678 + $0x158] sm:$0xff]
        %v6723 = vld [vmem:[%s6678 + $0x160] sm:$0xff]
        %v6724 = vld [vmem:[%s6678 + $0x168] sm:$0xff]
        %v6725 = vld [vmem:[%s6678 + $0x170] sm:$0xff]
        %v6726 = vld [vmem:[%s6678 + $0x178] sm:$0xff]
        %v6727 = vld [vmem:[%s6678 + $0x180] sm:$0xff]
        %v6728 = vld [vmem:[%s6678 + $0x188] sm:$0xff]
        %v6729 = vld [vmem:[%s6678 + $0x190] sm:$0xff]
        %v6730 = vld [vmem:[%s6678 + $0x198] sm:$0xff]
        %v6731 = vld [vmem:[%s6678 + $0x1a0] sm:$0xff]
        %v6732 = vld [vmem:[%s6678 + $0x1a8] sm:$0xff]
        %v6733 = vld [vmem:[%s6678 + $0x1b0] sm:$0xff]
        %v6734 = vld [vmem:[%s6678 + $0x1b8] sm:$0xff]
        %v6735 = vld [vmem:[%s6678 + $0x1c0] sm:$0xff]
        %v6736 = vld [vmem:[%s6678 + $0x1c8] sm:$0xff]
        %v6737 = vld [vmem:[%s6678 + $0x1d0] sm:$0xff]
        %v6738 = vld [vmem:[%s6678 + $0x1d8] sm:$0xff]
        %v6739 = vld [vmem:[%s6678 + $0x1e0] sm:$0xff]
        %v6740 = vld [vmem:[%s6678 + $0x1e8] sm:$0xff]
        %v6741 = vld [vmem:[%s6678 + $0x1f0] sm:$0xff]
        %v6742 = vld [vmem:[%s6678 + $0x1f8] sm:$0xff]
        %v6743 = vld [vmem:[%s6678 + $0x200] sm:$0xff]
        %v6744 = vld [vmem:[%s6678 + $0x208] sm:$0xff]
        %v6745 = vld [vmem:[%s6678 + $0x210] sm:$0xff]
        %v6746 = vld [vmem:[%s6678 + $0x218] sm:$0xff]
        %v6747 = vld [vmem:[%s6678 + $0x220] sm:$0xff]
        %v6748 = vld [vmem:[%s6678 + $0x228] sm:$0xff]
        %v6749 = vld [vmem:[%s6678 + $0x230] sm:$0xff]
        %v6750 = vld [vmem:[%s6678 + $0x238] sm:$0xff]
        %v6751 = vld [vmem:[%s6678 + $0x240] sm:$0xff]
        %v6752 = vld [vmem:[%s6678 + $0x248] sm:$0xff]
        %v6753 = vld [vmem:[%s6678 + $0x250] sm:$0xff]
        %v6754 = vld [vmem:[%s6678 + $0x258] sm:$0xff]
        %v6755 = vld [vmem:[%s6678 + $0x260] sm:$0xff]
        %v6756 = vld [vmem:[%s6678 + $0x268] sm:$0xff]
        %v6757 = vld [vmem:[%s6678 + $0x270] sm:$0xff]
        %v6758 = vld [vmem:[%s6678 + $0x278] sm:$0xff]
        %v6759 = vld [vmem:[%s6678 + $0x280] sm:$0xff]
        %v6760 = vld [vmem:[%s6678 + $0x288] sm:$0xff]
        %v6761 = vld [vmem:[%s6678 + $0x290] sm:$0xff]
        %v6762 = vld [vmem:[%s6678 + $0x298] sm:$0xff]
        %v6763 = vld [vmem:[%s6678 + $0x2a0] sm:$0xff]
        %v6764 = vld [vmem:[%s6678 + $0x2a8] sm:$0xff]
        %v6765 = vld [vmem:[%s6678 + $0x2b0] sm:$0xff]
        %v6766 = vld [vmem:[%s6678 + $0x2b8] sm:$0xff]
        %v6767 = vld [vmem:[%s6678 + $0x2c0] sm:$0xff]
        %v6768 = vld [vmem:[%s6678 + $0x2c8] sm:$0xff]
        %v6769 = vld [vmem:[%s6678 + $0x2d0] sm:$0xff]
        %v6770 = vld [vmem:[%s6678 + $0x2d8] sm:$0xff]
        %v6771 = vld [vmem:[%s6678 + $0x2e0] sm:$0xff]
        %v6772 = vld [vmem:[%s6678 + $0x2e8] sm:$0xff]
        %v6773 = vld [vmem:[%s6678 + $0x2f0] sm:$0xff]
        %v6774 = vld [vmem:[%s6678 + $0x2f8] sm:$0xff]
        %v6775 = vld [vmem:[%s6678 + $0x300] sm:$0xff]
        %v6776 = vld [vmem:[%s6678 + $0x308] sm:$0xff]
        %v6777 = vld [vmem:[%s6678 + $0x310] sm:$0xff]
        %v6778 = vld [vmem:[%s6678 + $0x318] sm:$0xff]
        %v6779 = vld [vmem:[%s6678 + $0x320] sm:$0xff]
        %v6780 = vld [vmem:[%s6678 + $0x328] sm:$0xff]
        %v6781 = vld [vmem:[%s6678 + $0x330] sm:$0xff]
        %v6782 = vld [vmem:[%s6678 + $0x338] sm:$0xff]
        %v6783 = vld [vmem:[%s6678 + $0x340] sm:$0xff]
        %v6784 = vld [vmem:[%s6678 + $0x348] sm:$0xff]
        %v6785 = vld [vmem:[%s6678 + $0x350] sm:$0xff]
        %v6786 = vld [vmem:[%s6678 + $0x358] sm:$0xff]
        %v6787 = vld [vmem:[%s6678 + $0x360] sm:$0xff]
        %v6788 = vld [vmem:[%s6678 + $0x368] sm:$0xff]
        %v6789 = vld [vmem:[%s6678 + $0x370] sm:$0xff]
        %v6790 = vld [vmem:[%s6678 + $0x378] sm:$0xff]
        %v6791 = vld [vmem:[%s6678 + $0x380] sm:$0xff]
        %v6792 = vld [vmem:[%s6678 + $0x388] sm:$0xff]
        %v6793 = vld [vmem:[%s6678 + $0x390] sm:$0xff]
        %v6794 = vld [vmem:[%s6678 + $0x398] sm:$0xff]
        %v6795 = vld [vmem:[%s6678 + $0x3a0] sm:$0xff]
        %v6796 = vld [vmem:[%s6678 + $0x3a8] sm:$0xff]
        %v6797 = vld [vmem:[%s6678 + $0x3b0] sm:$0xff]
        %v6798 = vld [vmem:[%s6678 + $0x3b8] sm:$0xff]
        %v6799 = vld [vmem:[%s6678 + $0x3c0] sm:$0xff]
        %v6800 = vld [vmem:[%s6678 + $0x3c8] sm:$0xff]
        %v6801 = vld [vmem:[%s6678 + $0x3d0] sm:$0xff]
        %v6802 = vld [vmem:[%s6678 + $0x3d8] sm:$0xff]
        %v6803 = vld [vmem:[%s6678 + $0x3e0] sm:$0xff]
        %v6804 = vld [vmem:[%s6678 + $0x3e8] sm:$0xff]
        %v6805 = vld [vmem:[%s6678 + $0x3f0] sm:$0xff]
        %v6806 = vld [vmem:[%s6678 + $0x3f8] sm:$0xff]
        %v6823 = vunpack.c.l.b16 %v4021
        %v6824 = vunpack.c.h.b16 %v4021
        %v6825 = vunpack.c.l.b16 %v4022
        %v6826 = vunpack.c.h.b16 %v4022
        %v6827 = vunpack.c.l.b16 %v4023
        %v6828 = vunpack.c.h.b16 %v4023
        %v6829 = vunpack.c.l.b16 %v4024
        %v6830 = vunpack.c.h.b16 %v4024
        %v6831 = vunpack.c.l.b16 %v4025
        %v6832 = vunpack.c.h.b16 %v4025
        %v6833 = vunpack.c.l.b16 %v4026
        %v6834 = vunpack.c.h.b16 %v4026
        %v6835 = vunpack.c.l.b16 %v4027
        %v6836 = vunpack.c.h.b16 %v4027
        %v6837 = vunpack.c.l.b16 %v4028
        %v6838 = vunpack.c.h.b16 %v4028
        %v6839 = vunpack.c.l.b16 %v4029
        %v6840 = vunpack.c.h.b16 %v4029
        %v6841 = vunpack.c.l.b16 %v4030
        %v6842 = vunpack.c.h.b16 %v4030
        %v6843 = vunpack.c.l.b16 %v4031
        %v6844 = vunpack.c.h.b16 %v4031
        %v6845 = vunpack.c.l.b16 %v4032
        %v6846 = vunpack.c.h.b16 %v4032
        %v6847 = vunpack.c.l.b16 %v4033
        %v6848 = vunpack.c.h.b16 %v4033
        %v6849 = vunpack.c.l.b16 %v4034
        %v6850 = vunpack.c.h.b16 %v4034
        %v6851 = vunpack.c.l.b16 %v4035
        %v6852 = vunpack.c.h.b16 %v4035
        %v6853 = vunpack.c.l.b16 %v4036
        %v6854 = vunpack.c.h.b16 %v4036
        %v6855 = vpack.c.b16 %v6827, %v6823
        %v6856 = vpack.c.b16 %v6828, %v6824
        %v6857 = vpack.c.b16 %v6829, %v6825
        %v6858 = vpack.c.b16 %v6830, %v6826
        %v6859 = vpack.c.b16 %v6835, %v6831
        %v6860 = vpack.c.b16 %v6836, %v6832
        %v6861 = vpack.c.b16 %v6837, %v6833
        %v6862 = vpack.c.b16 %v6838, %v6834
        %v6863 = vpack.c.b16 %v6843, %v6839
        %v6864 = vpack.c.b16 %v6844, %v6840
        %v6865 = vpack.c.b16 %v6845, %v6841
        %v6866 = vpack.c.b16 %v6846, %v6842
        %v6867 = vpack.c.b16 %v6851, %v6847
        %v6868 = vpack.c.b16 %v6852, %v6848
        %v6869 = vpack.c.b16 %v6853, %v6849
        %v6870 = vpack.c.b16 %v6854, %v6850
        %v7015 = vunpack.c.l.b16 %v6679
        %v7016 = vunpack.c.h.b16 %v6679
        %v7017 = vunpack.c.l.b16 %v6680
        %v7018 = vunpack.c.h.b16 %v6680
        %v7019 = vunpack.c.l.b16 %v6681
        %v7020 = vunpack.c.h.b16 %v6681
        %v7021 = vunpack.c.l.b16 %v6682
        %v7022 = vunpack.c.h.b16 %v6682
        %v7023 = vunpack.c.l.b16 %v6683
        %v7024 = vunpack.c.h.b16 %v6683
        %v7025 = vunpack.c.l.b16 %v6684
        %v7026 = vunpack.c.h.b16 %v6684
        %v7027 = vunpack.c.l.b16 %v6685
        %v7028 = vunpack.c.h.b16 %v6685
        %v7029 = vunpack.c.l.b16 %v6686
        %v7030 = vunpack.c.h.b16 %v6686
        %v7031 = vunpack.c.l.b16 %v6687
        %v7032 = vunpack.c.h.b16 %v6687
        %v7033 = vunpack.c.l.b16 %v6688
        %v7034 = vunpack.c.h.b16 %v6688
        %v7035 = vunpack.c.l.b16 %v6689
        %v7036 = vunpack.c.h.b16 %v6689
        %v7037 = vunpack.c.l.b16 %v6690
        %v7038 = vunpack.c.h.b16 %v6690
        %v7039 = vunpack.c.l.b16 %v6691
        %v7040 = vunpack.c.h.b16 %v6691
        %v7041 = vunpack.c.l.b16 %v6692
        %v7042 = vunpack.c.h.b16 %v6692
        %v7043 = vunpack.c.l.b16 %v6693
        %v7044 = vunpack.c.h.b16 %v6693
        %v7045 = vunpack.c.l.b16 %v6694
        %v7046 = vunpack.c.h.b16 %v6694
        %v7047 = vunpack.c.l.b16 %v6695
        %v7048 = vunpack.c.h.b16 %v6695
        %v7049 = vunpack.c.l.b16 %v6696
        %v7050 = vunpack.c.h.b16 %v6696
        %v7051 = vunpack.c.l.b16 %v6697
        %v7052 = vunpack.c.h.b16 %v6697
        %v7053 = vunpack.c.l.b16 %v6698
        %v7054 = vunpack.c.h.b16 %v6698
        %v7055 = vunpack.c.l.b16 %v6699
        %v7056 = vunpack.c.h.b16 %v6699
        %v7057 = vunpack.c.l.b16 %v6700
        %v7058 = vunpack.c.h.b16 %v6700
        %v7059 = vunpack.c.l.b16 %v6701
        %v7060 = vunpack.c.h.b16 %v6701
        %v7061 = vunpack.c.l.b16 %v6702
        %v7062 = vunpack.c.h.b16 %v6702
        %v7063 = vunpack.c.l.b16 %v6703
        %v7064 = vunpack.c.h.b16 %v6703
        %v7065 = vunpack.c.l.b16 %v6704
        %v7066 = vunpack.c.h.b16 %v6704
        %v7067 = vunpack.c.l.b16 %v6705
        %v7068 = vunpack.c.h.b16 %v6705
        %v7069 = vunpack.c.l.b16 %v6706
        %v7070 = vunpack.c.h.b16 %v6706
        %v7071 = vunpack.c.l.b16 %v6707
        %v7072 = vunpack.c.h.b16 %v6707
        %v7073 = vunpack.c.l.b16 %v6708
        %v7074 = vunpack.c.h.b16 %v6708
        %v7075 = vunpack.c.l.b16 %v6709
        %v7076 = vunpack.c.h.b16 %v6709
        %v7077 = vunpack.c.l.b16 %v6710
        %v7078 = vunpack.c.h.b16 %v6710
        %v7079 = vunpack.c.l.b16 %v6711
        %v7080 = vunpack.c.h.b16 %v6711
        %v7081 = vunpack.c.l.b16 %v6712
        %v7082 = vunpack.c.h.b16 %v6712
        %v7083 = vunpack.c.l.b16 %v6713
        %v7084 = vunpack.c.h.b16 %v6713
        %v7085 = vunpack.c.l.b16 %v6714
        %v7086 = vunpack.c.h.b16 %v6714
        %v7087 = vunpack.c.l.b16 %v6715
        %v7088 = vunpack.c.h.b16 %v6715
        %v7089 = vunpack.c.l.b16 %v6716
        %v7090 = vunpack.c.h.b16 %v6716
        %v7091 = vunpack.c.l.b16 %v6717
        %v7092 = vunpack.c.h.b16 %v6717
        %v7093 = vunpack.c.l.b16 %v6718
        %v7094 = vunpack.c.h.b16 %v6718
        %v7095 = vunpack.c.l.b16 %v6719
        %v7096 = vunpack.c.h.b16 %v6719
        %v7097 = vunpack.c.l.b16 %v6720
        %v7098 = vunpack.c.h.b16 %v6720
        %v7099 = vunpack.c.l.b16 %v6721
        %v7100 = vunpack.c.h.b16 %v6721
        %v7101 = vunpack.c.l.b16 %v6722
        %v7102 = vunpack.c.h.b16 %v6722
        %v7103 = vunpack.c.l.b16 %v6723
        %v7104 = vunpack.c.h.b16 %v6723
        %v7105 = vunpack.c.l.b16 %v6724
        %v7106 = vunpack.c.h.b16 %v6724
        %v7107 = vunpack.c.l.b16 %v6725
        %v7108 = vunpack.c.h.b16 %v6725
        %v7109 = vunpack.c.l.b16 %v6726
        %v7110 = vunpack.c.h.b16 %v6726
        %v7111 = vunpack.c.l.b16 %v6727
        %v7112 = vunpack.c.h.b16 %v6727
        %v7113 = vunpack.c.l.b16 %v6728
        %v7114 = vunpack.c.h.b16 %v6728
        %v7115 = vunpack.c.l.b16 %v6729
        %v7116 = vunpack.c.h.b16 %v6729
        %v7117 = vunpack.c.l.b16 %v6730
        %v7118 = vunpack.c.h.b16 %v6730
        %v7119 = vunpack.c.l.b16 %v6731
        %v7120 = vunpack.c.h.b16 %v6731
        %v7121 = vunpack.c.l.b16 %v6732
        %v7122 = vunpack.c.h.b16 %v6732
        %v7123 = vunpack.c.l.b16 %v6733
        %v7124 = vunpack.c.h.b16 %v6733
        %v7125 = vunpack.c.l.b16 %v6734
        %v7126 = vunpack.c.h.b16 %v6734
        %v7127 = vunpack.c.l.b16 %v6735
        %v7128 = vunpack.c.h.b16 %v6735
        %v7129 = vunpack.c.l.b16 %v6736
        %v7130 = vunpack.c.h.b16 %v6736
        %v7131 = vunpack.c.l.b16 %v6737
        %v7132 = vunpack.c.h.b16 %v6737
        %v7133 = vunpack.c.l.b16 %v6738
        %v7134 = vunpack.c.h.b16 %v6738
        %v7135 = vunpack.c.l.b16 %v6739
        %v7136 = vunpack.c.h.b16 %v6739
        %v7137 = vunpack.c.l.b16 %v6740
        %v7138 = vunpack.c.h.b16 %v6740
        %v7139 = vunpack.c.l.b16 %v6741
        %v7140 = vunpack.c.h.b16 %v6741
        %v7141 = vunpack.c.l.b16 %v6742
        %v7142 = vunpack.c.h.b16 %v6742
        %v7143 = vunpack.c.l.b16 %v6743
        %v7144 = vunpack.c.h.b16 %v6743
        %v7145 = vunpack.c.l.b16 %v6744
        %v7146 = vunpack.c.h.b16 %v6744
        %v7147 = vunpack.c.l.b16 %v6745
        %v7148 = vunpack.c.h.b16 %v6745
        %v7149 = vunpack.c.l.b16 %v6746
        %v7150 = vunpack.c.h.b16 %v6746
        %v7151 = vunpack.c.l.b16 %v6747
        %v7152 = vunpack.c.h.b16 %v6747
        %v7153 = vunpack.c.l.b16 %v6748
        %v7154 = vunpack.c.h.b16 %v6748
        %v7155 = vunpack.c.l.b16 %v6749
        %v7156 = vunpack.c.h.b16 %v6749
        %v7157 = vunpack.c.l.b16 %v6750
        %v7158 = vunpack.c.h.b16 %v6750
        %v7159 = vunpack.c.l.b16 %v6751
        %v7160 = vunpack.c.h.b16 %v6751
        %v7161 = vunpack.c.l.b16 %v6752
        %v7162 = vunpack.c.h.b16 %v6752
        %v7163 = vunpack.c.l.b16 %v6753
        %v7164 = vunpack.c.h.b16 %v6753
        %v7165 = vunpack.c.l.b16 %v6754
        %v7166 = vunpack.c.h.b16 %v6754
        %v7167 = vunpack.c.l.b16 %v6755
        %v7168 = vunpack.c.h.b16 %v6755
        %v7169 = vunpack.c.l.b16 %v6756
        %v7170 = vunpack.c.h.b16 %v6756
        %v7171 = vunpack.c.l.b16 %v6757
        %v7172 = vunpack.c.h.b16 %v6757
        %v7173 = vunpack.c.l.b16 %v6758
        %v7174 = vunpack.c.h.b16 %v6758
        %v7175 = vunpack.c.l.b16 %v6759
        %v7176 = vunpack.c.h.b16 %v6759
        %v7177 = vunpack.c.l.b16 %v6760
        %v7178 = vunpack.c.h.b16 %v6760
        %v7179 = vunpack.c.l.b16 %v6761
        %v7180 = vunpack.c.h.b16 %v6761
        %v7181 = vunpack.c.l.b16 %v6762
        %v7182 = vunpack.c.h.b16 %v6762
        %v7183 = vunpack.c.l.b16 %v6763
        %v7184 = vunpack.c.h.b16 %v6763
        %v7185 = vunpack.c.l.b16 %v6764
        %v7186 = vunpack.c.h.b16 %v6764
        %v7187 = vunpack.c.l.b16 %v6765
        %v7188 = vunpack.c.h.b16 %v6765
        %v7189 = vunpack.c.l.b16 %v6766
        %v7190 = vunpack.c.h.b16 %v6766
        %v7191 = vunpack.c.l.b16 %v6767
        %v7192 = vunpack.c.h.b16 %v6767
        %v7193 = vunpack.c.l.b16 %v6768
        %v7194 = vunpack.c.h.b16 %v6768
        %v7195 = vunpack.c.l.b16 %v6769
        %v7196 = vunpack.c.h.b16 %v6769
        %v7197 = vunpack.c.l.b16 %v6770
        %v7198 = vunpack.c.h.b16 %v6770
        %v7199 = vunpack.c.l.b16 %v6771
        %v7200 = vunpack.c.h.b16 %v6771
        %v7201 = vunpack.c.l.b16 %v6772
        %v7202 = vunpack.c.h.b16 %v6772
        %v7203 = vunpack.c.l.b16 %v6773
        %v7204 = vunpack.c.h.b16 %v6773
        %v7205 = vunpack.c.l.b16 %v6774
        %v7206 = vunpack.c.h.b16 %v6774
        %v7207 = vunpack.c.l.b16 %v6775
        %v7208 = vunpack.c.h.b16 %v6775
        %v7209 = vunpack.c.l.b16 %v6776
        %v7210 = vunpack.c.h.b16 %v6776
        %v7211 = vunpack.c.l.b16 %v6777
        %v7212 = vunpack.c.h.b16 %v6777
        %v7213 = vunpack.c.l.b16 %v6778
        %v7214 = vunpack.c.h.b16 %v6778
        %v7215 = vunpack.c.l.b16 %v6779
        %v7216 = vunpack.c.h.b16 %v6779
        %v7217 = vunpack.c.l.b16 %v6780
        %v7218 = vunpack.c.h.b16 %v6780
        %v7219 = vunpack.c.l.b16 %v6781
        %v7220 = vunpack.c.h.b16 %v6781
        %v7221 = vunpack.c.l.b16 %v6782
        %v7222 = vunpack.c.h.b16 %v6782
        %v7223 = vunpack.c.l.b16 %v6783
        %v7224 = vunpack.c.h.b16 %v6783
        %v7225 = vunpack.c.l.b16 %v6784
        %v7226 = vunpack.c.h.b16 %v6784
        %v7227 = vunpack.c.l.b16 %v6785
        %v7228 = vunpack.c.h.b16 %v6785
        %v7229 = vunpack.c.l.b16 %v6786
        %v7230 = vunpack.c.h.b16 %v6786
        %v7231 = vunpack.c.l.b16 %v6787
        %v7232 = vunpack.c.h.b16 %v6787
        %v7233 = vunpack.c.l.b16 %v6788
        %v7234 = vunpack.c.h.b16 %v6788
        %v7235 = vunpack.c.l.b16 %v6789
        %v7236 = vunpack.c.h.b16 %v6789
        %v7237 = vunpack.c.l.b16 %v6790
        %v7238 = vunpack.c.h.b16 %v6790
        %v7239 = vunpack.c.l.b16 %v6791
        %v7240 = vunpack.c.h.b16 %v6791
        %v7241 = vunpack.c.l.b16 %v6792
        %v7242 = vunpack.c.h.b16 %v6792
        %v7243 = vunpack.c.l.b16 %v6793
        %v7244 = vunpack.c.h.b16 %v6793
        %v7245 = vunpack.c.l.b16 %v6794
        %v7246 = vunpack.c.h.b16 %v6794
        %v7247 = vunpack.c.l.b16 %v6795
        %v7248 = vunpack.c.h.b16 %v6795
        %v7249 = vunpack.c.l.b16 %v6796
        %v7250 = vunpack.c.h.b16 %v6796
        %v7251 = vunpack.c.l.b16 %v6797
        %v7252 = vunpack.c.h.b16 %v6797
        %v7253 = vunpack.c.l.b16 %v6798
        %v7254 = vunpack.c.h.b16 %v6798
        %v7255 = vunpack.c.l.b16 %v6799
        %v7256 = vunpack.c.h.b16 %v6799
        %v7257 = vunpack.c.l.b16 %v6800
        %v7258 = vunpack.c.h.b16 %v6800
        %v7259 = vunpack.c.l.b16 %v6801
        %v7260 = vunpack.c.h.b16 %v6801
        %v7261 = vunpack.c.l.b16 %v6802
        %v7262 = vunpack.c.h.b16 %v6802
        %v7263 = vunpack.c.l.b16 %v6803
        %v7264 = vunpack.c.h.b16 %v6803
        %v7265 = vunpack.c.l.b16 %v6804
        %v7266 = vunpack.c.h.b16 %v6804
        %v7267 = vunpack.c.l.b16 %v6805
        %v7268 = vunpack.c.h.b16 %v6805
        %v7269 = vunpack.c.l.b16 %v6806
        %v7270 = vunpack.c.h.b16 %v6806
        %v7271 = vpack.c.b16 %v7019, %v7015
        %v7272 = vpack.c.b16 %v7020, %v7016
        %v7273 = vpack.c.b16 %v7021, %v7017
        %v7274 = vpack.c.b16 %v7022, %v7018
        %v7275 = vpack.c.b16 %v7027, %v7023
        %v7276 = vpack.c.b16 %v7028, %v7024
        %v7277 = vpack.c.b16 %v7029, %v7025
        %v7278 = vpack.c.b16 %v7030, %v7026
        %v7279 = vpack.c.b16 %v7035, %v7031
        %v7280 = vpack.c.b16 %v7036, %v7032
        %v7281 = vpack.c.b16 %v7037, %v7033
        %v7282 = vpack.c.b16 %v7038, %v7034
        %v7283 = vpack.c.b16 %v7043, %v7039
        %v7284 = vpack.c.b16 %v7044, %v7040
        %v7285 = vpack.c.b16 %v7045, %v7041
        %v7286 = vpack.c.b16 %v7046, %v7042
        %v7287 = vpack.c.b16 %v7051, %v7047
        %v7288 = vpack.c.b16 %v7052, %v7048
        %v7289 = vpack.c.b16 %v7053, %v7049
        %v7290 = vpack.c.b16 %v7054, %v7050
        %v7291 = vpack.c.b16 %v7059, %v7055
        %v7292 = vpack.c.b16 %v7060, %v7056
        %v7293 = vpack.c.b16 %v7061, %v7057
        %v7294 = vpack.c.b16 %v7062, %v7058
        %v7295 = vpack.c.b16 %v7067, %v7063
        %v7296 = vpack.c.b16 %v7068, %v7064
        %v7297 = vpack.c.b16 %v7069, %v7065
        %v7298 = vpack.c.b16 %v7070, %v7066
        %v7299 = vpack.c.b16 %v7075, %v7071
        %v7300 = vpack.c.b16 %v7076, %v7072
        %v7301 = vpack.c.b16 %v7077, %v7073
        %v7302 = vpack.c.b16 %v7078, %v7074
        %v7303 = vpack.c.b16 %v7083, %v7079
        %v7304 = vpack.c.b16 %v7084, %v7080
        %v7305 = vpack.c.b16 %v7085, %v7081
        %v7306 = vpack.c.b16 %v7086, %v7082
        %v7307 = vpack.c.b16 %v7091, %v7087
        %v7308 = vpack.c.b16 %v7092, %v7088
        %v7309 = vpack.c.b16 %v7093, %v7089
        %v7310 = vpack.c.b16 %v7094, %v7090
        %v7311 = vpack.c.b16 %v7099, %v7095
        %v7312 = vpack.c.b16 %v7100, %v7096
        %v7313 = vpack.c.b16 %v7101, %v7097
        %v7314 = vpack.c.b16 %v7102, %v7098
        %v7315 = vpack.c.b16 %v7107, %v7103
        %v7316 = vpack.c.b16 %v7108, %v7104
        %v7317 = vpack.c.b16 %v7109, %v7105
        %v7318 = vpack.c.b16 %v7110, %v7106
        %v7319 = vpack.c.b16 %v7115, %v7111
        %v7320 = vpack.c.b16 %v7116, %v7112
        %v7321 = vpack.c.b16 %v7117, %v7113
        %v7322 = vpack.c.b16 %v7118, %v7114
        %v7323 = vpack.c.b16 %v7123, %v7119
        %v7324 = vpack.c.b16 %v7124, %v7120
        %v7325 = vpack.c.b16 %v7125, %v7121
        %v7326 = vpack.c.b16 %v7126, %v7122
        %v7327 = vpack.c.b16 %v7131, %v7127
        %v7328 = vpack.c.b16 %v7132, %v7128
        %v7329 = vpack.c.b16 %v7133, %v7129
        %v7330 = vpack.c.b16 %v7134, %v7130
        %v7331 = vpack.c.b16 %v7139, %v7135
        %v7332 = vpack.c.b16 %v7140, %v7136
        %v7333 = vpack.c.b16 %v7141, %v7137
        %v7334 = vpack.c.b16 %v7142, %v7138
        %v7335 = vpack.c.b16 %v7147, %v7143
        %v7336 = vpack.c.b16 %v7148, %v7144
        %v7337 = vpack.c.b16 %v7149, %v7145
        %v7338 = vpack.c.b16 %v7150, %v7146
        %v7339 = vpack.c.b16 %v7155, %v7151
        %v7340 = vpack.c.b16 %v7156, %v7152
        %v7341 = vpack.c.b16 %v7157, %v7153
        %v7342 = vpack.c.b16 %v7158, %v7154
        %v7343 = vpack.c.b16 %v7163, %v7159
        %v7344 = vpack.c.b16 %v7164, %v7160
        %v7345 = vpack.c.b16 %v7165, %v7161
        %v7346 = vpack.c.b16 %v7166, %v7162
        %v7347 = vpack.c.b16 %v7171, %v7167
        %v7348 = vpack.c.b16 %v7172, %v7168
        %v7349 = vpack.c.b16 %v7173, %v7169
        %v7350 = vpack.c.b16 %v7174, %v7170
        %v7351 = vpack.c.b16 %v7179, %v7175
        %v7352 = vpack.c.b16 %v7180, %v7176
        %v7353 = vpack.c.b16 %v7181, %v7177
        %v7354 = vpack.c.b16 %v7182, %v7178
        %v7355 = vpack.c.b16 %v7187, %v7183
        %v7356 = vpack.c.b16 %v7188, %v7184
        %v7357 = vpack.c.b16 %v7189, %v7185
        %v7358 = vpack.c.b16 %v7190, %v7186
        %v7359 = vpack.c.b16 %v7195, %v7191
        %v7360 = vpack.c.b16 %v7196, %v7192
        %v7361 = vpack.c.b16 %v7197, %v7193
        %v7362 = vpack.c.b16 %v7198, %v7194
        %v7363 = vpack.c.b16 %v7203, %v7199
        %v7364 = vpack.c.b16 %v7204, %v7200
        %v7365 = vpack.c.b16 %v7205, %v7201
        %v7366 = vpack.c.b16 %v7206, %v7202
        %v7367 = vpack.c.b16 %v7211, %v7207
        %v7368 = vpack.c.b16 %v7212, %v7208
        %v7369 = vpack.c.b16 %v7213, %v7209
        %v7370 = vpack.c.b16 %v7214, %v7210
        %v7371 = vpack.c.b16 %v7219, %v7215
        %v7372 = vpack.c.b16 %v7220, %v7216
        %v7373 = vpack.c.b16 %v7221, %v7217
        %v7374 = vpack.c.b16 %v7222, %v7218
        %v7375 = vpack.c.b16 %v7227, %v7223
        %v7376 = vpack.c.b16 %v7228, %v7224
        %v7377 = vpack.c.b16 %v7229, %v7225
        %v7378 = vpack.c.b16 %v7230, %v7226
        %v7379 = vpack.c.b16 %v7235, %v7231
        %v7380 = vpack.c.b16 %v7236, %v7232
        %v7381 = vpack.c.b16 %v7237, %v7233
        %v7382 = vpack.c.b16 %v7238, %v7234
        %v7383 = vpack.c.b16 %v7243, %v7239
        %v7384 = vpack.c.b16 %v7244, %v7240
        %v7385 = vpack.c.b16 %v7245, %v7241
        %v7386 = vpack.c.b16 %v7246, %v7242
        %v7387 = vpack.c.b16 %v7251, %v7247
        %v7388 = vpack.c.b16 %v7252, %v7248
        %v7389 = vpack.c.b16 %v7253, %v7249
        %v7390 = vpack.c.b16 %v7254, %v7250
        %v7391 = vpack.c.b16 %v7259, %v7255
        %v7392 = vpack.c.b16 %v7260, %v7256
        %v7393 = vpack.c.b16 %v7261, %v7257
        %v7394 = vpack.c.b16 %v7262, %v7258
        %v7395 = vpack.c.b16 %v7267, %v7263
        %v7396 = vpack.c.b16 %v7268, %v7264
        %v7397 = vpack.c.b16 %v7269, %v7265
        %v7398 = vpack.c.b16 %v7270, %v7266
        %7527 = vmatpush.bf16.msra.mxu0 %v7299
        %7528 = vmatpush.bf16.msra.mxu0 %v7295
        %7529 = vmatpush.bf16.msra.mxu0 %v7291
        %7530 = vmatpush.bf16.msra.mxu0 %v7287
        %7531 = vmatpush.bf16.msra.mxu0 %v7283
        %7532 = vmatpush.bf16.msra.mxu0 %v7279
        %7533 = vmatpush.bf16.msra.mxu0 %v7275
        %7534 = vmatpush.bf16.msra.mxu0 %v7271
        %7535 = vmatmul.bf16.gmra.mxu0 %v6855
        %v7536 = vpop.f32.mrf.mxu0
        %v7537 = vadd.f32 0.0, %v7536
        %v7538 = vpop.f32.mrf.mxu0
        %v7539 = vadd.f32 0.0, %v7538
        %7540 = vmatmul.bf16.gmra.mxu0 %v6859
        %v7541 = vpop.f32.mrf.mxu0
        %v7542 = vadd.f32 0.0, %v7541
        %v7543 = vpop.f32.mrf.mxu0
        %v7544 = vadd.f32 0.0, %v7543
        %7545 = vmatmul.bf16.gmra.mxu0 %v6863
        %v7546 = vpop.f32.mrf.mxu0
        %v7547 = vadd.f32 0.0, %v7546
        %v7548 = vpop.f32.mrf.mxu0
        %v7549 = vadd.f32 0.0, %v7548
        %7550 = vmatmul.bf16.gmra.mxu0 %v6867
        %v7551 = vpop.f32.mrf.mxu0
        %v7552 = vadd.f32 0.0, %v7551
        %v7553 = vpop.f32.mrf.mxu0
        %v7554 = vadd.f32 0.0, %v7553
        %7555 = vdwg.mxu0
        %7556 = vmatpush.bf16.msra.mxu0 %v7331
        %7557 = vmatpush.bf16.msra.mxu0 %v7327
        %7558 = vmatpush.bf16.msra.mxu0 %v7323
        %7559 = vmatpush.bf16.msra.mxu0 %v7319
        %7560 = vmatpush.bf16.msra.mxu0 %v7315
        %7561 = vmatpush.bf16.msra.mxu0 %v7311
        %7562 = vmatpush.bf16.msra.mxu0 %v7307
        %7563 = vmatpush.bf16.msra.mxu0 %v7303
        %7564 = vmatmul.bf16.gmra.mxu0 %v6856
        %v7565 = vpop.f32.mrf.mxu0
        %v7566 = vadd.f32 %v7537, %v7565
        %v7567 = vpop.f32.mrf.mxu0
        %v7568 = vadd.f32 %v7539, %v7567
        %7569 = vmatmul.bf16.gmra.mxu0 %v6860
        %v7570 = vpop.f32.mrf.mxu0
        %v7571 = vadd.f32 %v7542, %v7570
        %v7572 = vpop.f32.mrf.mxu0
        %v7573 = vadd.f32 %v7544, %v7572
        %7574 = vmatmul.bf16.gmra.mxu0 %v6864
        %v7575 = vpop.f32.mrf.mxu0
        %v7576 = vadd.f32 %v7547, %v7575
        %v7577 = vpop.f32.mrf.mxu0
        %v7578 = vadd.f32 %v7549, %v7577
        %7579 = vmatmul.bf16.gmra.mxu0 %v6868
        %v7580 = vpop.f32.mrf.mxu0
        %v7581 = vadd.f32 %v7552, %v7580
        %v7582 = vpop.f32.mrf.mxu0
        %v7583 = vadd.f32 %v7554, %v7582
        %7584 = vdwg.mxu0
        %7585 = vmatpush.bf16.msra.mxu0 %v7363
        %7586 = vmatpush.bf16.msra.mxu0 %v7359
        %7587 = vmatpush.bf16.msra.mxu0 %v7355
        %7588 = vmatpush.bf16.msra.mxu0 %v7351
        %7589 = vmatpush.bf16.msra.mxu0 %v7347
        %7590 = vmatpush.bf16.msra.mxu0 %v7343
        %7591 = vmatpush.bf16.msra.mxu0 %v7339
        %7592 = vmatpush.bf16.msra.mxu0 %v7335
        %7593 = vmatmul.bf16.gmra.mxu0 %v6857
        %v7594 = vpop.f32.mrf.mxu0
        %v7595 = vadd.f32 %v7566, %v7594
        %v7596 = vpop.f32.mrf.mxu0
        %v7597 = vadd.f32 %v7568, %v7596
        %7598 = vmatmul.bf16.gmra.mxu0 %v6861
        %v7599 = vpop.f32.mrf.mxu0
        %v7600 = vadd.f32 %v7571, %v7599
        %v7601 = vpop.f32.mrf.mxu0
        %v7602 = vadd.f32 %v7573, %v7601
        %7603 = vmatmul.bf16.gmra.mxu0 %v6865
        %v7604 = vpop.f32.mrf.mxu0
        %v7605 = vadd.f32 %v7576, %v7604
        %v7606 = vpop.f32.mrf.mxu0
        %v7607 = vadd.f32 %v7578, %v7606
        %7608 = vmatmul.bf16.gmra.mxu0 %v6869
        %v7609 = vpop.f32.mrf.mxu0
        %v7610 = vadd.f32 %v7581, %v7609
        %v7611 = vpop.f32.mrf.mxu0
        %v7612 = vadd.f32 %v7583, %v7611
        %7613 = vdwg.mxu0
        %7614 = vmatpush.bf16.msra.mxu0 %v7395
        %7615 = vmatpush.bf16.msra.mxu0 %v7391
        %7616 = vmatpush.bf16.msra.mxu0 %v7387
        %7617 = vmatpush.bf16.msra.mxu0 %v7383
        %7618 = vmatpush.bf16.msra.mxu0 %v7379
        %7619 = vmatpush.bf16.msra.mxu0 %v7375
        %7620 = vmatpush.bf16.msra.mxu0 %v7371
        %7621 = vmatpush.bf16.msra.mxu0 %v7367
        %7622 = vmatmul.bf16.gmra.mxu0 %v6858
        %v7623 = vpop.f32.mrf.mxu0
        %v7624 = vadd.f32 %v7595, %v7623
        %v7625 = vpop.f32.mrf.mxu0
        %v7626 = vadd.f32 %v7597, %v7625
        %7627 = vmatmul.bf16.gmra.mxu0 %v6862
        %v7628 = vpop.f32.mrf.mxu0
        %v7629 = vadd.f32 %v7600, %v7628
        %v7630 = vpop.f32.mrf.mxu0
        %v7631 = vadd.f32 %v7602, %v7630
        %7632 = vmatmul.bf16.gmra.mxu0 %v6866
        %v7633 = vpop.f32.mrf.mxu0
        %v7634 = vadd.f32 %v7605, %v7633
        %v7635 = vpop.f32.mrf.mxu0
        %v7636 = vadd.f32 %v7607, %v7635
        %7637 = vmatmul.bf16.gmra.mxu0 %v6870
        %v7638 = vpop.f32.mrf.mxu0
        %v7639 = vadd.f32 %v7610, %v7638
        %v7640 = vpop.f32.mrf.mxu0
        %v7641 = vadd.f32 %v7612, %v7640
        %7642 = vdwg.mxu0
        %7643 = vmatpush.bf16.msra.mxu0 %v7300
        %7644 = vmatpush.bf16.msra.mxu0 %v7296
        %7645 = vmatpush.bf16.msra.mxu0 %v7292
        %7646 = vmatpush.bf16.msra.mxu0 %v7288
        %7647 = vmatpush.bf16.msra.mxu0 %v7284
        %7648 = vmatpush.bf16.msra.mxu0 %v7280
        %7649 = vmatpush.bf16.msra.mxu0 %v7276
        %7650 = vmatpush.bf16.msra.mxu0 %v7272
        %7651 = vmatmul.bf16.gmra.mxu0 %v6855
        %v7652 = vpop.f32.mrf.mxu0
        %v7653 = vadd.f32 0.0, %v7652
        %v7654 = vpop.f32.mrf.mxu0
        %v7655 = vadd.f32 0.0, %v7654
        %7656 = vmatmul.bf16.gmra.mxu0 %v6859
        %v7657 = vpop.f32.mrf.mxu0
        %v7658 = vadd.f32 0.0, %v7657
        %v7659 = vpop.f32.mrf.mxu0
        %v7660 = vadd.f32 0.0, %v7659
        %7661 = vmatmul.bf16.gmra.mxu0 %v6863
        %v7662 = vpop.f32.mrf.mxu0
        %v7663 = vadd.f32 0.0, %v7662
        %v7664 = vpop.f32.mrf.mxu0
        %v7665 = vadd.f32 0.0, %v7664
        %7666 = vmatmul.bf16.gmra.mxu0 %v6867
        %v7667 = vpop.f32.mrf.mxu0
        %v7668 = vadd.f32 0.0, %v7667
        %v7669 = vpop.f32.mrf.mxu0
        %v7670 = vadd.f32 0.0, %v7669
        %7671 = vdwg.mxu0
        %7672 = vmatpush.bf16.msra.mxu0 %v7332
        %7673 = vmatpush.bf16.msra.mxu0 %v7328
        %7674 = vmatpush.bf16.msra.mxu0 %v7324
        %7675 = vmatpush.bf16.msra.mxu0 %v7320
        %7676 = vmatpush.bf16.msra.mxu0 %v7316
        %7677 = vmatpush.bf16.msra.mxu0 %v7312
        %7678 = vmatpush.bf16.msra.mxu0 %v7308
        %7679 = vmatpush.bf16.msra.mxu0 %v7304
        %7680 = vmatmul.bf16.gmra.mxu0 %v6856
        %v7681 = vpop.f32.mrf.mxu0
        %v7682 = vadd.f32 %v7653, %v7681
        %v7683 = vpop.f32.mrf.mxu0
        %v7684 = vadd.f32 %v7655, %v7683
        %7685 = vmatmul.bf16.gmra.mxu0 %v6860
        %v7686 = vpop.f32.mrf.mxu0
        %v7687 = vadd.f32 %v7658, %v7686
        %v7688 = vpop.f32.mrf.mxu0
        %v7689 = vadd.f32 %v7660, %v7688
        %7690 = vmatmul.bf16.gmra.mxu0 %v6864
        %v7691 = vpop.f32.mrf.mxu0
        %v7692 = vadd.f32 %v7663, %v7691
        %v7693 = vpop.f32.mrf.mxu0
        %v7694 = vadd.f32 %v7665, %v7693
        %7695 = vmatmul.bf16.gmra.mxu0 %v6868
        %v7696 = vpop.f32.mrf.mxu0
        %v7697 = vadd.f32 %v7668, %v7696
        %v7698 = vpop.f32.mrf.mxu0
        %v7699 = vadd.f32 %v7670, %v7698
        %7700 = vdwg.mxu0
        %7701 = vmatpush.bf16.msra.mxu0 %v7364
        %7702 = vmatpush.bf16.msra.mxu0 %v7360
        %7703 = vmatpush.bf16.msra.mxu0 %v7356
        %7704 = vmatpush.bf16.msra.mxu0 %v7352
        %7705 = vmatpush.bf16.msra.mxu0 %v7348
        %7706 = vmatpush.bf16.msra.mxu0 %v7344
        %7707 = vmatpush.bf16.msra.mxu0 %v7340
        %7708 = vmatpush.bf16.msra.mxu0 %v7336
        %7709 = vmatmul.bf16.gmra.mxu0 %v6857
        %v7710 = vpop.f32.mrf.mxu0
        %v7711 = vadd.f32 %v7682, %v7710
        %v7712 = vpop.f32.mrf.mxu0
        %v7713 = vadd.f32 %v7684, %v7712
        %7714 = vmatmul.bf16.gmra.mxu0 %v6861
        %v7715 = vpop.f32.mrf.mxu0
        %v7716 = vadd.f32 %v7687, %v7715
        %v7717 = vpop.f32.mrf.mxu0
        %v7718 = vadd.f32 %v7689, %v7717
        %7719 = vmatmul.bf16.gmra.mxu0 %v6865
        %v7720 = vpop.f32.mrf.mxu0
        %v7721 = vadd.f32 %v7692, %v7720
        %v7722 = vpop.f32.mrf.mxu0
        %v7723 = vadd.f32 %v7694, %v7722
        %7724 = vmatmul.bf16.gmra.mxu0 %v6869
        %v7725 = vpop.f32.mrf.mxu0
        %v7726 = vadd.f32 %v7697, %v7725
        %v7727 = vpop.f32.mrf.mxu0
        %v7728 = vadd.f32 %v7699, %v7727
        %7729 = vdwg.mxu0
        %7730 = vmatpush.bf16.msra.mxu0 %v7396
        %7731 = vmatpush.bf16.msra.mxu0 %v7392
        %7732 = vmatpush.bf16.msra.mxu0 %v7388
        %7733 = vmatpush.bf16.msra.mxu0 %v7384
        %7734 = vmatpush.bf16.msra.mxu0 %v7380
        %7735 = vmatpush.bf16.msra.mxu0 %v7376
        %7736 = vmatpush.bf16.msra.mxu0 %v7372
        %7737 = vmatpush.bf16.msra.mxu0 %v7368
        %7738 = vmatmul.bf16.gmra.mxu0 %v6858
        %v7739 = vpop.f32.mrf.mxu0
        %v7740 = vadd.f32 %v7711, %v7739
        %v7741 = vpop.f32.mrf.mxu0
        %v7742 = vadd.f32 %v7713, %v7741
        %7743 = vmatmul.bf16.gmra.mxu0 %v6862
        %v7744 = vpop.f32.mrf.mxu0
        %v7745 = vadd.f32 %v7716, %v7744
        %v7746 = vpop.f32.mrf.mxu0
        %v7747 = vadd.f32 %v7718, %v7746
        %7748 = vmatmul.bf16.gmra.mxu0 %v6866
        %v7749 = vpop.f32.mrf.mxu0
        %v7750 = vadd.f32 %v7721, %v7749
        %v7751 = vpop.f32.mrf.mxu0
        %v7752 = vadd.f32 %v7723, %v7751
        %7753 = vmatmul.bf16.gmra.mxu0 %v6870
        %v7754 = vpop.f32.mrf.mxu0
        %v7755 = vadd.f32 %v7726, %v7754
        %v7756 = vpop.f32.mrf.mxu0
        %v7757 = vadd.f32 %v7728, %v7756
        %7758 = vdwg.mxu0
        %7759 = vmatpush.bf16.msra.mxu0 %v7301
        %7760 = vmatpush.bf16.msra.mxu0 %v7297
        %7761 = vmatpush.bf16.msra.mxu0 %v7293
        %7762 = vmatpush.bf16.msra.mxu0 %v7289
        %7763 = vmatpush.bf16.msra.mxu0 %v7285
        %7764 = vmatpush.bf16.msra.mxu0 %v7281
        %7765 = vmatpush.bf16.msra.mxu0 %v7277
        %7766 = vmatpush.bf16.msra.mxu0 %v7273
        %7767 = vmatmul.bf16.gmra.mxu0 %v6855
        %v7768 = vpop.f32.mrf.mxu0
        %v7769 = vadd.f32 0.0, %v7768
        %v7770 = vpop.f32.mrf.mxu0
        %v7771 = vadd.f32 0.0, %v7770
        %7772 = vmatmul.bf16.gmra.mxu0 %v6859
        %v7773 = vpop.f32.mrf.mxu0
        %v7774 = vadd.f32 0.0, %v7773
        %v7775 = vpop.f32.mrf.mxu0
        %v7776 = vadd.f32 0.0, %v7775
        %7777 = vmatmul.bf16.gmra.mxu0 %v6863
        %v7778 = vpop.f32.mrf.mxu0
        %v7779 = vadd.f32 0.0, %v7778
        %v7780 = vpop.f32.mrf.mxu0
        %v7781 = vadd.f32 0.0, %v7780
        %7782 = vmatmul.bf16.gmra.mxu0 %v6867
        %v7783 = vpop.f32.mrf.mxu0
        %v7784 = vadd.f32 0.0, %v7783
        %v7785 = vpop.f32.mrf.mxu0
        %v7786 = vadd.f32 0.0, %v7785
        %7787 = vdwg.mxu0
        %7788 = vmatpush.bf16.msra.mxu0 %v7333
        %7789 = vmatpush.bf16.msra.mxu0 %v7329
        %7790 = vmatpush.bf16.msra.mxu0 %v7325
        %7791 = vmatpush.bf16.msra.mxu0 %v7321
        %7792 = vmatpush.bf16.msra.mxu0 %v7317
        %7793 = vmatpush.bf16.msra.mxu0 %v7313
        %7794 = vmatpush.bf16.msra.mxu0 %v7309
        %7795 = vmatpush.bf16.msra.mxu0 %v7305
        %7796 = vmatmul.bf16.gmra.mxu0 %v6856
        %v7797 = vpop.f32.mrf.mxu0
        %v7798 = vadd.f32 %v7769, %v7797
        %v7799 = vpop.f32.mrf.mxu0
        %v7800 = vadd.f32 %v7771, %v7799
        %7801 = vmatmul.bf16.gmra.mxu0 %v6860
        %v7802 = vpop.f32.mrf.mxu0
        %v7803 = vadd.f32 %v7774, %v7802
        %v7804 = vpop.f32.mrf.mxu0
        %v7805 = vadd.f32 %v7776, %v7804
        %7806 = vmatmul.bf16.gmra.mxu0 %v6864
        %v7807 = vpop.f32.mrf.mxu0
        %v7808 = vadd.f32 %v7779, %v7807
        %v7809 = vpop.f32.mrf.mxu0
        %v7810 = vadd.f32 %v7781, %v7809
        %7811 = vmatmul.bf16.gmra.mxu0 %v6868
        %v7812 = vpop.f32.mrf.mxu0
        %v7813 = vadd.f32 %v7784, %v7812
        %v7814 = vpop.f32.mrf.mxu0
        %v7815 = vadd.f32 %v7786, %v7814
        %7816 = vdwg.mxu0
        %7817 = vmatpush.bf16.msra.mxu0 %v7365
        %7818 = vmatpush.bf16.msra.mxu0 %v7361
        %7819 = vmatpush.bf16.msra.mxu0 %v7357
        %7820 = vmatpush.bf16.msra.mxu0 %v7353
        %7821 = vmatpush.bf16.msra.mxu0 %v7349
        %7822 = vmatpush.bf16.msra.mxu0 %v7345
        %7823 = vmatpush.bf16.msra.mxu0 %v7341
        %7824 = vmatpush.bf16.msra.mxu0 %v7337
        %7825 = vmatmul.bf16.gmra.mxu0 %v6857
        %v7826 = vpop.f32.mrf.mxu0
        %v7827 = vadd.f32 %v7798, %v7826
        %v7828 = vpop.f32.mrf.mxu0
        %v7829 = vadd.f32 %v7800, %v7828
        %7830 = vmatmul.bf16.gmra.mxu0 %v6861
        %v7831 = vpop.f32.mrf.mxu0
        %v7832 = vadd.f32 %v7803, %v7831
        %v7833 = vpop.f32.mrf.mxu0
        %v7834 = vadd.f32 %v7805, %v7833
        %7835 = vmatmul.bf16.gmra.mxu0 %v6865
        %v7836 = vpop.f32.mrf.mxu0
        %v7837 = vadd.f32 %v7808, %v7836
        %v7838 = vpop.f32.mrf.mxu0
        %v7839 = vadd.f32 %v7810, %v7838
        %7840 = vmatmul.bf16.gmra.mxu0 %v6869
        %v7841 = vpop.f32.mrf.mxu0
        %v7842 = vadd.f32 %v7813, %v7841
        %v7843 = vpop.f32.mrf.mxu0
        %v7844 = vadd.f32 %v7815, %v7843
        %7845 = vdwg.mxu0
        %7846 = vmatpush.bf16.msra.mxu0 %v7397
        %7847 = vmatpush.bf16.msra.mxu0 %v7393
        %7848 = vmatpush.bf16.msra.mxu0 %v7389
        %7849 = vmatpush.bf16.msra.mxu0 %v7385
        %7850 = vmatpush.bf16.msra.mxu0 %v7381
        %7851 = vmatpush.bf16.msra.mxu0 %v7377
        %7852 = vmatpush.bf16.msra.mxu0 %v7373
        %7853 = vmatpush.bf16.msra.mxu0 %v7369
        %7854 = vmatmul.bf16.gmra.mxu0 %v6858
        %v7855 = vpop.f32.mrf.mxu0
        %v7856 = vadd.f32 %v7827, %v7855
        %v7857 = vpop.f32.mrf.mxu0
        %v7858 = vadd.f32 %v7829, %v7857
        %7859 = vmatmul.bf16.gmra.mxu0 %v6862
        %v7860 = vpop.f32.mrf.mxu0
        %v7861 = vadd.f32 %v7832, %v7860
        %v7862 = vpop.f32.mrf.mxu0
        %v7863 = vadd.f32 %v7834, %v7862
        %7864 = vmatmul.bf16.gmra.mxu0 %v6866
        %v7865 = vpop.f32.mrf.mxu0
        %v7866 = vadd.f32 %v7837, %v7865
        %v7867 = vpop.f32.mrf.mxu0
        %v7868 = vadd.f32 %v7839, %v7867
        %7869 = vmatmul.bf16.gmra.mxu0 %v6870
        %v7870 = vpop.f32.mrf.mxu0
        %v7871 = vadd.f32 %v7842, %v7870
        %v7872 = vpop.f32.mrf.mxu0
        %v7873 = vadd.f32 %v7844, %v7872
        %7874 = vdwg.mxu0
        %7875 = vmatpush.bf16.msra.mxu0 %v7302
        %7876 = vmatpush.bf16.msra.mxu0 %v7298
        %7877 = vmatpush.bf16.msra.mxu0 %v7294
        %7878 = vmatpush.bf16.msra.mxu0 %v7290
        %7879 = vmatpush.bf16.msra.mxu0 %v7286
        %7880 = vmatpush.bf16.msra.mxu0 %v7282
        %7881 = vmatpush.bf16.msra.mxu0 %v7278
        %7882 = vmatpush.bf16.msra.mxu0 %v7274
        %7883 = vmatmul.bf16.gmra.mxu0 %v6855
        %v7884 = vpop.f32.mrf.mxu0
        %v7885 = vadd.f32 0.0, %v7884
        %v7886 = vpop.f32.mrf.mxu0
        %v7887 = vadd.f32 0.0, %v7886
        %7888 = vmatmul.bf16.gmra.mxu0 %v6859
        %v7889 = vpop.f32.mrf.mxu0
        %v7890 = vadd.f32 0.0, %v7889
        %v7891 = vpop.f32.mrf.mxu0
        %v7892 = vadd.f32 0.0, %v7891
        %7893 = vmatmul.bf16.gmra.mxu0 %v6863
        %v7894 = vpop.f32.mrf.mxu0
        %v7895 = vadd.f32 0.0, %v7894
        %v7896 = vpop.f32.mrf.mxu0
        %v7897 = vadd.f32 0.0, %v7896
        %7898 = vmatmul.bf16.gmra.mxu0 %v6867
        %v7899 = vpop.f32.mrf.mxu0
        %v7900 = vadd.f32 0.0, %v7899
        %v7901 = vpop.f32.mrf.mxu0
        %v7902 = vadd.f32 0.0, %v7901
        %7903 = vdwg.mxu0
        %7904 = vmatpush.bf16.msra.mxu0 %v7334
        %7905 = vmatpush.bf16.msra.mxu0 %v7330
        %7906 = vmatpush.bf16.msra.mxu0 %v7326
        %7907 = vmatpush.bf16.msra.mxu0 %v7322
        %7908 = vmatpush.bf16.msra.mxu0 %v7318
        %7909 = vmatpush.bf16.msra.mxu0 %v7314
        %7910 = vmatpush.bf16.msra.mxu0 %v7310
        %7911 = vmatpush.bf16.msra.mxu0 %v7306
        %7912 = vmatmul.bf16.gmra.mxu0 %v6856
        %v7913 = vpop.f32.mrf.mxu0
        %v7914 = vadd.f32 %v7885, %v7913
        %v7915 = vpop.f32.mrf.mxu0
        %v7916 = vadd.f32 %v7887, %v7915
        %7917 = vmatmul.bf16.gmra.mxu0 %v6860
        %v7918 = vpop.f32.mrf.mxu0
        %v7919 = vadd.f32 %v7890, %v7918
        %v7920 = vpop.f32.mrf.mxu0
        %v7921 = vadd.f32 %v7892, %v7920
        %7922 = vmatmul.bf16.gmra.mxu0 %v6864
        %v7923 = vpop.f32.mrf.mxu0
        %v7924 = vadd.f32 %v7895, %v7923
        %v7925 = vpop.f32.mrf.mxu0
        %v7926 = vadd.f32 %v7897, %v7925
        %7927 = vmatmul.bf16.gmra.mxu0 %v6868
        %v7928 = vpop.f32.mrf.mxu0
        %v7929 = vadd.f32 %v7900, %v7928
        %v7930 = vpop.f32.mrf.mxu0
        %v7931 = vadd.f32 %v7902, %v7930
        %7932 = vdwg.mxu0
        %7933 = vmatpush.bf16.msra.mxu0 %v7366
        %7934 = vmatpush.bf16.msra.mxu0 %v7362
        %7935 = vmatpush.bf16.msra.mxu0 %v7358
        %7936 = vmatpush.bf16.msra.mxu0 %v7354
        %7937 = vmatpush.bf16.msra.mxu0 %v7350
        %7938 = vmatpush.bf16.msra.mxu0 %v7346
        %7939 = vmatpush.bf16.msra.mxu0 %v7342
        %7940 = vmatpush.bf16.msra.mxu0 %v7338
        %7941 = vmatmul.bf16.gmra.mxu0 %v6857
        %v7942 = vpop.f32.mrf.mxu0
        %v7943 = vadd.f32 %v7914, %v7942
        %v7944 = vpop.f32.mrf.mxu0
        %v7945 = vadd.f32 %v7916, %v7944
        %7946 = vmatmul.bf16.gmra.mxu0 %v6861
        %v7947 = vpop.f32.mrf.mxu0
        %v7948 = vadd.f32 %v7919, %v7947
        %v7949 = vpop.f32.mrf.mxu0
        %v7950 = vadd.f32 %v7921, %v7949
        %7951 = vmatmul.bf16.gmra.mxu0 %v6865
        %v7952 = vpop.f32.mrf.mxu0
        %v7953 = vadd.f32 %v7924, %v7952
        %v7954 = vpop.f32.mrf.mxu0
        %v7955 = vadd.f32 %v7926, %v7954
        %7956 = vmatmul.bf16.gmra.mxu0 %v6869
        %v7957 = vpop.f32.mrf.mxu0
        %v7958 = vadd.f32 %v7929, %v7957
        %v7959 = vpop.f32.mrf.mxu0
        %v7960 = vadd.f32 %v7931, %v7959
        %7961 = vdwg.mxu0
        %7962 = vmatpush.bf16.msra.mxu0 %v7398
        %7963 = vmatpush.bf16.msra.mxu0 %v7394
        %7964 = vmatpush.bf16.msra.mxu0 %v7390
        %7965 = vmatpush.bf16.msra.mxu0 %v7386
        %7966 = vmatpush.bf16.msra.mxu0 %v7382
        %7967 = vmatpush.bf16.msra.mxu0 %v7378
        %7968 = vmatpush.bf16.msra.mxu0 %v7374
        %7969 = vmatpush.bf16.msra.mxu0 %v7370
        %7970 = vmatmul.bf16.gmra.mxu0 %v6858
        %v7971 = vpop.f32.mrf.mxu0
        %v7972 = vadd.f32 %v7943, %v7971
        %v7973 = vpop.f32.mrf.mxu0
        %v7974 = vadd.f32 %v7945, %v7973
        %7975 = vmatmul.bf16.gmra.mxu0 %v6862
        %v7976 = vpop.f32.mrf.mxu0
        %v7977 = vadd.f32 %v7948, %v7976
        %v7978 = vpop.f32.mrf.mxu0
        %v7979 = vadd.f32 %v7950, %v7978
        %7980 = vmatmul.bf16.gmra.mxu0 %v6866
        %v7981 = vpop.f32.mrf.mxu0
        %v7982 = vadd.f32 %v7953, %v7981
        %v7983 = vpop.f32.mrf.mxu0
        %v7984 = vadd.f32 %v7955, %v7983
        %7985 = vmatmul.bf16.gmra.mxu0 %v6870
        %v7986 = vpop.f32.mrf.mxu0
        %v7987 = vadd.f32 %v7958, %v7986
        %v7988 = vpop.f32.mrf.mxu0
        %v7989 = vadd.f32 %v7960, %v7988
        %7990 = vdwg.mxu0
        %v7991 = vadd.f32 %v6311, %v7624
        %v7992 = vadd.f32 %v6427, %v7740
        %v7993 = vadd.f32 %v6543, %v7856
        %v7994 = vadd.f32 %v6659, %v7972
        %v7995 = vadd.f32 %v6313, %v7626
        %v7996 = vadd.f32 %v6429, %v7742
        %v7997 = vadd.f32 %v6545, %v7858
        %v7998 = vadd.f32 %v6661, %v7974
        %v7999 = vadd.f32 %v6316, %v7629
        %v8000 = vadd.f32 %v6432, %v7745
        %v8001 = vadd.f32 %v6548, %v7861
        %v8002 = vadd.f32 %v6664, %v7977
        %v8003 = vadd.f32 %v6318, %v7631
        %v8004 = vadd.f32 %v6434, %v7747
        %v8005 = vadd.f32 %v6550, %v7863
        %v8006 = vadd.f32 %v6666, %v7979
        %v8007 = vadd.f32 %v6321, %v7634
        %v8008 = vadd.f32 %v6437, %v7750
        %v8009 = vadd.f32 %v6553, %v7866
        %v8010 = vadd.f32 %v6669, %v7982
        %v8011 = vadd.f32 %v6323, %v7636
        %v8012 = vadd.f32 %v6439, %v7752
        %v8013 = vadd.f32 %v6555, %v7868
        %v8014 = vadd.f32 %v6671, %v7984
        %v8015 = vadd.f32 %v6326, %v7639
        %v8016 = vadd.f32 %v6442, %v7755
        %v8017 = vadd.f32 %v6558, %v7871
        %v8018 = vadd.f32 %v6674, %v7987
        %v8019 = vadd.f32 %v6328, %v7641
        %v8020 = vadd.f32 %v6444, %v7757
        %v8021 = vadd.f32 %v6560, %v7873
        %v8022 = vadd.f32 %v6676, %v7989
        %s8023 = scalar_lea.vmem %s5, 3072
        %v8024 = vld [vmem:[%s8023] sm:$0xff]
        %v8025 = vld [vmem:[%s8023 + $0x8] sm:$0xff]
        %v8026 = vld [vmem:[%s8023 + $0x10] sm:$0xff]
        %v8027 = vld [vmem:[%s8023 + $0x18] sm:$0xff]
        %v8028 = vld [vmem:[%s8023 + $0x20] sm:$0xff]
        %v8029 = vld [vmem:[%s8023 + $0x28] sm:$0xff]
        %v8030 = vld [vmem:[%s8023 + $0x30] sm:$0xff]
        %v8031 = vld [vmem:[%s8023 + $0x38] sm:$0xff]
        %v8032 = vld [vmem:[%s8023 + $0x40] sm:$0xff]
        %v8033 = vld [vmem:[%s8023 + $0x48] sm:$0xff]
        %v8034 = vld [vmem:[%s8023 + $0x50] sm:$0xff]
        %v8035 = vld [vmem:[%s8023 + $0x58] sm:$0xff]
        %v8036 = vld [vmem:[%s8023 + $0x60] sm:$0xff]
        %v8037 = vld [vmem:[%s8023 + $0x68] sm:$0xff]
        %v8038 = vld [vmem:[%s8023 + $0x70] sm:$0xff]
        %v8039 = vld [vmem:[%s8023 + $0x78] sm:$0xff]
        %v8040 = vld [vmem:[%s8023 + $0x80] sm:$0xff]
        %v8041 = vld [vmem:[%s8023 + $0x88] sm:$0xff]
        %v8042 = vld [vmem:[%s8023 + $0x90] sm:$0xff]
        %v8043 = vld [vmem:[%s8023 + $0x98] sm:$0xff]
        %v8044 = vld [vmem:[%s8023 + $0xa0] sm:$0xff]
        %v8045 = vld [vmem:[%s8023 + $0xa8] sm:$0xff]
        %v8046 = vld [vmem:[%s8023 + $0xb0] sm:$0xff]
        %v8047 = vld [vmem:[%s8023 + $0xb8] sm:$0xff]
        %v8048 = vld [vmem:[%s8023 + $0xc0] sm:$0xff]
        %v8049 = vld [vmem:[%s8023 + $0xc8] sm:$0xff]
        %v8050 = vld [vmem:[%s8023 + $0xd0] sm:$0xff]
        %v8051 = vld [vmem:[%s8023 + $0xd8] sm:$0xff]
        %v8052 = vld [vmem:[%s8023 + $0xe0] sm:$0xff]
        %v8053 = vld [vmem:[%s8023 + $0xe8] sm:$0xff]
        %v8054 = vld [vmem:[%s8023 + $0xf0] sm:$0xff]
        %v8055 = vld [vmem:[%s8023 + $0xf8] sm:$0xff]
        %v8056 = vld [vmem:[%s8023 + $0x100] sm:$0xff]
        %v8057 = vld [vmem:[%s8023 + $0x108] sm:$0xff]
        %v8058 = vld [vmem:[%s8023 + $0x110] sm:$0xff]
        %v8059 = vld [vmem:[%s8023 + $0x118] sm:$0xff]
        %v8060 = vld [vmem:[%s8023 + $0x120] sm:$0xff]
        %v8061 = vld [vmem:[%s8023 + $0x128] sm:$0xff]
        %v8062 = vld [vmem:[%s8023 + $0x130] sm:$0xff]
        %v8063 = vld [vmem:[%s8023 + $0x138] sm:$0xff]
        %v8064 = vld [vmem:[%s8023 + $0x140] sm:$0xff]
        %v8065 = vld [vmem:[%s8023 + $0x148] sm:$0xff]
        %v8066 = vld [vmem:[%s8023 + $0x150] sm:$0xff]
        %v8067 = vld [vmem:[%s8023 + $0x158] sm:$0xff]
        %v8068 = vld [vmem:[%s8023 + $0x160] sm:$0xff]
        %v8069 = vld [vmem:[%s8023 + $0x168] sm:$0xff]
        %v8070 = vld [vmem:[%s8023 + $0x170] sm:$0xff]
        %v8071 = vld [vmem:[%s8023 + $0x178] sm:$0xff]
        %v8072 = vld [vmem:[%s8023 + $0x180] sm:$0xff]
        %v8073 = vld [vmem:[%s8023 + $0x188] sm:$0xff]
        %v8074 = vld [vmem:[%s8023 + $0x190] sm:$0xff]
        %v8075 = vld [vmem:[%s8023 + $0x198] sm:$0xff]
        %v8076 = vld [vmem:[%s8023 + $0x1a0] sm:$0xff]
        %v8077 = vld [vmem:[%s8023 + $0x1a8] sm:$0xff]
        %v8078 = vld [vmem:[%s8023 + $0x1b0] sm:$0xff]
        %v8079 = vld [vmem:[%s8023 + $0x1b8] sm:$0xff]
        %v8080 = vld [vmem:[%s8023 + $0x1c0] sm:$0xff]
        %v8081 = vld [vmem:[%s8023 + $0x1c8] sm:$0xff]
        %v8082 = vld [vmem:[%s8023 + $0x1d0] sm:$0xff]
        %v8083 = vld [vmem:[%s8023 + $0x1d8] sm:$0xff]
        %v8084 = vld [vmem:[%s8023 + $0x1e0] sm:$0xff]
        %v8085 = vld [vmem:[%s8023 + $0x1e8] sm:$0xff]
        %v8086 = vld [vmem:[%s8023 + $0x1f0] sm:$0xff]
        %v8087 = vld [vmem:[%s8023 + $0x1f8] sm:$0xff]
        %v8088 = vld [vmem:[%s8023 + $0x200] sm:$0xff]
        %v8089 = vld [vmem:[%s8023 + $0x208] sm:$0xff]
        %v8090 = vld [vmem:[%s8023 + $0x210] sm:$0xff]
        %v8091 = vld [vmem:[%s8023 + $0x218] sm:$0xff]
        %v8092 = vld [vmem:[%s8023 + $0x220] sm:$0xff]
        %v8093 = vld [vmem:[%s8023 + $0x228] sm:$0xff]
        %v8094 = vld [vmem:[%s8023 + $0x230] sm:$0xff]
        %v8095 = vld [vmem:[%s8023 + $0x238] sm:$0xff]
        %v8096 = vld [vmem:[%s8023 + $0x240] sm:$0xff]
        %v8097 = vld [vmem:[%s8023 + $0x248] sm:$0xff]
        %v8098 = vld [vmem:[%s8023 + $0x250] sm:$0xff]
        %v8099 = vld [vmem:[%s8023 + $0x258] sm:$0xff]
        %v8100 = vld [vmem:[%s8023 + $0x260] sm:$0xff]
        %v8101 = vld [vmem:[%s8023 + $0x268] sm:$0xff]
        %v8102 = vld [vmem:[%s8023 + $0x270] sm:$0xff]
        %v8103 = vld [vmem:[%s8023 + $0x278] sm:$0xff]
        %v8104 = vld [vmem:[%s8023 + $0x280] sm:$0xff]
        %v8105 = vld [vmem:[%s8023 + $0x288] sm:$0xff]
        %v8106 = vld [vmem:[%s8023 + $0x290] sm:$0xff]
        %v8107 = vld [vmem:[%s8023 + $0x298] sm:$0xff]
        %v8108 = vld [vmem:[%s8023 + $0x2a0] sm:$0xff]
        %v8109 = vld [vmem:[%s8023 + $0x2a8] sm:$0xff]
        %v8110 = vld [vmem:[%s8023 + $0x2b0] sm:$0xff]
        %v8111 = vld [vmem:[%s8023 + $0x2b8] sm:$0xff]
        %v8112 = vld [vmem:[%s8023 + $0x2c0] sm:$0xff]
        %v8113 = vld [vmem:[%s8023 + $0x2c8] sm:$0xff]
        %v8114 = vld [vmem:[%s8023 + $0x2d0] sm:$0xff]
        %v8115 = vld [vmem:[%s8023 + $0x2d8] sm:$0xff]
        %v8116 = vld [vmem:[%s8023 + $0x2e0] sm:$0xff]
        %v8117 = vld [vmem:[%s8023 + $0x2e8] sm:$0xff]
        %v8118 = vld [vmem:[%s8023 + $0x2f0] sm:$0xff]
        %v8119 = vld [vmem:[%s8023 + $0x2f8] sm:$0xff]
        %v8120 = vld [vmem:[%s8023 + $0x300] sm:$0xff]
        %v8121 = vld [vmem:[%s8023 + $0x308] sm:$0xff]
        %v8122 = vld [vmem:[%s8023 + $0x310] sm:$0xff]
        %v8123 = vld [vmem:[%s8023 + $0x318] sm:$0xff]
        %v8124 = vld [vmem:[%s8023 + $0x320] sm:$0xff]
        %v8125 = vld [vmem:[%s8023 + $0x328] sm:$0xff]
        %v8126 = vld [vmem:[%s8023 + $0x330] sm:$0xff]
        %v8127 = vld [vmem:[%s8023 + $0x338] sm:$0xff]
        %v8128 = vld [vmem:[%s8023 + $0x340] sm:$0xff]
        %v8129 = vld [vmem:[%s8023 + $0x348] sm:$0xff]
        %v8130 = vld [vmem:[%s8023 + $0x350] sm:$0xff]
        %v8131 = vld [vmem:[%s8023 + $0x358] sm:$0xff]
        %v8132 = vld [vmem:[%s8023 + $0x360] sm:$0xff]
        %v8133 = vld [vmem:[%s8023 + $0x368] sm:$0xff]
        %v8134 = vld [vmem:[%s8023 + $0x370] sm:$0xff]
        %v8135 = vld [vmem:[%s8023 + $0x378] sm:$0xff]
        %v8136 = vld [vmem:[%s8023 + $0x380] sm:$0xff]
        %v8137 = vld [vmem:[%s8023 + $0x388] sm:$0xff]
        %v8138 = vld [vmem:[%s8023 + $0x390] sm:$0xff]
        %v8139 = vld [vmem:[%s8023 + $0x398] sm:$0xff]
        %v8140 = vld [vmem:[%s8023 + $0x3a0] sm:$0xff]
        %v8141 = vld [vmem:[%s8023 + $0x3a8] sm:$0xff]
        %v8142 = vld [vmem:[%s8023 + $0x3b0] sm:$0xff]
        %v8143 = vld [vmem:[%s8023 + $0x3b8] sm:$0xff]
        %v8144 = vld [vmem:[%s8023 + $0x3c0] sm:$0xff]
        %v8145 = vld [vmem:[%s8023 + $0x3c8] sm:$0xff]
        %v8146 = vld [vmem:[%s8023 + $0x3d0] sm:$0xff]
        %v8147 = vld [vmem:[%s8023 + $0x3d8] sm:$0xff]
        %v8148 = vld [vmem:[%s8023 + $0x3e0] sm:$0xff]
        %v8149 = vld [vmem:[%s8023 + $0x3e8] sm:$0xff]
        %v8150 = vld [vmem:[%s8023 + $0x3f0] sm:$0xff]
        %v8151 = vld [vmem:[%s8023 + $0x3f8] sm:$0xff]
        %v8168 = vunpack.c.l.b16 %v4037
        %v8169 = vunpack.c.h.b16 %v4037
        %v8170 = vunpack.c.l.b16 %v4038
        %v8171 = vunpack.c.h.b16 %v4038
        %v8172 = vunpack.c.l.b16 %v4039
        %v8173 = vunpack.c.h.b16 %v4039
        %v8174 = vunpack.c.l.b16 %v4040
        %v8175 = vunpack.c.h.b16 %v4040
        %v8176 = vunpack.c.l.b16 %v4041
        %v8177 = vunpack.c.h.b16 %v4041
        %v8178 = vunpack.c.l.b16 %v4042
        %v8179 = vunpack.c.h.b16 %v4042
        %v8180 = vunpack.c.l.b16 %v4043
        %v8181 = vunpack.c.h.b16 %v4043
        %v8182 = vunpack.c.l.b16 %v4044
        %v8183 = vunpack.c.h.b16 %v4044
        %v8184 = vunpack.c.l.b16 %v4045
        %v8185 = vunpack.c.h.b16 %v4045
        %v8186 = vunpack.c.l.b16 %v4046
        %v8187 = vunpack.c.h.b16 %v4046
        %v8188 = vunpack.c.l.b16 %v4047
        %v8189 = vunpack.c.h.b16 %v4047
        %v8190 = vunpack.c.l.b16 %v4048
        %v8191 = vunpack.c.h.b16 %v4048
        %v8192 = vunpack.c.l.b16 %v4049
        %v8193 = vunpack.c.h.b16 %v4049
        %v8194 = vunpack.c.l.b16 %v4050
        %v8195 = vunpack.c.h.b16 %v4050
        %v8196 = vunpack.c.l.b16 %v4051
        %v8197 = vunpack.c.h.b16 %v4051
        %v8198 = vunpack.c.l.b16 %v4052
        %v8199 = vunpack.c.h.b16 %v4052
        %v8200 = vpack.c.b16 %v8172, %v8168
        %v8201 = vpack.c.b16 %v8173, %v8169
        %v8202 = vpack.c.b16 %v8174, %v8170
        %v8203 = vpack.c.b16 %v8175, %v8171
        %v8204 = vpack.c.b16 %v8180, %v8176
        %v8205 = vpack.c.b16 %v8181, %v8177
        %v8206 = vpack.c.b16 %v8182, %v8178
        %v8207 = vpack.c.b16 %v8183, %v8179
        %v8208 = vpack.c.b16 %v8188, %v8184
        %v8209 = vpack.c.b16 %v8189, %v8185
        %v8210 = vpack.c.b16 %v8190, %v8186
        %v8211 = vpack.c.b16 %v8191, %v8187
        %v8212 = vpack.c.b16 %v8196, %v8192
        %v8213 = vpack.c.b16 %v8197, %v8193
        %v8214 = vpack.c.b16 %v8198, %v8194
        %v8215 = vpack.c.b16 %v8199, %v8195
        %v8360 = vunpack.c.l.b16 %v8024
        %v8361 = vunpack.c.h.b16 %v8024
        %v8362 = vunpack.c.l.b16 %v8025
        %v8363 = vunpack.c.h.b16 %v8025
        %v8364 = vunpack.c.l.b16 %v8026
        %v8365 = vunpack.c.h.b16 %v8026
        %v8366 = vunpack.c.l.b16 %v8027
        %v8367 = vunpack.c.h.b16 %v8027
        %v8368 = vunpack.c.l.b16 %v8028
        %v8369 = vunpack.c.h.b16 %v8028
        %v8370 = vunpack.c.l.b16 %v8029
        %v8371 = vunpack.c.h.b16 %v8029
        %v8372 = vunpack.c.l.b16 %v8030
        %v8373 = vunpack.c.h.b16 %v8030
        %v8374 = vunpack.c.l.b16 %v8031
        %v8375 = vunpack.c.h.b16 %v8031
        %v8376 = vunpack.c.l.b16 %v8032
        %v8377 = vunpack.c.h.b16 %v8032
        %v8378 = vunpack.c.l.b16 %v8033
        %v8379 = vunpack.c.h.b16 %v8033
        %v8380 = vunpack.c.l.b16 %v8034
        %v8381 = vunpack.c.h.b16 %v8034
        %v8382 = vunpack.c.l.b16 %v8035
        %v8383 = vunpack.c.h.b16 %v8035
        %v8384 = vunpack.c.l.b16 %v8036
        %v8385 = vunpack.c.h.b16 %v8036
        %v8386 = vunpack.c.l.b16 %v8037
        %v8387 = vunpack.c.h.b16 %v8037
        %v8388 = vunpack.c.l.b16 %v8038
        %v8389 = vunpack.c.h.b16 %v8038
        %v8390 = vunpack.c.l.b16 %v8039
        %v8391 = vunpack.c.h.b16 %v8039
        %v8392 = vunpack.c.l.b16 %v8040
        %v8393 = vunpack.c.h.b16 %v8040
        %v8394 = vunpack.c.l.b16 %v8041
        %v8395 = vunpack.c.h.b16 %v8041
        %v8396 = vunpack.c.l.b16 %v8042
        %v8397 = vunpack.c.h.b16 %v8042
        %v8398 = vunpack.c.l.b16 %v8043
        %v8399 = vunpack.c.h.b16 %v8043
        %v8400 = vunpack.c.l.b16 %v8044
        %v8401 = vunpack.c.h.b16 %v8044
        %v8402 = vunpack.c.l.b16 %v8045
        %v8403 = vunpack.c.h.b16 %v8045
        %v8404 = vunpack.c.l.b16 %v8046
        %v8405 = vunpack.c.h.b16 %v8046
        %v8406 = vunpack.c.l.b16 %v8047
        %v8407 = vunpack.c.h.b16 %v8047
        %v8408 = vunpack.c.l.b16 %v8048
        %v8409 = vunpack.c.h.b16 %v8048
        %v8410 = vunpack.c.l.b16 %v8049
        %v8411 = vunpack.c.h.b16 %v8049
        %v8412 = vunpack.c.l.b16 %v8050
        %v8413 = vunpack.c.h.b16 %v8050
        %v8414 = vunpack.c.l.b16 %v8051
        %v8415 = vunpack.c.h.b16 %v8051
        %v8416 = vunpack.c.l.b16 %v8052
        %v8417 = vunpack.c.h.b16 %v8052
        %v8418 = vunpack.c.l.b16 %v8053
        %v8419 = vunpack.c.h.b16 %v8053
        %v8420 = vunpack.c.l.b16 %v8054
        %v8421 = vunpack.c.h.b16 %v8054
        %v8422 = vunpack.c.l.b16 %v8055
        %v8423 = vunpack.c.h.b16 %v8055
        %v8424 = vunpack.c.l.b16 %v8056
        %v8425 = vunpack.c.h.b16 %v8056
        %v8426 = vunpack.c.l.b16 %v8057
        %v8427 = vunpack.c.h.b16 %v8057
        %v8428 = vunpack.c.l.b16 %v8058
        %v8429 = vunpack.c.h.b16 %v8058
        %v8430 = vunpack.c.l.b16 %v8059
        %v8431 = vunpack.c.h.b16 %v8059
        %v8432 = vunpack.c.l.b16 %v8060
        %v8433 = vunpack.c.h.b16 %v8060
        %v8434 = vunpack.c.l.b16 %v8061
        %v8435 = vunpack.c.h.b16 %v8061
        %v8436 = vunpack.c.l.b16 %v8062
        %v8437 = vunpack.c.h.b16 %v8062
        %v8438 = vunpack.c.l.b16 %v8063
        %v8439 = vunpack.c.h.b16 %v8063
        %v8440 = vunpack.c.l.b16 %v8064
        %v8441 = vunpack.c.h.b16 %v8064
        %v8442 = vunpack.c.l.b16 %v8065
        %v8443 = vunpack.c.h.b16 %v8065
        %v8444 = vunpack.c.l.b16 %v8066
        %v8445 = vunpack.c.h.b16 %v8066
        %v8446 = vunpack.c.l.b16 %v8067
        %v8447 = vunpack.c.h.b16 %v8067
        %v8448 = vunpack.c.l.b16 %v8068
        %v8449 = vunpack.c.h.b16 %v8068
        %v8450 = vunpack.c.l.b16 %v8069
        %v8451 = vunpack.c.h.b16 %v8069
        %v8452 = vunpack.c.l.b16 %v8070
        %v8453 = vunpack.c.h.b16 %v8070
        %v8454 = vunpack.c.l.b16 %v8071
        %v8455 = vunpack.c.h.b16 %v8071
        %v8456 = vunpack.c.l.b16 %v8072
        %v8457 = vunpack.c.h.b16 %v8072
        %v8458 = vunpack.c.l.b16 %v8073
        %v8459 = vunpack.c.h.b16 %v8073
        %v8460 = vunpack.c.l.b16 %v8074
        %v8461 = vunpack.c.h.b16 %v8074
        %v8462 = vunpack.c.l.b16 %v8075
        %v8463 = vunpack.c.h.b16 %v8075
        %v8464 = vunpack.c.l.b16 %v8076
        %v8465 = vunpack.c.h.b16 %v8076
        %v8466 = vunpack.c.l.b16 %v8077
        %v8467 = vunpack.c.h.b16 %v8077
        %v8468 = vunpack.c.l.b16 %v8078
        %v8469 = vunpack.c.h.b16 %v8078
        %v8470 = vunpack.c.l.b16 %v8079
        %v8471 = vunpack.c.h.b16 %v8079
        %v8472 = vunpack.c.l.b16 %v8080
        %v8473 = vunpack.c.h.b16 %v8080
        %v8474 = vunpack.c.l.b16 %v8081
        %v8475 = vunpack.c.h.b16 %v8081
        %v8476 = vunpack.c.l.b16 %v8082
        %v8477 = vunpack.c.h.b16 %v8082
        %v8478 = vunpack.c.l.b16 %v8083
        %v8479 = vunpack.c.h.b16 %v8083
        %v8480 = vunpack.c.l.b16 %v8084
        %v8481 = vunpack.c.h.b16 %v8084
        %v8482 = vunpack.c.l.b16 %v8085
        %v8483 = vunpack.c.h.b16 %v8085
        %v8484 = vunpack.c.l.b16 %v8086
        %v8485 = vunpack.c.h.b16 %v8086
        %v8486 = vunpack.c.l.b16 %v8087
        %v8487 = vunpack.c.h.b16 %v8087
        %v8488 = vunpack.c.l.b16 %v8088
        %v8489 = vunpack.c.h.b16 %v8088
        %v8490 = vunpack.c.l.b16 %v8089
        %v8491 = vunpack.c.h.b16 %v8089
        %v8492 = vunpack.c.l.b16 %v8090
        %v8493 = vunpack.c.h.b16 %v8090
        %v8494 = vunpack.c.l.b16 %v8091
        %v8495 = vunpack.c.h.b16 %v8091
        %v8496 = vunpack.c.l.b16 %v8092
        %v8497 = vunpack.c.h.b16 %v8092
        %v8498 = vunpack.c.l.b16 %v8093
        %v8499 = vunpack.c.h.b16 %v8093
        %v8500 = vunpack.c.l.b16 %v8094
        %v8501 = vunpack.c.h.b16 %v8094
        %v8502 = vunpack.c.l.b16 %v8095
        %v8503 = vunpack.c.h.b16 %v8095
        %v8504 = vunpack.c.l.b16 %v8096
        %v8505 = vunpack.c.h.b16 %v8096
        %v8506 = vunpack.c.l.b16 %v8097
        %v8507 = vunpack.c.h.b16 %v8097
        %v8508 = vunpack.c.l.b16 %v8098
        %v8509 = vunpack.c.h.b16 %v8098
        %v8510 = vunpack.c.l.b16 %v8099
        %v8511 = vunpack.c.h.b16 %v8099
        %v8512 = vunpack.c.l.b16 %v8100
        %v8513 = vunpack.c.h.b16 %v8100
        %v8514 = vunpack.c.l.b16 %v8101
        %v8515 = vunpack.c.h.b16 %v8101
        %v8516 = vunpack.c.l.b16 %v8102
        %v8517 = vunpack.c.h.b16 %v8102
        %v8518 = vunpack.c.l.b16 %v8103
        %v8519 = vunpack.c.h.b16 %v8103
        %v8520 = vunpack.c.l.b16 %v8104
        %v8521 = vunpack.c.h.b16 %v8104
        %v8522 = vunpack.c.l.b16 %v8105
        %v8523 = vunpack.c.h.b16 %v8105
        %v8524 = vunpack.c.l.b16 %v8106
        %v8525 = vunpack.c.h.b16 %v8106
        %v8526 = vunpack.c.l.b16 %v8107
        %v8527 = vunpack.c.h.b16 %v8107
        %v8528 = vunpack.c.l.b16 %v8108
        %v8529 = vunpack.c.h.b16 %v8108
        %v8530 = vunpack.c.l.b16 %v8109
        %v8531 = vunpack.c.h.b16 %v8109
        %v8532 = vunpack.c.l.b16 %v8110
        %v8533 = vunpack.c.h.b16 %v8110
        %v8534 = vunpack.c.l.b16 %v8111
        %v8535 = vunpack.c.h.b16 %v8111
        %v8536 = vunpack.c.l.b16 %v8112
        %v8537 = vunpack.c.h.b16 %v8112
        %v8538 = vunpack.c.l.b16 %v8113
        %v8539 = vunpack.c.h.b16 %v8113
        %v8540 = vunpack.c.l.b16 %v8114
        %v8541 = vunpack.c.h.b16 %v8114
        %v8542 = vunpack.c.l.b16 %v8115
        %v8543 = vunpack.c.h.b16 %v8115
        %v8544 = vunpack.c.l.b16 %v8116
        %v8545 = vunpack.c.h.b16 %v8116
        %v8546 = vunpack.c.l.b16 %v8117
        %v8547 = vunpack.c.h.b16 %v8117
        %v8548 = vunpack.c.l.b16 %v8118
        %v8549 = vunpack.c.h.b16 %v8118
        %v8550 = vunpack.c.l.b16 %v8119
        %v8551 = vunpack.c.h.b16 %v8119
        %v8552 = vunpack.c.l.b16 %v8120
        %v8553 = vunpack.c.h.b16 %v8120
        %v8554 = vunpack.c.l.b16 %v8121
        %v8555 = vunpack.c.h.b16 %v8121
        %v8556 = vunpack.c.l.b16 %v8122
        %v8557 = vunpack.c.h.b16 %v8122
        %v8558 = vunpack.c.l.b16 %v8123
        %v8559 = vunpack.c.h.b16 %v8123
        %v8560 = vunpack.c.l.b16 %v8124
        %v8561 = vunpack.c.h.b16 %v8124
        %v8562 = vunpack.c.l.b16 %v8125
        %v8563 = vunpack.c.h.b16 %v8125
        %v8564 = vunpack.c.l.b16 %v8126
        %v8565 = vunpack.c.h.b16 %v8126
        %v8566 = vunpack.c.l.b16 %v8127
        %v8567 = vunpack.c.h.b16 %v8127
        %v8568 = vunpack.c.l.b16 %v8128
        %v8569 = vunpack.c.h.b16 %v8128
        %v8570 = vunpack.c.l.b16 %v8129
        %v8571 = vunpack.c.h.b16 %v8129
        %v8572 = vunpack.c.l.b16 %v8130
        %v8573 = vunpack.c.h.b16 %v8130
        %v8574 = vunpack.c.l.b16 %v8131
        %v8575 = vunpack.c.h.b16 %v8131
        %v8576 = vunpack.c.l.b16 %v8132
        %v8577 = vunpack.c.h.b16 %v8132
        %v8578 = vunpack.c.l.b16 %v8133
        %v8579 = vunpack.c.h.b16 %v8133
        %v8580 = vunpack.c.l.b16 %v8134
        %v8581 = vunpack.c.h.b16 %v8134
        %v8582 = vunpack.c.l.b16 %v8135
        %v8583 = vunpack.c.h.b16 %v8135
        %v8584 = vunpack.c.l.b16 %v8136
        %v8585 = vunpack.c.h.b16 %v8136
        %v8586 = vunpack.c.l.b16 %v8137
        %v8587 = vunpack.c.h.b16 %v8137
        %v8588 = vunpack.c.l.b16 %v8138
        %v8589 = vunpack.c.h.b16 %v8138
        %v8590 = vunpack.c.l.b16 %v8139
        %v8591 = vunpack.c.h.b16 %v8139
        %v8592 = vunpack.c.l.b16 %v8140
        %v8593 = vunpack.c.h.b16 %v8140
        %v8594 = vunpack.c.l.b16 %v8141
        %v8595 = vunpack.c.h.b16 %v8141
        %v8596 = vunpack.c.l.b16 %v8142
        %v8597 = vunpack.c.h.b16 %v8142
        %v8598 = vunpack.c.l.b16 %v8143
        %v8599 = vunpack.c.h.b16 %v8143
        %v8600 = vunpack.c.l.b16 %v8144
        %v8601 = vunpack.c.h.b16 %v8144
        %v8602 = vunpack.c.l.b16 %v8145
        %v8603 = vunpack.c.h.b16 %v8145
        %v8604 = vunpack.c.l.b16 %v8146
        %v8605 = vunpack.c.h.b16 %v8146
        %v8606 = vunpack.c.l.b16 %v8147
        %v8607 = vunpack.c.h.b16 %v8147
        %v8608 = vunpack.c.l.b16 %v8148
        %v8609 = vunpack.c.h.b16 %v8148
        %v8610 = vunpack.c.l.b16 %v8149
        %v8611 = vunpack.c.h.b16 %v8149
        %v8612 = vunpack.c.l.b16 %v8150
        %v8613 = vunpack.c.h.b16 %v8150
        %v8614 = vunpack.c.l.b16 %v8151
        %v8615 = vunpack.c.h.b16 %v8151
        %v8616 = vpack.c.b16 %v8364, %v8360
        %v8617 = vpack.c.b16 %v8365, %v8361
        %v8618 = vpack.c.b16 %v8366, %v8362
        %v8619 = vpack.c.b16 %v8367, %v8363
        %v8620 = vpack.c.b16 %v8372, %v8368
        %v8621 = vpack.c.b16 %v8373, %v8369
        %v8622 = vpack.c.b16 %v8374, %v8370
        %v8623 = vpack.c.b16 %v8375, %v8371
        %v8624 = vpack.c.b16 %v8380, %v8376
        %v8625 = vpack.c.b16 %v8381, %v8377
        %v8626 = vpack.c.b16 %v8382, %v8378
        %v8627 = vpack.c.b16 %v8383, %v8379
        %v8628 = vpack.c.b16 %v8388, %v8384
        %v8629 = vpack.c.b16 %v8389, %v8385
        %v8630 = vpack.c.b16 %v8390, %v8386
        %v8631 = vpack.c.b16 %v8391, %v8387
        %v8632 = vpack.c.b16 %v8396, %v8392
        %v8633 = vpack.c.b16 %v8397, %v8393
        %v8634 = vpack.c.b16 %v8398, %v8394
        %v8635 = vpack.c.b16 %v8399, %v8395
        %v8636 = vpack.c.b16 %v8404, %v8400
        %v8637 = vpack.c.b16 %v8405, %v8401
        %v8638 = vpack.c.b16 %v8406, %v8402
        %v8639 = vpack.c.b16 %v8407, %v8403
        %v8640 = vpack.c.b16 %v8412, %v8408
        %v8641 = vpack.c.b16 %v8413, %v8409
        %v8642 = vpack.c.b16 %v8414, %v8410
        %v8643 = vpack.c.b16 %v8415, %v8411
        %v8644 = vpack.c.b16 %v8420, %v8416
        %v8645 = vpack.c.b16 %v8421, %v8417
        %v8646 = vpack.c.b16 %v8422, %v8418
        %v8647 = vpack.c.b16 %v8423, %v8419
        %v8648 = vpack.c.b16 %v8428, %v8424
        %v8649 = vpack.c.b16 %v8429, %v8425
        %v8650 = vpack.c.b16 %v8430, %v8426
        %v8651 = vpack.c.b16 %v8431, %v8427
        %v8652 = vpack.c.b16 %v8436, %v8432
        %v8653 = vpack.c.b16 %v8437, %v8433
        %v8654 = vpack.c.b16 %v8438, %v8434
        %v8655 = vpack.c.b16 %v8439, %v8435
        %v8656 = vpack.c.b16 %v8444, %v8440
        %v8657 = vpack.c.b16 %v8445, %v8441
        %v8658 = vpack.c.b16 %v8446, %v8442
        %v8659 = vpack.c.b16 %v8447, %v8443
        %v8660 = vpack.c.b16 %v8452, %v8448
        %v8661 = vpack.c.b16 %v8453, %v8449
        %v8662 = vpack.c.b16 %v8454, %v8450
        %v8663 = vpack.c.b16 %v8455, %v8451
        %v8664 = vpack.c.b16 %v8460, %v8456
        %v8665 = vpack.c.b16 %v8461, %v8457
        %v8666 = vpack.c.b16 %v8462, %v8458
        %v8667 = vpack.c.b16 %v8463, %v8459
        %v8668 = vpack.c.b16 %v8468, %v8464
        %v8669 = vpack.c.b16 %v8469, %v8465
        %v8670 = vpack.c.b16 %v8470, %v8466
        %v8671 = vpack.c.b16 %v8471, %v8467
        %v8672 = vpack.c.b16 %v8476, %v8472
        %v8673 = vpack.c.b16 %v8477, %v8473
        %v8674 = vpack.c.b16 %v8478, %v8474
        %v8675 = vpack.c.b16 %v8479, %v8475
        %v8676 = vpack.c.b16 %v8484, %v8480
        %v8677 = vpack.c.b16 %v8485, %v8481
        %v8678 = vpack.c.b16 %v8486, %v8482
        %v8679 = vpack.c.b16 %v8487, %v8483
        %v8680 = vpack.c.b16 %v8492, %v8488
        %v8681 = vpack.c.b16 %v8493, %v8489
        %v8682 = vpack.c.b16 %v8494, %v8490
        %v8683 = vpack.c.b16 %v8495, %v8491
        %v8684 = vpack.c.b16 %v8500, %v8496
        %v8685 = vpack.c.b16 %v8501, %v8497
        %v8686 = vpack.c.b16 %v8502, %v8498
        %v8687 = vpack.c.b16 %v8503, %v8499
        %v8688 = vpack.c.b16 %v8508, %v8504
        %v8689 = vpack.c.b16 %v8509, %v8505
        %v8690 = vpack.c.b16 %v8510, %v8506
        %v8691 = vpack.c.b16 %v8511, %v8507
        %v8692 = vpack.c.b16 %v8516, %v8512
        %v8693 = vpack.c.b16 %v8517, %v8513
        %v8694 = vpack.c.b16 %v8518, %v8514
        %v8695 = vpack.c.b16 %v8519, %v8515
        %v8696 = vpack.c.b16 %v8524, %v8520
        %v8697 = vpack.c.b16 %v8525, %v8521
        %v8698 = vpack.c.b16 %v8526, %v8522
        %v8699 = vpack.c.b16 %v8527, %v8523
        %v8700 = vpack.c.b16 %v8532, %v8528
        %v8701 = vpack.c.b16 %v8533, %v8529
        %v8702 = vpack.c.b16 %v8534, %v8530
        %v8703 = vpack.c.b16 %v8535, %v8531
        %v8704 = vpack.c.b16 %v8540, %v8536
        %v8705 = vpack.c.b16 %v8541, %v8537
        %v8706 = vpack.c.b16 %v8542, %v8538
        %v8707 = vpack.c.b16 %v8543, %v8539
        %v8708 = vpack.c.b16 %v8548, %v8544
        %v8709 = vpack.c.b16 %v8549, %v8545
        %v8710 = vpack.c.b16 %v8550, %v8546
        %v8711 = vpack.c.b16 %v8551, %v8547
        %v8712 = vpack.c.b16 %v8556, %v8552
        %v8713 = vpack.c.b16 %v8557, %v8553
        %v8714 = vpack.c.b16 %v8558, %v8554
        %v8715 = vpack.c.b16 %v8559, %v8555
        %v8716 = vpack.c.b16 %v8564, %v8560
        %v8717 = vpack.c.b16 %v8565, %v8561
        %v8718 = vpack.c.b16 %v8566, %v8562
        %v8719 = vpack.c.b16 %v8567, %v8563
        %v8720 = vpack.c.b16 %v8572, %v8568
        %v8721 = vpack.c.b16 %v8573, %v8569
        %v8722 = vpack.c.b16 %v8574, %v8570
        %v8723 = vpack.c.b16 %v8575, %v8571
        %v8724 = vpack.c.b16 %v8580, %v8576
        %v8725 = vpack.c.b16 %v8581, %v8577
        %v8726 = vpack.c.b16 %v8582, %v8578
        %v8727 = vpack.c.b16 %v8583, %v8579
        %v8728 = vpack.c.b16 %v8588, %v8584
        %v8729 = vpack.c.b16 %v8589, %v8585
        %v8730 = vpack.c.b16 %v8590, %v8586
        %v8731 = vpack.c.b16 %v8591, %v8587
        %v8732 = vpack.c.b16 %v8596, %v8592
        %v8733 = vpack.c.b16 %v8597, %v8593
        %v8734 = vpack.c.b16 %v8598, %v8594
        %v8735 = vpack.c.b16 %v8599, %v8595
        %v8736 = vpack.c.b16 %v8604, %v8600
        %v8737 = vpack.c.b16 %v8605, %v8601
        %v8738 = vpack.c.b16 %v8606, %v8602
        %v8739 = vpack.c.b16 %v8607, %v8603
        %v8740 = vpack.c.b16 %v8612, %v8608
        %v8741 = vpack.c.b16 %v8613, %v8609
        %v8742 = vpack.c.b16 %v8614, %v8610
        %v8743 = vpack.c.b16 %v8615, %v8611
        %8872 = vmatpush.bf16.msra.mxu0 %v8644
        %8873 = vmatpush.bf16.msra.mxu0 %v8640
        %8874 = vmatpush.bf16.msra.mxu0 %v8636
        %8875 = vmatpush.bf16.msra.mxu0 %v8632
        %8876 = vmatpush.bf16.msra.mxu0 %v8628
        %8877 = vmatpush.bf16.msra.mxu0 %v8624
        %8878 = vmatpush.bf16.msra.mxu0 %v8620
        %8879 = vmatpush.bf16.msra.mxu0 %v8616
        %8880 = vmatmul.bf16.gmra.mxu0 %v8200
        %v8881 = vpop.f32.mrf.mxu0
        %v8882 = vadd.f32 0.0, %v8881
        %v8883 = vpop.f32.mrf.mxu0
        %v8884 = vadd.f32 0.0, %v8883
        %8885 = vmatmul.bf16.gmra.mxu0 %v8204
        %v8886 = vpop.f32.mrf.mxu0
        %v8887 = vadd.f32 0.0, %v8886
        %v8888 = vpop.f32.mrf.mxu0
        %v8889 = vadd.f32 0.0, %v8888
        %8890 = vmatmul.bf16.gmra.mxu0 %v8208
        %v8891 = vpop.f32.mrf.mxu0
        %v8892 = vadd.f32 0.0, %v8891
        %v8893 = vpop.f32.mrf.mxu0
        %v8894 = vadd.f32 0.0, %v8893
        %8895 = vmatmul.bf16.gmra.mxu0 %v8212
        %v8896 = vpop.f32.mrf.mxu0
        %v8897 = vadd.f32 0.0, %v8896
        %v8898 = vpop.f32.mrf.mxu0
        %v8899 = vadd.f32 0.0, %v8898
        %8900 = vdwg.mxu0
        %8901 = vmatpush.bf16.msra.mxu0 %v8676
        %8902 = vmatpush.bf16.msra.mxu0 %v8672
        %8903 = vmatpush.bf16.msra.mxu0 %v8668
        %8904 = vmatpush.bf16.msra.mxu0 %v8664
        %8905 = vmatpush.bf16.msra.mxu0 %v8660
        %8906 = vmatpush.bf16.msra.mxu0 %v8656
        %8907 = vmatpush.bf16.msra.mxu0 %v8652
        %8908 = vmatpush.bf16.msra.mxu0 %v8648
        %8909 = vmatmul.bf16.gmra.mxu0 %v8201
        %v8910 = vpop.f32.mrf.mxu0
        %v8911 = vadd.f32 %v8882, %v8910
        %v8912 = vpop.f32.mrf.mxu0
        %v8913 = vadd.f32 %v8884, %v8912
        %8914 = vmatmul.bf16.gmra.mxu0 %v8205
        %v8915 = vpop.f32.mrf.mxu0
        %v8916 = vadd.f32 %v8887, %v8915
        %v8917 = vpop.f32.mrf.mxu0
        %v8918 = vadd.f32 %v8889, %v8917
        %8919 = vmatmul.bf16.gmra.mxu0 %v8209
        %v8920 = vpop.f32.mrf.mxu0
        %v8921 = vadd.f32 %v8892, %v8920
        %v8922 = vpop.f32.mrf.mxu0
        %v8923 = vadd.f32 %v8894, %v8922
        %8924 = vmatmul.bf16.gmra.mxu0 %v8213
        %v8925 = vpop.f32.mrf.mxu0
        %v8926 = vadd.f32 %v8897, %v8925
        %v8927 = vpop.f32.mrf.mxu0
        %v8928 = vadd.f32 %v8899, %v8927
        %8929 = vdwg.mxu0
        %8930 = vmatpush.bf16.msra.mxu0 %v8708
        %8931 = vmatpush.bf16.msra.mxu0 %v8704
        %8932 = vmatpush.bf16.msra.mxu0 %v8700
        %8933 = vmatpush.bf16.msra.mxu0 %v8696
        %8934 = vmatpush.bf16.msra.mxu0 %v8692
        %8935 = vmatpush.bf16.msra.mxu0 %v8688
        %8936 = vmatpush.bf16.msra.mxu0 %v8684
        %8937 = vmatpush.bf16.msra.mxu0 %v8680
        %8938 = vmatmul.bf16.gmra.mxu0 %v8202
        %v8939 = vpop.f32.mrf.mxu0
        %v8940 = vadd.f32 %v8911, %v8939
        %v8941 = vpop.f32.mrf.mxu0
        %v8942 = vadd.f32 %v8913, %v8941
        %8943 = vmatmul.bf16.gmra.mxu0 %v8206
        %v8944 = vpop.f32.mrf.mxu0
        %v8945 = vadd.f32 %v8916, %v8944
        %v8946 = vpop.f32.mrf.mxu0
        %v8947 = vadd.f32 %v8918, %v8946
        %8948 = vmatmul.bf16.gmra.mxu0 %v8210
        %v8949 = vpop.f32.mrf.mxu0
        %v8950 = vadd.f32 %v8921, %v8949
        %v8951 = vpop.f32.mrf.mxu0
        %v8952 = vadd.f32 %v8923, %v8951
        %8953 = vmatmul.bf16.gmra.mxu0 %v8214
        %v8954 = vpop.f32.mrf.mxu0
        %v8955 = vadd.f32 %v8926, %v8954
        %v8956 = vpop.f32.mrf.mxu0
        %v8957 = vadd.f32 %v8928, %v8956
        %8958 = vdwg.mxu0
        %8959 = vmatpush.bf16.msra.mxu0 %v8740
        %8960 = vmatpush.bf16.msra.mxu0 %v8736
        %8961 = vmatpush.bf16.msra.mxu0 %v8732
        %8962 = vmatpush.bf16.msra.mxu0 %v8728
        %8963 = vmatpush.bf16.msra.mxu0 %v8724
        %8964 = vmatpush.bf16.msra.mxu0 %v8720
        %8965 = vmatpush.bf16.msra.mxu0 %v8716
        %8966 = vmatpush.bf16.msra.mxu0 %v8712
        %8967 = vmatmul.bf16.gmra.mxu0 %v8203
        %v8968 = vpop.f32.mrf.mxu0
        %v8969 = vadd.f32 %v8940, %v8968
        %v8970 = vpop.f32.mrf.mxu0
        %v8971 = vadd.f32 %v8942, %v8970
        %8972 = vmatmul.bf16.gmra.mxu0 %v8207
        %v8973 = vpop.f32.mrf.mxu0
        %v8974 = vadd.f32 %v8945, %v8973
        %v8975 = vpop.f32.mrf.mxu0
        %v8976 = vadd.f32 %v8947, %v8975
        %8977 = vmatmul.bf16.gmra.mxu0 %v8211
        %v8978 = vpop.f32.mrf.mxu0
        %v8979 = vadd.f32 %v8950, %v8978
        %v8980 = vpop.f32.mrf.mxu0
        %v8981 = vadd.f32 %v8952, %v8980
        %8982 = vmatmul.bf16.gmra.mxu0 %v8215
        %v8983 = vpop.f32.mrf.mxu0
        %v8984 = vadd.f32 %v8955, %v8983
        %v8985 = vpop.f32.mrf.mxu0
        %v8986 = vadd.f32 %v8957, %v8985
        %8987 = vdwg.mxu0
        %8988 = vmatpush.bf16.msra.mxu0 %v8645
        %8989 = vmatpush.bf16.msra.mxu0 %v8641
        %8990 = vmatpush.bf16.msra.mxu0 %v8637
        %8991 = vmatpush.bf16.msra.mxu0 %v8633
        %8992 = vmatpush.bf16.msra.mxu0 %v8629
        %8993 = vmatpush.bf16.msra.mxu0 %v8625
        %8994 = vmatpush.bf16.msra.mxu0 %v8621
        %8995 = vmatpush.bf16.msra.mxu0 %v8617
        %8996 = vmatmul.bf16.gmra.mxu0 %v8200
        %v8997 = vpop.f32.mrf.mxu0
        %v8998 = vadd.f32 0.0, %v8997
        %v8999 = vpop.f32.mrf.mxu0
        %v9000 = vadd.f32 0.0, %v8999
        %9001 = vmatmul.bf16.gmra.mxu0 %v8204
        %v9002 = vpop.f32.mrf.mxu0
        %v9003 = vadd.f32 0.0, %v9002
        %v9004 = vpop.f32.mrf.mxu0
        %v9005 = vadd.f32 0.0, %v9004
        %9006 = vmatmul.bf16.gmra.mxu0 %v8208
        %v9007 = vpop.f32.mrf.mxu0
        %v9008 = vadd.f32 0.0, %v9007
        %v9009 = vpop.f32.mrf.mxu0
        %v9010 = vadd.f32 0.0, %v9009
        %9011 = vmatmul.bf16.gmra.mxu0 %v8212
        %v9012 = vpop.f32.mrf.mxu0
        %v9013 = vadd.f32 0.0, %v9012
        %v9014 = vpop.f32.mrf.mxu0
        %v9015 = vadd.f32 0.0, %v9014
        %9016 = vdwg.mxu0
        %9017 = vmatpush.bf16.msra.mxu0 %v8677
        %9018 = vmatpush.bf16.msra.mxu0 %v8673
        %9019 = vmatpush.bf16.msra.mxu0 %v8669
        %9020 = vmatpush.bf16.msra.mxu0 %v8665
        %9021 = vmatpush.bf16.msra.mxu0 %v8661
        %9022 = vmatpush.bf16.msra.mxu0 %v8657
        %9023 = vmatpush.bf16.msra.mxu0 %v8653
        %9024 = vmatpush.bf16.msra.mxu0 %v8649
        %9025 = vmatmul.bf16.gmra.mxu0 %v8201
        %v9026 = vpop.f32.mrf.mxu0
        %v9027 = vadd.f32 %v8998, %v9026
        %v9028 = vpop.f32.mrf.mxu0
        %v9029 = vadd.f32 %v9000, %v9028
        %9030 = vmatmul.bf16.gmra.mxu0 %v8205
        %v9031 = vpop.f32.mrf.mxu0
        %v9032 = vadd.f32 %v9003, %v9031
        %v9033 = vpop.f32.mrf.mxu0
        %v9034 = vadd.f32 %v9005, %v9033
        %9035 = vmatmul.bf16.gmra.mxu0 %v8209
        %v9036 = vpop.f32.mrf.mxu0
        %v9037 = vadd.f32 %v9008, %v9036
        %v9038 = vpop.f32.mrf.mxu0
        %v9039 = vadd.f32 %v9010, %v9038
        %9040 = vmatmul.bf16.gmra.mxu0 %v8213
        %v9041 = vpop.f32.mrf.mxu0
        %v9042 = vadd.f32 %v9013, %v9041
        %v9043 = vpop.f32.mrf.mxu0
        %v9044 = vadd.f32 %v9015, %v9043
        %9045 = vdwg.mxu0
        %9046 = vmatpush.bf16.msra.mxu0 %v8709
        %9047 = vmatpush.bf16.msra.mxu0 %v8705
        %9048 = vmatpush.bf16.msra.mxu0 %v8701
        %9049 = vmatpush.bf16.msra.mxu0 %v8697
        %9050 = vmatpush.bf16.msra.mxu0 %v8693
        %9051 = vmatpush.bf16.msra.mxu0 %v8689
        %9052 = vmatpush.bf16.msra.mxu0 %v8685
        %9053 = vmatpush.bf16.msra.mxu0 %v8681
        %9054 = vmatmul.bf16.gmra.mxu0 %v8202
        %v9055 = vpop.f32.mrf.mxu0
        %v9056 = vadd.f32 %v9027, %v9055
        %v9057 = vpop.f32.mrf.mxu0
        %v9058 = vadd.f32 %v9029, %v9057
        %9059 = vmatmul.bf16.gmra.mxu0 %v8206
        %v9060 = vpop.f32.mrf.mxu0
        %v9061 = vadd.f32 %v9032, %v9060
        %v9062 = vpop.f32.mrf.mxu0
        %v9063 = vadd.f32 %v9034, %v9062
        %9064 = vmatmul.bf16.gmra.mxu0 %v8210
        %v9065 = vpop.f32.mrf.mxu0
        %v9066 = vadd.f32 %v9037, %v9065
        %v9067 = vpop.f32.mrf.mxu0
        %v9068 = vadd.f32 %v9039, %v9067
        %9069 = vmatmul.bf16.gmra.mxu0 %v8214
        %v9070 = vpop.f32.mrf.mxu0
        %v9071 = vadd.f32 %v9042, %v9070
        %v9072 = vpop.f32.mrf.mxu0
        %v9073 = vadd.f32 %v9044, %v9072
        %9074 = vdwg.mxu0
        %9075 = vmatpush.bf16.msra.mxu0 %v8741
        %9076 = vmatpush.bf16.msra.mxu0 %v8737
        %9077 = vmatpush.bf16.msra.mxu0 %v8733
        %9078 = vmatpush.bf16.msra.mxu0 %v8729
        %9079 = vmatpush.bf16.msra.mxu0 %v8725
        %9080 = vmatpush.bf16.msra.mxu0 %v8721
        %9081 = vmatpush.bf16.msra.mxu0 %v8717
        %9082 = vmatpush.bf16.msra.mxu0 %v8713
        %9083 = vmatmul.bf16.gmra.mxu0 %v8203
        %v9084 = vpop.f32.mrf.mxu0
        %v9085 = vadd.f32 %v9056, %v9084
        %v9086 = vpop.f32.mrf.mxu0
        %v9087 = vadd.f32 %v9058, %v9086
        %9088 = vmatmul.bf16.gmra.mxu0 %v8207
        %v9089 = vpop.f32.mrf.mxu0
        %v9090 = vadd.f32 %v9061, %v9089
        %v9091 = vpop.f32.mrf.mxu0
        %v9092 = vadd.f32 %v9063, %v9091
        %9093 = vmatmul.bf16.gmra.mxu0 %v8211
        %v9094 = vpop.f32.mrf.mxu0
        %v9095 = vadd.f32 %v9066, %v9094
        %v9096 = vpop.f32.mrf.mxu0
        %v9097 = vadd.f32 %v9068, %v9096
        %9098 = vmatmul.bf16.gmra.mxu0 %v8215
        %v9099 = vpop.f32.mrf.mxu0
        %v9100 = vadd.f32 %v9071, %v9099
        %v9101 = vpop.f32.mrf.mxu0
        %v9102 = vadd.f32 %v9073, %v9101
        %9103 = vdwg.mxu0
        %9104 = vmatpush.bf16.msra.mxu0 %v8646
        %9105 = vmatpush.bf16.msra.mxu0 %v8642
        %9106 = vmatpush.bf16.msra.mxu0 %v8638
        %9107 = vmatpush.bf16.msra.mxu0 %v8634
        %9108 = vmatpush.bf16.msra.mxu0 %v8630
        %9109 = vmatpush.bf16.msra.mxu0 %v8626
        %9110 = vmatpush.bf16.msra.mxu0 %v8622
        %9111 = vmatpush.bf16.msra.mxu0 %v8618
        %9112 = vmatmul.bf16.gmra.mxu0 %v8200
        %v9113 = vpop.f32.mrf.mxu0
        %v9114 = vadd.f32 0.0, %v9113
        %v9115 = vpop.f32.mrf.mxu0
        %v9116 = vadd.f32 0.0, %v9115
        %9117 = vmatmul.bf16.gmra.mxu0 %v8204
        %v9118 = vpop.f32.mrf.mxu0
        %v9119 = vadd.f32 0.0, %v9118
        %v9120 = vpop.f32.mrf.mxu0
        %v9121 = vadd.f32 0.0, %v9120
        %9122 = vmatmul.bf16.gmra.mxu0 %v8208
        %v9123 = vpop.f32.mrf.mxu0
        %v9124 = vadd.f32 0.0, %v9123
        %v9125 = vpop.f32.mrf.mxu0
        %v9126 = vadd.f32 0.0, %v9125
        %9127 = vmatmul.bf16.gmra.mxu0 %v8212
        %v9128 = vpop.f32.mrf.mxu0
        %v9129 = vadd.f32 0.0, %v9128
        %v9130 = vpop.f32.mrf.mxu0
        %v9131 = vadd.f32 0.0, %v9130
        %9132 = vdwg.mxu0
        %9133 = vmatpush.bf16.msra.mxu0 %v8678
        %9134 = vmatpush.bf16.msra.mxu0 %v8674
        %9135 = vmatpush.bf16.msra.mxu0 %v8670
        %9136 = vmatpush.bf16.msra.mxu0 %v8666
        %9137 = vmatpush.bf16.msra.mxu0 %v8662
        %9138 = vmatpush.bf16.msra.mxu0 %v8658
        %9139 = vmatpush.bf16.msra.mxu0 %v8654
        %9140 = vmatpush.bf16.msra.mxu0 %v8650
        %9141 = vmatmul.bf16.gmra.mxu0 %v8201
        %v9142 = vpop.f32.mrf.mxu0
        %v9143 = vadd.f32 %v9114, %v9142
        %v9144 = vpop.f32.mrf.mxu0
        %v9145 = vadd.f32 %v9116, %v9144
        %9146 = vmatmul.bf16.gmra.mxu0 %v8205
        %v9147 = vpop.f32.mrf.mxu0
        %v9148 = vadd.f32 %v9119, %v9147
        %v9149 = vpop.f32.mrf.mxu0
        %v9150 = vadd.f32 %v9121, %v9149
        %9151 = vmatmul.bf16.gmra.mxu0 %v8209
        %v9152 = vpop.f32.mrf.mxu0
        %v9153 = vadd.f32 %v9124, %v9152
        %v9154 = vpop.f32.mrf.mxu0
        %v9155 = vadd.f32 %v9126, %v9154
        %9156 = vmatmul.bf16.gmra.mxu0 %v8213
        %v9157 = vpop.f32.mrf.mxu0
        %v9158 = vadd.f32 %v9129, %v9157
        %v9159 = vpop.f32.mrf.mxu0
        %v9160 = vadd.f32 %v9131, %v9159
        %9161 = vdwg.mxu0
        %9162 = vmatpush.bf16.msra.mxu0 %v8710
        %9163 = vmatpush.bf16.msra.mxu0 %v8706
        %9164 = vmatpush.bf16.msra.mxu0 %v8702
        %9165 = vmatpush.bf16.msra.mxu0 %v8698
        %9166 = vmatpush.bf16.msra.mxu0 %v8694
        %9167 = vmatpush.bf16.msra.mxu0 %v8690
        %9168 = vmatpush.bf16.msra.mxu0 %v8686
        %9169 = vmatpush.bf16.msra.mxu0 %v8682
        %9170 = vmatmul.bf16.gmra.mxu0 %v8202
        %v9171 = vpop.f32.mrf.mxu0
        %v9172 = vadd.f32 %v9143, %v9171
        %v9173 = vpop.f32.mrf.mxu0
        %v9174 = vadd.f32 %v9145, %v9173
        %9175 = vmatmul.bf16.gmra.mxu0 %v8206
        %v9176 = vpop.f32.mrf.mxu0
        %v9177 = vadd.f32 %v9148, %v9176
        %v9178 = vpop.f32.mrf.mxu0
        %v9179 = vadd.f32 %v9150, %v9178
        %9180 = vmatmul.bf16.gmra.mxu0 %v8210
        %v9181 = vpop.f32.mrf.mxu0
        %v9182 = vadd.f32 %v9153, %v9181
        %v9183 = vpop.f32.mrf.mxu0
        %v9184 = vadd.f32 %v9155, %v9183
        %9185 = vmatmul.bf16.gmra.mxu0 %v8214
        %v9186 = vpop.f32.mrf.mxu0
        %v9187 = vadd.f32 %v9158, %v9186
        %v9188 = vpop.f32.mrf.mxu0
        %v9189 = vadd.f32 %v9160, %v9188
        %9190 = vdwg.mxu0
        %9191 = vmatpush.bf16.msra.mxu0 %v8742
        %9192 = vmatpush.bf16.msra.mxu0 %v8738
        %9193 = vmatpush.bf16.msra.mxu0 %v8734
        %9194 = vmatpush.bf16.msra.mxu0 %v8730
        %9195 = vmatpush.bf16.msra.mxu0 %v8726
        %9196 = vmatpush.bf16.msra.mxu0 %v8722
        %9197 = vmatpush.bf16.msra.mxu0 %v8718
        %9198 = vmatpush.bf16.msra.mxu0 %v8714
        %9199 = vmatmul.bf16.gmra.mxu0 %v8203
        %v9200 = vpop.f32.mrf.mxu0
        %v9201 = vadd.f32 %v9172, %v9200
        %v9202 = vpop.f32.mrf.mxu0
        %v9203 = vadd.f32 %v9174, %v9202
        %9204 = vmatmul.bf16.gmra.mxu0 %v8207
        %v9205 = vpop.f32.mrf.mxu0
        %v9206 = vadd.f32 %v9177, %v9205
        %v9207 = vpop.f32.mrf.mxu0
        %v9208 = vadd.f32 %v9179, %v9207
        %9209 = vmatmul.bf16.gmra.mxu0 %v8211
        %v9210 = vpop.f32.mrf.mxu0
        %v9211 = vadd.f32 %v9182, %v9210
        %v9212 = vpop.f32.mrf.mxu0
        %v9213 = vadd.f32 %v9184, %v9212
        %9214 = vmatmul.bf16.gmra.mxu0 %v8215
        %v9215 = vpop.f32.mrf.mxu0
        %v9216 = vadd.f32 %v9187, %v9215
        %v9217 = vpop.f32.mrf.mxu0
        %v9218 = vadd.f32 %v9189, %v9217
        %9219 = vdwg.mxu0
        %9220 = vmatpush.bf16.msra.mxu0 %v8647
        %9221 = vmatpush.bf16.msra.mxu0 %v8643
        %9222 = vmatpush.bf16.msra.mxu0 %v8639
        %9223 = vmatpush.bf16.msra.mxu0 %v8635
        %9224 = vmatpush.bf16.msra.mxu0 %v8631
        %9225 = vmatpush.bf16.msra.mxu0 %v8627
        %9226 = vmatpush.bf16.msra.mxu0 %v8623
        %9227 = vmatpush.bf16.msra.mxu0 %v8619
        %9228 = vmatmul.bf16.gmra.mxu0 %v8200
        %v9229 = vpop.f32.mrf.mxu0
        %v9230 = vadd.f32 0.0, %v9229
        %v9231 = vpop.f32.mrf.mxu0
        %v9232 = vadd.f32 0.0, %v9231
        %9233 = vmatmul.bf16.gmra.mxu0 %v8204
        %v9234 = vpop.f32.mrf.mxu0
        %v9235 = vadd.f32 0.0, %v9234
        %v9236 = vpop.f32.mrf.mxu0
        %v9237 = vadd.f32 0.0, %v9236
        %9238 = vmatmul.bf16.gmra.mxu0 %v8208
        %v9239 = vpop.f32.mrf.mxu0
        %v9240 = vadd.f32 0.0, %v9239
        %v9241 = vpop.f32.mrf.mxu0
        %v9242 = vadd.f32 0.0, %v9241
        %9243 = vmatmul.bf16.gmra.mxu0 %v8212
        %v9244 = vpop.f32.mrf.mxu0
        %v9245 = vadd.f32 0.0, %v9244
        %v9246 = vpop.f32.mrf.mxu0
        %v9247 = vadd.f32 0.0, %v9246
        %9248 = vdwg.mxu0
        %9249 = vmatpush.bf16.msra.mxu0 %v8679
        %9250 = vmatpush.bf16.msra.mxu0 %v8675
        %9251 = vmatpush.bf16.msra.mxu0 %v8671
        %9252 = vmatpush.bf16.msra.mxu0 %v8667
        %9253 = vmatpush.bf16.msra.mxu0 %v8663
        %9254 = vmatpush.bf16.msra.mxu0 %v8659
        %9255 = vmatpush.bf16.msra.mxu0 %v8655
        %9256 = vmatpush.bf16.msra.mxu0 %v8651
        %9257 = vmatmul.bf16.gmra.mxu0 %v8201
        %v9258 = vpop.f32.mrf.mxu0
        %v9259 = vadd.f32 %v9230, %v9258
        %v9260 = vpop.f32.mrf.mxu0
        %v9261 = vadd.f32 %v9232, %v9260
        %9262 = vmatmul.bf16.gmra.mxu0 %v8205
        %v9263 = vpop.f32.mrf.mxu0
        %v9264 = vadd.f32 %v9235, %v9263
        %v9265 = vpop.f32.mrf.mxu0
        %v9266 = vadd.f32 %v9237, %v9265
        %9267 = vmatmul.bf16.gmra.mxu0 %v8209
        %v9268 = vpop.f32.mrf.mxu0
        %v9269 = vadd.f32 %v9240, %v9268
        %v9270 = vpop.f32.mrf.mxu0
        %v9271 = vadd.f32 %v9242, %v9270
        %9272 = vmatmul.bf16.gmra.mxu0 %v8213
        %v9273 = vpop.f32.mrf.mxu0
        %v9274 = vadd.f32 %v9245, %v9273
        %v9275 = vpop.f32.mrf.mxu0
        %v9276 = vadd.f32 %v9247, %v9275
        %9277 = vdwg.mxu0
        %9278 = vmatpush.bf16.msra.mxu0 %v8711
        %9279 = vmatpush.bf16.msra.mxu0 %v8707
        %9280 = vmatpush.bf16.msra.mxu0 %v8703
        %9281 = vmatpush.bf16.msra.mxu0 %v8699
        %9282 = vmatpush.bf16.msra.mxu0 %v8695
        %9283 = vmatpush.bf16.msra.mxu0 %v8691
        %9284 = vmatpush.bf16.msra.mxu0 %v8687
        %9285 = vmatpush.bf16.msra.mxu0 %v8683
        %9286 = vmatmul.bf16.gmra.mxu0 %v8202
        %v9287 = vpop.f32.mrf.mxu0
        %v9288 = vadd.f32 %v9259, %v9287
        %v9289 = vpop.f32.mrf.mxu0
        %v9290 = vadd.f32 %v9261, %v9289
        %9291 = vmatmul.bf16.gmra.mxu0 %v8206
        %v9292 = vpop.f32.mrf.mxu0
        %v9293 = vadd.f32 %v9264, %v9292
        %v9294 = vpop.f32.mrf.mxu0
        %v9295 = vadd.f32 %v9266, %v9294
        %9296 = vmatmul.bf16.gmra.mxu0 %v8210
        %v9297 = vpop.f32.mrf.mxu0
        %v9298 = vadd.f32 %v9269, %v9297
        %v9299 = vpop.f32.mrf.mxu0
        %v9300 = vadd.f32 %v9271, %v9299
        %9301 = vmatmul.bf16.gmra.mxu0 %v8214
        %v9302 = vpop.f32.mrf.mxu0
        %v9303 = vadd.f32 %v9274, %v9302
        %v9304 = vpop.f32.mrf.mxu0
        %v9305 = vadd.f32 %v9276, %v9304
        %9306 = vdwg.mxu0
        %9307 = vmatpush.bf16.msra.mxu0 %v8743
        %9308 = vmatpush.bf16.msra.mxu0 %v8739
        %9309 = vmatpush.bf16.msra.mxu0 %v8735
        %9310 = vmatpush.bf16.msra.mxu0 %v8731
        %9311 = vmatpush.bf16.msra.mxu0 %v8727
        %9312 = vmatpush.bf16.msra.mxu0 %v8723
        %9313 = vmatpush.bf16.msra.mxu0 %v8719
        %9314 = vmatpush.bf16.msra.mxu0 %v8715
        %9315 = vmatmul.bf16.gmra.mxu0 %v8203
        %v9316 = vpop.f32.mrf.mxu0
        %v9317 = vadd.f32 %v9288, %v9316
        %v9318 = vpop.f32.mrf.mxu0
        %v9319 = vadd.f32 %v9290, %v9318
        %9320 = vmatmul.bf16.gmra.mxu0 %v8207
        %v9321 = vpop.f32.mrf.mxu0
        %v9322 = vadd.f32 %v9293, %v9321
        %v9323 = vpop.f32.mrf.mxu0
        %v9324 = vadd.f32 %v9295, %v9323
        %9325 = vmatmul.bf16.gmra.mxu0 %v8211
        %v9326 = vpop.f32.mrf.mxu0
        %v9327 = vadd.f32 %v9298, %v9326
        %v9328 = vpop.f32.mrf.mxu0
        %v9329 = vadd.f32 %v9300, %v9328
        %9330 = vmatmul.bf16.gmra.mxu0 %v8215
        %v9331 = vpop.f32.mrf.mxu0
        %v9332 = vadd.f32 %v9303, %v9331
        %v9333 = vpop.f32.mrf.mxu0
        %v9334 = vadd.f32 %v9305, %v9333
        %9335 = vdwg.mxu0
        %v9336 = vadd.f32 %v7991, %v8969
        %v9337 = vadd.f32 %v7992, %v9085
        %v9338 = vadd.f32 %v7993, %v9201
        %v9339 = vadd.f32 %v7994, %v9317
        %v9340 = vadd.f32 %v7995, %v8971
        %v9341 = vadd.f32 %v7996, %v9087
        %v9342 = vadd.f32 %v7997, %v9203
        %v9343 = vadd.f32 %v7998, %v9319
        %v9344 = vadd.f32 %v7999, %v8974
        %v9345 = vadd.f32 %v8000, %v9090
        %v9346 = vadd.f32 %v8001, %v9206
        %v9347 = vadd.f32 %v8002, %v9322
        %v9348 = vadd.f32 %v8003, %v8976
        %v9349 = vadd.f32 %v8004, %v9092
        %v9350 = vadd.f32 %v8005, %v9208
        %v9351 = vadd.f32 %v8006, %v9324
        %v9352 = vadd.f32 %v8007, %v8979
        %v9353 = vadd.f32 %v8008, %v9095
        %v9354 = vadd.f32 %v8009, %v9211
        %v9355 = vadd.f32 %v8010, %v9327
        %v9356 = vadd.f32 %v8011, %v8981
        %v9357 = vadd.f32 %v8012, %v9097
        %v9358 = vadd.f32 %v8013, %v9213
        %v9359 = vadd.f32 %v8014, %v9329
        %v9360 = vadd.f32 %v8015, %v8984
        %v9361 = vadd.f32 %v8016, %v9100
        %v9362 = vadd.f32 %v8017, %v9216
        %v9363 = vadd.f32 %v8018, %v9332
        %v9364 = vadd.f32 %v8019, %v8986
        %v9365 = vadd.f32 %v8020, %v9102
        %v9366 = vadd.f32 %v8021, %v9218
        %v9367 = vadd.f32 %v8022, %v9334
        %v9368 = vld [vmem:[%s6] sm:$0xf]
        %v9370 = vperm.slane %v9368, 0
        %v9371 = vperm.slane %v9368, 1
        %v9372 = vperm.slane %v9368, 2
        %v9373 = vperm.slane %v9368, 3
        %v9378 = vadd.f32 %v9336, %v9370
        %v9379 = vadd.f32 %v9337, %v9371
        %v9380 = vadd.f32 %v9338, %v9372
        %v9381 = vadd.f32 %v9339, %v9373
        %v9382 = vadd.f32 %v9340, %v9370
        %v9383 = vadd.f32 %v9341, %v9371
        %v9384 = vadd.f32 %v9342, %v9372
        %v9385 = vadd.f32 %v9343, %v9373
        %v9386 = vadd.f32 %v9344, %v9370
        %v9387 = vadd.f32 %v9345, %v9371
        %v9388 = vadd.f32 %v9346, %v9372
        %v9389 = vadd.f32 %v9347, %v9373
        %v9390 = vadd.f32 %v9348, %v9370
        %v9391 = vadd.f32 %v9349, %v9371
        %v9392 = vadd.f32 %v9350, %v9372
        %v9393 = vadd.f32 %v9351, %v9373
        %v9394 = vadd.f32 %v9352, %v9370
        %v9395 = vadd.f32 %v9353, %v9371
        %v9396 = vadd.f32 %v9354, %v9372
        %v9397 = vadd.f32 %v9355, %v9373
        %v9398 = vadd.f32 %v9356, %v9370
        %v9399 = vadd.f32 %v9357, %v9371
        %v9400 = vadd.f32 %v9358, %v9372
        %v9401 = vadd.f32 %v9359, %v9373
        %v9402 = vadd.f32 %v9360, %v9370
        %v9403 = vadd.f32 %v9361, %v9371
        %v9404 = vadd.f32 %v9362, %v9372
        %v9405 = vadd.f32 %v9363, %v9373
        %v9406 = vadd.f32 %v9364, %v9370
        %v9407 = vadd.f32 %v9365, %v9371
        %v9408 = vadd.f32 %v9366, %v9372
        %v9409 = vadd.f32 %v9367, %v9373
        %v9410 = vmax.f32 %v9378, 0.0
        %v9411 = vmax.f32 %v9379, 0.0
        %v9412 = vmax.f32 %v9380, 0.0
        %v9413 = vmax.f32 %v9381, 0.0
        %v9414 = vmax.f32 %v9382, 0.0
        %v9415 = vmax.f32 %v9383, 0.0
        %v9416 = vmax.f32 %v9384, 0.0
        %v9417 = vmax.f32 %v9385, 0.0
        %v9418 = vmax.f32 %v9386, 0.0
        %v9419 = vmax.f32 %v9387, 0.0
        %v9420 = vmax.f32 %v9388, 0.0
        %v9421 = vmax.f32 %v9389, 0.0
        %v9422 = vmax.f32 %v9390, 0.0
        %v9423 = vmax.f32 %v9391, 0.0
        %v9424 = vmax.f32 %v9392, 0.0
        %v9425 = vmax.f32 %v9393, 0.0
        %v9426 = vmax.f32 %v9394, 0.0
        %v9427 = vmax.f32 %v9395, 0.0
        %v9428 = vmax.f32 %v9396, 0.0
        %v9429 = vmax.f32 %v9397, 0.0
        %v9430 = vmax.f32 %v9398, 0.0
        %v9431 = vmax.f32 %v9399, 0.0
        %v9432 = vmax.f32 %v9400, 0.0
        %v9433 = vmax.f32 %v9401, 0.0
        %v9434 = vmax.f32 %v9402, 0.0
        %v9435 = vmax.f32 %v9403, 0.0
        %v9436 = vmax.f32 %v9404, 0.0
        %v9437 = vmax.f32 %v9405, 0.0
        %v9438 = vmax.f32 %v9406, 0.0
        %v9439 = vmax.f32 %v9407, 0.0
        %v9440 = vmax.f32 %v9408, 0.0
        %v9441 = vmax.f32 %v9409, 0.0
        %v9442 = vpack.c.bf16 %v9414, %v9410
        %v9443 = vpack.c.bf16 %v9415, %v9411
        %v9444 = vpack.c.bf16 %v9416, %v9412
        %v9445 = vpack.c.bf16 %v9417, %v9413
        %v9446 = vpack.c.bf16 %v9422, %v9418
        %v9447 = vpack.c.bf16 %v9423, %v9419
        %v9448 = vpack.c.bf16 %v9424, %v9420
        %v9449 = vpack.c.bf16 %v9425, %v9421
        %v9450 = vpack.c.bf16 %v9430, %v9426
        %v9451 = vpack.c.bf16 %v9431, %v9427
        %v9452 = vpack.c.bf16 %v9432, %v9428
        %v9453 = vpack.c.bf16 %v9433, %v9429
        %v9454 = vpack.c.bf16 %v9438, %v9434
        %v9455 = vpack.c.bf16 %v9439, %v9435
        %v9456 = vpack.c.bf16 %v9440, %v9436
        %v9457 = vpack.c.bf16 %v9441, %v9437
        %v9458 = vld [vmem:[%s7] sm:$0xf]
        %v9459 = vld [vmem:[%s7 + $0x4] sm:$0xf]
        %v9460 = vld [vmem:[%s7 + $0x8] sm:$0xf]
        %v9461 = vld [vmem:[%s7 + $0xc] sm:$0xf]
        %v9462 = vld [vmem:[%s7 + $0x10] sm:$0xf]
        %v9463 = vld [vmem:[%s7 + $0x14] sm:$0xf]
        %v9464 = vld [vmem:[%s7 + $0x18] sm:$0xf]
        %v9465 = vld [vmem:[%s7 + $0x1c] sm:$0xf]
        %v9466 = vld [vmem:[%s7 + $0x20] sm:$0xf]
        %v9467 = vld [vmem:[%s7 + $0x24] sm:$0xf]
        %v9468 = vld [vmem:[%s7 + $0x28] sm:$0xf]
        %v9469 = vld [vmem:[%s7 + $0x2c] sm:$0xf]
        %v9470 = vld [vmem:[%s7 + $0x30] sm:$0xf]
        %v9471 = vld [vmem:[%s7 + $0x34] sm:$0xf]
        %v9472 = vld [vmem:[%s7 + $0x38] sm:$0xf]
        %v9473 = vld [vmem:[%s7 + $0x3c] sm:$0xf]
        %v9490 = vunpack.c.l.b16 %v9458
        %v9491 = vunpack.c.l.b16 %v9459
        %v9492 = vunpack.c.l.b16 %v9460
        %v9493 = vunpack.c.l.b16 %v9461
        %v9494 = vunpack.c.l.b16 %v9462
        %v9495 = vunpack.c.l.b16 %v9463
        %v9496 = vunpack.c.l.b16 %v9464
        %v9497 = vunpack.c.l.b16 %v9465
        %v9498 = vunpack.c.l.b16 %v9466
        %v9499 = vunpack.c.l.b16 %v9467
        %v9500 = vunpack.c.l.b16 %v9468
        %v9501 = vunpack.c.l.b16 %v9469
        %v9502 = vunpack.c.l.b16 %v9470
        %v9503 = vunpack.c.l.b16 %v9471
        %v9504 = vunpack.c.l.b16 %v9472
        %v9505 = vunpack.c.l.b16 %v9473
        %v9506 = vpack.c.b16 %v9491, %v9490
        %v9507 = vpack.c.b16 %v9493, %v9492
        %v9508 = vpack.c.b16 %v9495, %v9494
        %v9509 = vpack.c.b16 %v9497, %v9496
        %v9510 = vpack.c.b16 %v9499, %v9498
        %v9511 = vpack.c.b16 %v9501, %v9500
        %v9512 = vpack.c.b16 %v9503, %v9502
        %v9513 = vpack.c.b16 %v9505, %v9504
        %vm9514 = vcmask 523264
        %v9516 = vsel %vm9514, %v9506, 0
        %v9519 = vsel %vm9514, %v9507, 0
        %v9522 = vsel %vm9514, %v9508, 0
        %v9525 = vsel %vm9514, %v9509, 0
        %v9528 = vsel %vm9514, %v9510, 0
        %v9531 = vsel %vm9514, %v9511, 0
        %v9534 = vsel %vm9514, %v9512, 0
        %v9537 = vsel %vm9514, %v9513, 0
        %9539 = vmatpush.bf16.msra.mxu0 0
        %9540 = vmatpush.bf16.msra.mxu0 0
        %9541 = vmatpush.bf16.msra.mxu0 0
        %9542 = vmatpush.bf16.msra.mxu0 0
        %9543 = vmatpush.bf16.msra.mxu0 %v9454
        %9544 = vmatpush.bf16.msra.mxu0 %v9450
        %9545 = vmatpush.bf16.msra.mxu0 %v9446
        %9546 = vmatpush.bf16.msra.mxu0 %v9442
        %9547 = vmatmul.bf16.gmra.mxu0 %v9516
        %v9548 = vpop.f32.mrf.mxu0
        %v9549 = vadd.f32 0.0, %v9548
        %v9550 = vpop.f32.mrf.mxu0
        %v9551 = vadd.f32 0.0, %v9550
        %9552 = vmatmul.bf16.gmra.mxu0 %v9519
        %v9553 = vpop.f32.mrf.mxu0
        %v9554 = vadd.f32 0.0, %v9553
        %v9555 = vpop.f32.mrf.mxu0
        %v9556 = vadd.f32 0.0, %v9555
        %9557 = vmatmul.bf16.gmra.mxu0 %v9522
        %v9558 = vpop.f32.mrf.mxu0
        %v9559 = vadd.f32 0.0, %v9558
        %v9560 = vpop.f32.mrf.mxu0
        %v9561 = vadd.f32 0.0, %v9560
        %9562 = vmatmul.bf16.gmra.mxu0 %v9525
        %v9563 = vpop.f32.mrf.mxu0
        %v9564 = vadd.f32 0.0, %v9563
        %v9565 = vpop.f32.mrf.mxu0
        %v9566 = vadd.f32 0.0, %v9565
        %9567 = vmatmul.bf16.gmra.mxu0 %v9528
        %v9568 = vpop.f32.mrf.mxu0
        %v9569 = vadd.f32 0.0, %v9568
        %v9570 = vpop.f32.mrf.mxu0
        %v9571 = vadd.f32 0.0, %v9570
        %9572 = vmatmul.bf16.gmra.mxu0 %v9531
        %v9573 = vpop.f32.mrf.mxu0
        %v9574 = vadd.f32 0.0, %v9573
        %v9575 = vpop.f32.mrf.mxu0
        %v9576 = vadd.f32 0.0, %v9575
        %9577 = vmatmul.bf16.gmra.mxu0 %v9534
        %v9578 = vpop.f32.mrf.mxu0
        %v9579 = vadd.f32 0.0, %v9578
        %v9580 = vpop.f32.mrf.mxu0
        %v9581 = vadd.f32 0.0, %v9580
        %9582 = vmatmul.bf16.gmra.mxu0 %v9537
        %v9583 = vpop.f32.mrf.mxu0
        %v9584 = vadd.f32 0.0, %v9583
        %v9585 = vpop.f32.mrf.mxu0
        %v9586 = vadd.f32 0.0, %v9585
        %9587 = vdwg.mxu0
        %9588 = vmatpush.bf16.msra.mxu0 0
        %9589 = vmatpush.bf16.msra.mxu0 0
        %9590 = vmatpush.bf16.msra.mxu0 0
        %9591 = vmatpush.bf16.msra.mxu0 0
        %9592 = vmatpush.bf16.msra.mxu0 %v9455
        %9593 = vmatpush.bf16.msra.mxu0 %v9451
        %9594 = vmatpush.bf16.msra.mxu0 %v9447
        %9595 = vmatpush.bf16.msra.mxu0 %v9443
        %9596 = vmatmul.bf16.gmra.mxu0 %v9516
        %v9597 = vpop.f32.mrf.mxu0
        %v9598 = vadd.f32 0.0, %v9597
        %v9599 = vpop.f32.mrf.mxu0
        %v9600 = vadd.f32 0.0, %v9599
        %9601 = vmatmul.bf16.gmra.mxu0 %v9519
        %v9602 = vpop.f32.mrf.mxu0
        %v9603 = vadd.f32 0.0, %v9602
        %v9604 = vpop.f32.mrf.mxu0
        %v9605 = vadd.f32 0.0, %v9604
        %9606 = vmatmul.bf16.gmra.mxu0 %v9522
        %v9607 = vpop.f32.mrf.mxu0
        %v9608 = vadd.f32 0.0, %v9607
        %v9609 = vpop.f32.mrf.mxu0
        %v9610 = vadd.f32 0.0, %v9609
        %9611 = vmatmul.bf16.gmra.mxu0 %v9525
        %v9612 = vpop.f32.mrf.mxu0
        %v9613 = vadd.f32 0.0, %v9612
        %v9614 = vpop.f32.mrf.mxu0
        %v9615 = vadd.f32 0.0, %v9614
        %9616 = vmatmul.bf16.gmra.mxu0 %v9528
        %v9617 = vpop.f32.mrf.mxu0
        %v9618 = vadd.f32 0.0, %v9617
        %v9619 = vpop.f32.mrf.mxu0
        %v9620 = vadd.f32 0.0, %v9619
        %9621 = vmatmul.bf16.gmra.mxu0 %v9531
        %v9622 = vpop.f32.mrf.mxu0
        %v9623 = vadd.f32 0.0, %v9622
        %v9624 = vpop.f32.mrf.mxu0
        %v9625 = vadd.f32 0.0, %v9624
        %9626 = vmatmul.bf16.gmra.mxu0 %v9534
        %v9627 = vpop.f32.mrf.mxu0
        %v9628 = vadd.f32 0.0, %v9627
        %v9629 = vpop.f32.mrf.mxu0
        %v9630 = vadd.f32 0.0, %v9629
        %9631 = vmatmul.bf16.gmra.mxu0 %v9537
        %v9632 = vpop.f32.mrf.mxu0
        %v9633 = vadd.f32 0.0, %v9632
        %v9634 = vpop.f32.mrf.mxu0
        %v9635 = vadd.f32 0.0, %v9634
        %9636 = vdwg.mxu0
        %9637 = vmatpush.bf16.msra.mxu0 0
        %9638 = vmatpush.bf16.msra.mxu0 0
        %9639 = vmatpush.bf16.msra.mxu0 0
        %9640 = vmatpush.bf16.msra.mxu0 0
        %9641 = vmatpush.bf16.msra.mxu0 %v9456
        %9642 = vmatpush.bf16.msra.mxu0 %v9452
        %9643 = vmatpush.bf16.msra.mxu0 %v9448
        %9644 = vmatpush.bf16.msra.mxu0 %v9444
        %9645 = vmatmul.bf16.gmra.mxu0 %v9516
        %v9646 = vpop.f32.mrf.mxu0
        %v9647 = vadd.f32 0.0, %v9646
        %v9648 = vpop.f32.mrf.mxu0
        %v9649 = vadd.f32 0.0, %v9648
        %9650 = vmatmul.bf16.gmra.mxu0 %v9519
        %v9651 = vpop.f32.mrf.mxu0
        %v9652 = vadd.f32 0.0, %v9651
        %v9653 = vpop.f32.mrf.mxu0
        %v9654 = vadd.f32 0.0, %v9653
        %9655 = vmatmul.bf16.gmra.mxu0 %v9522
        %v9656 = vpop.f32.mrf.mxu0
        %v9657 = vadd.f32 0.0, %v9656
        %v9658 = vpop.f32.mrf.mxu0
        %v9659 = vadd.f32 0.0, %v9658
        %9660 = vmatmul.bf16.gmra.mxu0 %v9525
        %v9661 = vpop.f32.mrf.mxu0
        %v9662 = vadd.f32 0.0, %v9661
        %v9663 = vpop.f32.mrf.mxu0
        %v9664 = vadd.f32 0.0, %v9663
        %9665 = vmatmul.bf16.gmra.mxu0 %v9528
        %v9666 = vpop.f32.mrf.mxu0
        %v9667 = vadd.f32 0.0, %v9666
        %v9668 = vpop.f32.mrf.mxu0
        %v9669 = vadd.f32 0.0, %v9668
        %9670 = vmatmul.bf16.gmra.mxu0 %v9531
        %v9671 = vpop.f32.mrf.mxu0
        %v9672 = vadd.f32 0.0, %v9671
        %v9673 = vpop.f32.mrf.mxu0
        %v9674 = vadd.f32 0.0, %v9673
        %9675 = vmatmul.bf16.gmra.mxu0 %v9534
        %v9676 = vpop.f32.mrf.mxu0
        %v9677 = vadd.f32 0.0, %v9676
        %v9678 = vpop.f32.mrf.mxu0
        %v9679 = vadd.f32 0.0, %v9678
        %9680 = vmatmul.bf16.gmra.mxu0 %v9537
        %v9681 = vpop.f32.mrf.mxu0
        %v9682 = vadd.f32 0.0, %v9681
        %v9683 = vpop.f32.mrf.mxu0
        %v9684 = vadd.f32 0.0, %v9683
        %9685 = vdwg.mxu0
        %9686 = vmatpush.bf16.msra.mxu0 0
        %9687 = vmatpush.bf16.msra.mxu0 0
        %9688 = vmatpush.bf16.msra.mxu0 0
        %9689 = vmatpush.bf16.msra.mxu0 0
        %9690 = vmatpush.bf16.msra.mxu0 %v9457
        %9691 = vmatpush.bf16.msra.mxu0 %v9453
        %9692 = vmatpush.bf16.msra.mxu0 %v9449
        %9693 = vmatpush.bf16.msra.mxu0 %v9445
        %9694 = vmatmul.bf16.gmra.mxu0 %v9516
        %v9695 = vpop.f32.mrf.mxu0
        %v9696 = vadd.f32 0.0, %v9695
        %v9697 = vpop.f32.mrf.mxu0
        %v9698 = vadd.f32 0.0, %v9697
        %9699 = vmatmul.bf16.gmra.mxu0 %v9519
        %v9700 = vpop.f32.mrf.mxu0
        %v9701 = vadd.f32 0.0, %v9700
        %v9702 = vpop.f32.mrf.mxu0
        %v9703 = vadd.f32 0.0, %v9702
        %9704 = vmatmul.bf16.gmra.mxu0 %v9522
        %v9705 = vpop.f32.mrf.mxu0
        %v9706 = vadd.f32 0.0, %v9705
        %v9707 = vpop.f32.mrf.mxu0
        %v9708 = vadd.f32 0.0, %v9707
        %9709 = vmatmul.bf16.gmra.mxu0 %v9525
        %v9710 = vpop.f32.mrf.mxu0
        %v9711 = vadd.f32 0.0, %v9710
        %v9712 = vpop.f32.mrf.mxu0
        %v9713 = vadd.f32 0.0, %v9712
        %9714 = vmatmul.bf16.gmra.mxu0 %v9528
        %v9715 = vpop.f32.mrf.mxu0
        %v9716 = vadd.f32 0.0, %v9715
        %v9717 = vpop.f32.mrf.mxu0
        %v9718 = vadd.f32 0.0, %v9717
        %9719 = vmatmul.bf16.gmra.mxu0 %v9531
        %v9720 = vpop.f32.mrf.mxu0
        %v9721 = vadd.f32 0.0, %v9720
        %v9722 = vpop.f32.mrf.mxu0
        %v9723 = vadd.f32 0.0, %v9722
        %9724 = vmatmul.bf16.gmra.mxu0 %v9534
        %v9725 = vpop.f32.mrf.mxu0
        %v9726 = vadd.f32 0.0, %v9725
        %v9727 = vpop.f32.mrf.mxu0
        %v9728 = vadd.f32 0.0, %v9727
        %9729 = vmatmul.bf16.gmra.mxu0 %v9537
        %v9730 = vpop.f32.mrf.mxu0
        %v9731 = vadd.f32 0.0, %v9730
        %v9732 = vpop.f32.mrf.mxu0
        %v9733 = vadd.f32 0.0, %v9732
        %9734 = vdwg.mxu0
        %v9735 = vpack.c.bf16 %v9598, %v9549
        %v9736 = vpack.c.bf16 %v9696, %v9647
        %v9737 = vpack.c.bf16 %v9600, %v9551
        %v9738 = vpack.c.bf16 %v9698, %v9649
        %v9739 = vpack.c.bf16 %v9603, %v9554
        %v9740 = vpack.c.bf16 %v9701, %v9652
        %v9741 = vpack.c.bf16 %v9605, %v9556
        %v9742 = vpack.c.bf16 %v9703, %v9654
        %v9743 = vpack.c.bf16 %v9608, %v9559
        %v9744 = vpack.c.bf16 %v9706, %v9657
        %v9745 = vpack.c.bf16 %v9610, %v9561
        %v9746 = vpack.c.bf16 %v9708, %v9659
        %v9747 = vpack.c.bf16 %v9613, %v9564
        %v9748 = vpack.c.bf16 %v9711, %v9662
        %v9749 = vpack.c.bf16 %v9615, %v9566
        %v9750 = vpack.c.bf16 %v9713, %v9664
        %v9751 = vpack.c.bf16 %v9618, %v9569
        %v9752 = vpack.c.bf16 %v9716, %v9667
        %v9753 = vpack.c.bf16 %v9620, %v9571
        %v9754 = vpack.c.bf16 %v9718, %v9669
        %v9755 = vpack.c.bf16 %v9623, %v9574
        %v9756 = vpack.c.bf16 %v9721, %v9672
        %v9757 = vpack.c.bf16 %v9625, %v9576
        %v9758 = vpack.c.bf16 %v9723, %v9674
        %v9759 = vpack.c.bf16 %v9628, %v9579
        %v9760 = vpack.c.bf16 %v9726, %v9677
        %v9761 = vpack.c.bf16 %v9630, %v9581
        %v9762 = vpack.c.bf16 %v9728, %v9679
        %v9763 = vpack.c.bf16 %v9633, %v9584
        %v9764 = vpack.c.bf16 %v9731, %v9682
        %v9765 = vpack.c.bf16 %v9635, %v9586
        %v9766 = vpack.c.bf16 %v9733, %v9684
        %v9767 = vld [vmem:[#allocation2] sm:$0xff]
        %v9768 = vld [vmem:[#allocation2 + $0x8] sm:$0xff]
        %v9769 = vld [vmem:[#allocation2 + $0x10] sm:$0xff]
        %v9770 = vld [vmem:[#allocation2 + $0x18] sm:$0xff]
        %v9771 = vld [vmem:[#allocation2 + $0x20] sm:$0xff]
        %v9772 = vld [vmem:[#allocation2 + $0x28] sm:$0xff]
        %v9773 = vld [vmem:[#allocation2 + $0x30] sm:$0xff]
        %v9774 = vld [vmem:[#allocation2 + $0x38] sm:$0xff]
        %v9775 = vld [vmem:[#allocation2 + $0x40] sm:$0xff]
        %v9776 = vld [vmem:[#allocation2 + $0x48] sm:$0xff]
        %v9777 = vld [vmem:[#allocation2 + $0x50] sm:$0xff]
        %v9778 = vld [vmem:[#allocation2 + $0x58] sm:$0xff]
        %v9779 = vld [vmem:[#allocation2 + $0x60] sm:$0xff]
        %v9780 = vld [vmem:[#allocation2 + $0x68] sm:$0xff]
        %v9781 = vld [vmem:[#allocation2 + $0x70] sm:$0xff]
        %v9782 = vld [vmem:[#allocation2 + $0x78] sm:$0xff]
        %v9783 = vld [vmem:[#allocation2 + $0x80] sm:$0xff]
        %v9784 = vld [vmem:[#allocation2 + $0x88] sm:$0xff]
        %v9785 = vld [vmem:[#allocation2 + $0x90] sm:$0xff]
        %v9786 = vld [vmem:[#allocation2 + $0x98] sm:$0xff]
        %v9787 = vld [vmem:[#allocation2 + $0xa0] sm:$0xff]
        %v9788 = vld [vmem:[#allocation2 + $0xa8] sm:$0xff]
        %v9789 = vld [vmem:[#allocation2 + $0xb0] sm:$0xff]
        %v9790 = vld [vmem:[#allocation2 + $0xb8] sm:$0xff]
        %v9791 = vld [vmem:[#allocation2 + $0xc0] sm:$0xff]
        %v9792 = vld [vmem:[#allocation2 + $0xc8] sm:$0xff]
        %v9793 = vld [vmem:[#allocation2 + $0xd0] sm:$0xff]
        %v9794 = vld [vmem:[#allocation2 + $0xd8] sm:$0xff]
        %v9795 = vld [vmem:[#allocation2 + $0xe0] sm:$0xff]
        %v9796 = vld [vmem:[#allocation2 + $0xe8] sm:$0xff]
        %v9797 = vld [vmem:[#allocation2 + $0xf0] sm:$0xff]
        %v9798 = vld [vmem:[#allocation2 + $0xf8] sm:$0xff]
        %v9799 = vld [vmem:[#allocation2 + $0x100] sm:$0xff]
        %v9800 = vld [vmem:[#allocation2 + $0x108] sm:$0xff]
        %v9801 = vld [vmem:[#allocation2 + $0x110] sm:$0xff]
        %v9802 = vld [vmem:[#allocation2 + $0x118] sm:$0xff]
        %v9803 = vld [vmem:[#allocation2 + $0x120] sm:$0xff]
        %v9804 = vld [vmem:[#allocation2 + $0x128] sm:$0xff]
        %v9805 = vld [vmem:[#allocation2 + $0x130] sm:$0xff]
        %v9806 = vld [vmem:[#allocation2 + $0x138] sm:$0xff]
        %v9807 = vld [vmem:[#allocation2 + $0x140] sm:$0xff]
        %v9808 = vld [vmem:[#allocation2 + $0x148] sm:$0xff]
        %v9809 = vld [vmem:[#allocation2 + $0x150] sm:$0xff]
        %v9810 = vld [vmem:[#allocation2 + $0x158] sm:$0xff]
        %v9811 = vld [vmem:[#allocation2 + $0x160] sm:$0xff]
        %v9812 = vld [vmem:[#allocation2 + $0x168] sm:$0xff]
        %v9813 = vld [vmem:[#allocation2 + $0x170] sm:$0xff]
        %v9814 = vld [vmem:[#allocation2 + $0x178] sm:$0xff]
        %v9815 = vld [vmem:[#allocation2 + $0x180] sm:$0xff]
        %v9816 = vld [vmem:[#allocation2 + $0x188] sm:$0xff]
        %v9817 = vld [vmem:[#allocation2 + $0x190] sm:$0xff]
        %v9818 = vld [vmem:[#allocation2 + $0x198] sm:$0xff]
        %v9819 = vld [vmem:[#allocation2 + $0x1a0] sm:$0xff]
        %v9820 = vld [vmem:[#allocation2 + $0x1a8] sm:$0xff]
        %v9821 = vld [vmem:[#allocation2 + $0x1b0] sm:$0xff]
        %v9822 = vld [vmem:[#allocation2 + $0x1b8] sm:$0xff]
        %v9823 = vld [vmem:[#allocation2 + $0x1c0] sm:$0xff]
        %v9824 = vld [vmem:[#allocation2 + $0x1c8] sm:$0xff]
        %v9825 = vld [vmem:[#allocation2 + $0x1d0] sm:$0xff]
        %v9826 = vld [vmem:[#allocation2 + $0x1d8] sm:$0xff]
        %v9827 = vld [vmem:[#allocation2 + $0x1e0] sm:$0xff]
        %v9828 = vld [vmem:[#allocation2 + $0x1e8] sm:$0xff]
        %v9829 = vld [vmem:[#allocation2 + $0x1f0] sm:$0xff]
        %v9830 = vld [vmem:[#allocation2 + $0x1f8] sm:$0xff]
        %s9831 = scalar_lea.vmem [#allocation2], 512
        %v9832 = vld [vmem:[%s9831] sm:$0xff]
        %v9833 = vld [vmem:[%s9831 + $0x8] sm:$0xff]
        %v9834 = vld [vmem:[%s9831 + $0x10] sm:$0xff]
        %v9835 = vld [vmem:[%s9831 + $0x18] sm:$0xff]
        %v9836 = vld [vmem:[%s9831 + $0x20] sm:$0xff]
        %v9837 = vld [vmem:[%s9831 + $0x28] sm:$0xff]
        %v9838 = vld [vmem:[%s9831 + $0x30] sm:$0xff]
        %v9839 = vld [vmem:[%s9831 + $0x38] sm:$0xff]
        %v9840 = vld [vmem:[%s9831 + $0x40] sm:$0xff]
        %v9841 = vld [vmem:[%s9831 + $0x48] sm:$0xff]
        %v9842 = vld [vmem:[%s9831 + $0x50] sm:$0xff]
        %v9843 = vld [vmem:[%s9831 + $0x58] sm:$0xff]
        %v9844 = vld [vmem:[%s9831 + $0x60] sm:$0xff]
        %v9845 = vld [vmem:[%s9831 + $0x68] sm:$0xff]
        %v9846 = vld [vmem:[%s9831 + $0x70] sm:$0xff]
        %v9847 = vld [vmem:[%s9831 + $0x78] sm:$0xff]
        %v9848 = vld [vmem:[%s9831 + $0x80] sm:$0xff]
        %v9849 = vld [vmem:[%s9831 + $0x88] sm:$0xff]
        %v9850 = vld [vmem:[%s9831 + $0x90] sm:$0xff]
        %v9851 = vld [vmem:[%s9831 + $0x98] sm:$0xff]
        %v9852 = vld [vmem:[%s9831 + $0xa0] sm:$0xff]
        %v9853 = vld [vmem:[%s9831 + $0xa8] sm:$0xff]
        %v9854 = vld [vmem:[%s9831 + $0xb0] sm:$0xff]
        %v9855 = vld [vmem:[%s9831 + $0xb8] sm:$0xff]
        %v9856 = vld [vmem:[%s9831 + $0xc0] sm:$0xff]
        %v9857 = vld [vmem:[%s9831 + $0xc8] sm:$0xff]
        %v9858 = vld [vmem:[%s9831 + $0xd0] sm:$0xff]
        %v9859 = vld [vmem:[%s9831 + $0xd8] sm:$0xff]
        %v9860 = vld [vmem:[%s9831 + $0xe0] sm:$0xff]
        %v9861 = vld [vmem:[%s9831 + $0xe8] sm:$0xff]
        %v9862 = vld [vmem:[%s9831 + $0xf0] sm:$0xff]
        %v9863 = vld [vmem:[%s9831 + $0xf8] sm:$0xff]
        %v9864 = vld [vmem:[%s9831 + $0x100] sm:$0xff]
        %v9865 = vld [vmem:[%s9831 + $0x108] sm:$0xff]
        %v9866 = vld [vmem:[%s9831 + $0x110] sm:$0xff]
        %v9867 = vld [vmem:[%s9831 + $0x118] sm:$0xff]
        %v9868 = vld [vmem:[%s9831 + $0x120] sm:$0xff]
        %v9869 = vld [vmem:[%s9831 + $0x128] sm:$0xff]
        %v9870 = vld [vmem:[%s9831 + $0x130] sm:$0xff]
        %v9871 = vld [vmem:[%s9831 + $0x138] sm:$0xff]
        %v9872 = vld [vmem:[%s9831 + $0x140] sm:$0xff]
        %v9873 = vld [vmem:[%s9831 + $0x148] sm:$0xff]
        %v9874 = vld [vmem:[%s9831 + $0x150] sm:$0xff]
        %v9875 = vld [vmem:[%s9831 + $0x158] sm:$0xff]
        %v9876 = vld [vmem:[%s9831 + $0x160] sm:$0xff]
        %v9877 = vld [vmem:[%s9831 + $0x168] sm:$0xff]
        %v9878 = vld [vmem:[%s9831 + $0x170] sm:$0xff]
        %v9879 = vld [vmem:[%s9831 + $0x178] sm:$0xff]
        %v9880 = vld [vmem:[%s9831 + $0x180] sm:$0xff]
        %v9881 = vld [vmem:[%s9831 + $0x188] sm:$0xff]
        %v9882 = vld [vmem:[%s9831 + $0x190] sm:$0xff]
        %v9883 = vld [vmem:[%s9831 + $0x198] sm:$0xff]
        %v9884 = vld [vmem:[%s9831 + $0x1a0] sm:$0xff]
        %v9885 = vld [vmem:[%s9831 + $0x1a8] sm:$0xff]
        %v9886 = vld [vmem:[%s9831 + $0x1b0] sm:$0xff]
        %v9887 = vld [vmem:[%s9831 + $0x1b8] sm:$0xff]
        %v9888 = vld [vmem:[%s9831 + $0x1c0] sm:$0xff]
        %v9889 = vld [vmem:[%s9831 + $0x1c8] sm:$0xff]
        %v9890 = vld [vmem:[%s9831 + $0x1d0] sm:$0xff]
        %v9891 = vld [vmem:[%s9831 + $0x1d8] sm:$0xff]
        %v9892 = vld [vmem:[%s9831 + $0x1e0] sm:$0xff]
        %v9893 = vld [vmem:[%s9831 + $0x1e8] sm:$0xff]
        %v9894 = vld [vmem:[%s9831 + $0x1f0] sm:$0xff]
        %v9895 = vld [vmem:[%s9831 + $0x1f8] sm:$0xff]
        %v9904 = vunpack.c.l.b16 %v9743
        %v9905 = vunpack.c.h.b16 %v9743
        %v9906 = vunpack.c.l.b16 %v9744
        %v9907 = vunpack.c.h.b16 %v9744
        %v9908 = vunpack.c.l.b16 %v9745
        %v9909 = vunpack.c.h.b16 %v9745
        %v9910 = vunpack.c.l.b16 %v9746
        %v9911 = vunpack.c.h.b16 %v9746
        %v9912 = vunpack.c.l.b16 %v9747
        %v9913 = vunpack.c.h.b16 %v9747
        %v9914 = vunpack.c.l.b16 %v9748
        %v9915 = vunpack.c.h.b16 %v9748
        %v9916 = vunpack.c.l.b16 %v9749
        %v9917 = vunpack.c.h.b16 %v9749
        %v9918 = vunpack.c.l.b16 %v9750
        %v9919 = vunpack.c.h.b16 %v9750
        %v9920 = vpack.c.b16 %v9908, %v9904
        %v9921 = vpack.c.b16 %v9909, %v9905
        %v9922 = vpack.c.b16 %v9910, %v9906
        %v9923 = vpack.c.b16 %v9911, %v9907
        %v9924 = vpack.c.b16 %v9916, %v9912
        %v9925 = vpack.c.b16 %v9917, %v9913
        %v9926 = vpack.c.b16 %v9918, %v9914
        %v9927 = vpack.c.b16 %v9919, %v9915
        %v10000 = vunpack.c.l.b16 %v9832
        %v10001 = vunpack.c.h.b16 %v9832
        %v10002 = vunpack.c.l.b16 %v9833
        %v10003 = vunpack.c.h.b16 %v9833
        %v10004 = vunpack.c.l.b16 %v9834
        %v10005 = vunpack.c.h.b16 %v9834
        %v10006 = vunpack.c.l.b16 %v9835
        %v10007 = vunpack.c.h.b16 %v9835
        %v10008 = vunpack.c.l.b16 %v9836
        %v10009 = vunpack.c.h.b16 %v9836
        %v10010 = vunpack.c.l.b16 %v9837
        %v10011 = vunpack.c.h.b16 %v9837
        %v10012 = vunpack.c.l.b16 %v9838
        %v10013 = vunpack.c.h.b16 %v9838
        %v10014 = vunpack.c.l.b16 %v9839
        %v10015 = vunpack.c.h.b16 %v9839
        %v10016 = vunpack.c.l.b16 %v9840
        %v10017 = vunpack.c.h.b16 %v9840
        %v10018 = vunpack.c.l.b16 %v9841
        %v10019 = vunpack.c.h.b16 %v9841
        %v10020 = vunpack.c.l.b16 %v9842
        %v10021 = vunpack.c.h.b16 %v9842
        %v10022 = vunpack.c.l.b16 %v9843
        %v10023 = vunpack.c.h.b16 %v9843
        %v10024 = vunpack.c.l.b16 %v9844
        %v10025 = vunpack.c.h.b16 %v9844
        %v10026 = vunpack.c.l.b16 %v9845
        %v10027 = vunpack.c.h.b16 %v9845
        %v10028 = vunpack.c.l.b16 %v9846
        %v10029 = vunpack.c.h.b16 %v9846
        %v10030 = vunpack.c.l.b16 %v9847
        %v10031 = vunpack.c.h.b16 %v9847
        %v10032 = vunpack.c.l.b16 %v9848
        %v10033 = vunpack.c.h.b16 %v9848
        %v10034 = vunpack.c.l.b16 %v9849
        %v10035 = vunpack.c.h.b16 %v9849
        %v10036 = vunpack.c.l.b16 %v9850
        %v10037 = vunpack.c.h.b16 %v9850
        %v10038 = vunpack.c.l.b16 %v9851
        %v10039 = vunpack.c.h.b16 %v9851
        %v10040 = vunpack.c.l.b16 %v9852
        %v10041 = vunpack.c.h.b16 %v9852
        %v10042 = vunpack.c.l.b16 %v9853
        %v10043 = vunpack.c.h.b16 %v9853
        %v10044 = vunpack.c.l.b16 %v9854
        %v10045 = vunpack.c.h.b16 %v9854
        %v10046 = vunpack.c.l.b16 %v9855
        %v10047 = vunpack.c.h.b16 %v9855
        %v10048 = vunpack.c.l.b16 %v9856
        %v10049 = vunpack.c.h.b16 %v9856
        %v10050 = vunpack.c.l.b16 %v9857
        %v10051 = vunpack.c.h.b16 %v9857
        %v10052 = vunpack.c.l.b16 %v9858
        %v10053 = vunpack.c.h.b16 %v9858
        %v10054 = vunpack.c.l.b16 %v9859
        %v10055 = vunpack.c.h.b16 %v9859
        %v10056 = vunpack.c.l.b16 %v9860
        %v10057 = vunpack.c.h.b16 %v9860
        %v10058 = vunpack.c.l.b16 %v9861
        %v10059 = vunpack.c.h.b16 %v9861
        %v10060 = vunpack.c.l.b16 %v9862
        %v10061 = vunpack.c.h.b16 %v9862
        %v10062 = vunpack.c.l.b16 %v9863
        %v10063 = vunpack.c.h.b16 %v9863
        %v10064 = vunpack.c.l.b16 %v9864
        %v10065 = vunpack.c.h.b16 %v9864
        %v10066 = vunpack.c.l.b16 %v9865
        %v10067 = vunpack.c.h.b16 %v9865
        %v10068 = vunpack.c.l.b16 %v9866
        %v10069 = vunpack.c.h.b16 %v9866
        %v10070 = vunpack.c.l.b16 %v9867
        %v10071 = vunpack.c.h.b16 %v9867
        %v10072 = vunpack.c.l.b16 %v9868
        %v10073 = vunpack.c.h.b16 %v9868
        %v10074 = vunpack.c.l.b16 %v9869
        %v10075 = vunpack.c.h.b16 %v9869
        %v10076 = vunpack.c.l.b16 %v9870
        %v10077 = vunpack.c.h.b16 %v9870
        %v10078 = vunpack.c.l.b16 %v9871
        %v10079 = vunpack.c.h.b16 %v9871
        %v10080 = vunpack.c.l.b16 %v9872
        %v10081 = vunpack.c.h.b16 %v9872
        %v10082 = vunpack.c.l.b16 %v9873
        %v10083 = vunpack.c.h.b16 %v9873
        %v10084 = vunpack.c.l.b16 %v9874
        %v10085 = vunpack.c.h.b16 %v9874
        %v10086 = vunpack.c.l.b16 %v9875
        %v10087 = vunpack.c.h.b16 %v9875
        %v10088 = vunpack.c.l.b16 %v9876
        %v10089 = vunpack.c.h.b16 %v9876
        %v10090 = vunpack.c.l.b16 %v9877
        %v10091 = vunpack.c.h.b16 %v9877
        %v10092 = vunpack.c.l.b16 %v9878
        %v10093 = vunpack.c.h.b16 %v9878
        %v10094 = vunpack.c.l.b16 %v9879
        %v10095 = vunpack.c.h.b16 %v9879
        %v10096 = vunpack.c.l.b16 %v9880
        %v10097 = vunpack.c.h.b16 %v9880
        %v10098 = vunpack.c.l.b16 %v9881
        %v10099 = vunpack.c.h.b16 %v9881
        %v10100 = vunpack.c.l.b16 %v9882
        %v10101 = vunpack.c.h.b16 %v9882
        %v10102 = vunpack.c.l.b16 %v9883
        %v10103 = vunpack.c.h.b16 %v9883
        %v10104 = vunpack.c.l.b16 %v9884
        %v10105 = vunpack.c.h.b16 %v9884
        %v10106 = vunpack.c.l.b16 %v9885
        %v10107 = vunpack.c.h.b16 %v9885
        %v10108 = vunpack.c.l.b16 %v9886
        %v10109 = vunpack.c.h.b16 %v9886
        %v10110 = vunpack.c.l.b16 %v9887
        %v10111 = vunpack.c.h.b16 %v9887
        %v10112 = vunpack.c.l.b16 %v9888
        %v10113 = vunpack.c.h.b16 %v9888
        %v10114 = vunpack.c.l.b16 %v9889
        %v10115 = vunpack.c.h.b16 %v9889
        %v10116 = vunpack.c.l.b16 %v9890
        %v10117 = vunpack.c.h.b16 %v9890
        %v10118 = vunpack.c.l.b16 %v9891
        %v10119 = vunpack.c.h.b16 %v9891
        %v10120 = vunpack.c.l.b16 %v9892
        %v10121 = vunpack.c.h.b16 %v9892
        %v10122 = vunpack.c.l.b16 %v9893
        %v10123 = vunpack.c.h.b16 %v9893
        %v10124 = vunpack.c.l.b16 %v9894
        %v10125 = vunpack.c.h.b16 %v9894
        %v10126 = vunpack.c.l.b16 %v9895
        %v10127 = vunpack.c.h.b16 %v9895
        %v10128 = vpack.c.b16 %v10002, %v10000
        %v10129 = vpack.c.b16 %v10003, %v10001
        %v10130 = vpack.c.b16 %v10006, %v10004
        %v10131 = vpack.c.b16 %v10007, %v10005
        %v10132 = vpack.c.b16 %v10010, %v10008
        %v10133 = vpack.c.b16 %v10011, %v10009
        %v10134 = vpack.c.b16 %v10014, %v10012
        %v10135 = vpack.c.b16 %v10015, %v10013
        %v10136 = vpack.c.b16 %v10018, %v10016
        %v10137 = vpack.c.b16 %v10019, %v10017
        %v10138 = vpack.c.b16 %v10022, %v10020
        %v10139 = vpack.c.b16 %v10023, %v10021
        %v10140 = vpack.c.b16 %v10026, %v10024
        %v10141 = vpack.c.b16 %v10027, %v10025
        %v10142 = vpack.c.b16 %v10030, %v10028
        %v10143 = vpack.c.b16 %v10031, %v10029
        %v10144 = vpack.c.b16 %v10034, %v10032
        %v10145 = vpack.c.b16 %v10035, %v10033
        %v10146 = vpack.c.b16 %v10038, %v10036
        %v10147 = vpack.c.b16 %v10039, %v10037
        %v10148 = vpack.c.b16 %v10042, %v10040
        %v10149 = vpack.c.b16 %v10043, %v10041
        %v10150 = vpack.c.b16 %v10046, %v10044
        %v10151 = vpack.c.b16 %v10047, %v10045
        %v10152 = vpack.c.b16 %v10050, %v10048
        %v10153 = vpack.c.b16 %v10051, %v10049
        %v10154 = vpack.c.b16 %v10054, %v10052
        %v10155 = vpack.c.b16 %v10055, %v10053
        %v10156 = vpack.c.b16 %v10058, %v10056
        %v10157 = vpack.c.b16 %v10059, %v10057
        %v10158 = vpack.c.b16 %v10062, %v10060
        %v10159 = vpack.c.b16 %v10063, %v10061
        %v10160 = vpack.c.b16 %v10066, %v10064
        %v10161 = vpack.c.b16 %v10067, %v10065
        %v10162 = vpack.c.b16 %v10070, %v10068
        %v10163 = vpack.c.b16 %v10071, %v10069
        %v10164 = vpack.c.b16 %v10074, %v10072
        %v10165 = vpack.c.b16 %v10075, %v10073
        %v10166 = vpack.c.b16 %v10078, %v10076
        %v10167 = vpack.c.b16 %v10079, %v10077
        %v10168 = vpack.c.b16 %v10082, %v10080
        %v10169 = vpack.c.b16 %v10083, %v10081
        %v10170 = vpack.c.b16 %v10086, %v10084
        %v10171 = vpack.c.b16 %v10087, %v10085
        %v10172 = vpack.c.b16 %v10090, %v10088
        %v10173 = vpack.c.b16 %v10091, %v10089
        %v10174 = vpack.c.b16 %v10094, %v10092
        %v10175 = vpack.c.b16 %v10095, %v10093
        %v10176 = vpack.c.b16 %v10098, %v10096
        %v10177 = vpack.c.b16 %v10099, %v10097
        %v10178 = vpack.c.b16 %v10102, %v10100
        %v10179 = vpack.c.b16 %v10103, %v10101
        %v10180 = vpack.c.b16 %v10106, %v10104
        %v10181 = vpack.c.b16 %v10107, %v10105
        %v10182 = vpack.c.b16 %v10110, %v10108
        %v10183 = vpack.c.b16 %v10111, %v10109
        %v10184 = vpack.c.b16 %v10114, %v10112
        %v10185 = vpack.c.b16 %v10115, %v10113
        %v10186 = vpack.c.b16 %v10118, %v10116
        %v10187 = vpack.c.b16 %v10119, %v10117
        %v10188 = vpack.c.b16 %v10122, %v10120
        %v10189 = vpack.c.b16 %v10123, %v10121
        %v10190 = vpack.c.b16 %v10126, %v10124
        %v10191 = vpack.c.b16 %v10127, %v10125
        %10256 = vmatpush.bf16.msra.mxu0 %v10142
        %10257 = vmatpush.bf16.msra.mxu0 %v10140
        %10258 = vmatpush.bf16.msra.mxu0 %v10138
        %10259 = vmatpush.bf16.msra.mxu0 %v10136
        %10260 = vmatpush.bf16.msra.mxu0 %v10134
        %10261 = vmatpush.bf16.msra.mxu0 %v10132
        %10262 = vmatpush.bf16.msra.mxu0 %v10130
        %10263 = vmatpush.bf16.msra.mxu0 %v10128
        %10264 = vmatmul.bf16.gmra.mxu0 %v9920
        %v10265 = vpop.f32.mrf.mxu0
        %v10266 = vadd.f32 0.0, %v10265
        %v10267 = vpop.f32.mrf.mxu0
        %v10268 = vadd.f32 0.0, %v10267
        %10269 = vmatmul.bf16.gmra.mxu0 %v9924
        %v10270 = vpop.f32.mrf.mxu0
        %v10271 = vadd.f32 0.0, %v10270
        %v10272 = vpop.f32.mrf.mxu0
        %v10273 = vadd.f32 0.0, %v10272
        %10274 = vdwg.mxu0
        %10275 = vmatpush.bf16.msra.mxu0 %v10158
        %10276 = vmatpush.bf16.msra.mxu0 %v10156
        %10277 = vmatpush.bf16.msra.mxu0 %v10154
        %10278 = vmatpush.bf16.msra.mxu0 %v10152
        %10279 = vmatpush.bf16.msra.mxu0 %v10150
        %10280 = vmatpush.bf16.msra.mxu0 %v10148
        %10281 = vmatpush.bf16.msra.mxu0 %v10146
        %10282 = vmatpush.bf16.msra.mxu0 %v10144
        %10283 = vmatmul.bf16.gmra.mxu0 %v9921
        %v10284 = vpop.f32.mrf.mxu0
        %v10285 = vadd.f32 %v10266, %v10284
        %v10286 = vpop.f32.mrf.mxu0
        %v10287 = vadd.f32 %v10268, %v10286
        %10288 = vmatmul.bf16.gmra.mxu0 %v9925
        %v10289 = vpop.f32.mrf.mxu0
        %v10290 = vadd.f32 %v10271, %v10289
        %v10291 = vpop.f32.mrf.mxu0
        %v10292 = vadd.f32 %v10273, %v10291
        %10293 = vdwg.mxu0
        %10294 = vmatpush.bf16.msra.mxu0 %v10174
        %10295 = vmatpush.bf16.msra.mxu0 %v10172
        %10296 = vmatpush.bf16.msra.mxu0 %v10170
        %10297 = vmatpush.bf16.msra.mxu0 %v10168
        %10298 = vmatpush.bf16.msra.mxu0 %v10166
        %10299 = vmatpush.bf16.msra.mxu0 %v10164
        %10300 = vmatpush.bf16.msra.mxu0 %v10162
        %10301 = vmatpush.bf16.msra.mxu0 %v10160
        %10302 = vmatmul.bf16.gmra.mxu0 %v9922
        %v10303 = vpop.f32.mrf.mxu0
        %v10304 = vadd.f32 %v10285, %v10303
        %v10305 = vpop.f32.mrf.mxu0
        %v10306 = vadd.f32 %v10287, %v10305
        %10307 = vmatmul.bf16.gmra.mxu0 %v9926
        %v10308 = vpop.f32.mrf.mxu0
        %v10309 = vadd.f32 %v10290, %v10308
        %v10310 = vpop.f32.mrf.mxu0
        %v10311 = vadd.f32 %v10292, %v10310
        %10312 = vdwg.mxu0
        %10313 = vmatpush.bf16.msra.mxu0 %v10190
        %10314 = vmatpush.bf16.msra.mxu0 %v10188
        %10315 = vmatpush.bf16.msra.mxu0 %v10186
        %10316 = vmatpush.bf16.msra.mxu0 %v10184
        %10317 = vmatpush.bf16.msra.mxu0 %v10182
        %10318 = vmatpush.bf16.msra.mxu0 %v10180
        %10319 = vmatpush.bf16.msra.mxu0 %v10178
        %10320 = vmatpush.bf16.msra.mxu0 %v10176
        %10321 = vmatmul.bf16.gmra.mxu0 %v9923
        %v10322 = vpop.f32.mrf.mxu0
        %v10323 = vadd.f32 %v10304, %v10322
        %v10324 = vpop.f32.mrf.mxu0
        %v10325 = vadd.f32 %v10306, %v10324
        %10326 = vmatmul.bf16.gmra.mxu0 %v9927
        %v10327 = vpop.f32.mrf.mxu0
        %v10328 = vadd.f32 %v10309, %v10327
        %v10329 = vpop.f32.mrf.mxu0
        %v10330 = vadd.f32 %v10311, %v10329
        %10331 = vdwg.mxu0
        %10332 = vmatpush.bf16.msra.mxu0 %v10143
        %10333 = vmatpush.bf16.msra.mxu0 %v10141
        %10334 = vmatpush.bf16.msra.mxu0 %v10139
        %10335 = vmatpush.bf16.msra.mxu0 %v10137
        %10336 = vmatpush.bf16.msra.mxu0 %v10135
        %10337 = vmatpush.bf16.msra.mxu0 %v10133
        %10338 = vmatpush.bf16.msra.mxu0 %v10131
        %10339 = vmatpush.bf16.msra.mxu0 %v10129
        %10340 = vmatmul.bf16.gmra.mxu0 %v9920
        %v10341 = vpop.f32.mrf.mxu0
        %v10342 = vadd.f32 0.0, %v10341
        %v10343 = vpop.f32.mrf.mxu0
        %v10344 = vadd.f32 0.0, %v10343
        %10345 = vmatmul.bf16.gmra.mxu0 %v9924
        %v10346 = vpop.f32.mrf.mxu0
        %v10347 = vadd.f32 0.0, %v10346
        %v10348 = vpop.f32.mrf.mxu0
        %v10349 = vadd.f32 0.0, %v10348
        %10350 = vdwg.mxu0
        %10351 = vmatpush.bf16.msra.mxu0 %v10159
        %10352 = vmatpush.bf16.msra.mxu0 %v10157
        %10353 = vmatpush.bf16.msra.mxu0 %v10155
        %10354 = vmatpush.bf16.msra.mxu0 %v10153
        %10355 = vmatpush.bf16.msra.mxu0 %v10151
        %10356 = vmatpush.bf16.msra.mxu0 %v10149
        %10357 = vmatpush.bf16.msra.mxu0 %v10147
        %10358 = vmatpush.bf16.msra.mxu0 %v10145
        %10359 = vmatmul.bf16.gmra.mxu0 %v9921
        %v10360 = vpop.f32.mrf.mxu0
        %v10361 = vadd.f32 %v10342, %v10360
        %v10362 = vpop.f32.mrf.mxu0
        %v10363 = vadd.f32 %v10344, %v10362
        %10364 = vmatmul.bf16.gmra.mxu0 %v9925
        %v10365 = vpop.f32.mrf.mxu0
        %v10366 = vadd.f32 %v10347, %v10365
        %v10367 = vpop.f32.mrf.mxu0
        %v10368 = vadd.f32 %v10349, %v10367
        %10369 = vdwg.mxu0
        %10370 = vmatpush.bf16.msra.mxu0 %v10175
        %10371 = vmatpush.bf16.msra.mxu0 %v10173
        %10372 = vmatpush.bf16.msra.mxu0 %v10171
        %10373 = vmatpush.bf16.msra.mxu0 %v10169
        %10374 = vmatpush.bf16.msra.mxu0 %v10167
        %10375 = vmatpush.bf16.msra.mxu0 %v10165
        %10376 = vmatpush.bf16.msra.mxu0 %v10163
        %10377 = vmatpush.bf16.msra.mxu0 %v10161
        %10378 = vmatmul.bf16.gmra.mxu0 %v9922
        %v10379 = vpop.f32.mrf.mxu0
        %v10380 = vadd.f32 %v10361, %v10379
        %v10381 = vpop.f32.mrf.mxu0
        %v10382 = vadd.f32 %v10363, %v10381
        %10383 = vmatmul.bf16.gmra.mxu0 %v9926
        %v10384 = vpop.f32.mrf.mxu0
        %v10385 = vadd.f32 %v10366, %v10384
        %v10386 = vpop.f32.mrf.mxu0
        %v10387 = vadd.f32 %v10368, %v10386
        %10388 = vdwg.mxu0
        %10389 = vmatpush.bf16.msra.mxu0 %v10191
        %10390 = vmatpush.bf16.msra.mxu0 %v10189
        %10391 = vmatpush.bf16.msra.mxu0 %v10187
        %10392 = vmatpush.bf16.msra.mxu0 %v10185
        %10393 = vmatpush.bf16.msra.mxu0 %v10183
        %10394 = vmatpush.bf16.msra.mxu0 %v10181
        %10395 = vmatpush.bf16.msra.mxu0 %v10179
        %10396 = vmatpush.bf16.msra.mxu0 %v10177
        %10397 = vmatmul.bf16.gmra.mxu0 %v9923
        %v10398 = vpop.f32.mrf.mxu0
        %v10399 = vadd.f32 %v10380, %v10398
        %v10400 = vpop.f32.mrf.mxu0
        %v10401 = vadd.f32 %v10382, %v10400
        %10402 = vmatmul.bf16.gmra.mxu0 %v9927
        %v10403 = vpop.f32.mrf.mxu0
        %v10404 = vadd.f32 %v10385, %v10403
        %v10405 = vpop.f32.mrf.mxu0
        %v10406 = vadd.f32 %v10387, %v10405
        %10407 = vdwg.mxu0
        %v10416 = vunpack.c.l.b16 %v9735
        %v10417 = vunpack.c.h.b16 %v9735
        %v10418 = vunpack.c.l.b16 %v9736
        %v10419 = vunpack.c.h.b16 %v9736
        %v10420 = vunpack.c.l.b16 %v9737
        %v10421 = vunpack.c.h.b16 %v9737
        %v10422 = vunpack.c.l.b16 %v9738
        %v10423 = vunpack.c.h.b16 %v9738
        %v10424 = vunpack.c.l.b16 %v9739
        %v10425 = vunpack.c.h.b16 %v9739
        %v10426 = vunpack.c.l.b16 %v9740
        %v10427 = vunpack.c.h.b16 %v9740
        %v10428 = vunpack.c.l.b16 %v9741
        %v10429 = vunpack.c.h.b16 %v9741
        %v10430 = vunpack.c.l.b16 %v9742
        %v10431 = vunpack.c.h.b16 %v9742
        %v10432 = vpack.c.b16 %v10420, %v10416
        %v10433 = vpack.c.b16 %v10421, %v10417
        %v10434 = vpack.c.b16 %v10422, %v10418
        %v10435 = vpack.c.b16 %v10423, %v10419
        %v10436 = vpack.c.b16 %v10428, %v10424
        %v10437 = vpack.c.b16 %v10429, %v10425
        %v10438 = vpack.c.b16 %v10430, %v10426
        %v10439 = vpack.c.b16 %v10431, %v10427
        %v10512 = vunpack.c.l.b16 %v9767
        %v10513 = vunpack.c.h.b16 %v9767
        %v10514 = vunpack.c.l.b16 %v9768
        %v10515 = vunpack.c.h.b16 %v9768
        %v10516 = vunpack.c.l.b16 %v9769
        %v10517 = vunpack.c.h.b16 %v9769
        %v10518 = vunpack.c.l.b16 %v9770
        %v10519 = vunpack.c.h.b16 %v9770
        %v10520 = vunpack.c.l.b16 %v9771
        %v10521 = vunpack.c.h.b16 %v9771
        %v10522 = vunpack.c.l.b16 %v9772
        %v10523 = vunpack.c.h.b16 %v9772
        %v10524 = vunpack.c.l.b16 %v9773
        %v10525 = vunpack.c.h.b16 %v9773
        %v10526 = vunpack.c.l.b16 %v9774
        %v10527 = vunpack.c.h.b16 %v9774
        %v10528 = vunpack.c.l.b16 %v9775
        %v10529 = vunpack.c.h.b16 %v9775
        %v10530 = vunpack.c.l.b16 %v9776
        %v10531 = vunpack.c.h.b16 %v9776
        %v10532 = vunpack.c.l.b16 %v9777
        %v10533 = vunpack.c.h.b16 %v9777
        %v10534 = vunpack.c.l.b16 %v9778
        %v10535 = vunpack.c.h.b16 %v9778
        %v10536 = vunpack.c.l.b16 %v9779
        %v10537 = vunpack.c.h.b16 %v9779
        %v10538 = vunpack.c.l.b16 %v9780
        %v10539 = vunpack.c.h.b16 %v9780
        %v10540 = vunpack.c.l.b16 %v9781
        %v10541 = vunpack.c.h.b16 %v9781
        %v10542 = vunpack.c.l.b16 %v9782
        %v10543 = vunpack.c.h.b16 %v9782
        %v10544 = vunpack.c.l.b16 %v9783
        %v10545 = vunpack.c.h.b16 %v9783
        %v10546 = vunpack.c.l.b16 %v9784
        %v10547 = vunpack.c.h.b16 %v9784
        %v10548 = vunpack.c.l.b16 %v9785
        %v10549 = vunpack.c.h.b16 %v9785
        %v10550 = vunpack.c.l.b16 %v9786
        %v10551 = vunpack.c.h.b16 %v9786
        %v10552 = vunpack.c.l.b16 %v9787
        %v10553 = vunpack.c.h.b16 %v9787
        %v10554 = vunpack.c.l.b16 %v9788
        %v10555 = vunpack.c.h.b16 %v9788
        %v10556 = vunpack.c.l.b16 %v9789
        %v10557 = vunpack.c.h.b16 %v9789
        %v10558 = vunpack.c.l.b16 %v9790
        %v10559 = vunpack.c.h.b16 %v9790
        %v10560 = vunpack.c.l.b16 %v9791
        %v10561 = vunpack.c.h.b16 %v9791
        %v10562 = vunpack.c.l.b16 %v9792
        %v10563 = vunpack.c.h.b16 %v9792
        %v10564 = vunpack.c.l.b16 %v9793
        %v10565 = vunpack.c.h.b16 %v9793
        %v10566 = vunpack.c.l.b16 %v9794
        %v10567 = vunpack.c.h.b16 %v9794
        %v10568 = vunpack.c.l.b16 %v9795
        %v10569 = vunpack.c.h.b16 %v9795
        %v10570 = vunpack.c.l.b16 %v9796
        %v10571 = vunpack.c.h.b16 %v9796
        %v10572 = vunpack.c.l.b16 %v9797
        %v10573 = vunpack.c.h.b16 %v9797
        %v10574 = vunpack.c.l.b16 %v9798
        %v10575 = vunpack.c.h.b16 %v9798
        %v10576 = vunpack.c.l.b16 %v9799
        %v10577 = vunpack.c.h.b16 %v9799
        %v10578 = vunpack.c.l.b16 %v9800
        %v10579 = vunpack.c.h.b16 %v9800
        %v10580 = vunpack.c.l.b16 %v9801
        %v10581 = vunpack.c.h.b16 %v9801
        %v10582 = vunpack.c.l.b16 %v9802
        %v10583 = vunpack.c.h.b16 %v9802
        %v10584 = vunpack.c.l.b16 %v9803
        %v10585 = vunpack.c.h.b16 %v9803
        %v10586 = vunpack.c.l.b16 %v9804
        %v10587 = vunpack.c.h.b16 %v9804
        %v10588 = vunpack.c.l.b16 %v9805
        %v10589 = vunpack.c.h.b16 %v9805
        %v10590 = vunpack.c.l.b16 %v9806
        %v10591 = vunpack.c.h.b16 %v9806
        %v10592 = vunpack.c.l.b16 %v9807
        %v10593 = vunpack.c.h.b16 %v9807
        %v10594 = vunpack.c.l.b16 %v9808
        %v10595 = vunpack.c.h.b16 %v9808
        %v10596 = vunpack.c.l.b16 %v9809
        %v10597 = vunpack.c.h.b16 %v9809
        %v10598 = vunpack.c.l.b16 %v9810
        %v10599 = vunpack.c.h.b16 %v9810
        %v10600 = vunpack.c.l.b16 %v9811
        %v10601 = vunpack.c.h.b16 %v9811
        %v10602 = vunpack.c.l.b16 %v9812
        %v10603 = vunpack.c.h.b16 %v9812
        %v10604 = vunpack.c.l.b16 %v9813
        %v10605 = vunpack.c.h.b16 %v9813
        %v10606 = vunpack.c.l.b16 %v9814
        %v10607 = vunpack.c.h.b16 %v9814
        %v10608 = vunpack.c.l.b16 %v9815
        %v10609 = vunpack.c.h.b16 %v9815
        %v10610 = vunpack.c.l.b16 %v9816
        %v10611 = vunpack.c.h.b16 %v9816
        %v10612 = vunpack.c.l.b16 %v9817
        %v10613 = vunpack.c.h.b16 %v9817
        %v10614 = vunpack.c.l.b16 %v9818
        %v10615 = vunpack.c.h.b16 %v9818
        %v10616 = vunpack.c.l.b16 %v9819
        %v10617 = vunpack.c.h.b16 %v9819
        %v10618 = vunpack.c.l.b16 %v9820
        %v10619 = vunpack.c.h.b16 %v9820
        %v10620 = vunpack.c.l.b16 %v9821
        %v10621 = vunpack.c.h.b16 %v9821
        %v10622 = vunpack.c.l.b16 %v9822
        %v10623 = vunpack.c.h.b16 %v9822
        %v10624 = vunpack.c.l.b16 %v9823
        %v10625 = vunpack.c.h.b16 %v9823
        %v10626 = vunpack.c.l.b16 %v9824
        %v10627 = vunpack.c.h.b16 %v9824
        %v10628 = vunpack.c.l.b16 %v9825
        %v10629 = vunpack.c.h.b16 %v9825
        %v10630 = vunpack.c.l.b16 %v9826
        %v10631 = vunpack.c.h.b16 %v9826
        %v10632 = vunpack.c.l.b16 %v9827
        %v10633 = vunpack.c.h.b16 %v9827
        %v10634 = vunpack.c.l.b16 %v9828
        %v10635 = vunpack.c.h.b16 %v9828
        %v10636 = vunpack.c.l.b16 %v9829
        %v10637 = vunpack.c.h.b16 %v9829
        %v10638 = vunpack.c.l.b16 %v9830
        %v10639 = vunpack.c.h.b16 %v9830
        %v10640 = vpack.c.b16 %v10514, %v10512
        %v10641 = vpack.c.b16 %v10515, %v10513
        %v10642 = vpack.c.b16 %v10518, %v10516
        %v10643 = vpack.c.b16 %v10519, %v10517
        %v10644 = vpack.c.b16 %v10522, %v10520
        %v10645 = vpack.c.b16 %v10523, %v10521
        %v10646 = vpack.c.b16 %v10526, %v10524
        %v10647 = vpack.c.b16 %v10527, %v10525
        %v10648 = vpack.c.b16 %v10530, %v10528
        %v10649 = vpack.c.b16 %v10531, %v10529
        %v10650 = vpack.c.b16 %v10534, %v10532
        %v10651 = vpack.c.b16 %v10535, %v10533
        %v10652 = vpack.c.b16 %v10538, %v10536
        %v10653 = vpack.c.b16 %v10539, %v10537
        %v10654 = vpack.c.b16 %v10542, %v10540
        %v10655 = vpack.c.b16 %v10543, %v10541
        %v10656 = vpack.c.b16 %v10546, %v10544
        %v10657 = vpack.c.b16 %v10547, %v10545
        %v10658 = vpack.c.b16 %v10550, %v10548
        %v10659 = vpack.c.b16 %v10551, %v10549
        %v10660 = vpack.c.b16 %v10554, %v10552
        %v10661 = vpack.c.b16 %v10555, %v10553
        %v10662 = vpack.c.b16 %v10558, %v10556
        %v10663 = vpack.c.b16 %v10559, %v10557
        %v10664 = vpack.c.b16 %v10562, %v10560
        %v10665 = vpack.c.b16 %v10563, %v10561
        %v10666 = vpack.c.b16 %v10566, %v10564
        %v10667 = vpack.c.b16 %v10567, %v10565
        %v10668 = vpack.c.b16 %v10570, %v10568
        %v10669 = vpack.c.b16 %v10571, %v10569
        %v10670 = vpack.c.b16 %v10574, %v10572
        %v10671 = vpack.c.b16 %v10575, %v10573
        %v10672 = vpack.c.b16 %v10578, %v10576
        %v10673 = vpack.c.b16 %v10579, %v10577
        %v10674 = vpack.c.b16 %v10582, %v10580
        %v10675 = vpack.c.b16 %v10583, %v10581
        %v10676 = vpack.c.b16 %v10586, %v10584
        %v10677 = vpack.c.b16 %v10587, %v10585
        %v10678 = vpack.c.b16 %v10590, %v10588
        %v10679 = vpack.c.b16 %v10591, %v10589
        %v10680 = vpack.c.b16 %v10594, %v10592
        %v10681 = vpack.c.b16 %v10595, %v10593
        %v10682 = vpack.c.b16 %v10598, %v10596
        %v10683 = vpack.c.b16 %v10599, %v10597
        %v10684 = vpack.c.b16 %v10602, %v10600
        %v10685 = vpack.c.b16 %v10603, %v10601
        %v10686 = vpack.c.b16 %v10606, %v10604
        %v10687 = vpack.c.b16 %v10607, %v10605
        %v10688 = vpack.c.b16 %v10610, %v10608
        %v10689 = vpack.c.b16 %v10611, %v10609
        %v10690 = vpack.c.b16 %v10614, %v10612
        %v10691 = vpack.c.b16 %v10615, %v10613
        %v10692 = vpack.c.b16 %v10618, %v10616
        %v10693 = vpack.c.b16 %v10619, %v10617
        %v10694 = vpack.c.b16 %v10622, %v10620
        %v10695 = vpack.c.b16 %v10623, %v10621
        %v10696 = vpack.c.b16 %v10626, %v10624
        %v10697 = vpack.c.b16 %v10627, %v10625
        %v10698 = vpack.c.b16 %v10630, %v10628
        %v10699 = vpack.c.b16 %v10631, %v10629
        %v10700 = vpack.c.b16 %v10634, %v10632
        %v10701 = vpack.c.b16 %v10635, %v10633
        %v10702 = vpack.c.b16 %v10638, %v10636
        %v10703 = vpack.c.b16 %v10639, %v10637
        %10768 = vmatpush.bf16.msra.mxu0 %v10654
        %10769 = vmatpush.bf16.msra.mxu0 %v10652
        %10770 = vmatpush.bf16.msra.mxu0 %v10650
        %10771 = vmatpush.bf16.msra.mxu0 %v10648
        %10772 = vmatpush.bf16.msra.mxu0 %v10646
        %10773 = vmatpush.bf16.msra.mxu0 %v10644
        %10774 = vmatpush.bf16.msra.mxu0 %v10642
        %10775 = vmatpush.bf16.msra.mxu0 %v10640
        %10776 = vmatmul.bf16.gmra.mxu0 %v10432
        %v10777 = vpop.f32.mrf.mxu0
        %v10778 = vadd.f32 %v10323, %v10777
        %v10779 = vpop.f32.mrf.mxu0
        %v10780 = vadd.f32 %v10325, %v10779
        %10781 = vmatmul.bf16.gmra.mxu0 %v10436
        %v10782 = vpop.f32.mrf.mxu0
        %v10783 = vadd.f32 %v10328, %v10782
        %v10784 = vpop.f32.mrf.mxu0
        %v10785 = vadd.f32 %v10330, %v10784
        %10786 = vdwg.mxu0
        %10787 = vmatpush.bf16.msra.mxu0 %v10670
        %10788 = vmatpush.bf16.msra.mxu0 %v10668
        %10789 = vmatpush.bf16.msra.mxu0 %v10666
        %10790 = vmatpush.bf16.msra.mxu0 %v10664
        %10791 = vmatpush.bf16.msra.mxu0 %v10662
        %10792 = vmatpush.bf16.msra.mxu0 %v10660
        %10793 = vmatpush.bf16.msra.mxu0 %v10658
        %10794 = vmatpush.bf16.msra.mxu0 %v10656
        %10795 = vmatmul.bf16.gmra.mxu0 %v10433
        %v10796 = vpop.f32.mrf.mxu0
        %v10797 = vadd.f32 %v10778, %v10796
        %v10798 = vpop.f32.mrf.mxu0
        %v10799 = vadd.f32 %v10780, %v10798
        %10800 = vmatmul.bf16.gmra.mxu0 %v10437
        %v10801 = vpop.f32.mrf.mxu0
        %v10802 = vadd.f32 %v10783, %v10801
        %v10803 = vpop.f32.mrf.mxu0
        %v10804 = vadd.f32 %v10785, %v10803
        %10805 = vdwg.mxu0
        %10806 = vmatpush.bf16.msra.mxu0 %v10686
        %10807 = vmatpush.bf16.msra.mxu0 %v10684
        %10808 = vmatpush.bf16.msra.mxu0 %v10682
        %10809 = vmatpush.bf16.msra.mxu0 %v10680
        %10810 = vmatpush.bf16.msra.mxu0 %v10678
        %10811 = vmatpush.bf16.msra.mxu0 %v10676
        %10812 = vmatpush.bf16.msra.mxu0 %v10674
        %10813 = vmatpush.bf16.msra.mxu0 %v10672
        %10814 = vmatmul.bf16.gmra.mxu0 %v10434
        %v10815 = vpop.f32.mrf.mxu0
        %v10816 = vadd.f32 %v10797, %v10815
        %v10817 = vpop.f32.mrf.mxu0
        %v10818 = vadd.f32 %v10799, %v10817
        %10819 = vmatmul.bf16.gmra.mxu0 %v10438
        %v10820 = vpop.f32.mrf.mxu0
        %v10821 = vadd.f32 %v10802, %v10820
        %v10822 = vpop.f32.mrf.mxu0
        %v10823 = vadd.f32 %v10804, %v10822
        %10824 = vdwg.mxu0
        %10825 = vmatpush.bf16.msra.mxu0 %v10702
        %10826 = vmatpush.bf16.msra.mxu0 %v10700
        %10827 = vmatpush.bf16.msra.mxu0 %v10698
        %10828 = vmatpush.bf16.msra.mxu0 %v10696
        %10829 = vmatpush.bf16.msra.mxu0 %v10694
        %10830 = vmatpush.bf16.msra.mxu0 %v10692
        %10831 = vmatpush.bf16.msra.mxu0 %v10690
        %10832 = vmatpush.bf16.msra.mxu0 %v10688
        %10833 = vmatmul.bf16.gmra.mxu0 %v10435
        %v10834 = vpop.f32.mrf.mxu0
        %v10835 = vadd.f32 %v10816, %v10834
        %v10836 = vpop.f32.mrf.mxu0
        %v10837 = vadd.f32 %v10818, %v10836
        %10838 = vmatmul.bf16.gmra.mxu0 %v10439
        %v10839 = vpop.f32.mrf.mxu0
        %v10840 = vadd.f32 %v10821, %v10839
        %v10841 = vpop.f32.mrf.mxu0
        %v10842 = vadd.f32 %v10823, %v10841
        %10843 = vdwg.mxu0
        %10844 = vmatpush.bf16.msra.mxu0 %v10655
        %10845 = vmatpush.bf16.msra.mxu0 %v10653
        %10846 = vmatpush.bf16.msra.mxu0 %v10651
        %10847 = vmatpush.bf16.msra.mxu0 %v10649
        %10848 = vmatpush.bf16.msra.mxu0 %v10647
        %10849 = vmatpush.bf16.msra.mxu0 %v10645
        %10850 = vmatpush.bf16.msra.mxu0 %v10643
        %10851 = vmatpush.bf16.msra.mxu0 %v10641
        %10852 = vmatmul.bf16.gmra.mxu0 %v10432
        %v10853 = vpop.f32.mrf.mxu0
        %v10854 = vadd.f32 %v10399, %v10853
        %v10855 = vpop.f32.mrf.mxu0
        %v10856 = vadd.f32 %v10401, %v10855
        %10857 = vmatmul.bf16.gmra.mxu0 %v10436
        %v10858 = vpop.f32.mrf.mxu0
        %v10859 = vadd.f32 %v10404, %v10858
        %v10860 = vpop.f32.mrf.mxu0
        %v10861 = vadd.f32 %v10406, %v10860
        %10862 = vdwg.mxu0
        %10863 = vmatpush.bf16.msra.mxu0 %v10671
        %10864 = vmatpush.bf16.msra.mxu0 %v10669
        %10865 = vmatpush.bf16.msra.mxu0 %v10667
        %10866 = vmatpush.bf16.msra.mxu0 %v10665
        %10867 = vmatpush.bf16.msra.mxu0 %v10663
        %10868 = vmatpush.bf16.msra.mxu0 %v10661
        %10869 = vmatpush.bf16.msra.mxu0 %v10659
        %10870 = vmatpush.bf16.msra.mxu0 %v10657
        %10871 = vmatmul.bf16.gmra.mxu0 %v10433
        %v10872 = vpop.f32.mrf.mxu0
        %v10873 = vadd.f32 %v10854, %v10872
        %v10874 = vpop.f32.mrf.mxu0
        %v10875 = vadd.f32 %v10856, %v10874
        %10876 = vmatmul.bf16.gmra.mxu0 %v10437
        %v10877 = vpop.f32.mrf.mxu0
        %v10878 = vadd.f32 %v10859, %v10877
        %v10879 = vpop.f32.mrf.mxu0
        %v10880 = vadd.f32 %v10861, %v10879
        %10881 = vdwg.mxu0
        %10882 = vmatpush.bf16.msra.mxu0 %v10687
        %10883 = vmatpush.bf16.msra.mxu0 %v10685
        %10884 = vmatpush.bf16.msra.mxu0 %v10683
        %10885 = vmatpush.bf16.msra.mxu0 %v10681
        %10886 = vmatpush.bf16.msra.mxu0 %v10679
        %10887 = vmatpush.bf16.msra.mxu0 %v10677
        %10888 = vmatpush.bf16.msra.mxu0 %v10675
        %10889 = vmatpush.bf16.msra.mxu0 %v10673
        %10890 = vmatmul.bf16.gmra.mxu0 %v10434
        %v10891 = vpop.f32.mrf.mxu0
        %v10892 = vadd.f32 %v10873, %v10891
        %v10893 = vpop.f32.mrf.mxu0
        %v10894 = vadd.f32 %v10875, %v10893
        %10895 = vmatmul.bf16.gmra.mxu0 %v10438
        %v10896 = vpop.f32.mrf.mxu0
        %v10897 = vadd.f32 %v10878, %v10896
        %v10898 = vpop.f32.mrf.mxu0
        %v10899 = vadd.f32 %v10880, %v10898
        %10900 = vdwg.mxu0
        %10901 = vmatpush.bf16.msra.mxu0 %v10703
        %10902 = vmatpush.bf16.msra.mxu0 %v10701
        %10903 = vmatpush.bf16.msra.mxu0 %v10699
        %10904 = vmatpush.bf16.msra.mxu0 %v10697
        %10905 = vmatpush.bf16.msra.mxu0 %v10695
        %10906 = vmatpush.bf16.msra.mxu0 %v10693
        %10907 = vmatpush.bf16.msra.mxu0 %v10691
        %10908 = vmatpush.bf16.msra.mxu0 %v10689
        %10909 = vmatmul.bf16.gmra.mxu0 %v10435
        %v10910 = vpop.f32.mrf.mxu0
        %v10911 = vadd.f32 %v10892, %v10910
        %v10912 = vpop.f32.mrf.mxu0
        %v10913 = vadd.f32 %v10894, %v10912
        %10914 = vmatmul.bf16.gmra.mxu0 %v10439
        %v10915 = vpop.f32.mrf.mxu0
        %v10916 = vadd.f32 %v10897, %v10915
        %v10917 = vpop.f32.mrf.mxu0
        %v10918 = vadd.f32 %v10899, %v10917
        %10919 = vdwg.mxu0
        %s10920 = scalar_lea.vmem [#allocation2], 1024
        %v10921 = vld [vmem:[%s10920] sm:$0xff]
        %v10922 = vld [vmem:[%s10920 + $0x8] sm:$0xff]
        %v10923 = vld [vmem:[%s10920 + $0x10] sm:$0xff]
        %v10924 = vld [vmem:[%s10920 + $0x18] sm:$0xff]
        %v10925 = vld [vmem:[%s10920 + $0x20] sm:$0xff]
        %v10926 = vld [vmem:[%s10920 + $0x28] sm:$0xff]
        %v10927 = vld [vmem:[%s10920 + $0x30] sm:$0xff]
        %v10928 = vld [vmem:[%s10920 + $0x38] sm:$0xff]
        %v10929 = vld [vmem:[%s10920 + $0x40] sm:$0xff]
        %v10930 = vld [vmem:[%s10920 + $0x48] sm:$0xff]
        %v10931 = vld [vmem:[%s10920 + $0x50] sm:$0xff]
        %v10932 = vld [vmem:[%s10920 + $0x58] sm:$0xff]
        %v10933 = vld [vmem:[%s10920 + $0x60] sm:$0xff]
        %v10934 = vld [vmem:[%s10920 + $0x68] sm:$0xff]
        %v10935 = vld [vmem:[%s10920 + $0x70] sm:$0xff]
        %v10936 = vld [vmem:[%s10920 + $0x78] sm:$0xff]
        %v10937 = vld [vmem:[%s10920 + $0x80] sm:$0xff]
        %v10938 = vld [vmem:[%s10920 + $0x88] sm:$0xff]
        %v10939 = vld [vmem:[%s10920 + $0x90] sm:$0xff]
        %v10940 = vld [vmem:[%s10920 + $0x98] sm:$0xff]
        %v10941 = vld [vmem:[%s10920 + $0xa0] sm:$0xff]
        %v10942 = vld [vmem:[%s10920 + $0xa8] sm:$0xff]
        %v10943 = vld [vmem:[%s10920 + $0xb0] sm:$0xff]
        %v10944 = vld [vmem:[%s10920 + $0xb8] sm:$0xff]
        %v10945 = vld [vmem:[%s10920 + $0xc0] sm:$0xff]
        %v10946 = vld [vmem:[%s10920 + $0xc8] sm:$0xff]
        %v10947 = vld [vmem:[%s10920 + $0xd0] sm:$0xff]
        %v10948 = vld [vmem:[%s10920 + $0xd8] sm:$0xff]
        %v10949 = vld [vmem:[%s10920 + $0xe0] sm:$0xff]
        %v10950 = vld [vmem:[%s10920 + $0xe8] sm:$0xff]
        %v10951 = vld [vmem:[%s10920 + $0xf0] sm:$0xff]
        %v10952 = vld [vmem:[%s10920 + $0xf8] sm:$0xff]
        %v10953 = vld [vmem:[%s10920 + $0x100] sm:$0xff]
        %v10954 = vld [vmem:[%s10920 + $0x108] sm:$0xff]
        %v10955 = vld [vmem:[%s10920 + $0x110] sm:$0xff]
        %v10956 = vld [vmem:[%s10920 + $0x118] sm:$0xff]
        %v10957 = vld [vmem:[%s10920 + $0x120] sm:$0xff]
        %v10958 = vld [vmem:[%s10920 + $0x128] sm:$0xff]
        %v10959 = vld [vmem:[%s10920 + $0x130] sm:$0xff]
        %v10960 = vld [vmem:[%s10920 + $0x138] sm:$0xff]
        %v10961 = vld [vmem:[%s10920 + $0x140] sm:$0xff]
        %v10962 = vld [vmem:[%s10920 + $0x148] sm:$0xff]
        %v10963 = vld [vmem:[%s10920 + $0x150] sm:$0xff]
        %v10964 = vld [vmem:[%s10920 + $0x158] sm:$0xff]
        %v10965 = vld [vmem:[%s10920 + $0x160] sm:$0xff]
        %v10966 = vld [vmem:[%s10920 + $0x168] sm:$0xff]
        %v10967 = vld [vmem:[%s10920 + $0x170] sm:$0xff]
        %v10968 = vld [vmem:[%s10920 + $0x178] sm:$0xff]
        %v10969 = vld [vmem:[%s10920 + $0x180] sm:$0xff]
        %v10970 = vld [vmem:[%s10920 + $0x188] sm:$0xff]
        %v10971 = vld [vmem:[%s10920 + $0x190] sm:$0xff]
        %v10972 = vld [vmem:[%s10920 + $0x198] sm:$0xff]
        %v10973 = vld [vmem:[%s10920 + $0x1a0] sm:$0xff]
        %v10974 = vld [vmem:[%s10920 + $0x1a8] sm:$0xff]
        %v10975 = vld [vmem:[%s10920 + $0x1b0] sm:$0xff]
        %v10976 = vld [vmem:[%s10920 + $0x1b8] sm:$0xff]
        %v10977 = vld [vmem:[%s10920 + $0x1c0] sm:$0xff]
        %v10978 = vld [vmem:[%s10920 + $0x1c8] sm:$0xff]
        %v10979 = vld [vmem:[%s10920 + $0x1d0] sm:$0xff]
        %v10980 = vld [vmem:[%s10920 + $0x1d8] sm:$0xff]
        %v10981 = vld [vmem:[%s10920 + $0x1e0] sm:$0xff]
        %v10982 = vld [vmem:[%s10920 + $0x1e8] sm:$0xff]
        %v10983 = vld [vmem:[%s10920 + $0x1f0] sm:$0xff]
        %v10984 = vld [vmem:[%s10920 + $0x1f8] sm:$0xff]
        %v10993 = vunpack.c.l.b16 %v9751
        %v10994 = vunpack.c.h.b16 %v9751
        %v10995 = vunpack.c.l.b16 %v9752
        %v10996 = vunpack.c.h.b16 %v9752
        %v10997 = vunpack.c.l.b16 %v9753
        %v10998 = vunpack.c.h.b16 %v9753
        %v10999 = vunpack.c.l.b16 %v9754
        %v11000 = vunpack.c.h.b16 %v9754
        %v11001 = vunpack.c.l.b16 %v9755
        %v11002 = vunpack.c.h.b16 %v9755
        %v11003 = vunpack.c.l.b16 %v9756
        %v11004 = vunpack.c.h.b16 %v9756
        %v11005 = vunpack.c.l.b16 %v9757
        %v11006 = vunpack.c.h.b16 %v9757
        %v11007 = vunpack.c.l.b16 %v9758
        %v11008 = vunpack.c.h.b16 %v9758
        %v11009 = vpack.c.b16 %v10997, %v10993
        %v11010 = vpack.c.b16 %v10998, %v10994
        %v11011 = vpack.c.b16 %v10999, %v10995
        %v11012 = vpack.c.b16 %v11000, %v10996
        %v11013 = vpack.c.b16 %v11005, %v11001
        %v11014 = vpack.c.b16 %v11006, %v11002
        %v11015 = vpack.c.b16 %v11007, %v11003
        %v11016 = vpack.c.b16 %v11008, %v11004
        %v11089 = vunpack.c.l.b16 %v10921
        %v11090 = vunpack.c.h.b16 %v10921
        %v11091 = vunpack.c.l.b16 %v10922
        %v11092 = vunpack.c.h.b16 %v10922
        %v11093 = vunpack.c.l.b16 %v10923
        %v11094 = vunpack.c.h.b16 %v10923
        %v11095 = vunpack.c.l.b16 %v10924
        %v11096 = vunpack.c.h.b16 %v10924
        %v11097 = vunpack.c.l.b16 %v10925
        %v11098 = vunpack.c.h.b16 %v10925
        %v11099 = vunpack.c.l.b16 %v10926
        %v11100 = vunpack.c.h.b16 %v10926
        %v11101 = vunpack.c.l.b16 %v10927
        %v11102 = vunpack.c.h.b16 %v10927
        %v11103 = vunpack.c.l.b16 %v10928
        %v11104 = vunpack.c.h.b16 %v10928
        %v11105 = vunpack.c.l.b16 %v10929
        %v11106 = vunpack.c.h.b16 %v10929
        %v11107 = vunpack.c.l.b16 %v10930
        %v11108 = vunpack.c.h.b16 %v10930
        %v11109 = vunpack.c.l.b16 %v10931
        %v11110 = vunpack.c.h.b16 %v10931
        %v11111 = vunpack.c.l.b16 %v10932
        %v11112 = vunpack.c.h.b16 %v10932
        %v11113 = vunpack.c.l.b16 %v10933
        %v11114 = vunpack.c.h.b16 %v10933
        %v11115 = vunpack.c.l.b16 %v10934
        %v11116 = vunpack.c.h.b16 %v10934
        %v11117 = vunpack.c.l.b16 %v10935
        %v11118 = vunpack.c.h.b16 %v10935
        %v11119 = vunpack.c.l.b16 %v10936
        %v11120 = vunpack.c.h.b16 %v10936
        %v11121 = vunpack.c.l.b16 %v10937
        %v11122 = vunpack.c.h.b16 %v10937
        %v11123 = vunpack.c.l.b16 %v10938
        %v11124 = vunpack.c.h.b16 %v10938
        %v11125 = vunpack.c.l.b16 %v10939
        %v11126 = vunpack.c.h.b16 %v10939
        %v11127 = vunpack.c.l.b16 %v10940
        %v11128 = vunpack.c.h.b16 %v10940
        %v11129 = vunpack.c.l.b16 %v10941
        %v11130 = vunpack.c.h.b16 %v10941
        %v11131 = vunpack.c.l.b16 %v10942
        %v11132 = vunpack.c.h.b16 %v10942
        %v11133 = vunpack.c.l.b16 %v10943
        %v11134 = vunpack.c.h.b16 %v10943
        %v11135 = vunpack.c.l.b16 %v10944
        %v11136 = vunpack.c.h.b16 %v10944
        %v11137 = vunpack.c.l.b16 %v10945
        %v11138 = vunpack.c.h.b16 %v10945
        %v11139 = vunpack.c.l.b16 %v10946
        %v11140 = vunpack.c.h.b16 %v10946
        %v11141 = vunpack.c.l.b16 %v10947
        %v11142 = vunpack.c.h.b16 %v10947
        %v11143 = vunpack.c.l.b16 %v10948
        %v11144 = vunpack.c.h.b16 %v10948
        %v11145 = vunpack.c.l.b16 %v10949
        %v11146 = vunpack.c.h.b16 %v10949
        %v11147 = vunpack.c.l.b16 %v10950
        %v11148 = vunpack.c.h.b16 %v10950
        %v11149 = vunpack.c.l.b16 %v10951
        %v11150 = vunpack.c.h.b16 %v10951
        %v11151 = vunpack.c.l.b16 %v10952
        %v11152 = vunpack.c.h.b16 %v10952
        %v11153 = vunpack.c.l.b16 %v10953
        %v11154 = vunpack.c.h.b16 %v10953
        %v11155 = vunpack.c.l.b16 %v10954
        %v11156 = vunpack.c.h.b16 %v10954
        %v11157 = vunpack.c.l.b16 %v10955
        %v11158 = vunpack.c.h.b16 %v10955
        %v11159 = vunpack.c.l.b16 %v10956
        %v11160 = vunpack.c.h.b16 %v10956
        %v11161 = vunpack.c.l.b16 %v10957
        %v11162 = vunpack.c.h.b16 %v10957
        %v11163 = vunpack.c.l.b16 %v10958
        %v11164 = vunpack.c.h.b16 %v10958
        %v11165 = vunpack.c.l.b16 %v10959
        %v11166 = vunpack.c.h.b16 %v10959
        %v11167 = vunpack.c.l.b16 %v10960
        %v11168 = vunpack.c.h.b16 %v10960
        %v11169 = vunpack.c.l.b16 %v10961
        %v11170 = vunpack.c.h.b16 %v10961
        %v11171 = vunpack.c.l.b16 %v10962
        %v11172 = vunpack.c.h.b16 %v10962
        %v11173 = vunpack.c.l.b16 %v10963
        %v11174 = vunpack.c.h.b16 %v10963
        %v11175 = vunpack.c.l.b16 %v10964
        %v11176 = vunpack.c.h.b16 %v10964
        %v11177 = vunpack.c.l.b16 %v10965
        %v11178 = vunpack.c.h.b16 %v10965
        %v11179 = vunpack.c.l.b16 %v10966
        %v11180 = vunpack.c.h.b16 %v10966
        %v11181 = vunpack.c.l.b16 %v10967
        %v11182 = vunpack.c.h.b16 %v10967
        %v11183 = vunpack.c.l.b16 %v10968
        %v11184 = vunpack.c.h.b16 %v10968
        %v11185 = vunpack.c.l.b16 %v10969
        %v11186 = vunpack.c.h.b16 %v10969
        %v11187 = vunpack.c.l.b16 %v10970
        %v11188 = vunpack.c.h.b16 %v10970
        %v11189 = vunpack.c.l.b16 %v10971
        %v11190 = vunpack.c.h.b16 %v10971
        %v11191 = vunpack.c.l.b16 %v10972
        %v11192 = vunpack.c.h.b16 %v10972
        %v11193 = vunpack.c.l.b16 %v10973
        %v11194 = vunpack.c.h.b16 %v10973
        %v11195 = vunpack.c.l.b16 %v10974
        %v11196 = vunpack.c.h.b16 %v10974
        %v11197 = vunpack.c.l.b16 %v10975
        %v11198 = vunpack.c.h.b16 %v10975
        %v11199 = vunpack.c.l.b16 %v10976
        %v11200 = vunpack.c.h.b16 %v10976
        %v11201 = vunpack.c.l.b16 %v10977
        %v11202 = vunpack.c.h.b16 %v10977
        %v11203 = vunpack.c.l.b16 %v10978
        %v11204 = vunpack.c.h.b16 %v10978
        %v11205 = vunpack.c.l.b16 %v10979
        %v11206 = vunpack.c.h.b16 %v10979
        %v11207 = vunpack.c.l.b16 %v10980
        %v11208 = vunpack.c.h.b16 %v10980
        %v11209 = vunpack.c.l.b16 %v10981
        %v11210 = vunpack.c.h.b16 %v10981
        %v11211 = vunpack.c.l.b16 %v10982
        %v11212 = vunpack.c.h.b16 %v10982
        %v11213 = vunpack.c.l.b16 %v10983
        %v11214 = vunpack.c.h.b16 %v10983
        %v11215 = vunpack.c.l.b16 %v10984
        %v11216 = vunpack.c.h.b16 %v10984
        %v11217 = vpack.c.b16 %v11091, %v11089
        %v11218 = vpack.c.b16 %v11092, %v11090
        %v11219 = vpack.c.b16 %v11095, %v11093
        %v11220 = vpack.c.b16 %v11096, %v11094
        %v11221 = vpack.c.b16 %v11099, %v11097
        %v11222 = vpack.c.b16 %v11100, %v11098
        %v11223 = vpack.c.b16 %v11103, %v11101
        %v11224 = vpack.c.b16 %v11104, %v11102
        %v11225 = vpack.c.b16 %v11107, %v11105
        %v11226 = vpack.c.b16 %v11108, %v11106
        %v11227 = vpack.c.b16 %v11111, %v11109
        %v11228 = vpack.c.b16 %v11112, %v11110
        %v11229 = vpack.c.b16 %v11115, %v11113
        %v11230 = vpack.c.b16 %v11116, %v11114
        %v11231 = vpack.c.b16 %v11119, %v11117
        %v11232 = vpack.c.b16 %v11120, %v11118
        %v11233 = vpack.c.b16 %v11123, %v11121
        %v11234 = vpack.c.b16 %v11124, %v11122
        %v11235 = vpack.c.b16 %v11127, %v11125
        %v11236 = vpack.c.b16 %v11128, %v11126
        %v11237 = vpack.c.b16 %v11131, %v11129
        %v11238 = vpack.c.b16 %v11132, %v11130
        %v11239 = vpack.c.b16 %v11135, %v11133
        %v11240 = vpack.c.b16 %v11136, %v11134
        %v11241 = vpack.c.b16 %v11139, %v11137
        %v11242 = vpack.c.b16 %v11140, %v11138
        %v11243 = vpack.c.b16 %v11143, %v11141
        %v11244 = vpack.c.b16 %v11144, %v11142
        %v11245 = vpack.c.b16 %v11147, %v11145
        %v11246 = vpack.c.b16 %v11148, %v11146
        %v11247 = vpack.c.b16 %v11151, %v11149
        %v11248 = vpack.c.b16 %v11152, %v11150
        %v11249 = vpack.c.b16 %v11155, %v11153
        %v11250 = vpack.c.b16 %v11156, %v11154
        %v11251 = vpack.c.b16 %v11159, %v11157
        %v11252 = vpack.c.b16 %v11160, %v11158
        %v11253 = vpack.c.b16 %v11163, %v11161
        %v11254 = vpack.c.b16 %v11164, %v11162
        %v11255 = vpack.c.b16 %v11167, %v11165
        %v11256 = vpack.c.b16 %v11168, %v11166
        %v11257 = vpack.c.b16 %v11171, %v11169
        %v11258 = vpack.c.b16 %v11172, %v11170
        %v11259 = vpack.c.b16 %v11175, %v11173
        %v11260 = vpack.c.b16 %v11176, %v11174
        %v11261 = vpack.c.b16 %v11179, %v11177
        %v11262 = vpack.c.b16 %v11180, %v11178
        %v11263 = vpack.c.b16 %v11183, %v11181
        %v11264 = vpack.c.b16 %v11184, %v11182
        %v11265 = vpack.c.b16 %v11187, %v11185
        %v11266 = vpack.c.b16 %v11188, %v11186
        %v11267 = vpack.c.b16 %v11191, %v11189
        %v11268 = vpack.c.b16 %v11192, %v11190
        %v11269 = vpack.c.b16 %v11195, %v11193
        %v11270 = vpack.c.b16 %v11196, %v11194
        %v11271 = vpack.c.b16 %v11199, %v11197
        %v11272 = vpack.c.b16 %v11200, %v11198
        %v11273 = vpack.c.b16 %v11203, %v11201
        %v11274 = vpack.c.b16 %v11204, %v11202
        %v11275 = vpack.c.b16 %v11207, %v11205
        %v11276 = vpack.c.b16 %v11208, %v11206
        %v11277 = vpack.c.b16 %v11211, %v11209
        %v11278 = vpack.c.b16 %v11212, %v11210
        %v11279 = vpack.c.b16 %v11215, %v11213
        %v11280 = vpack.c.b16 %v11216, %v11214
        %11345 = vmatpush.bf16.msra.mxu0 %v11231
        %11346 = vmatpush.bf16.msra.mxu0 %v11229
        %11347 = vmatpush.bf16.msra.mxu0 %v11227
        %11348 = vmatpush.bf16.msra.mxu0 %v11225
        %11349 = vmatpush.bf16.msra.mxu0 %v11223
        %11350 = vmatpush.bf16.msra.mxu0 %v11221
        %11351 = vmatpush.bf16.msra.mxu0 %v11219
        %11352 = vmatpush.bf16.msra.mxu0 %v11217
        %11353 = vmatmul.bf16.gmra.mxu0 %v11009
        %v11354 = vpop.f32.mrf.mxu0
        %v11355 = vadd.f32 0.0, %v11354
        %v11356 = vpop.f32.mrf.mxu0
        %v11357 = vadd.f32 0.0, %v11356
        %11358 = vmatmul.bf16.gmra.mxu0 %v11013
        %v11359 = vpop.f32.mrf.mxu0
        %v11360 = vadd.f32 0.0, %v11359
        %v11361 = vpop.f32.mrf.mxu0
        %v11362 = vadd.f32 0.0, %v11361
        %11363 = vdwg.mxu0
        %11364 = vmatpush.bf16.msra.mxu0 %v11247
        %11365 = vmatpush.bf16.msra.mxu0 %v11245
        %11366 = vmatpush.bf16.msra.mxu0 %v11243
        %11367 = vmatpush.bf16.msra.mxu0 %v11241
        %11368 = vmatpush.bf16.msra.mxu0 %v11239
        %11369 = vmatpush.bf16.msra.mxu0 %v11237
        %11370 = vmatpush.bf16.msra.mxu0 %v11235
        %11371 = vmatpush.bf16.msra.mxu0 %v11233
        %11372 = vmatmul.bf16.gmra.mxu0 %v11010
        %v11373 = vpop.f32.mrf.mxu0
        %v11374 = vadd.f32 %v11355, %v11373
        %v11375 = vpop.f32.mrf.mxu0
        %v11376 = vadd.f32 %v11357, %v11375
        %11377 = vmatmul.bf16.gmra.mxu0 %v11014
        %v11378 = vpop.f32.mrf.mxu0
        %v11379 = vadd.f32 %v11360, %v11378
        %v11380 = vpop.f32.mrf.mxu0
        %v11381 = vadd.f32 %v11362, %v11380
        %11382 = vdwg.mxu0
        %11383 = vmatpush.bf16.msra.mxu0 %v11263
        %11384 = vmatpush.bf16.msra.mxu0 %v11261
        %11385 = vmatpush.bf16.msra.mxu0 %v11259
        %11386 = vmatpush.bf16.msra.mxu0 %v11257
        %11387 = vmatpush.bf16.msra.mxu0 %v11255
        %11388 = vmatpush.bf16.msra.mxu0 %v11253
        %11389 = vmatpush.bf16.msra.mxu0 %v11251
        %11390 = vmatpush.bf16.msra.mxu0 %v11249
        %11391 = vmatmul.bf16.gmra.mxu0 %v11011
        %v11392 = vpop.f32.mrf.mxu0
        %v11393 = vadd.f32 %v11374, %v11392
        %v11394 = vpop.f32.mrf.mxu0
        %v11395 = vadd.f32 %v11376, %v11394
        %11396 = vmatmul.bf16.gmra.mxu0 %v11015
        %v11397 = vpop.f32.mrf.mxu0
        %v11398 = vadd.f32 %v11379, %v11397
        %v11399 = vpop.f32.mrf.mxu0
        %v11400 = vadd.f32 %v11381, %v11399
        %11401 = vdwg.mxu0
        %11402 = vmatpush.bf16.msra.mxu0 %v11279
        %11403 = vmatpush.bf16.msra.mxu0 %v11277
        %11404 = vmatpush.bf16.msra.mxu0 %v11275
        %11405 = vmatpush.bf16.msra.mxu0 %v11273
        %11406 = vmatpush.bf16.msra.mxu0 %v11271
        %11407 = vmatpush.bf16.msra.mxu0 %v11269
        %11408 = vmatpush.bf16.msra.mxu0 %v11267
        %11409 = vmatpush.bf16.msra.mxu0 %v11265
        %11410 = vmatmul.bf16.gmra.mxu0 %v11012
        %v11411 = vpop.f32.mrf.mxu0
        %v11412 = vadd.f32 %v11393, %v11411
        %v11413 = vpop.f32.mrf.mxu0
        %v11414 = vadd.f32 %v11395, %v11413
        %11415 = vmatmul.bf16.gmra.mxu0 %v11016
        %v11416 = vpop.f32.mrf.mxu0
        %v11417 = vadd.f32 %v11398, %v11416
        %v11418 = vpop.f32.mrf.mxu0
        %v11419 = vadd.f32 %v11400, %v11418
        %11420 = vdwg.mxu0
        %11421 = vmatpush.bf16.msra.mxu0 %v11232
        %11422 = vmatpush.bf16.msra.mxu0 %v11230
        %11423 = vmatpush.bf16.msra.mxu0 %v11228
        %11424 = vmatpush.bf16.msra.mxu0 %v11226
        %11425 = vmatpush.bf16.msra.mxu0 %v11224
        %11426 = vmatpush.bf16.msra.mxu0 %v11222
        %11427 = vmatpush.bf16.msra.mxu0 %v11220
        %11428 = vmatpush.bf16.msra.mxu0 %v11218
        %11429 = vmatmul.bf16.gmra.mxu0 %v11009
        %v11430 = vpop.f32.mrf.mxu0
        %v11431 = vadd.f32 0.0, %v11430
        %v11432 = vpop.f32.mrf.mxu0
        %v11433 = vadd.f32 0.0, %v11432
        %11434 = vmatmul.bf16.gmra.mxu0 %v11013
        %v11435 = vpop.f32.mrf.mxu0
        %v11436 = vadd.f32 0.0, %v11435
        %v11437 = vpop.f32.mrf.mxu0
        %v11438 = vadd.f32 0.0, %v11437
        %11439 = vdwg.mxu0
        %11440 = vmatpush.bf16.msra.mxu0 %v11248
        %11441 = vmatpush.bf16.msra.mxu0 %v11246
        %11442 = vmatpush.bf16.msra.mxu0 %v11244
        %11443 = vmatpush.bf16.msra.mxu0 %v11242
        %11444 = vmatpush.bf16.msra.mxu0 %v11240
        %11445 = vmatpush.bf16.msra.mxu0 %v11238
        %11446 = vmatpush.bf16.msra.mxu0 %v11236
        %11447 = vmatpush.bf16.msra.mxu0 %v11234
        %11448 = vmatmul.bf16.gmra.mxu0 %v11010
        %v11449 = vpop.f32.mrf.mxu0
        %v11450 = vadd.f32 %v11431, %v11449
        %v11451 = vpop.f32.mrf.mxu0
        %v11452 = vadd.f32 %v11433, %v11451
        %11453 = vmatmul.bf16.gmra.mxu0 %v11014
        %v11454 = vpop.f32.mrf.mxu0
        %v11455 = vadd.f32 %v11436, %v11454
        %v11456 = vpop.f32.mrf.mxu0
        %v11457 = vadd.f32 %v11438, %v11456
        %11458 = vdwg.mxu0
        %11459 = vmatpush.bf16.msra.mxu0 %v11264
        %11460 = vmatpush.bf16.msra.mxu0 %v11262
        %11461 = vmatpush.bf16.msra.mxu0 %v11260
        %11462 = vmatpush.bf16.msra.mxu0 %v11258
        %11463 = vmatpush.bf16.msra.mxu0 %v11256
        %11464 = vmatpush.bf16.msra.mxu0 %v11254
        %11465 = vmatpush.bf16.msra.mxu0 %v11252
        %11466 = vmatpush.bf16.msra.mxu0 %v11250
        %11467 = vmatmul.bf16.gmra.mxu0 %v11011
        %v11468 = vpop.f32.mrf.mxu0
        %v11469 = vadd.f32 %v11450, %v11468
        %v11470 = vpop.f32.mrf.mxu0
        %v11471 = vadd.f32 %v11452, %v11470
        %11472 = vmatmul.bf16.gmra.mxu0 %v11015
        %v11473 = vpop.f32.mrf.mxu0
        %v11474 = vadd.f32 %v11455, %v11473
        %v11475 = vpop.f32.mrf.mxu0
        %v11476 = vadd.f32 %v11457, %v11475
        %11477 = vdwg.mxu0
        %11478 = vmatpush.bf16.msra.mxu0 %v11280
        %11479 = vmatpush.bf16.msra.mxu0 %v11278
        %11480 = vmatpush.bf16.msra.mxu0 %v11276
        %11481 = vmatpush.bf16.msra.mxu0 %v11274
        %11482 = vmatpush.bf16.msra.mxu0 %v11272
        %11483 = vmatpush.bf16.msra.mxu0 %v11270
        %11484 = vmatpush.bf16.msra.mxu0 %v11268
        %11485 = vmatpush.bf16.msra.mxu0 %v11266
        %11486 = vmatmul.bf16.gmra.mxu0 %v11012
        %v11487 = vpop.f32.mrf.mxu0
        %v11488 = vadd.f32 %v11469, %v11487
        %v11489 = vpop.f32.mrf.mxu0
        %v11490 = vadd.f32 %v11471, %v11489
        %11491 = vmatmul.bf16.gmra.mxu0 %v11016
        %v11492 = vpop.f32.mrf.mxu0
        %v11493 = vadd.f32 %v11474, %v11492
        %v11494 = vpop.f32.mrf.mxu0
        %v11495 = vadd.f32 %v11476, %v11494
        %11496 = vdwg.mxu0
        %v11497 = vadd.f32 %v10835, %v11412
        %v11498 = vadd.f32 %v10911, %v11488
        %v11499 = vadd.f32 %v10837, %v11414
        %v11500 = vadd.f32 %v10913, %v11490
        %v11501 = vadd.f32 %v10840, %v11417
        %v11502 = vadd.f32 %v10916, %v11493
        %v11503 = vadd.f32 %v10842, %v11419
        %v11504 = vadd.f32 %v10918, %v11495
        %s11505 = scalar_lea.vmem [#allocation2], 1536
        %v11506 = vld [vmem:[%s11505] sm:$0xff]
        %v11507 = vld [vmem:[%s11505 + $0x8] sm:$0xff]
        %v11508 = vld [vmem:[%s11505 + $0x10] sm:$0xff]
        %v11509 = vld [vmem:[%s11505 + $0x18] sm:$0xff]
        %v11510 = vld [vmem:[%s11505 + $0x20] sm:$0xff]
        %v11511 = vld [vmem:[%s11505 + $0x28] sm:$0xff]
        %v11512 = vld [vmem:[%s11505 + $0x30] sm:$0xff]
        %v11513 = vld [vmem:[%s11505 + $0x38] sm:$0xff]
        %v11514 = vld [vmem:[%s11505 + $0x40] sm:$0xff]
        %v11515 = vld [vmem:[%s11505 + $0x48] sm:$0xff]
        %v11516 = vld [vmem:[%s11505 + $0x50] sm:$0xff]
        %v11517 = vld [vmem:[%s11505 + $0x58] sm:$0xff]
        %v11518 = vld [vmem:[%s11505 + $0x60] sm:$0xff]
        %v11519 = vld [vmem:[%s11505 + $0x68] sm:$0xff]
        %v11520 = vld [vmem:[%s11505 + $0x70] sm:$0xff]
        %v11521 = vld [vmem:[%s11505 + $0x78] sm:$0xff]
        %v11522 = vld [vmem:[%s11505 + $0x80] sm:$0xff]
        %v11523 = vld [vmem:[%s11505 + $0x88] sm:$0xff]
        %v11524 = vld [vmem:[%s11505 + $0x90] sm:$0xff]
        %v11525 = vld [vmem:[%s11505 + $0x98] sm:$0xff]
        %v11526 = vld [vmem:[%s11505 + $0xa0] sm:$0xff]
        %v11527 = vld [vmem:[%s11505 + $0xa8] sm:$0xff]
        %v11528 = vld [vmem:[%s11505 + $0xb0] sm:$0xff]
        %v11529 = vld [vmem:[%s11505 + $0xb8] sm:$0xff]
        %v11530 = vld [vmem:[%s11505 + $0xc0] sm:$0xff]
        %v11531 = vld [vmem:[%s11505 + $0xc8] sm:$0xff]
        %v11532 = vld [vmem:[%s11505 + $0xd0] sm:$0xff]
        %v11533 = vld [vmem:[%s11505 + $0xd8] sm:$0xff]
        %v11534 = vld [vmem:[%s11505 + $0xe0] sm:$0xff]
        %v11535 = vld [vmem:[%s11505 + $0xe8] sm:$0xff]
        %v11536 = vld [vmem:[%s11505 + $0xf0] sm:$0xff]
        %v11537 = vld [vmem:[%s11505 + $0xf8] sm:$0xff]
        %v11538 = vld [vmem:[%s11505 + $0x100] sm:$0xff]
        %v11539 = vld [vmem:[%s11505 + $0x108] sm:$0xff]
        %v11540 = vld [vmem:[%s11505 + $0x110] sm:$0xff]
        %v11541 = vld [vmem:[%s11505 + $0x118] sm:$0xff]
        %v11542 = vld [vmem:[%s11505 + $0x120] sm:$0xff]
        %v11543 = vld [vmem:[%s11505 + $0x128] sm:$0xff]
        %v11544 = vld [vmem:[%s11505 + $0x130] sm:$0xff]
        %v11545 = vld [vmem:[%s11505 + $0x138] sm:$0xff]
        %v11546 = vld [vmem:[%s11505 + $0x140] sm:$0xff]
        %v11547 = vld [vmem:[%s11505 + $0x148] sm:$0xff]
        %v11548 = vld [vmem:[%s11505 + $0x150] sm:$0xff]
        %v11549 = vld [vmem:[%s11505 + $0x158] sm:$0xff]
        %v11550 = vld [vmem:[%s11505 + $0x160] sm:$0xff]
        %v11551 = vld [vmem:[%s11505 + $0x168] sm:$0xff]
        %v11552 = vld [vmem:[%s11505 + $0x170] sm:$0xff]
        %v11553 = vld [vmem:[%s11505 + $0x178] sm:$0xff]
        %v11554 = vld [vmem:[%s11505 + $0x180] sm:$0xff]
        %v11555 = vld [vmem:[%s11505 + $0x188] sm:$0xff]
        %v11556 = vld [vmem:[%s11505 + $0x190] sm:$0xff]
        %v11557 = vld [vmem:[%s11505 + $0x198] sm:$0xff]
        %v11558 = vld [vmem:[%s11505 + $0x1a0] sm:$0xff]
        %v11559 = vld [vmem:[%s11505 + $0x1a8] sm:$0xff]
        %v11560 = vld [vmem:[%s11505 + $0x1b0] sm:$0xff]
        %v11561 = vld [vmem:[%s11505 + $0x1b8] sm:$0xff]
        %v11562 = vld [vmem:[%s11505 + $0x1c0] sm:$0xff]
        %v11563 = vld [vmem:[%s11505 + $0x1c8] sm:$0xff]
        %v11564 = vld [vmem:[%s11505 + $0x1d0] sm:$0xff]
        %v11565 = vld [vmem:[%s11505 + $0x1d8] sm:$0xff]
        %v11566 = vld [vmem:[%s11505 + $0x1e0] sm:$0xff]
        %v11567 = vld [vmem:[%s11505 + $0x1e8] sm:$0xff]
        %v11568 = vld [vmem:[%s11505 + $0x1f0] sm:$0xff]
        %v11569 = vld [vmem:[%s11505 + $0x1f8] sm:$0xff]
        %v11578 = vunpack.c.l.b16 %v9759
        %v11579 = vunpack.c.h.b16 %v9759
        %v11580 = vunpack.c.l.b16 %v9760
        %v11581 = vunpack.c.h.b16 %v9760
        %v11582 = vunpack.c.l.b16 %v9761
        %v11583 = vunpack.c.h.b16 %v9761
        %v11584 = vunpack.c.l.b16 %v9762
        %v11585 = vunpack.c.h.b16 %v9762
        %v11586 = vunpack.c.l.b16 %v9763
        %v11587 = vunpack.c.h.b16 %v9763
        %v11588 = vunpack.c.l.b16 %v9764
        %v11589 = vunpack.c.h.b16 %v9764
        %v11590 = vunpack.c.l.b16 %v9765
        %v11591 = vunpack.c.h.b16 %v9765
        %v11592 = vunpack.c.l.b16 %v9766
        %v11593 = vunpack.c.h.b16 %v9766
        %v11594 = vpack.c.b16 %v11582, %v11578
        %v11595 = vpack.c.b16 %v11583, %v11579
        %v11596 = vpack.c.b16 %v11584, %v11580
        %v11597 = vpack.c.b16 %v11585, %v11581
        %v11598 = vpack.c.b16 %v11590, %v11586
        %v11599 = vpack.c.b16 %v11591, %v11587
        %v11600 = vpack.c.b16 %v11592, %v11588
        %v11601 = vpack.c.b16 %v11593, %v11589
        %v11674 = vunpack.c.l.b16 %v11506
        %v11675 = vunpack.c.h.b16 %v11506
        %v11676 = vunpack.c.l.b16 %v11507
        %v11677 = vunpack.c.h.b16 %v11507
        %v11678 = vunpack.c.l.b16 %v11508
        %v11679 = vunpack.c.h.b16 %v11508
        %v11680 = vunpack.c.l.b16 %v11509
        %v11681 = vunpack.c.h.b16 %v11509
        %v11682 = vunpack.c.l.b16 %v11510
        %v11683 = vunpack.c.h.b16 %v11510
        %v11684 = vunpack.c.l.b16 %v11511
        %v11685 = vunpack.c.h.b16 %v11511
        %v11686 = vunpack.c.l.b16 %v11512
        %v11687 = vunpack.c.h.b16 %v11512
        %v11688 = vunpack.c.l.b16 %v11513
        %v11689 = vunpack.c.h.b16 %v11513
        %v11690 = vunpack.c.l.b16 %v11514
        %v11691 = vunpack.c.h.b16 %v11514
        %v11692 = vunpack.c.l.b16 %v11515
        %v11693 = vunpack.c.h.b16 %v11515
        %v11694 = vunpack.c.l.b16 %v11516
        %v11695 = vunpack.c.h.b16 %v11516
        %v11696 = vunpack.c.l.b16 %v11517
        %v11697 = vunpack.c.h.b16 %v11517
        %v11698 = vunpack.c.l.b16 %v11518
        %v11699 = vunpack.c.h.b16 %v11518
        %v11700 = vunpack.c.l.b16 %v11519
        %v11701 = vunpack.c.h.b16 %v11519
        %v11702 = vunpack.c.l.b16 %v11520
        %v11703 = vunpack.c.h.b16 %v11520
        %v11704 = vunpack.c.l.b16 %v11521
        %v11705 = vunpack.c.h.b16 %v11521
        %v11706 = vunpack.c.l.b16 %v11522
        %v11707 = vunpack.c.h.b16 %v11522
        %v11708 = vunpack.c.l.b16 %v11523
        %v11709 = vunpack.c.h.b16 %v11523
        %v11710 = vunpack.c.l.b16 %v11524
        %v11711 = vunpack.c.h.b16 %v11524
        %v11712 = vunpack.c.l.b16 %v11525
        %v11713 = vunpack.c.h.b16 %v11525
        %v11714 = vunpack.c.l.b16 %v11526
        %v11715 = vunpack.c.h.b16 %v11526
        %v11716 = vunpack.c.l.b16 %v11527
        %v11717 = vunpack.c.h.b16 %v11527
        %v11718 = vunpack.c.l.b16 %v11528
        %v11719 = vunpack.c.h.b16 %v11528
        %v11720 = vunpack.c.l.b16 %v11529
        %v11721 = vunpack.c.h.b16 %v11529
        %v11722 = vunpack.c.l.b16 %v11530
        %v11723 = vunpack.c.h.b16 %v11530
        %v11724 = vunpack.c.l.b16 %v11531
        %v11725 = vunpack.c.h.b16 %v11531
        %v11726 = vunpack.c.l.b16 %v11532
        %v11727 = vunpack.c.h.b16 %v11532
        %v11728 = vunpack.c.l.b16 %v11533
        %v11729 = vunpack.c.h.b16 %v11533
        %v11730 = vunpack.c.l.b16 %v11534
        %v11731 = vunpack.c.h.b16 %v11534
        %v11732 = vunpack.c.l.b16 %v11535
        %v11733 = vunpack.c.h.b16 %v11535
        %v11734 = vunpack.c.l.b16 %v11536
        %v11735 = vunpack.c.h.b16 %v11536
        %v11736 = vunpack.c.l.b16 %v11537
        %v11737 = vunpack.c.h.b16 %v11537
        %v11738 = vunpack.c.l.b16 %v11538
        %v11739 = vunpack.c.h.b16 %v11538
        %v11740 = vunpack.c.l.b16 %v11539
        %v11741 = vunpack.c.h.b16 %v11539
        %v11742 = vunpack.c.l.b16 %v11540
        %v11743 = vunpack.c.h.b16 %v11540
        %v11744 = vunpack.c.l.b16 %v11541
        %v11745 = vunpack.c.h.b16 %v11541
        %v11746 = vunpack.c.l.b16 %v11542
        %v11747 = vunpack.c.h.b16 %v11542
        %v11748 = vunpack.c.l.b16 %v11543
        %v11749 = vunpack.c.h.b16 %v11543
        %v11750 = vunpack.c.l.b16 %v11544
        %v11751 = vunpack.c.h.b16 %v11544
        %v11752 = vunpack.c.l.b16 %v11545
        %v11753 = vunpack.c.h.b16 %v11545
        %v11754 = vunpack.c.l.b16 %v11546
        %v11755 = vunpack.c.h.b16 %v11546
        %v11756 = vunpack.c.l.b16 %v11547
        %v11757 = vunpack.c.h.b16 %v11547
        %v11758 = vunpack.c.l.b16 %v11548
        %v11759 = vunpack.c.h.b16 %v11548
        %v11760 = vunpack.c.l.b16 %v11549
        %v11761 = vunpack.c.h.b16 %v11549
        %v11762 = vunpack.c.l.b16 %v11550
        %v11763 = vunpack.c.h.b16 %v11550
        %v11764 = vunpack.c.l.b16 %v11551
        %v11765 = vunpack.c.h.b16 %v11551
        %v11766 = vunpack.c.l.b16 %v11552
        %v11767 = vunpack.c.h.b16 %v11552
        %v11768 = vunpack.c.l.b16 %v11553
        %v11769 = vunpack.c.h.b16 %v11553
        %v11770 = vunpack.c.l.b16 %v11554
        %v11771 = vunpack.c.h.b16 %v11554
        %v11772 = vunpack.c.l.b16 %v11555
        %v11773 = vunpack.c.h.b16 %v11555
        %v11774 = vunpack.c.l.b16 %v11556
        %v11775 = vunpack.c.h.b16 %v11556
        %v11776 = vunpack.c.l.b16 %v11557
        %v11777 = vunpack.c.h.b16 %v11557
        %v11778 = vunpack.c.l.b16 %v11558
        %v11779 = vunpack.c.h.b16 %v11558
        %v11780 = vunpack.c.l.b16 %v11559
        %v11781 = vunpack.c.h.b16 %v11559
        %v11782 = vunpack.c.l.b16 %v11560
        %v11783 = vunpack.c.h.b16 %v11560
        %v11784 = vunpack.c.l.b16 %v11561
        %v11785 = vunpack.c.h.b16 %v11561
        %v11786 = vunpack.c.l.b16 %v11562
        %v11787 = vunpack.c.h.b16 %v11562
        %v11788 = vunpack.c.l.b16 %v11563
        %v11789 = vunpack.c.h.b16 %v11563
        %v11790 = vunpack.c.l.b16 %v11564
        %v11791 = vunpack.c.h.b16 %v11564
        %v11792 = vunpack.c.l.b16 %v11565
        %v11793 = vunpack.c.h.b16 %v11565
        %v11794 = vunpack.c.l.b16 %v11566
        %v11795 = vunpack.c.h.b16 %v11566
        %v11796 = vunpack.c.l.b16 %v11567
        %v11797 = vunpack.c.h.b16 %v11567
        %v11798 = vunpack.c.l.b16 %v11568
        %v11799 = vunpack.c.h.b16 %v11568
        %v11800 = vunpack.c.l.b16 %v11569
        %v11801 = vunpack.c.h.b16 %v11569
        %v11802 = vpack.c.b16 %v11676, %v11674
        %v11803 = vpack.c.b16 %v11677, %v11675
        %v11804 = vpack.c.b16 %v11680, %v11678
        %v11805 = vpack.c.b16 %v11681, %v11679
        %v11806 = vpack.c.b16 %v11684, %v11682
        %v11807 = vpack.c.b16 %v11685, %v11683
        %v11808 = vpack.c.b16 %v11688, %v11686
        %v11809 = vpack.c.b16 %v11689, %v11687
        %v11810 = vpack.c.b16 %v11692, %v11690
        %v11811 = vpack.c.b16 %v11693, %v11691
        %v11812 = vpack.c.b16 %v11696, %v11694
        %v11813 = vpack.c.b16 %v11697, %v11695
        %v11814 = vpack.c.b16 %v11700, %v11698
        %v11815 = vpack.c.b16 %v11701, %v11699
        %v11816 = vpack.c.b16 %v11704, %v11702
        %v11817 = vpack.c.b16 %v11705, %v11703
        %v11818 = vpack.c.b16 %v11708, %v11706
        %v11819 = vpack.c.b16 %v11709, %v11707
        %v11820 = vpack.c.b16 %v11712, %v11710
        %v11821 = vpack.c.b16 %v11713, %v11711
        %v11822 = vpack.c.b16 %v11716, %v11714
        %v11823 = vpack.c.b16 %v11717, %v11715
        %v11824 = vpack.c.b16 %v11720, %v11718
        %v11825 = vpack.c.b16 %v11721, %v11719
        %v11826 = vpack.c.b16 %v11724, %v11722
        %v11827 = vpack.c.b16 %v11725, %v11723
        %v11828 = vpack.c.b16 %v11728, %v11726
        %v11829 = vpack.c.b16 %v11729, %v11727
        %v11830 = vpack.c.b16 %v11732, %v11730
        %v11831 = vpack.c.b16 %v11733, %v11731
        %v11832 = vpack.c.b16 %v11736, %v11734
        %v11833 = vpack.c.b16 %v11737, %v11735
        %v11834 = vpack.c.b16 %v11740, %v11738
        %v11835 = vpack.c.b16 %v11741, %v11739
        %v11836 = vpack.c.b16 %v11744, %v11742
        %v11837 = vpack.c.b16 %v11745, %v11743
        %v11838 = vpack.c.b16 %v11748, %v11746
        %v11839 = vpack.c.b16 %v11749, %v11747
        %v11840 = vpack.c.b16 %v11752, %v11750
        %v11841 = vpack.c.b16 %v11753, %v11751
        %v11842 = vpack.c.b16 %v11756, %v11754
        %v11843 = vpack.c.b16 %v11757, %v11755
        %v11844 = vpack.c.b16 %v11760, %v11758
        %v11845 = vpack.c.b16 %v11761, %v11759
        %v11846 = vpack.c.b16 %v11764, %v11762
        %v11847 = vpack.c.b16 %v11765, %v11763
        %v11848 = vpack.c.b16 %v11768, %v11766
        %v11849 = vpack.c.b16 %v11769, %v11767
        %v11850 = vpack.c.b16 %v11772, %v11770
        %v11851 = vpack.c.b16 %v11773, %v11771
        %v11852 = vpack.c.b16 %v11776, %v11774
        %v11853 = vpack.c.b16 %v11777, %v11775
        %v11854 = vpack.c.b16 %v11780, %v11778
        %v11855 = vpack.c.b16 %v11781, %v11779
        %v11856 = vpack.c.b16 %v11784, %v11782
        %v11857 = vpack.c.b16 %v11785, %v11783
        %v11858 = vpack.c.b16 %v11788, %v11786
        %v11859 = vpack.c.b16 %v11789, %v11787
        %v11860 = vpack.c.b16 %v11792, %v11790
        %v11861 = vpack.c.b16 %v11793, %v11791
        %v11862 = vpack.c.b16 %v11796, %v11794
        %v11863 = vpack.c.b16 %v11797, %v11795
        %v11864 = vpack.c.b16 %v11800, %v11798
        %v11865 = vpack.c.b16 %v11801, %v11799
        %11930 = vmatpush.bf16.msra.mxu0 %v11816
        %11931 = vmatpush.bf16.msra.mxu0 %v11814
        %11932 = vmatpush.bf16.msra.mxu0 %v11812
        %11933 = vmatpush.bf16.msra.mxu0 %v11810
        %11934 = vmatpush.bf16.msra.mxu0 %v11808
        %11935 = vmatpush.bf16.msra.mxu0 %v11806
        %11936 = vmatpush.bf16.msra.mxu0 %v11804
        %11937 = vmatpush.bf16.msra.mxu0 %v11802
        %11938 = vmatmul.bf16.gmra.mxu0 %v11594
        %v11939 = vpop.f32.mrf.mxu0
        %v11940 = vadd.f32 0.0, %v11939
        %v11941 = vpop.f32.mrf.mxu0
        %v11942 = vadd.f32 0.0, %v11941
        %11943 = vmatmul.bf16.gmra.mxu0 %v11598
        %v11944 = vpop.f32.mrf.mxu0
        %v11945 = vadd.f32 0.0, %v11944
        %v11946 = vpop.f32.mrf.mxu0
        %v11947 = vadd.f32 0.0, %v11946
        %11948 = vdwg.mxu0
        %11949 = vmatpush.bf16.msra.mxu0 %v11832
        %11950 = vmatpush.bf16.msra.mxu0 %v11830
        %11951 = vmatpush.bf16.msra.mxu0 %v11828
        %11952 = vmatpush.bf16.msra.mxu0 %v11826
        %11953 = vmatpush.bf16.msra.mxu0 %v11824
        %11954 = vmatpush.bf16.msra.mxu0 %v11822
        %11955 = vmatpush.bf16.msra.mxu0 %v11820
        %11956 = vmatpush.bf16.msra.mxu0 %v11818
        %11957 = vmatmul.bf16.gmra.mxu0 %v11595
        %v11958 = vpop.f32.mrf.mxu0
        %v11959 = vadd.f32 %v11940, %v11958
        %v11960 = vpop.f32.mrf.mxu0
        %v11961 = vadd.f32 %v11942, %v11960
        %11962 = vmatmul.bf16.gmra.mxu0 %v11599
        %v11963 = vpop.f32.mrf.mxu0
        %v11964 = vadd.f32 %v11945, %v11963
        %v11965 = vpop.f32.mrf.mxu0
        %v11966 = vadd.f32 %v11947, %v11965
        %11967 = vdwg.mxu0
        %11968 = vmatpush.bf16.msra.mxu0 %v11848
        %11969 = vmatpush.bf16.msra.mxu0 %v11846
        %11970 = vmatpush.bf16.msra.mxu0 %v11844
        %11971 = vmatpush.bf16.msra.mxu0 %v11842
        %11972 = vmatpush.bf16.msra.mxu0 %v11840
        %11973 = vmatpush.bf16.msra.mxu0 %v11838
        %11974 = vmatpush.bf16.msra.mxu0 %v11836
        %11975 = vmatpush.bf16.msra.mxu0 %v11834
        %11976 = vmatmul.bf16.gmra.mxu0 %v11596
        %v11977 = vpop.f32.mrf.mxu0
        %v11978 = vadd.f32 %v11959, %v11977
        %v11979 = vpop.f32.mrf.mxu0
        %v11980 = vadd.f32 %v11961, %v11979
        %11981 = vmatmul.bf16.gmra.mxu0 %v11600
        %v11982 = vpop.f32.mrf.mxu0
        %v11983 = vadd.f32 %v11964, %v11982
        %v11984 = vpop.f32.mrf.mxu0
        %v11985 = vadd.f32 %v11966, %v11984
        %11986 = vdwg.mxu0
        %11987 = vmatpush.bf16.msra.mxu0 %v11864
        %11988 = vmatpush.bf16.msra.mxu0 %v11862
        %11989 = vmatpush.bf16.msra.mxu0 %v11860
        %11990 = vmatpush.bf16.msra.mxu0 %v11858
        %11991 = vmatpush.bf16.msra.mxu0 %v11856
        %11992 = vmatpush.bf16.msra.mxu0 %v11854
        %11993 = vmatpush.bf16.msra.mxu0 %v11852
        %11994 = vmatpush.bf16.msra.mxu0 %v11850
        %11995 = vmatmul.bf16.gmra.mxu0 %v11597
        %v11996 = vpop.f32.mrf.mxu0
        %v11997 = vadd.f32 %v11978, %v11996
        %v11998 = vpop.f32.mrf.mxu0
        %v11999 = vadd.f32 %v11980, %v11998
        %12000 = vmatmul.bf16.gmra.mxu0 %v11601
        %v12001 = vpop.f32.mrf.mxu0
        %v12002 = vadd.f32 %v11983, %v12001
        %v12003 = vpop.f32.mrf.mxu0
        %v12004 = vadd.f32 %v11985, %v12003
        %12005 = vdwg.mxu0
        %12006 = vmatpush.bf16.msra.mxu0 %v11817
        %12007 = vmatpush.bf16.msra.mxu0 %v11815
        %12008 = vmatpush.bf16.msra.mxu0 %v11813
        %12009 = vmatpush.bf16.msra.mxu0 %v11811
        %12010 = vmatpush.bf16.msra.mxu0 %v11809
        %12011 = vmatpush.bf16.msra.mxu0 %v11807
        %12012 = vmatpush.bf16.msra.mxu0 %v11805
        %12013 = vmatpush.bf16.msra.mxu0 %v11803
        %12014 = vmatmul.bf16.gmra.mxu0 %v11594
        %v12015 = vpop.f32.mrf.mxu0
        %v12016 = vadd.f32 0.0, %v12015
        %v12017 = vpop.f32.mrf.mxu0
        %v12018 = vadd.f32 0.0, %v12017
        %12019 = vmatmul.bf16.gmra.mxu0 %v11598
        %v12020 = vpop.f32.mrf.mxu0
        %v12021 = vadd.f32 0.0, %v12020
        %v12022 = vpop.f32.mrf.mxu0
        %v12023 = vadd.f32 0.0, %v12022
        %12024 = vdwg.mxu0
        %12025 = vmatpush.bf16.msra.mxu0 %v11833
        %12026 = vmatpush.bf16.msra.mxu0 %v11831
        %12027 = vmatpush.bf16.msra.mxu0 %v11829
        %12028 = vmatpush.bf16.msra.mxu0 %v11827
        %12029 = vmatpush.bf16.msra.mxu0 %v11825
        %12030 = vmatpush.bf16.msra.mxu0 %v11823
        %12031 = vmatpush.bf16.msra.mxu0 %v11821
        %12032 = vmatpush.bf16.msra.mxu0 %v11819
        %12033 = vmatmul.bf16.gmra.mxu0 %v11595
        %v12034 = vpop.f32.mrf.mxu0
        %v12035 = vadd.f32 %v12016, %v12034
        %v12036 = vpop.f32.mrf.mxu0
        %v12037 = vadd.f32 %v12018, %v12036
        %12038 = vmatmul.bf16.gmra.mxu0 %v11599
        %v12039 = vpop.f32.mrf.mxu0
        %v12040 = vadd.f32 %v12021, %v12039
        %v12041 = vpop.f32.mrf.mxu0
        %v12042 = vadd.f32 %v12023, %v12041
        %12043 = vdwg.mxu0
        %12044 = vmatpush.bf16.msra.mxu0 %v11849
        %12045 = vmatpush.bf16.msra.mxu0 %v11847
        %12046 = vmatpush.bf16.msra.mxu0 %v11845
        %12047 = vmatpush.bf16.msra.mxu0 %v11843
        %12048 = vmatpush.bf16.msra.mxu0 %v11841
        %12049 = vmatpush.bf16.msra.mxu0 %v11839
        %12050 = vmatpush.bf16.msra.mxu0 %v11837
        %12051 = vmatpush.bf16.msra.mxu0 %v11835
        %12052 = vmatmul.bf16.gmra.mxu0 %v11596
        %v12053 = vpop.f32.mrf.mxu0
        %v12054 = vadd.f32 %v12035, %v12053
        %v12055 = vpop.f32.mrf.mxu0
        %v12056 = vadd.f32 %v12037, %v12055
        %12057 = vmatmul.bf16.gmra.mxu0 %v11600
        %v12058 = vpop.f32.mrf.mxu0
        %v12059 = vadd.f32 %v12040, %v12058
        %v12060 = vpop.f32.mrf.mxu0
        %v12061 = vadd.f32 %v12042, %v12060
        %12062 = vdwg.mxu0
        %12063 = vmatpush.bf16.msra.mxu0 %v11865
        %12064 = vmatpush.bf16.msra.mxu0 %v11863
        %12065 = vmatpush.bf16.msra.mxu0 %v11861
        %12066 = vmatpush.bf16.msra.mxu0 %v11859
        %12067 = vmatpush.bf16.msra.mxu0 %v11857
        %12068 = vmatpush.bf16.msra.mxu0 %v11855
        %12069 = vmatpush.bf16.msra.mxu0 %v11853
        %12070 = vmatpush.bf16.msra.mxu0 %v11851
        %12071 = vmatmul.bf16.gmra.mxu0 %v11597
        %v12072 = vpop.f32.mrf.mxu0
        %v12073 = vadd.f32 %v12054, %v12072
        %v12074 = vpop.f32.mrf.mxu0
        %v12075 = vadd.f32 %v12056, %v12074
        %12076 = vmatmul.bf16.gmra.mxu0 %v11601
        %v12077 = vpop.f32.mrf.mxu0
        %v12078 = vadd.f32 %v12059, %v12077
        %v12079 = vpop.f32.mrf.mxu0
        %v12080 = vadd.f32 %v12061, %v12079
        %12081 = vdwg.mxu0
        %v12082 = vadd.f32 %v11497, %v11997
        %v12083 = vadd.f32 %v11498, %v12073
        %v12084 = vadd.f32 %v11499, %v11999
        %v12085 = vadd.f32 %v11500, %v12075
        %v12086 = vadd.f32 %v11501, %v12002
        %v12087 = vadd.f32 %v11502, %v12078
        %v12088 = vadd.f32 %v11503, %v12004
        %v12089 = vadd.f32 %v11504, %v12080
        %v12090 = vld [vmem:[%s9] sm:$0x3]
        %v12092 = vperm.slane %v12090, 0
        %v12093 = vperm.slane %v12090, 1
        %v12096 = vadd.f32 %v12082, %v12092
        %v12097 = vadd.f32 %v12083, %v12093
        %v12098 = vadd.f32 %v12084, %v12092
        %v12099 = vadd.f32 %v12085, %v12093
        %v12100 = vadd.f32 %v12086, %v12092
        %v12101 = vadd.f32 %v12087, %v12093
        %v12102 = vadd.f32 %v12088, %v12092
        %v12103 = vadd.f32 %v12089, %v12093
        %v12104 = vmax.f32 %v12096, 0.0
        %v12105 = vmax.f32 %v12097, 0.0
        %v12106 = vmax.f32 %v12098, 0.0
        %v12107 = vmax.f32 %v12099, 0.0
        %v12108 = vmax.f32 %v12100, 0.0
        %v12109 = vmax.f32 %v12101, 0.0
        %v12110 = vmax.f32 %v12102, 0.0
        %v12111 = vmax.f32 %v12103, 0.0
        %v12112 = vpack.c.bf16 %v12106, %v12104
        %v12113 = vpack.c.bf16 %v12107, %v12105
        %v12114 = vpack.c.bf16 %v12110, %v12108
        %v12115 = vpack.c.bf16 %v12111, %v12109
        %v12116 = vld [vmem:[#allocation4] sm:$0xf]
        %v12117 = vld [vmem:[#allocation4 + $0x4] sm:$0xf]
        %v12118 = vld [vmem:[#allocation4 + $0x8] sm:$0xf]
        %v12119 = vld [vmem:[#allocation4 + $0xc] sm:$0xf]
        %v12124 = vunpack.c.l.b16 %v12116
        %v12125 = vunpack.c.l.b16 %v12117
        %v12126 = vunpack.c.l.b16 %v12118
        %v12127 = vunpack.c.l.b16 %v12119
        %v12128 = vpack.c.b16 %v12125, %v12124
        %v12129 = vpack.c.b16 %v12127, %v12126
        %vm12130 = vcmask 261120
        %v12132 = vsel %vm12130, %v12128, 0
        %v12135 = vsel %vm12130, %v12129, 0
        %12137 = vmatpush.bf16.msra.mxu0 0
        %12138 = vmatpush.bf16.msra.mxu0 0
        %12139 = vmatpush.bf16.msra.mxu0 0
        %12140 = vmatpush.bf16.msra.mxu0 0
        %12141 = vmatpush.bf16.msra.mxu0 0
        %12142 = vmatpush.bf16.msra.mxu0 0
        %12143 = vmatpush.bf16.msra.mxu0 %v12114
        %12144 = vmatpush.bf16.msra.mxu0 %v12112
        %12145 = vmatmul.bf16.gmra.mxu0 %v12132
        %v12146 = vpop.f32.mrf.mxu0
        %v12147 = vadd.f32 0.0, %v12146
        %v12148 = vpop.f32.mrf.mxu0
        %v12149 = vadd.f32 0.0, %v12148
        %12150 = vmatmul.bf16.gmra.mxu0 %v12135
        %v12151 = vpop.f32.mrf.mxu0
        %v12152 = vadd.f32 0.0, %v12151
        %v12153 = vpop.f32.mrf.mxu0
        %v12154 = vadd.f32 0.0, %v12153
        %12155 = vdwg.mxu0
        %12156 = vmatpush.bf16.msra.mxu0 0
        %12157 = vmatpush.bf16.msra.mxu0 0
        %12158 = vmatpush.bf16.msra.mxu0 0
        %12159 = vmatpush.bf16.msra.mxu0 0
        %12160 = vmatpush.bf16.msra.mxu0 0
        %12161 = vmatpush.bf16.msra.mxu0 0
        %12162 = vmatpush.bf16.msra.mxu0 %v12115
        %12163 = vmatpush.bf16.msra.mxu0 %v12113
        %12164 = vmatmul.bf16.gmra.mxu0 %v12132
        %v12165 = vpop.f32.mrf.mxu0
        %v12166 = vadd.f32 0.0, %v12165
        %v12167 = vpop.f32.mrf.mxu0
        %v12168 = vadd.f32 0.0, %v12167
        %12169 = vmatmul.bf16.gmra.mxu0 %v12135
        %v12170 = vpop.f32.mrf.mxu0
        %v12171 = vadd.f32 0.0, %v12170
        %v12172 = vpop.f32.mrf.mxu0
        %v12173 = vadd.f32 0.0, %v12172
        %12174 = vdwg.mxu0
        %v12175 = vpack.c.bf16 %v12166, %v12147
        %v12176 = vpack.c.bf16 %v12168, %v12149
        %v12177 = vpack.c.bf16 %v12171, %v12152
        %v12178 = vpack.c.bf16 %v12173, %v12154
        %v12179 = vld [vmem:[#allocation6] sm:$0xf]
        %v12180 = vld [vmem:[#allocation6 + $0x4] sm:$0xf]
        %v12181 = vld [vmem:[#allocation6 + $0x8] sm:$0xf]
        %v12182 = vld [vmem:[#allocation6 + $0xc] sm:$0xf]
        %v12183 = vld [vmem:[#allocation6 + $0x10] sm:$0xf]
        %v12184 = vld [vmem:[#allocation6 + $0x14] sm:$0xf]
        %v12185 = vld [vmem:[#allocation6 + $0x18] sm:$0xf]
        %v12186 = vld [vmem:[#allocation6 + $0x1c] sm:$0xf]
        %v12187 = vld [vmem:[#allocation6 + $0x20] sm:$0xf]
        %v12188 = vld [vmem:[#allocation6 + $0x24] sm:$0xf]
        %v12189 = vld [vmem:[#allocation6 + $0x28] sm:$0xf]
        %v12190 = vld [vmem:[#allocation6 + $0x2c] sm:$0xf]
        %v12191 = vld [vmem:[#allocation6 + $0x30] sm:$0xf]
        %v12192 = vld [vmem:[#allocation6 + $0x34] sm:$0xf]
        %v12193 = vld [vmem:[#allocation6 + $0x38] sm:$0xf]
        %v12194 = vld [vmem:[#allocation6 + $0x3c] sm:$0xf]
        %v12195 = vld [vmem:[#allocation6 + $0x40] sm:$0xf]
        %v12196 = vld [vmem:[#allocation6 + $0x44] sm:$0xf]
        %v12197 = vld [vmem:[#allocation6 + $0x48] sm:$0xf]
        %v12198 = vld [vmem:[#allocation6 + $0x4c] sm:$0xf]
        %v12199 = vld [vmem:[#allocation6 + $0x50] sm:$0xf]
        %v12200 = vld [vmem:[#allocation6 + $0x54] sm:$0xf]
        %v12201 = vld [vmem:[#allocation6 + $0x58] sm:$0xf]
        %v12202 = vld [vmem:[#allocation6 + $0x5c] sm:$0xf]
        %v12203 = vld [vmem:[#allocation6 + $0x60] sm:$0xf]
        %v12204 = vld [vmem:[#allocation6 + $0x64] sm:$0xf]
        %v12205 = vld [vmem:[#allocation6 + $0x68] sm:$0xf]
        %v12206 = vld [vmem:[#allocation6 + $0x6c] sm:$0xf]
        %v12207 = vld [vmem:[#allocation6 + $0x70] sm:$0xf]
        %v12208 = vld [vmem:[#allocation6 + $0x74] sm:$0xf]
        %v12209 = vld [vmem:[#allocation6 + $0x78] sm:$0xf]
        %v12210 = vld [vmem:[#allocation6 + $0x7c] sm:$0xf]
        %s12211 = scalar_lea.vmem [#allocation6], 128
        %v12212 = vld [vmem:[%s12211] sm:$0xf]
        %v12213 = vld [vmem:[%s12211 + $0x4] sm:$0xf]
        %v12214 = vld [vmem:[%s12211 + $0x8] sm:$0xf]
        %v12215 = vld [vmem:[%s12211 + $0xc] sm:$0xf]
        %v12216 = vld [vmem:[%s12211 + $0x10] sm:$0xf]
        %v12217 = vld [vmem:[%s12211 + $0x14] sm:$0xf]
        %v12218 = vld [vmem:[%s12211 + $0x18] sm:$0xf]
        %v12219 = vld [vmem:[%s12211 + $0x1c] sm:$0xf]
        %v12220 = vld [vmem:[%s12211 + $0x20] sm:$0xf]
        %v12221 = vld [vmem:[%s12211 + $0x24] sm:$0xf]
        %v12222 = vld [vmem:[%s12211 + $0x28] sm:$0xf]
        %v12223 = vld [vmem:[%s12211 + $0x2c] sm:$0xf]
        %v12224 = vld [vmem:[%s12211 + $0x30] sm:$0xf]
        %v12225 = vld [vmem:[%s12211 + $0x34] sm:$0xf]
        %v12226 = vld [vmem:[%s12211 + $0x38] sm:$0xf]
        %v12227 = vld [vmem:[%s12211 + $0x3c] sm:$0xf]
        %v12228 = vld [vmem:[%s12211 + $0x40] sm:$0xf]
        %v12229 = vld [vmem:[%s12211 + $0x44] sm:$0xf]
        %v12230 = vld [vmem:[%s12211 + $0x48] sm:$0xf]
        %v12231 = vld [vmem:[%s12211 + $0x4c] sm:$0xf]
        %v12232 = vld [vmem:[%s12211 + $0x50] sm:$0xf]
        %v12233 = vld [vmem:[%s12211 + $0x54] sm:$0xf]
        %v12234 = vld [vmem:[%s12211 + $0x58] sm:$0xf]
        %v12235 = vld [vmem:[%s12211 + $0x5c] sm:$0xf]
        %v12236 = vld [vmem:[%s12211 + $0x60] sm:$0xf]
        %v12237 = vld [vmem:[%s12211 + $0x64] sm:$0xf]
        %v12238 = vld [vmem:[%s12211 + $0x68] sm:$0xf]
        %v12239 = vld [vmem:[%s12211 + $0x6c] sm:$0xf]
        %v12240 = vld [vmem:[%s12211 + $0x70] sm:$0xf]
        %v12241 = vld [vmem:[%s12211 + $0x74] sm:$0xf]
        %v12242 = vld [vmem:[%s12211 + $0x78] sm:$0xf]
        %v12243 = vld [vmem:[%s12211 + $0x7c] sm:$0xf]
        %v12245 = vunpack.c.l.b16 %v12176
        %v12246 = vunpack.c.h.b16 %v12176
        %v12247 = vpack.c.b16 %v12245, %v12245
        %v12248 = vpack.c.b16 %v12246, %v12246
        %v12283 = vunpack.c.l.b16 %v12212
        %v12284 = vunpack.c.l.b16 %v12213
        %v12285 = vunpack.c.l.b16 %v12214
        %v12286 = vunpack.c.l.b16 %v12215
        %v12287 = vunpack.c.l.b16 %v12216
        %v12288 = vunpack.c.l.b16 %v12217
        %v12289 = vunpack.c.l.b16 %v12218
        %v12290 = vunpack.c.l.b16 %v12219
        %v12291 = vunpack.c.l.b16 %v12220
        %v12292 = vunpack.c.l.b16 %v12221
        %v12293 = vunpack.c.l.b16 %v12222
        %v12294 = vunpack.c.l.b16 %v12223
        %v12295 = vunpack.c.l.b16 %v12224
        %v12296 = vunpack.c.l.b16 %v12225
        %v12297 = vunpack.c.l.b16 %v12226
        %v12298 = vunpack.c.l.b16 %v12227
        %v12299 = vunpack.c.l.b16 %v12228
        %v12300 = vunpack.c.l.b16 %v12229
        %v12301 = vunpack.c.l.b16 %v12230
        %v12302 = vunpack.c.l.b16 %v12231
        %v12303 = vunpack.c.l.b16 %v12232
        %v12304 = vunpack.c.l.b16 %v12233
        %v12305 = vunpack.c.l.b16 %v12234
        %v12306 = vunpack.c.l.b16 %v12235
        %v12307 = vunpack.c.l.b16 %v12236
        %v12308 = vunpack.c.l.b16 %v12237
        %v12309 = vunpack.c.l.b16 %v12238
        %v12310 = vunpack.c.l.b16 %v12239
        %v12311 = vunpack.c.l.b16 %v12240
        %v12312 = vunpack.c.l.b16 %v12241
        %v12313 = vunpack.c.l.b16 %v12242
        %v12314 = vunpack.c.l.b16 %v12243
        %v12315 = vpack.c.b16 %v12284, %v12283
        %v12316 = vpack.c.b16 %v12286, %v12285
        %v12317 = vpack.c.b16 %v12288, %v12287
        %v12318 = vpack.c.b16 %v12290, %v12289
        %v12319 = vpack.c.b16 %v12292, %v12291
        %v12320 = vpack.c.b16 %v12294, %v12293
        %v12321 = vpack.c.b16 %v12296, %v12295
        %v12322 = vpack.c.b16 %v12298, %v12297
        %v12323 = vpack.c.b16 %v12300, %v12299
        %v12324 = vpack.c.b16 %v12302, %v12301
        %v12325 = vpack.c.b16 %v12304, %v12303
        %v12326 = vpack.c.b16 %v12306, %v12305
        %v12327 = vpack.c.b16 %v12308, %v12307
        %v12328 = vpack.c.b16 %v12310, %v12309
        %v12329 = vpack.c.b16 %v12312, %v12311
        %v12330 = vpack.c.b16 %v12314, %v12313
        %12347 = vmatpush.bf16.msra.mxu0 %v12322
        %12348 = vmatpush.bf16.msra.mxu0 %v12321
        %12349 = vmatpush.bf16.msra.mxu0 %v12320
        %12350 = vmatpush.bf16.msra.mxu0 %v12319
        %12351 = vmatpush.bf16.msra.mxu0 %v12318
        %12352 = vmatpush.bf16.msra.mxu0 %v12317
        %12353 = vmatpush.bf16.msra.mxu0 %v12316
        %12354 = vmatpush.bf16.msra.mxu0 %v12315
        %12355 = vmatmul.bf16.gmra.mxu0 %v12247
        %v12356 = vpop.f32.mrf.mxu0
        %v12357 = vadd.f32 0.0, %v12356
        %v12358 = vpop.f32.mrf.mxu0
        %12359 = vdwg.mxu0
        %12360 = vmatpush.bf16.msra.mxu0 %v12330
        %12361 = vmatpush.bf16.msra.mxu0 %v12329
        %12362 = vmatpush.bf16.msra.mxu0 %v12328
        %12363 = vmatpush.bf16.msra.mxu0 %v12327
        %12364 = vmatpush.bf16.msra.mxu0 %v12326
        %12365 = vmatpush.bf16.msra.mxu0 %v12325
        %12366 = vmatpush.bf16.msra.mxu0 %v12324
        %12367 = vmatpush.bf16.msra.mxu0 %v12323
        %12368 = vmatmul.bf16.gmra.mxu0 %v12248
        %v12369 = vpop.f32.mrf.mxu0
        %v12370 = vadd.f32 %v12357, %v12369
        %v12371 = vpop.f32.mrf.mxu0
        %12372 = vdwg.mxu0
        %v12374 = vunpack.c.l.b16 %v12175
        %v12375 = vunpack.c.h.b16 %v12175
        %v12376 = vpack.c.b16 %v12374, %v12374
        %v12377 = vpack.c.b16 %v12375, %v12375
        %v12412 = vunpack.c.l.b16 %v12179
        %v12413 = vunpack.c.l.b16 %v12180
        %v12414 = vunpack.c.l.b16 %v12181
        %v12415 = vunpack.c.l.b16 %v12182
        %v12416 = vunpack.c.l.b16 %v12183
        %v12417 = vunpack.c.l.b16 %v12184
        %v12418 = vunpack.c.l.b16 %v12185
        %v12419 = vunpack.c.l.b16 %v12186
        %v12420 = vunpack.c.l.b16 %v12187
        %v12421 = vunpack.c.l.b16 %v12188
        %v12422 = vunpack.c.l.b16 %v12189
        %v12423 = vunpack.c.l.b16 %v12190
        %v12424 = vunpack.c.l.b16 %v12191
        %v12425 = vunpack.c.l.b16 %v12192
        %v12426 = vunpack.c.l.b16 %v12193
        %v12427 = vunpack.c.l.b16 %v12194
        %v12428 = vunpack.c.l.b16 %v12195
        %v12429 = vunpack.c.l.b16 %v12196
        %v12430 = vunpack.c.l.b16 %v12197
        %v12431 = vunpack.c.l.b16 %v12198
        %v12432 = vunpack.c.l.b16 %v12199
        %v12433 = vunpack.c.l.b16 %v12200
        %v12434 = vunpack.c.l.b16 %v12201
        %v12435 = vunpack.c.l.b16 %v12202
        %v12436 = vunpack.c.l.b16 %v12203
        %v12437 = vunpack.c.l.b16 %v12204
        %v12438 = vunpack.c.l.b16 %v12205
        %v12439 = vunpack.c.l.b16 %v12206
        %v12440 = vunpack.c.l.b16 %v12207
        %v12441 = vunpack.c.l.b16 %v12208
        %v12442 = vunpack.c.l.b16 %v12209
        %v12443 = vunpack.c.l.b16 %v12210
        %v12444 = vpack.c.b16 %v12413, %v12412
        %v12445 = vpack.c.b16 %v12415, %v12414
        %v12446 = vpack.c.b16 %v12417, %v12416
        %v12447 = vpack.c.b16 %v12419, %v12418
        %v12448 = vpack.c.b16 %v12421, %v12420
        %v12449 = vpack.c.b16 %v12423, %v12422
        %v12450 = vpack.c.b16 %v12425, %v12424
        %v12451 = vpack.c.b16 %v12427, %v12426
        %v12452 = vpack.c.b16 %v12429, %v12428
        %v12453 = vpack.c.b16 %v12431, %v12430
        %v12454 = vpack.c.b16 %v12433, %v12432
        %v12455 = vpack.c.b16 %v12435, %v12434
        %v12456 = vpack.c.b16 %v12437, %v12436
        %v12457 = vpack.c.b16 %v12439, %v12438
        %v12458 = vpack.c.b16 %v12441, %v12440
        %v12459 = vpack.c.b16 %v12443, %v12442
        %12476 = vmatpush.bf16.msra.mxu0 %v12451
        %12477 = vmatpush.bf16.msra.mxu0 %v12450
        %12478 = vmatpush.bf16.msra.mxu0 %v12449
        %12479 = vmatpush.bf16.msra.mxu0 %v12448
        %12480 = vmatpush.bf16.msra.mxu0 %v12447
        %12481 = vmatpush.bf16.msra.mxu0 %v12446
        %12482 = vmatpush.bf16.msra.mxu0 %v12445
        %12483 = vmatpush.bf16.msra.mxu0 %v12444
        %12484 = vmatmul.bf16.gmra.mxu0 %v12376
        %v12485 = vpop.f32.mrf.mxu0
        %v12486 = vadd.f32 %v12370, %v12485
        %v12487 = vpop.f32.mrf.mxu0
        %12488 = vdwg.mxu0
        %12489 = vmatpush.bf16.msra.mxu0 %v12459
        %12490 = vmatpush.bf16.msra.mxu0 %v12458
        %12491 = vmatpush.bf16.msra.mxu0 %v12457
        %12492 = vmatpush.bf16.msra.mxu0 %v12456
        %12493 = vmatpush.bf16.msra.mxu0 %v12455
        %12494 = vmatpush.bf16.msra.mxu0 %v12454
        %12495 = vmatpush.bf16.msra.mxu0 %v12453
        %12496 = vmatpush.bf16.msra.mxu0 %v12452
        %12497 = vmatmul.bf16.gmra.mxu0 %v12377
        %v12498 = vpop.f32.mrf.mxu0
        %v12499 = vadd.f32 %v12486, %v12498
        %v12500 = vpop.f32.mrf.mxu0
        %12501 = vdwg.mxu0
        %s12502 = scalar_lea.vmem [#allocation6], 256
        %v12503 = vld [vmem:[%s12502] sm:$0xf]
        %v12504 = vld [vmem:[%s12502 + $0x4] sm:$0xf]
        %v12505 = vld [vmem:[%s12502 + $0x8] sm:$0xf]
        %v12506 = vld [vmem:[%s12502 + $0xc] sm:$0xf]
        %v12507 = vld [vmem:[%s12502 + $0x10] sm:$0xf]
        %v12508 = vld [vmem:[%s12502 + $0x14] sm:$0xf]
        %v12509 = vld [vmem:[%s12502 + $0x18] sm:$0xf]
        %v12510 = vld [vmem:[%s12502 + $0x1c] sm:$0xf]
        %v12511 = vld [vmem:[%s12502 + $0x20] sm:$0xf]
        %v12512 = vld [vmem:[%s12502 + $0x24] sm:$0xf]
        %v12513 = vld [vmem:[%s12502 + $0x28] sm:$0xf]
        %v12514 = vld [vmem:[%s12502 + $0x2c] sm:$0xf]
        %v12515 = vld [vmem:[%s12502 + $0x30] sm:$0xf]
        %v12516 = vld [vmem:[%s12502 + $0x34] sm:$0xf]
        %v12517 = vld [vmem:[%s12502 + $0x38] sm:$0xf]
        %v12518 = vld [vmem:[%s12502 + $0x3c] sm:$0xf]
        %v12519 = vld [vmem:[%s12502 + $0x40] sm:$0xf]
        %v12520 = vld [vmem:[%s12502 + $0x44] sm:$0xf]
        %v12521 = vld [vmem:[%s12502 + $0x48] sm:$0xf]
        %v12522 = vld [vmem:[%s12502 + $0x4c] sm:$0xf]
        %v12523 = vld [vmem:[%s12502 + $0x50] sm:$0xf]
        %v12524 = vld [vmem:[%s12502 + $0x54] sm:$0xf]
        %v12525 = vld [vmem:[%s12502 + $0x58] sm:$0xf]
        %v12526 = vld [vmem:[%s12502 + $0x5c] sm:$0xf]
        %v12527 = vld [vmem:[%s12502 + $0x60] sm:$0xf]
        %v12528 = vld [vmem:[%s12502 + $0x64] sm:$0xf]
        %v12529 = vld [vmem:[%s12502 + $0x68] sm:$0xf]
        %v12530 = vld [vmem:[%s12502 + $0x6c] sm:$0xf]
        %v12531 = vld [vmem:[%s12502 + $0x70] sm:$0xf]
        %v12532 = vld [vmem:[%s12502 + $0x74] sm:$0xf]
        %v12533 = vld [vmem:[%s12502 + $0x78] sm:$0xf]
        %v12534 = vld [vmem:[%s12502 + $0x7c] sm:$0xf]
        %v12536 = vunpack.c.l.b16 %v12177
        %v12537 = vunpack.c.h.b16 %v12177
        %v12538 = vpack.c.b16 %v12536, %v12536
        %v12539 = vpack.c.b16 %v12537, %v12537
        %v12574 = vunpack.c.l.b16 %v12503
        %v12575 = vunpack.c.l.b16 %v12504
        %v12576 = vunpack.c.l.b16 %v12505
        %v12577 = vunpack.c.l.b16 %v12506
        %v12578 = vunpack.c.l.b16 %v12507
        %v12579 = vunpack.c.l.b16 %v12508
        %v12580 = vunpack.c.l.b16 %v12509
        %v12581 = vunpack.c.l.b16 %v12510
        %v12582 = vunpack.c.l.b16 %v12511
        %v12583 = vunpack.c.l.b16 %v12512
        %v12584 = vunpack.c.l.b16 %v12513
        %v12585 = vunpack.c.l.b16 %v12514
        %v12586 = vunpack.c.l.b16 %v12515
        %v12587 = vunpack.c.l.b16 %v12516
        %v12588 = vunpack.c.l.b16 %v12517
        %v12589 = vunpack.c.l.b16 %v12518
        %v12590 = vunpack.c.l.b16 %v12519
        %v12591 = vunpack.c.l.b16 %v12520
        %v12592 = vunpack.c.l.b16 %v12521
        %v12593 = vunpack.c.l.b16 %v12522
        %v12594 = vunpack.c.l.b16 %v12523
        %v12595 = vunpack.c.l.b16 %v12524
        %v12596 = vunpack.c.l.b16 %v12525
        %v12597 = vunpack.c.l.b16 %v12526
        %v12598 = vunpack.c.l.b16 %v12527
        %v12599 = vunpack.c.l.b16 %v12528
        %v12600 = vunpack.c.l.b16 %v12529
        %v12601 = vunpack.c.l.b16 %v12530
        %v12602 = vunpack.c.l.b16 %v12531
        %v12603 = vunpack.c.l.b16 %v12532
        %v12604 = vunpack.c.l.b16 %v12533
        %v12605 = vunpack.c.l.b16 %v12534
        %v12606 = vpack.c.b16 %v12575, %v12574
        %v12607 = vpack.c.b16 %v12577, %v12576
        %v12608 = vpack.c.b16 %v12579, %v12578
        %v12609 = vpack.c.b16 %v12581, %v12580
        %v12610 = vpack.c.b16 %v12583, %v12582
        %v12611 = vpack.c.b16 %v12585, %v12584
        %v12612 = vpack.c.b16 %v12587, %v12586
        %v12613 = vpack.c.b16 %v12589, %v12588
        %v12614 = vpack.c.b16 %v12591, %v12590
        %v12615 = vpack.c.b16 %v12593, %v12592
        %v12616 = vpack.c.b16 %v12595, %v12594
        %v12617 = vpack.c.b16 %v12597, %v12596
        %v12618 = vpack.c.b16 %v12599, %v12598
        %v12619 = vpack.c.b16 %v12601, %v12600
        %v12620 = vpack.c.b16 %v12603, %v12602
        %v12621 = vpack.c.b16 %v12605, %v12604
        %12638 = vmatpush.bf16.msra.mxu0 %v12613
        %12639 = vmatpush.bf16.msra.mxu0 %v12612
        %12640 = vmatpush.bf16.msra.mxu0 %v12611
        %12641 = vmatpush.bf16.msra.mxu0 %v12610
        %12642 = vmatpush.bf16.msra.mxu0 %v12609
        %12643 = vmatpush.bf16.msra.mxu0 %v12608
        %12644 = vmatpush.bf16.msra.mxu0 %v12607
        %12645 = vmatpush.bf16.msra.mxu0 %v12606
        %12646 = vmatmul.bf16.gmra.mxu0 %v12538
        %v12647 = vpop.f32.mrf.mxu0
        %v12648 = vadd.f32 0.0, %v12647
        %v12649 = vpop.f32.mrf.mxu0
        %12650 = vdwg.mxu0
        %12651 = vmatpush.bf16.msra.mxu0 %v12621
        %12652 = vmatpush.bf16.msra.mxu0 %v12620
        %12653 = vmatpush.bf16.msra.mxu0 %v12619
        %12654 = vmatpush.bf16.msra.mxu0 %v12618
        %12655 = vmatpush.bf16.msra.mxu0 %v12617
        %12656 = vmatpush.bf16.msra.mxu0 %v12616
        %12657 = vmatpush.bf16.msra.mxu0 %v12615
        %12658 = vmatpush.bf16.msra.mxu0 %v12614
        %12659 = vmatmul.bf16.gmra.mxu0 %v12539
        %v12660 = vpop.f32.mrf.mxu0
        %v12661 = vadd.f32 %v12648, %v12660
        %v12662 = vpop.f32.mrf.mxu0
        %12663 = vdwg.mxu0
        %v12664 = vadd.f32 %v12499, %v12661
        %s12665 = scalar_lea.vmem [#allocation6], 384
        %v12666 = vld [vmem:[%s12665] sm:$0xf]
        %v12667 = vld [vmem:[%s12665 + $0x4] sm:$0xf]
        %v12668 = vld [vmem:[%s12665 + $0x8] sm:$0xf]
        %v12669 = vld [vmem:[%s12665 + $0xc] sm:$0xf]
        %v12670 = vld [vmem:[%s12665 + $0x10] sm:$0xf]
        %v12671 = vld [vmem:[%s12665 + $0x14] sm:$0xf]
        %v12672 = vld [vmem:[%s12665 + $0x18] sm:$0xf]
        %v12673 = vld [vmem:[%s12665 + $0x1c] sm:$0xf]
        %v12674 = vld [vmem:[%s12665 + $0x20] sm:$0xf]
        %v12675 = vld [vmem:[%s12665 + $0x24] sm:$0xf]
        %v12676 = vld [vmem:[%s12665 + $0x28] sm:$0xf]
        %v12677 = vld [vmem:[%s12665 + $0x2c] sm:$0xf]
        %v12678 = vld [vmem:[%s12665 + $0x30] sm:$0xf]
        %v12679 = vld [vmem:[%s12665 + $0x34] sm:$0xf]
        %v12680 = vld [vmem:[%s12665 + $0x38] sm:$0xf]
        %v12681 = vld [vmem:[%s12665 + $0x3c] sm:$0xf]
        %v12682 = vld [vmem:[%s12665 + $0x40] sm:$0xf]
        %v12683 = vld [vmem:[%s12665 + $0x44] sm:$0xf]
        %v12684 = vld [vmem:[%s12665 + $0x48] sm:$0xf]
        %v12685 = vld [vmem:[%s12665 + $0x4c] sm:$0xf]
        %v12686 = vld [vmem:[%s12665 + $0x50] sm:$0xf]
        %v12687 = vld [vmem:[%s12665 + $0x54] sm:$0xf]
        %v12688 = vld [vmem:[%s12665 + $0x58] sm:$0xf]
        %v12689 = vld [vmem:[%s12665 + $0x5c] sm:$0xf]
        %v12690 = vld [vmem:[%s12665 + $0x60] sm:$0xf]
        %v12691 = vld [vmem:[%s12665 + $0x64] sm:$0xf]
        %v12692 = vld [vmem:[%s12665 + $0x68] sm:$0xf]
        %v12693 = vld [vmem:[%s12665 + $0x6c] sm:$0xf]
        %v12694 = vld [vmem:[%s12665 + $0x70] sm:$0xf]
        %v12695 = vld [vmem:[%s12665 + $0x74] sm:$0xf]
        %v12696 = vld [vmem:[%s12665 + $0x78] sm:$0xf]
        %v12697 = vld [vmem:[%s12665 + $0x7c] sm:$0xf]
        %v12699 = vunpack.c.l.b16 %v12178
        %v12700 = vunpack.c.h.b16 %v12178
        %v12701 = vpack.c.b16 %v12699, %v12699
        %v12702 = vpack.c.b16 %v12700, %v12700
        %v12737 = vunpack.c.l.b16 %v12666
        %v12738 = vunpack.c.l.b16 %v12667
        %v12739 = vunpack.c.l.b16 %v12668
        %v12740 = vunpack.c.l.b16 %v12669
        %v12741 = vunpack.c.l.b16 %v12670
        %v12742 = vunpack.c.l.b16 %v12671
        %v12743 = vunpack.c.l.b16 %v12672
        %v12744 = vunpack.c.l.b16 %v12673
        %v12745 = vunpack.c.l.b16 %v12674
        %v12746 = vunpack.c.l.b16 %v12675
        %v12747 = vunpack.c.l.b16 %v12676
        %v12748 = vunpack.c.l.b16 %v12677
        %v12749 = vunpack.c.l.b16 %v12678
        %v12750 = vunpack.c.l.b16 %v12679
        %v12751 = vunpack.c.l.b16 %v12680
        %v12752 = vunpack.c.l.b16 %v12681
        %v12753 = vunpack.c.l.b16 %v12682
        %v12754 = vunpack.c.l.b16 %v12683
        %v12755 = vunpack.c.l.b16 %v12684
        %v12756 = vunpack.c.l.b16 %v12685
        %v12757 = vunpack.c.l.b16 %v12686
        %v12758 = vunpack.c.l.b16 %v12687
        %v12759 = vunpack.c.l.b16 %v12688
        %v12760 = vunpack.c.l.b16 %v12689
        %v12761 = vunpack.c.l.b16 %v12690
        %v12762 = vunpack.c.l.b16 %v12691
        %v12763 = vunpack.c.l.b16 %v12692
        %v12764 = vunpack.c.l.b16 %v12693
        %v12765 = vunpack.c.l.b16 %v12694
        %v12766 = vunpack.c.l.b16 %v12695
        %v12767 = vunpack.c.l.b16 %v12696
        %v12768 = vunpack.c.l.b16 %v12697
        %v12769 = vpack.c.b16 %v12738, %v12737
        %v12770 = vpack.c.b16 %v12740, %v12739
        %v12771 = vpack.c.b16 %v12742, %v12741
        %v12772 = vpack.c.b16 %v12744, %v12743
        %v12773 = vpack.c.b16 %v12746, %v12745
        %v12774 = vpack.c.b16 %v12748, %v12747
        %v12775 = vpack.c.b16 %v12750, %v12749
        %v12776 = vpack.c.b16 %v12752, %v12751
        %v12777 = vpack.c.b16 %v12754, %v12753
        %v12778 = vpack.c.b16 %v12756, %v12755
        %v12779 = vpack.c.b16 %v12758, %v12757
        %v12780 = vpack.c.b16 %v12760, %v12759
        %v12781 = vpack.c.b16 %v12762, %v12761
        %v12782 = vpack.c.b16 %v12764, %v12763
        %v12783 = vpack.c.b16 %v12766, %v12765
        %v12784 = vpack.c.b16 %v12768, %v12767
        %12801 = vmatpush.bf16.msra.mxu0 %v12776
        %12802 = vmatpush.bf16.msra.mxu0 %v12775
        %12803 = vmatpush.bf16.msra.mxu0 %v12774
        %12804 = vmatpush.bf16.msra.mxu0 %v12773
        %12805 = vmatpush.bf16.msra.mxu0 %v12772
        %12806 = vmatpush.bf16.msra.mxu0 %v12771
        %12807 = vmatpush.bf16.msra.mxu0 %v12770
        %12808 = vmatpush.bf16.msra.mxu0 %v12769
        %12809 = vmatmul.bf16.gmra.mxu0 %v12701
        %v12810 = vpop.f32.mrf.mxu0
        %v12811 = vadd.f32 0.0, %v12810
        %v12812 = vpop.f32.mrf.mxu0
        %12813 = vdwg.mxu0
        %12814 = vmatpush.bf16.msra.mxu0 %v12784
        %12815 = vmatpush.bf16.msra.mxu0 %v12783
        %12816 = vmatpush.bf16.msra.mxu0 %v12782
        %12817 = vmatpush.bf16.msra.mxu0 %v12781
        %12818 = vmatpush.bf16.msra.mxu0 %v12780
        %12819 = vmatpush.bf16.msra.mxu0 %v12779
        %12820 = vmatpush.bf16.msra.mxu0 %v12778
        %12821 = vmatpush.bf16.msra.mxu0 %v12777
        %12822 = vmatmul.bf16.gmra.mxu0 %v12702
        %v12823 = vpop.f32.mrf.mxu0
        %v12824 = vadd.f32 %v12811, %v12823
        %v12825 = vpop.f32.mrf.mxu0
        %12826 = vdwg.mxu0
        %v12827 = vadd.f32 %v12664, %v12824
        %v12828 = vld [vmem:[%s12] sm:$0x1]
        %v12830 = vperm.slane %v12828, 0
        %v12832 = vadd.f32 %v12827, %v12830
        %v12833 = vmax.f32 %v12832, 0.0
        %v12834 = vpack.c.bf16 %v12833, %v12833
        %v12835 = vld [vmem:[%s13] sm:$0xf]
        %v12836 = vld [vmem:[%s13 + $0x4] sm:$0xf]
        %v12837 = vld [vmem:[%s13 + $0x8] sm:$0xf]
        %v12838 = vld [vmem:[%s13 + $0xc] sm:$0xf]
        %v12839 = vld [vmem:[%s13 + $0x10] sm:$0xf]
        %v12840 = vld [vmem:[%s13 + $0x14] sm:$0xf]
        %v12841 = vld [vmem:[%s13 + $0x18] sm:$0xf]
        %v12842 = vld [vmem:[%s13 + $0x1c] sm:$0xf]
        %v12843 = vld [vmem:[%s13 + $0x20] sm:$0xf]
        %v12844 = vld [vmem:[%s13 + $0x24] sm:$0xf]
        %v12845 = vld [vmem:[%s13 + $0x28] sm:$0xf]
        %v12846 = vld [vmem:[%s13 + $0x2c] sm:$0xf]
        %v12847 = vld [vmem:[%s13 + $0x30] sm:$0xf]
        %v12848 = vld [vmem:[%s13 + $0x34] sm:$0xf]
        %v12849 = vld [vmem:[%s13 + $0x38] sm:$0xf]
        %v12850 = vld [vmem:[%s13 + $0x3c] sm:$0xf]
        %v12851 = vld [vmem:[%s14] sm:$0x1]
        %v12853 = vperm.slane %v12851, 0
        %v12871 = vunpack.c.l.b16 %v12835
        %v12872 = vunpack.c.l.b16 %v12836
        %v12873 = vunpack.c.l.b16 %v12837
        %v12874 = vunpack.c.l.b16 %v12838
        %v12875 = vunpack.c.l.b16 %v12839
        %v12876 = vunpack.c.l.b16 %v12840
        %v12877 = vunpack.c.l.b16 %v12841
        %v12878 = vunpack.c.l.b16 %v12842
        %v12879 = vunpack.c.l.b16 %v12843
        %v12880 = vunpack.c.l.b16 %v12844
        %v12881 = vunpack.c.l.b16 %v12845
        %v12882 = vunpack.c.l.b16 %v12846
        %v12883 = vunpack.c.l.b16 %v12847
        %v12884 = vunpack.c.l.b16 %v12848
        %v12885 = vunpack.c.l.b16 %v12849
        %v12886 = vunpack.c.l.b16 %v12850
        %v12887 = vpack.c.b16 %v12872, %v12871
        %v12888 = vpack.c.b16 %v12874, %v12873
        %v12889 = vpack.c.b16 %v12876, %v12875
        %v12890 = vpack.c.b16 %v12878, %v12877
        %v12891 = vpack.c.b16 %v12880, %v12879
        %v12892 = vpack.c.b16 %v12882, %v12881
        %v12893 = vpack.c.b16 %v12884, %v12883
        %v12894 = vpack.c.b16 %v12886, %v12885
        %12903 = vmatpush.bf16.msra.mxu0 %v12894
        %12904 = vmatpush.bf16.msra.mxu0 %v12893
        %12905 = vmatpush.bf16.msra.mxu0 %v12892
        %12906 = vmatpush.bf16.msra.mxu0 %v12891
        %12907 = vmatpush.bf16.msra.mxu0 %v12890
        %12908 = vmatpush.bf16.msra.mxu0 %v12889
        %12909 = vmatpush.bf16.msra.mxu0 %v12888
        %12910 = vmatpush.bf16.msra.mxu0 %v12887
        %12911 = vmatmul.bf16.gmra.mxu0 %v12834
        %v12912 = vpop.f32.mrf.mxu0
        %v12913 = vadd.f32 %v12853, %v12912
        %v12914 = vpop.f32.mrf.mxu0
        %12915 = vdwg.mxu0
        %v12916 = vlaneseq
        %v12917 = vand.u32 %v12916, 127
        %vm12918 = vcmp.lt.s32.totalorder %v12917, 16
        %vm12919 = vcmp.ge.s32.totalorder %v12917, 16
        %vm12920 = vcmp.lt.s32.totalorder %v12917, 32
        %vm12921 = vmand %vm12919, %vm12920
        %v12922 = vsel %vm12921, %v12913, -1e+30
        %12923 = vmax.xlane.f32.xlu0 %v12922
        %v12924 = vpop.xlane.xlu0 %12923
        %v12925 = vsub.f32 %v12913, %v12924
        %v12926 = vmul.f32 %v12925, 1.442695
        %v12927 = vpow.pop %v12926
        %v12928 = vsel %vm12921, %v12927, 0.0
        %12929 = vadd.xlane.f32.xlu0 %v12928
        %v12930 = vpop.xlane.xlu0 %12929
        %v12931 = vrcp.pop %v12930
        %v12932 = vmul.f32 %v12928, %v12931
        %v12933 = vadd.f32 %v12932, 1e-06
        %v12934 = vsel %vm12918, %v12913, 0.0
        %v12935 = vsel %vm12921, %v12933, %v12934
        %12936 = vst [vmem:[%s544] sm:$0xff] %v12935
        %p12937 = scmp.lt.s32.totalorder %s28, 1
        %s12938 = scalar_select %p12937, %s28, 1
        %s12939 = smul.addr %s12938, 8
        %s12940 = scalar_lea.vmem %s15, %s12939
        // Predicated region
        $region93: #{enc_svhn_forward.1} parent=79 // pred_check
          %p12941 = pneg %p366
        $region94: #{enc_svhn_forward.1} parent=79 // pred_check_branch
          %12943 = sbr.rel (%p12941) target = $region96
        $region95: #{enc_svhn_forward.1} parent=79 // pred_region
          _
        $region96: #{enc_svhn_forward.1} parent=79 // pred_fallthru
          _
      $region80: #{enc_svhn_forward.1} parent=5 // pred_fallthru
        _
      %p12944 = scmp.le.s32.totalorder 2, %s23
      // Predicated region
      $region97: #{enc_svhn_forward.1} parent=5 // pred_check
        %p12945 = pneg %p12944
      $region98: #{enc_svhn_forward.1} parent=5 // pred_check_branch
        %12947 = sbr.rel (%p12945) target = $region100
      $region99: #{enc_svhn_forward.1} parent=5 // pred_region
        %s12948 = ssub.s32 %s23, 2
        // Predicated region
        $region101: #{enc_svhn_forward.1} parent=99 // pred_check
          %p12949 = pneg %p372
        $region102: #{enc_svhn_forward.1} parent=99 // pred_check_branch
          %12951 = sbr.rel (%p12949) target = $region104
        $region103: #{enc_svhn_forward.1} parent=99 // pred_region
          %p12952 = scmp.lt.s32.totalorder %s29, 1
          %s12953 = scalar_select %p12952, %s29, 1
          %s12954 = smul.addr %s12953, 8
          %s12955 = scalar_lea.vmem %s15, %s12954
        $region104: #{enc_svhn_forward.1} parent=99 // pred_fallthru
          _
      $region100: #{enc_svhn_forward.1} parent=5 // pred_fallthru
        _
    $region6: #{enc_svhn_forward.1} parent=1 // loop_footer
      %s27 = sadd.s32 1, %s23
    $region7: #{enc_svhn_forward.1} parent=1 // loop_footer_branch
      %22 = sbr.rel target = $region3
    $region8: #{enc_svhn_forward.1} parent=1 // loop_exit
      _
    %12956 = vsyncpa [#allocation3], 1
    %s12957 = scalar_lea.sflag [#allocation3], 1
    %12958 = vsyncpa %s12957, 1
    %12959 = vsyncpa [#allocation5], 1

</llo_original>
